<compile_context>
chip_gen: v7x
topology: tpu7x:2x2x1
jax: 0.10.0
libtpu: 0.0.40
codegen_flags: <defaults>
</compile_context>

<pallas_src>
import functools

import jax
import jax.numpy as jnp
from jax.experimental import pallas as pl
from jax.experimental.pallas import tpu as pltpu


def _round_up(x, m):
    return (x + m - 1) // m * m


# ----------------------------- kernel ---------------------------------------
def _kl_partial_kernel(p_ref, q_ref, *args, pack: int, n_classes: int, valid_rows):
    """Partial KL sum for one tile of packed rows.

    p_ref, q_ref : (tile_m, pack*C) logits, `pack` distributions per 128-lane row
    seg_ref      : (pack, pack*C)   0/1 per-segment broadcast matrix   (only when pack > 1)
    segT_ref     : (pack*C, pack)   0/1 per-segment reduction matrix   (only when pack > 1)
    o_ref        : (1, 8, 128)      lane-dense block holding this tile's partial KL sum
    """
    o_ref = args[-1]
    P, C = pack, n_classes

    x = p_ref[...].astype(jnp.float32)          # (tm, P*C), lane-dense (no-op for f32 inputs)
    y = q_ref[...].astype(jnp.float32)
    tm, CP = x.shape

    remaining = None
    if valid_rows is not None:
        # Ragged last tile: rows at/after `remaining` hold undefined DMA padding.  Zero the
        # logits BEFORE any exp so garbage can never produce inf/NaN; an all-zero logit pair
        # is two identical uniform distributions (KL == 0), and kl is re-masked below anyway.
        remaining = valid_rows - pl.program_id(0) * tm
        keep = jax.lax.broadcasted_iota(jnp.int32, (tm, CP), 0) < remaining
        x = jnp.where(keep, x, 0.0)
        y = jnp.where(keep, y, 0.0)

    if P == 1:
        # One distribution per row: plain keepdims reductions, no segment machinery.
        mp = jnp.max(x, axis=-1, keepdims=True)
        mq = jnp.max(y, axis=-1, keepdims=True)
        ex = jnp.exp(x - mp)
        ey = jnp.exp(y - mq)
        w = ex * (x - y)
        zp = jnp.sum(ex, axis=-1, keepdims=True)
        zq = jnp.sum(ey, axis=-1, keepdims=True)
        ws = jnp.sum(w, axis=-1, keepdims=True)
    else:
        seg_ref, segT_ref = args[0], args[1]
        # Full-f32 MXU passes: the shift broadcasts stay bit-exact (needed for the exact
        # (mq - mp) cancellation) and the per-segment sums keep f32 accuracy.  The MXU is
        # otherwise idle, so the extra passes are free.
        hp = jax.lax.Precision.HIGHEST

        # Exact per-distribution maxima (numerically safe softmax shifts).
        mp = jnp.max(x.reshape(tm, P, C), axis=-1)                    # (tm, P)
        mq = jnp.max(y.reshape(tm, P, C), axis=-1)

        # Broadcast the shifts back to the lane-dense layout on the MXU.
        seg = seg_ref[...]
        mp_b = jnp.dot(mp, seg, preferred_element_type=jnp.float32, precision=hp)
        mq_b = jnp.dot(mq, seg, preferred_element_type=jnp.float32, precision=hp)

        # Heavy lane-dense elementwise / EUP work.
        ex = jnp.exp(x - mp_b)
        ey = jnp.exp(y - mq_b)
        w = ex * (x - y)

        # Per-distribution reductions on the MXU.
        segT = segT_ref[...]
        zp = jnp.dot(ex, segT, preferred_element_type=jnp.float32, precision=hp)
        zq = jnp.dot(ey, segT, preferred_element_type=jnp.float32, precision=hp)
        ws = jnp.dot(w, segT, preferred_element_type=jnp.float32, precision=hp)

    # KL(p||q) per distribution:
    #   sum_c softmax(p)_c * (p_c - q_c) - logsumexp(p) + logsumexp(q)
    #   = ws/zp + log(zq/zp) + (mq - mp)          (one divide + one log on the tiny tail)
    rzp = 1.0 / zp
    kl = ws * rzp + jnp.log(zq * rzp) + (mq - mp)                      # (tm, P)

    if valid_rows is not None:
        keep_kl = jax.lax.broadcasted_iota(jnp.int32, kl.shape, 0) < remaining
        kl = jnp.where(keep_kl, kl, 0.0)

    o_ref[...] = jnp.full(o_ref.shape, jnp.sum(kl), dtype=o_ref.dtype)


# ----------------------------- wrapper ---------------------------------------
def categorical_kl_free_bits(p_logits, q_logits, free_bits, *, tile_rows: int = 2048):
    """p_logits, q_logits: (B, L, D, C) -> (max(free_bits, kl_mean), kl_mean)."""
    B, L, D, C = p_logits.shape
    assert q_logits.shape == p_logits.shape
    N = B * L * D

    # Pack `pack` consecutive distributions into one 128-lane row when shapes allow it.
    pack = (128 // C) if (C <= 128 and 128 % C == 0 and N % (128 // C) == 0) else 1
    CP = pack * C
    m_raw = N // pack                      # packed rows (exact: N % pack == 0 by construction)

    # Row tile: large (HBM-bound kernel), capped to ~2 MiB of f32 per input block and rounded
    # to 32 sublanes (safe for f32/bf16/fp8 blocks).  Keep >= 2 grid steps when there is
    # enough data so v7x's two TensorCores both get work; tiny inputs use one full-array block.
    tm_cap = max(32, (2 * 1024 * 1024) // (CP * 4) // 32 * 32)
    tm_req = max(32, min(_round_up(int(tile_rows), 32), tm_cap))
    if m_raw > 2 * tm_req:
        tile_m = tm_req
    elif m_raw >= 64:
        tile_m = min(tm_req, _round_up(pl.cdiv(m_raw, 2), 32))
    else:
        tile_m = m_raw                     # single block equal to the full array: always legal
    G = pl.cdiv(m_raw, tile_m)
    ragged = (m_raw % tile_m) != 0

    # Free contiguous reshapes -- no jnp.pad / extra HBM round trip.  Inputs keep their dtype
    # (bf16 halves the dominant HBM stream); the kernel casts to f32 after load.
    pm = p_logits.reshape(m_raw, CP)
    qm = q_logits.reshape(m_raw, CP)

    operands = [pm, qm]
    in_specs = [pl.BlockSpec((tile_m, CP), lambda i: (i, 0)),
                pl.BlockSpec((tile_m, CP), lambda i: (i, 0))]
    if pack > 1:
        # Tiny 0/1 segment matrices, built once on the host; constant block index means Pallas
        # fetches them once and keeps them resident across the whole grid.
        lanes = jnp.arange(CP, dtype=jnp.int32)
        segs = jnp.arange(pack, dtype=jnp.int32)
        seg = (lanes[None, :] // C == segs[:, None]).astype(jnp.float32)   # (pack, CP)
        segT = jnp.transpose(seg)                                          # (CP, pack)
        operands += [seg, segT]
        in_specs += [pl.BlockSpec((pack, CP), lambda i: (0, 0)),
                     pl.BlockSpec((CP, pack), lambda i: (0, 0))]

    kernel = functools.partial(
        _kl_partial_kernel, pack=pack, n_classes=C,
        valid_rows=(m_raw if ragged else None))

    partials = pl.pallas_call(
        kernel,
        out_shape=jax.ShapeDtypeStruct((G, 8, 128), jnp.float32),
        grid_spec=pltpu.PrefetchScalarGridSpec(
            num_scalar_prefetch=0,
            grid=(G,),
            in_specs=in_specs,
            out_specs=pl.BlockSpec((1, 8, 128), lambda i: (i, 0, 0)),
        ),
        compiler_params=pltpu.CompilerParams(
            dimension_semantics=("parallel",),
            vmem_limit_bytes=64 * 1024 * 1024),
    )(*operands)

    # Tiny final reduction + free-bits clamp as plain JAX glue.
    total = jnp.sum(partials[:, 0, 0])
    real_kl = total / (B * L)
    kl = jnp.maximum(jnp.asarray(free_bits, jnp.float32), real_kl)
    return kl, real_kl


# ----------------------------- reference ------------------------------------
def categorical_kl_free_bits_ref(p_logits, q_logits, free_bits):
    lp = jax.nn.log_softmax(p_logits.astype(jnp.float32), axis=-1)
    lq = jax.nn.log_softmax(q_logits.astype(jnp.float32), axis=-1)
    kl = jnp.sum(jnp.exp(lp) * (lp - lq), axis=-1)   # (B, L, D)
    kl = jnp.sum(kl, axis=-1)                        # (B, L)
    real = jnp.mean(kl)
    return jnp.maximum(jnp.asarray(free_bits, jnp.float32), real), real


# ----------------------------- main ------------------------------------------
if __name__ == "__main__":
    key = jax.random.PRNGKey(0)
    kp, kq = jax.random.split(key)

    B, L, D, C = 2, 8, 32, 32          # (B, L, D) latents, C categories each
    free_bits = 1.0

    p_logits = jax.random.normal(kp, (B, L, D, C), dtype=jnp.float32)
    q_logits = jax.random.normal(kq, (B, L, D, C), dtype=jnp.float32)

    kl, real_kl = categorical_kl_free_bits(p_logits, q_logits, free_bits)
    kl, real_kl = jax.block_until_ready((kl, real_kl))

    ref_kl, ref_real = categorical_kl_free_bits_ref(p_logits, q_logits, free_bits)
    assert jnp.allclose(real_kl, ref_real, rtol=1e-4, atol=1e-5), (real_kl, ref_real)
    assert jnp.allclose(kl, ref_kl, rtol=1e-4, atol=1e-5), (kl, ref_kl)

    # Exercise the free-bits clamp branch.
    kl_hi, real_hi = jax.block_until_ready(
        categorical_kl_free_bits(p_logits, q_logits, 1e6))
    assert jnp.allclose(kl_hi, jnp.float32(1e6))
    assert jnp.allclose(real_hi, ref_real, rtol=1e-4, atol=1e-5)

    # bf16 logits stream straight through (kernel casts to f32 after load).
    p_bf = p_logits.astype(jnp.bfloat16)
    q_bf = q_logits.astype(jnp.bfloat16)
    kl_bf, real_bf = jax.block_until_ready(
        categorical_kl_free_bits(p_bf, q_bf, free_bits))
    ref_kl_bf, ref_real_bf = categorical_kl_free_bits_ref(p_bf, q_bf, free_bits)
    assert jnp.allclose(real_bf, ref_real_bf, rtol=1e-4, atol=1e-4), (real_bf, ref_real_bf)
    assert jnp.allclose(kl_bf, ref_kl_bf, rtol=1e-4, atol=1e-4)

    # Ragged row count (exercises the in-kernel mask path, no jnp.pad anywhere).
    p_r = jax.random.normal(kp, (2, 5, 28, 32), dtype=jnp.float32)
    q_r = jax.random.normal(kq, (2, 5, 28, 32), dtype=jnp.float32)
    kl_r, real_r = jax.block_until_ready(categorical_kl_free_bits(p_r, q_r, 0.1))
    ref_kl_r, ref_real_r = categorical_kl_free_bits_ref(p_r, q_r, 0.1)
    assert jnp.allclose(real_r, ref_real_r, rtol=1e-4, atol=1e-5), (real_r, ref_real_r)
    assert jnp.allclose(kl_r, ref_kl_r, rtol=1e-4, atol=1e-5)

    # Unpackable class count (exercises the pack == 1 path).
    p_u = jax.random.normal(kp, (2, 3, 5, 48), dtype=jnp.float32)
    q_u = jax.random.normal(kq, (2, 3, 5, 48), dtype=jnp.float32)
    kl_u, real_u = jax.block_until_ready(categorical_kl_free_bits(p_u, q_u, 0.1))
    ref_kl_u, ref_real_u = categorical_kl_free_bits_ref(p_u, q_u, 0.1)
    assert jnp.allclose(real_u, ref_real_u, rtol=1e-4, atol=1e-5), (real_u, ref_real_u)
    assert jnp.allclose(kl_u, ref_kl_u, rtol=1e-4, atol=1e-5)

    print("KERNEL_OK")
</pallas_src>

<mosaic_0001>
module attributes {stable_mosaic.version = 11 : i64} {
  func.func @_kl_partial_kernel(%arg0: i32, %arg1: memref<64x128xf32, #tpu.memory_space<vmem>>, %arg2: memref<64x128xf32, #tpu.memory_space<vmem>>, %arg3: memref<4x128xf32, #tpu.memory_space<vmem>>, %arg4: memref<128x4xf32, #tpu.memory_space<vmem>>, %arg5: memref<1x8x128xf32, #tpu.memory_space<vmem>>) attributes {dimension_semantics = [#tpu.dimension_semantics<parallel>], iteration_bounds = array<i64: 2>, scalar_prefetch = 0 : i64, scratch_operands = 0 : i64, tpu.core_type = #tpu.core_type<tc>, window_params = [{transform_indices = @transform_0, window_bounds = array<i64: 64, 128>}, {transform_indices = @transform_1, window_bounds = array<i64: 64, 128>}, {pipeline_mode = #tpu.pipeline_mode<synchronous>, transform_indices = @transform_2, window_bounds = array<i64: 4, 128>}, {pipeline_mode = #tpu.pipeline_mode<synchronous>, transform_indices = @transform_3, window_bounds = array<i64: 128, 4>}, {transform_indices = @transform_4, window_bounds = array<i64: 1, 8, 128>}]} {
    %c0 = arith.constant 0 : index
    %c0_0 = arith.constant 0 : index
    %0 = vector.load %arg1[%c0, %c0_0] : memref<64x128xf32, #tpu.memory_space<vmem>>, vector<64x128xf32>
    %c0_1 = arith.constant 0 : index
    %c0_2 = arith.constant 0 : index
    %1 = vector.load %arg2[%c0_1, %c0_2] : memref<64x128xf32, #tpu.memory_space<vmem>>, vector<64x128xf32>
    %2 = vector.shape_cast %0 : vector<64x128xf32> to vector<64x4x32xf32>
    %cst = arith.constant dense<0xFF800000> : vector<64x4xf32>
    %3 = vector.multi_reduction <maximumf>, %2, %cst [2] : vector<64x4x32xf32> to vector<64x4xf32>
    %4 = vector.shape_cast %1 : vector<64x128xf32> to vector<64x4x32xf32>
    %cst_3 = arith.constant dense<0xFF800000> : vector<64x4xf32>
    %5 = vector.multi_reduction <maximumf>, %4, %cst_3 [2] : vector<64x4x32xf32> to vector<64x4xf32>
    %c0_4 = arith.constant 0 : index
    %c0_5 = arith.constant 0 : index
    %6 = vector.load %arg3[%c0_4, %c0_5] : memref<4x128xf32, #tpu.memory_space<vmem>>, vector<4x128xf32>
    %cst_6 = arith.constant dense<0.000000e+00> : vector<64x128xf32>
    %7 = tpu.matmul %3, %6, %cst_6 {dimension_numbers = #tpu.dot_dimension_numbers<[1], [0], [0], [1], [0, 0, 1, 1], [], []>, precision = #tpu.contract_precision<fp32>} : vector<64x4xf32>, vector<4x128xf32>, vector<64x128xf32> -> vector<64x128xf32>
    %cst_7 = arith.constant dense<0.000000e+00> : vector<64x128xf32>
    %8 = tpu.matmul %5, %6, %cst_7 {dimension_numbers = #tpu.dot_dimension_numbers<[1], [0], [0], [1], [0, 0, 1, 1], [], []>, precision = #tpu.contract_precision<fp32>} : vector<64x4xf32>, vector<4x128xf32>, vector<64x128xf32> -> vector<64x128xf32>
    %9 = arith.subf %0, %7 : vector<64x128xf32>
    %10 = math.exp %9 : vector<64x128xf32>
    %11 = arith.subf %1, %8 : vector<64x128xf32>
    %12 = math.exp %11 : vector<64x128xf32>
    %13 = arith.subf %0, %1 : vector<64x128xf32>
    %14 = arith.mulf %10, %13 : vector<64x128xf32>
    %c0_8 = arith.constant 0 : index
    %c0_9 = arith.constant 0 : index
    %15 = vector.load %arg4[%c0_8, %c0_9] : memref<128x4xf32, #tpu.memory_space<vmem>>, vector<128x4xf32>
    %cst_10 = arith.constant dense<0.000000e+00> : vector<64x4xf32>
    %16 = tpu.matmul %10, %15, %cst_10 {dimension_numbers = #tpu.dot_dimension_numbers<[1], [0], [0], [1], [0, 0, 1, 1], [], []>, precision = #tpu.contract_precision<fp32>} : vector<64x128xf32>, vector<128x4xf32>, vector<64x4xf32> -> vector<64x4xf32>
    %cst_11 = arith.constant dense<0.000000e+00> : vector<64x4xf32>
    %17 = tpu.matmul %12, %15, %cst_11 {dimension_numbers = #tpu.dot_dimension_numbers<[1], [0], [0], [1], [0, 0, 1, 1], [], []>, precision = #tpu.contract_precision<fp32>} : vector<64x128xf32>, vector<128x4xf32>, vector<64x4xf32> -> vector<64x4xf32>
    %cst_12 = arith.constant dense<0.000000e+00> : vector<64x4xf32>
    %18 = tpu.matmul %14, %15, %cst_12 {dimension_numbers = #tpu.dot_dimension_numbers<[1], [0], [0], [1], [0, 0, 1, 1], [], []>, precision = #tpu.contract_precision<fp32>} : vector<64x128xf32>, vector<128x4xf32>, vector<64x4xf32> -> vector<64x4xf32>
    %cst_13 = arith.constant 1.000000e+00 : f32
    %19 = vector.broadcast %cst_13 : f32 to vector<64x4xf32>
    %20 = arith.divf %19, %16 : vector<64x4xf32>
    %21 = arith.mulf %18, %20 : vector<64x4xf32>
    %22 = arith.mulf %17, %20 : vector<64x4xf32>
    %23 = math.log %22 : vector<64x4xf32>
    %24 = arith.addf %21, %23 : vector<64x4xf32>
    %25 = arith.subf %5, %3 : vector<64x4xf32>
    %26 = arith.addf %24, %25 : vector<64x4xf32>
    %27 = vector.shape_cast %26 : vector<64x4xf32> to vector<1x64x4xf32>
    %cst_14 = arith.constant dense<0.000000e+00> : vector<1xf32>
    %28 = vector.multi_reduction <add>, %27, %cst_14 [1, 2] : vector<1x64x4xf32> to vector<1xf32>
    %29 = vector.shape_cast %28 : vector<1xf32> to vector<1x1x1xf32>
    %30 = vector.extract %29[0, 0, 0] : f32 from vector<1x1x1xf32>
    %31 = vector.broadcast %30 : f32 to vector<1x8x128xf32>
    %c0_15 = arith.constant 0 : index
    %c0_16 = arith.constant 0 : index
    %c0_17 = arith.constant 0 : index
    %32 = vector.load %arg5[%c0_15, %c0_16, %c0_17] : memref<1x8x128xf32, #tpu.memory_space<vmem>>, vector<1x8x128xf32>
    tpu.vector_store %arg5[%c0_15, %c0_16, %c0_17], %31 {strides = array<i32>} : memref<1x8x128xf32, #tpu.memory_space<vmem>>, vector<1x8x128xf32>,
    return
  }
  func.func @transform_0(%arg0: i32) -> (i32, i32) {
    %c0_i32 = arith.constant 0 : i32
    %c0_i32_0 = arith.constant 0 : i32
    return %arg0, %c0_i32 : i32, i32
  }
  func.func @transform_1(%arg0: i32) -> (i32, i32) {
    %c0_i32 = arith.constant 0 : i32
    %c0_i32_0 = arith.constant 0 : i32
    return %arg0, %c0_i32 : i32, i32
  }
  func.func @transform_2(%arg0: i32) -> (i32, i32) {
    %c0_i32 = arith.constant 0 : i32
    %c0_i32_0 = arith.constant 0 : i32
    %c0_i32_1 = arith.constant 0 : i32
    return %c0_i32, %c0_i32_0 : i32, i32
  }
  func.func @transform_3(%arg0: i32) -> (i32, i32) {
    %c0_i32 = arith.constant 0 : i32
    %c0_i32_0 = arith.constant 0 : i32
    %c0_i32_1 = arith.constant 0 : i32
    return %c0_i32, %c0_i32_0 : i32, i32
  }
  func.func @transform_4(%arg0: i32) -> (i32, i32, i32) {
    %c0_i32 = arith.constant 0 : i32
    %c0_i32_0 = arith.constant 0 : i32
    %c0_i32_1 = arith.constant 0 : i32
    return %arg0, %c0_i32, %c0_i32_0 : i32, i32, i32
  }
}

</mosaic_0001>

<llo_original>
// kernel: tpu_custom_call.1
$region0: #{tpu_custom_call.1}
  #allocation0 [shape = 'u32[]', space=smem, size = 0x4, offset = 0x4, fixed_abs, tag = 'smem constant byte address 0x4 - core index']
  #allocation1 [shape = 'u32[144,128]{1,0:T(1,128)}', space=vmem, size = 0x12000, scoped, tag = 'internal scratch']
  %s0 = inlined_call_operand.hbm [shape: f32[128,128], index: 0, kind: input, shape index: {}]
  %s1 = inlined_call_operand.hbm [shape: f32[128,128], index: 1, kind: input, shape index: {}]
  %s2 = inlined_call_operand.hbm [shape: f32[4,128], index: 2, kind: input, shape index: {}]
  %s3 = inlined_call_operand.hbm [shape: f32[128,4], index: 3, kind: input, shape index: {}]
  %s4 = inlined_call_operand.hbm [shape: f32[2,8,128], index: 4, kind: output, shape index: {}]
  %s5 = sld [smem:[#allocation0]]
  $region65: #{tpu_custom_call.1} parent=0
    _
  %s7 = ssub.s32 1, %s5
  %s8 = scalar_select 0, %s7, %s5
  $region1: #{tpu_custom_call.1} parent=0
    #allocation2 [shape = 'u8[65536]{0}', space=vmem, size = 0x10000, scoped, tag = 'input window, operand 0']
    #allocation3 [shape = 's32[2]{0}', space=sflag, size = 0x8, scoped, tag = 'scoped memory for tpu_custom_call.1']
    #allocation4 [shape = 's32[2]{0}', space=sflag, size = 0x8, scoped, tag = 'scoped memory for tpu_custom_call.1']
    #allocation5 [shape = 'u8[65536]{0}', space=vmem, size = 0x10000, scoped, tag = 'input window, operand 1']
    #allocation6 [shape = 's32[2]{0}', space=sflag, size = 0x8, scoped, tag = 'scoped memory for tpu_custom_call.1']
    #allocation7 [shape = 'u8[2048]{0}', space=vmem, size = 0x800, scoped, tag = 'input window, operand 2, single buffered']
    #allocation8 [shape = 'u8[65536]{0}', space=vmem, size = 0x10000, scoped, tag = 'input window, operand 3, single buffered']
    #allocation9 [shape = 's32[1]{0}', space=sflag, size = 0x4, scoped, tag = 'scoped memory for tpu_custom_call.1']
    #allocation10 [shape = 'u8[8192]{0}', space=vmem, size = 0x2000, scoped, tag = 'output window, operand 0']
    %9 = vsyncpa [#allocation3], 0
    %s10 = scalar_lea.sflag [#allocation3], 1
    %11 = vsyncpa %s10, 0
    %12 = vsyncpa [#allocation6], 0
    %s13 = scalar_lea.sflag [#allocation6], 1
    %14 = vsyncpa %s13, 0
    %15 = vsyncpa [#allocation9], 0
    %16 = vsyncpa [#allocation4], 0
    %s17 = scalar_lea.sflag [#allocation4], 1
    %18 = vsyncpa %s17, 0
    loop: start=0, step=1, limit=4
    $region2: #{tpu_custom_call.1} parent=1 // loop_pre_header
      _
    $region3: #{tpu_custom_call.1} parent=1 // loop_header
      %s20 = sphi 0, %s24
      %p21 = scmp.ge.s32.totalorder %s20, 4
      %s30 = sphi 0, %s32
      %s33 = sphi 0, %s30
      %s34 = sphi 0, %s33
      %s50 = sphi 0, %s34
      %s56 = sphi 0, %s58
      %s59 = sphi 0, %s56
      %s60 = sphi 0, %s59
      %s76 = sphi 0, %s60
      %s80 = sphi 0, %s80
      %s82 = sphi 0, %s80
      %s83 = sphi 0, %s82
      %s97 = sphi 0, %s83
      %s101 = sphi 0, %s101
      %s103 = sphi 0, %s101
      %s104 = sphi 0, %s103
      %s118 = sphi 0, %s104
      %s124 = sphi 0, %s126
      %s127 = sphi 0, %s124
      %s128 = sphi 0, %s127
      %s144 = sphi 0, %s128
    $region4: #{tpu_custom_call.1} parent=1 // loop_header_branch
      %23 = sbr.rel (%p21) target = $region8
    $region5: #{tpu_custom_call.1} parent=1 // loop_body
      %s25 = ssub.s32 %s20, 1
      %s26 = ssub.s32 %s20, 2
      %s27 = sadd.s32 %s20, 1
      %s28 = ssub.s32 %s20, %s27
      %p29 = scmp.eq.s32.totalorder %s28, 0
      %s31 = sadd.s32 %s30, 1
      %s32 = scalar_select %p29, %s30, %s31
      %p35 = pneg %p29
      %p36 = scmp.eq.s32.totalorder %s20, 1
      %p37 = por %p35, %p36
      %p38 = scmp.ne.s32.totalorder %s30, %s33
      %p39 = scmp.eq.s32.totalorder %s20, 0
      %p40 = por %p38, %p39
      %p41 = scmp.ne.s32.totalorder %s30, %s33
      %p42 = scmp.eq.s32.totalorder %s25, 1
      %p43 = por %p41, %p42
      %p44 = scmp.ne.s32.totalorder %s33, %s34
      %p45 = scmp.eq.s32.totalorder %s25, 0
      %p46 = por %p44, %p45
      %p47 = scmp.ne.s32.totalorder %s33, %s34
      %p48 = scmp.eq.s32.totalorder %s26, 1
      %p49 = por %p47, %p48
      %p51 = scmp.ne.s32.totalorder %s34, %s50
      %p52 = scmp.eq.s32.totalorder %s26, 0
      %p53 = por %p51, %p52
      %s54 = ssub.s32 %s20, %s27
      %p55 = scmp.eq.s32.totalorder %s54, 0
      %s57 = sadd.s32 %s56, 1
      %s58 = scalar_select %p55, %s56, %s57
      %p61 = pneg %p55
      %p62 = scmp.eq.s32.totalorder %s20, 1
      %p63 = por %p61, %p62
      %p64 = scmp.ne.s32.totalorder %s56, %s59
      %p65 = scmp.eq.s32.totalorder %s20, 0
      %p66 = por %p64, %p65
      %p67 = scmp.ne.s32.totalorder %s56, %s59
      %p68 = scmp.eq.s32.totalorder %s25, 1
      %p69 = por %p67, %p68
      %p70 = scmp.ne.s32.totalorder %s59, %s60
      %p71 = scmp.eq.s32.totalorder %s25, 0
      %p72 = por %p70, %p71
      %p73 = scmp.ne.s32.totalorder %s59, %s60
      %p74 = scmp.eq.s32.totalorder %s26, 1
      %p75 = por %p73, %p74
      %p77 = scmp.ne.s32.totalorder %s60, %s76
      %p78 = scmp.eq.s32.totalorder %s26, 0
      %p79 = por %p77, %p78
      %s81 = sadd.s32 %s80, 1
      %p84 = scmp.eq.s32.totalorder %s20, 1
      %p85 = scmp.ne.s32.totalorder %s80, %s82
      %p86 = scmp.eq.s32.totalorder %s20, 0
      %p87 = por %p85, %p86
      %p88 = scmp.ne.s32.totalorder %s80, %s82
      %p89 = scmp.eq.s32.totalorder %s25, 1
      %p90 = por %p88, %p89
      %p91 = scmp.ne.s32.totalorder %s82, %s83
      %p92 = scmp.eq.s32.totalorder %s25, 0
      %p93 = por %p91, %p92
      %p94 = scmp.ne.s32.totalorder %s82, %s83
      %p95 = scmp.eq.s32.totalorder %s26, 1
      %p96 = por %p94, %p95
      %p98 = scmp.ne.s32.totalorder %s83, %s97
      %p99 = scmp.eq.s32.totalorder %s26, 0
      %p100 = por %p98, %p99
      %s102 = sadd.s32 %s101, 1
      %p105 = scmp.eq.s32.totalorder %s20, 1
      %p106 = scmp.ne.s32.totalorder %s101, %s103
      %p107 = scmp.eq.s32.totalorder %s20, 0
      %p108 = por %p106, %p107
      %p109 = scmp.ne.s32.totalorder %s101, %s103
      %p110 = scmp.eq.s32.totalorder %s25, 1
      %p111 = por %p109, %p110
      %p112 = scmp.ne.s32.totalorder %s103, %s104
      %p113 = scmp.eq.s32.totalorder %s25, 0
      %p114 = por %p112, %p113
      %p115 = scmp.ne.s32.totalorder %s103, %s104
      %p116 = scmp.eq.s32.totalorder %s26, 1
      %p117 = por %p115, %p116
      %p119 = scmp.ne.s32.totalorder %s104, %s118
      %p120 = scmp.eq.s32.totalorder %s26, 0
      %p121 = por %p119, %p120
      %s122 = ssub.s32 %s20, %s27
      %p123 = scmp.eq.s32.totalorder %s122, 0
      %s125 = sadd.s32 %s124, 1
      %s126 = scalar_select %p123, %s124, %s125
      %p129 = pneg %p123
      %p130 = scmp.eq.s32.totalorder %s20, 1
      %p131 = por %p129, %p130
      %p132 = scmp.ne.s32.totalorder %s124, %s127
      %p133 = scmp.eq.s32.totalorder %s20, 0
      %p134 = por %p132, %p133
      %p135 = scmp.ne.s32.totalorder %s124, %s127
      %p136 = scmp.eq.s32.totalorder %s25, 1
      %p137 = por %p135, %p136
      %p138 = scmp.ne.s32.totalorder %s127, %s128
      %p139 = scmp.eq.s32.totalorder %s25, 0
      %p140 = por %p138, %p139
      %p141 = scmp.ne.s32.totalorder %s127, %s128
      %p142 = scmp.eq.s32.totalorder %s26, 1
      %p143 = por %p141, %p142
      %p145 = scmp.ne.s32.totalorder %s128, %s144
      %p146 = scmp.eq.s32.totalorder %s26, 0
      %p147 = por %p145, %p146
      %p148 = scmp.le.s32.totalorder 1, %s20
      %p149 = scmp.lt.s32.totalorder %s20, 3
      %p150 = pnand %p148, %p149
      %p151 = pneg %p150
      // Predicated region
      $region9: #{tpu_custom_call.1} parent=5 // pred_check
        _
      $region10: #{tpu_custom_call.1} parent=5 // pred_check_branch
        %153 = sbr.rel (%p150) target = $region12
      $region11: #{tpu_custom_call.1} parent=5 // pred_region
        %s154 = ssub.s32 %s20, 1
        // Predicated region
        $region13: #{tpu_custom_call.1} parent=11 // pred_check
          %p155 = pneg %p93
        $region14: #{tpu_custom_call.1} parent=11 // pred_check_branch
          %157 = sbr.rel (%p155) target = $region16
        $region15: #{tpu_custom_call.1} parent=11 // pred_region
          %s159 = ssub.s32 64, 64
          %160 = vsyncadd [#allocation6], %s159
          %s162 = sshll.u32 [#allocation7], 4
          %s163 = int_to_ptr.vmem [resolvable:$true] %s162
          %165 = dma.hbm_to_vmem [thread:$0]  %s2, 64, %s163, [#allocation6]
        $region16: #{tpu_custom_call.1} parent=11 // pred_fallthru
          _
        // Predicated region
        $region17: #{tpu_custom_call.1} parent=11 // pred_check
          %p166 = pneg %p114
        $region18: #{tpu_custom_call.1} parent=11 // pred_check_branch
          %168 = sbr.rel (%p166) target = $region20
        $region19: #{tpu_custom_call.1} parent=11 // pred_region
          %s170 = ssub.s32 2048, 2048
          %171 = vsyncadd [#allocation9], %s170
          %s172 = sshll.u32 [#allocation8], 4
          %s173 = int_to_ptr.vmem [resolvable:$true] %s172
          %178 = dma.hbm_to_vmem [thread:$0]  %s3, 2048, %s173, [#allocation9], 128, 128, 8
        $region20: #{tpu_custom_call.1} parent=11 // pred_fallthru
          _
      $region12: #{tpu_custom_call.1} parent=5 // pred_fallthru
        _
      %p179 = scmp.lt.s32.totalorder %s20, 2
      // Predicated region
      $region21: #{tpu_custom_call.1} parent=5 // pred_check
        %p180 = pneg %p179
      $region22: #{tpu_custom_call.1} parent=5 // pred_check_branch
        %182 = sbr.rel (%p180) target = $region24
      $region23: #{tpu_custom_call.1} parent=5 // pred_region
        // Predicated region
        $region25: #{tpu_custom_call.1} parent=23 // pred_check
          %p183 = pneg %p40
        $region26: #{tpu_custom_call.1} parent=23 // pred_check_branch
          %185 = sbr.rel (%p183) target = $region28
        $region27: #{tpu_custom_call.1} parent=23 // pred_region
          %s186 = sand.u32 %s30, 1
          %s187 = scalar_lea.sflag [#allocation3], %s186
          %s188 = sand.u32 %s30, 1
          %s189 = smul.addr %s188, 64
          %s190 = scalar_lea.vmem [#allocation2], %s189
          %s191 = smul.u32 8, %s20
          %s193 = ssub.s32 1024, 1024
          %194 = vsyncadd %s187, %s193
          %s195 = smul.addr %s191, 128
          %s196 = scalar_lea.hbm %s0, %s195
          %s197 = sshll.u32 %s190, 4
          %s198 = int_to_ptr.vmem [resolvable:$true] %s197
          %203 = dma.hbm_to_vmem [thread:$0]  %s196, 1024, %s198, %s187, 128, 128, 8
        $region28: #{tpu_custom_call.1} parent=23 // pred_fallthru
          _
        // Predicated region
        $region29: #{tpu_custom_call.1} parent=23 // pred_check
          %p204 = pneg %p66
        $region30: #{tpu_custom_call.1} parent=23 // pred_check_branch
          %206 = sbr.rel (%p204) target = $region32
        $region31: #{tpu_custom_call.1} parent=23 // pred_region
          %s207 = sand.u32 %s20, 1
          %s208 = scalar_lea.sflag [#allocation6], %s207
          %s209 = sand.u32 %s56, 1
          %s210 = smul.addr %s209, 64
          %s211 = scalar_lea.vmem [#allocation5], %s210
          %s212 = smul.u32 8, %s20
          %s214 = ssub.s32 1024, 1024
          %215 = vsyncadd %s208, %s214
          %s216 = smul.addr %s212, 128
          %s217 = scalar_lea.hbm %s1, %s216
          %s218 = sshll.u32 %s211, 4
          %s219 = int_to_ptr.vmem [resolvable:$true] %s218
          %224 = dma.hbm_to_vmem [thread:$0]  %s217, 1024, %s219, %s208, 128, 128, 8
        $region32: #{tpu_custom_call.1} parent=23 // pred_fallthru
          _
      $region24: #{tpu_custom_call.1} parent=5 // pred_fallthru
        _
      %p225 = scmp.le.s32.totalorder 1, %s20
      %p226 = scmp.lt.s32.totalorder %s20, 3
      %p227 = pnand %p225, %p226
      %p228 = pneg %p227
      // Predicated region
      $region33: #{tpu_custom_call.1} parent=5 // pred_check
        _
      $region34: #{tpu_custom_call.1} parent=5 // pred_check_branch
        %230 = sbr.rel (%p227) target = $region36
      $region35: #{tpu_custom_call.1} parent=5 // pred_region
        %s231 = ssub.s32 %s20, 1
        %s232 = sand.u32 %s33, 1
        %s233 = scalar_lea.sflag [#allocation3], %s232
        %s234 = sand.u32 %s33, 1
        %s235 = smul.addr %s234, 64
        %s236 = scalar_lea.vmem [#allocation2], %s235
        // Predicated region
        $region37: #{tpu_custom_call.1} parent=35 // pred_check
          %p237 = pneg %p46
        $region38: #{tpu_custom_call.1} parent=35 // pred_check_branch
          %239 = sbr.rel (%p237) target = $region40
        $region39: #{tpu_custom_call.1} parent=35 // pred_region
          %240 = dma.done %s233, 1024
        $region40: #{tpu_custom_call.1} parent=35 // pred_fallthru
          _
        %s241 = sand.u32 %s25, 1
        %s242 = scalar_lea.sflag [#allocation6], %s241
        %s243 = sand.u32 %s59, 1
        %s244 = smul.addr %s243, 64
        %s245 = scalar_lea.vmem [#allocation5], %s244
        // Predicated region
        $region41: #{tpu_custom_call.1} parent=35 // pred_check
          %p246 = pneg %p72
        $region42: #{tpu_custom_call.1} parent=35 // pred_check_branch
          %248 = sbr.rel (%p246) target = $region44
        $region43: #{tpu_custom_call.1} parent=35 // pred_region
          %249 = dma.done %s242, 1024
        $region44: #{tpu_custom_call.1} parent=35 // pred_fallthru
          _
        // Predicated region
        $region45: #{tpu_custom_call.1} parent=35 // pred_check
          %p250 = pneg %p93
        $region46: #{tpu_custom_call.1} parent=35 // pred_check_branch
          %252 = sbr.rel (%p250) target = $region48
        $region47: #{tpu_custom_call.1} parent=35 // pred_region
          %253 = dma.done [#allocation6], 64
        $region48: #{tpu_custom_call.1} parent=35 // pred_fallthru
          _
        // Predicated region
        $region49: #{tpu_custom_call.1} parent=35 // pred_check
          %p254 = pneg %p114
        $region50: #{tpu_custom_call.1} parent=35 // pred_check_branch
          %256 = sbr.rel (%p254) target = $region52
        $region51: #{tpu_custom_call.1} parent=35 // pred_region
          %257 = dma.done [#allocation9], 2048
        $region52: #{tpu_custom_call.1} parent=35 // pred_fallthru
          _
        %s258 = sand.u32 %s33, 1
        %s259 = scalar_lea.sflag [#allocation3], %s258
        %s260 = sand.u32 %s33, 1
        %s261 = smul.addr %s260, 64
        %s262 = scalar_lea.vmem [#allocation2], %s261
        %p263 = pneg %p46
        %p264 = pneg %p43
        %s265 = sand.u32 %s25, 1
        %s266 = scalar_lea.sflag [#allocation6], %s265
        %s267 = sand.u32 %s59, 1
        %s268 = smul.addr %s267, 64
        %s269 = scalar_lea.vmem [#allocation5], %s268
        %p270 = pneg %p72
        %p271 = pneg %p69
        %p272 = pneg %p93
        %p273 = pneg %p90
        %p274 = pneg %p114
        %p275 = pneg %p111
        %p276 = pneg %p140
        %p277 = pneg %p137
        %s278 = sand.u32 %s127, 1
        %s279 = scalar_lea.sflag [#allocation4], %s278
        %s280 = sand.u32 %s127, 1
        %s281 = smul.addr %s280, 8
        %s282 = scalar_lea.vmem [#allocation10], %s281
        %s283 = smul.u32 8, %s25
        %s284 = smul.u32 8, %s25
        %v285 = vld [vmem:[%s236] sm:$0xff]
        %v286 = vld [vmem:[%s236 + $0x8] sm:$0xff]
        %v287 = vld [vmem:[%s236 + $0x10] sm:$0xff]
        %v288 = vld [vmem:[%s236 + $0x18] sm:$0xff]
        %v289 = vld [vmem:[%s236 + $0x20] sm:$0xff]
        %v290 = vld [vmem:[%s236 + $0x28] sm:$0xff]
        %v291 = vld [vmem:[%s236 + $0x30] sm:$0xff]
        %v292 = vld [vmem:[%s236 + $0x38] sm:$0xff]
        %v293 = vld [vmem:[%s245] sm:$0xff]
        %v294 = vld [vmem:[%s245 + $0x8] sm:$0xff]
        %v295 = vld [vmem:[%s245 + $0x10] sm:$0xff]
        %v296 = vld [vmem:[%s245 + $0x18] sm:$0xff]
        %v297 = vld [vmem:[%s245 + $0x20] sm:$0xff]
        %v298 = vld [vmem:[%s245 + $0x28] sm:$0xff]
        %v299 = vld [vmem:[%s245 + $0x30] sm:$0xff]
        %v300 = vld [vmem:[%s245 + $0x38] sm:$0xff]
        %309 = vrot.lane.b32.xlu0 %v285, 96
        %v310 = vpop.permute.xlu0 %309
        %311 = vrot.lane.b32.xlu0 %v286, 96
        %v312 = vpop.permute.xlu0 %311
        %313 = vrot.lane.b32.xlu0 %v287, 96
        %v314 = vpop.permute.xlu0 %313
        %315 = vrot.lane.b32.xlu0 %v288, 96
        %v316 = vpop.permute.xlu0 %315
        %317 = vrot.lane.b32.xlu0 %v289, 96
        %v318 = vpop.permute.xlu0 %317
        %319 = vrot.lane.b32.xlu0 %v290, 96
        %v320 = vpop.permute.xlu0 %319
        %321 = vrot.lane.b32.xlu0 %v291, 96
        %v322 = vpop.permute.xlu0 %321
        %323 = vrot.lane.b32.xlu0 %v292, 96
        %v324 = vpop.permute.xlu0 %323
        %333 = vrot.lane.b32.xlu0 %v285, 64
        %v334 = vpop.permute.xlu0 %333
        %335 = vrot.lane.b32.xlu0 %v286, 64
        %v336 = vpop.permute.xlu0 %335
        %337 = vrot.lane.b32.xlu0 %v287, 64
        %v338 = vpop.permute.xlu0 %337
        %339 = vrot.lane.b32.xlu0 %v288, 64
        %v340 = vpop.permute.xlu0 %339
        %341 = vrot.lane.b32.xlu0 %v289, 64
        %v342 = vpop.permute.xlu0 %341
        %343 = vrot.lane.b32.xlu0 %v290, 64
        %v344 = vpop.permute.xlu0 %343
        %345 = vrot.lane.b32.xlu0 %v291, 64
        %v346 = vpop.permute.xlu0 %345
        %347 = vrot.lane.b32.xlu0 %v292, 64
        %v348 = vpop.permute.xlu0 %347
        %357 = vrot.lane.b32.xlu0 %v285, 32
        %v358 = vpop.permute.xlu0 %357
        %359 = vrot.lane.b32.xlu0 %v286, 32
        %v360 = vpop.permute.xlu0 %359
        %361 = vrot.lane.b32.xlu0 %v287, 32
        %v362 = vpop.permute.xlu0 %361
        %363 = vrot.lane.b32.xlu0 %v288, 32
        %v364 = vpop.permute.xlu0 %363
        %365 = vrot.lane.b32.xlu0 %v289, 32
        %v366 = vpop.permute.xlu0 %365
        %367 = vrot.lane.b32.xlu0 %v290, 32
        %v368 = vpop.permute.xlu0 %367
        %369 = vrot.lane.b32.xlu0 %v291, 32
        %v370 = vpop.permute.xlu0 %369
        %371 = vrot.lane.b32.xlu0 %v292, 32
        %v372 = vpop.permute.xlu0 %371
        %v381 = vcombine.low %v285, %v334
        %v382 = vcombine.high %v285, %v334
        %v384 = vunpack.c.l.s4 1983009808
        %v385 = vunpack.c.0.s8 %v384
        %v386 = vlaneseq
        %v387 = vshrl.u32 %v386, 7
        %v388 = vsub.s32 %v385, %v387
        %v389 = vrot.slane %v381, %v388
        %v391 = vunpack.c.l.s4 1983009808
        %v392 = vunpack.c.0.s8 %v391
        %v393 = vlaneseq
        %v394 = vshrl.u32 %v393, 7
        %v395 = vsub.s32 %v392, %v394
        %v396 = vrot.slane %v382, %v395
        %v397 = vcombine.low %v310, %v358
        %v398 = vcombine.high %v310, %v358
        %v400 = vunpack.c.l.s4 1983009808
        %v401 = vunpack.c.0.s8 %v400
        %v402 = vlaneseq
        %v403 = vshrl.u32 %v402, 7
        %v404 = vsub.s32 %v401, %v403
        %v405 = vrot.slane %v397, %v404
        %v407 = vunpack.c.l.s4 1983009808
        %v408 = vunpack.c.0.s8 %v407
        %v409 = vlaneseq
        %v410 = vshrl.u32 %v409, 7
        %v411 = vsub.s32 %v408, %v410
        %v412 = vrot.slane %v398, %v411
        %v413 = vcombine.low %v389, %v405
        %v414 = vcombine.high %v389, %v405
        %v416 = vunpack.c.l.s4 1934713408
        %v417 = vunpack.c.0.s8 %v416
        %v418 = vlaneseq
        %v419 = vshrl.u32 %v418, 7
        %v420 = vsub.s32 %v417, %v419
        %v421 = vrot.slane %v413, %v420
        %v423 = vunpack.c.l.s4 1934713408
        %v424 = vunpack.c.0.s8 %v423
        %v425 = vlaneseq
        %v426 = vshrl.u32 %v425, 7
        %v427 = vsub.s32 %v424, %v426
        %v428 = vrot.slane %v414, %v427
        %v429 = vcombine.low %v396, %v412
        %v430 = vcombine.high %v396, %v412
        %v432 = vunpack.c.l.s4 1934713408
        %v433 = vunpack.c.0.s8 %v432
        %v434 = vlaneseq
        %v435 = vshrl.u32 %v434, 7
        %v436 = vsub.s32 %v433, %v435
        %v437 = vrot.slane %v429, %v436
        %v439 = vunpack.c.l.s4 1934713408
        %v440 = vunpack.c.0.s8 %v439
        %v441 = vlaneseq
        %v442 = vshrl.u32 %v441, 7
        %v443 = vsub.s32 %v440, %v442
        %v444 = vrot.slane %v430, %v443
        %v445 = vcombine.high %v421, 0.0
        %v446 = vcombine.high %v428, 0.0
        %v447 = vcombine.high %v437, 0.0
        %v448 = vcombine.high %v444, 0.0
        %v449 = vcombine.low %v286, %v336
        %v450 = vcombine.high %v286, %v336
        %v452 = vunpack.c.l.s4 1983009808
        %v453 = vunpack.c.0.s8 %v452
        %v454 = vlaneseq
        %v455 = vshrl.u32 %v454, 7
        %v456 = vsub.s32 %v453, %v455
        %v457 = vrot.slane %v449, %v456
        %v459 = vunpack.c.l.s4 1983009808
        %v460 = vunpack.c.0.s8 %v459
        %v461 = vlaneseq
        %v462 = vshrl.u32 %v461, 7
        %v463 = vsub.s32 %v460, %v462
        %v464 = vrot.slane %v450, %v463
        %v465 = vcombine.low %v312, %v360
        %v466 = vcombine.high %v312, %v360
        %v468 = vunpack.c.l.s4 1983009808
        %v469 = vunpack.c.0.s8 %v468
        %v470 = vlaneseq
        %v471 = vshrl.u32 %v470, 7
        %v472 = vsub.s32 %v469, %v471
        %v473 = vrot.slane %v465, %v472
        %v475 = vunpack.c.l.s4 1983009808
        %v476 = vunpack.c.0.s8 %v475
        %v477 = vlaneseq
        %v478 = vshrl.u32 %v477, 7
        %v479 = vsub.s32 %v476, %v478
        %v480 = vrot.slane %v466, %v479
        %v481 = vcombine.low %v457, %v473
        %v482 = vcombine.high %v457, %v473
        %v484 = vunpack.c.l.s4 1934713408
        %v485 = vunpack.c.0.s8 %v484
        %v486 = vlaneseq
        %v487 = vshrl.u32 %v486, 7
        %v488 = vsub.s32 %v485, %v487
        %v489 = vrot.slane %v481, %v488
        %v491 = vunpack.c.l.s4 1934713408
        %v492 = vunpack.c.0.s8 %v491
        %v493 = vlaneseq
        %v494 = vshrl.u32 %v493, 7
        %v495 = vsub.s32 %v492, %v494
        %v496 = vrot.slane %v482, %v495
        %v497 = vcombine.low %v464, %v480
        %v498 = vcombine.high %v464, %v480
        %v500 = vunpack.c.l.s4 1934713408
        %v501 = vunpack.c.0.s8 %v500
        %v502 = vlaneseq
        %v503 = vshrl.u32 %v502, 7
        %v504 = vsub.s32 %v501, %v503
        %v505 = vrot.slane %v497, %v504
        %v507 = vunpack.c.l.s4 1934713408
        %v508 = vunpack.c.0.s8 %v507
        %v509 = vlaneseq
        %v510 = vshrl.u32 %v509, 7
        %v511 = vsub.s32 %v508, %v510
        %v512 = vrot.slane %v498, %v511
        %v513 = vcombine.high %v489, 0.0
        %v514 = vcombine.high %v496, 0.0
        %v515 = vcombine.high %v505, 0.0
        %v516 = vcombine.high %v512, 0.0
        %v517 = vcombine.low %v287, %v338
        %v518 = vcombine.high %v287, %v338
        %v520 = vunpack.c.l.s4 1983009808
        %v521 = vunpack.c.0.s8 %v520
        %v522 = vlaneseq
        %v523 = vshrl.u32 %v522, 7
        %v524 = vsub.s32 %v521, %v523
        %v525 = vrot.slane %v517, %v524
        %v527 = vunpack.c.l.s4 1983009808
        %v528 = vunpack.c.0.s8 %v527
        %v529 = vlaneseq
        %v530 = vshrl.u32 %v529, 7
        %v531 = vsub.s32 %v528, %v530
        %v532 = vrot.slane %v518, %v531
        %v533 = vcombine.low %v314, %v362
        %v534 = vcombine.high %v314, %v362
        %v536 = vunpack.c.l.s4 1983009808
        %v537 = vunpack.c.0.s8 %v536
        %v538 = vlaneseq
        %v539 = vshrl.u32 %v538, 7
        %v540 = vsub.s32 %v537, %v539
        %v541 = vrot.slane %v533, %v540
        %v543 = vunpack.c.l.s4 1983009808
        %v544 = vunpack.c.0.s8 %v543
        %v545 = vlaneseq
        %v546 = vshrl.u32 %v545, 7
        %v547 = vsub.s32 %v544, %v546
        %v548 = vrot.slane %v534, %v547
        %v549 = vcombine.low %v525, %v541
        %v550 = vcombine.high %v525, %v541
        %v552 = vunpack.c.l.s4 1934713408
        %v553 = vunpack.c.0.s8 %v552
        %v554 = vlaneseq
        %v555 = vshrl.u32 %v554, 7
        %v556 = vsub.s32 %v553, %v555
        %v557 = vrot.slane %v549, %v556
        %v559 = vunpack.c.l.s4 1934713408
        %v560 = vunpack.c.0.s8 %v559
        %v561 = vlaneseq
        %v562 = vshrl.u32 %v561, 7
        %v563 = vsub.s32 %v560, %v562
        %v564 = vrot.slane %v550, %v563
        %v565 = vcombine.low %v532, %v548
        %v566 = vcombine.high %v532, %v548
        %v568 = vunpack.c.l.s4 1934713408
        %v569 = vunpack.c.0.s8 %v568
        %v570 = vlaneseq
        %v571 = vshrl.u32 %v570, 7
        %v572 = vsub.s32 %v569, %v571
        %v573 = vrot.slane %v565, %v572
        %v575 = vunpack.c.l.s4 1934713408
        %v576 = vunpack.c.0.s8 %v575
        %v577 = vlaneseq
        %v578 = vshrl.u32 %v577, 7
        %v579 = vsub.s32 %v576, %v578
        %v580 = vrot.slane %v566, %v579
        %v581 = vcombine.high %v557, 0.0
        %v582 = vcombine.high %v564, 0.0
        %v583 = vcombine.high %v573, 0.0
        %v584 = vcombine.high %v580, 0.0
        %v585 = vcombine.low %v288, %v340
        %v586 = vcombine.high %v288, %v340
        %v588 = vunpack.c.l.s4 1983009808
        %v589 = vunpack.c.0.s8 %v588
        %v590 = vlaneseq
        %v591 = vshrl.u32 %v590, 7
        %v592 = vsub.s32 %v589, %v591
        %v593 = vrot.slane %v585, %v592
        %v595 = vunpack.c.l.s4 1983009808
        %v596 = vunpack.c.0.s8 %v595
        %v597 = vlaneseq
        %v598 = vshrl.u32 %v597, 7
        %v599 = vsub.s32 %v596, %v598
        %v600 = vrot.slane %v586, %v599
        %v601 = vcombine.low %v316, %v364
        %v602 = vcombine.high %v316, %v364
        %v604 = vunpack.c.l.s4 1983009808
        %v605 = vunpack.c.0.s8 %v604
        %v606 = vlaneseq
        %v607 = vshrl.u32 %v606, 7
        %v608 = vsub.s32 %v605, %v607
        %v609 = vrot.slane %v601, %v608
        %v611 = vunpack.c.l.s4 1983009808
        %v612 = vunpack.c.0.s8 %v611
        %v613 = vlaneseq
        %v614 = vshrl.u32 %v613, 7
        %v615 = vsub.s32 %v612, %v614
        %v616 = vrot.slane %v602, %v615
        %v617 = vcombine.low %v593, %v609
        %v618 = vcombine.high %v593, %v609
        %v620 = vunpack.c.l.s4 1934713408
        %v621 = vunpack.c.0.s8 %v620
        %v622 = vlaneseq
        %v623 = vshrl.u32 %v622, 7
        %v624 = vsub.s32 %v621, %v623
        %v625 = vrot.slane %v617, %v624
        %v627 = vunpack.c.l.s4 1934713408
        %v628 = vunpack.c.0.s8 %v627
        %v629 = vlaneseq
        %v630 = vshrl.u32 %v629, 7
        %v631 = vsub.s32 %v628, %v630
        %v632 = vrot.slane %v618, %v631
        %v633 = vcombine.low %v600, %v616
        %v634 = vcombine.high %v600, %v616
        %v636 = vunpack.c.l.s4 1934713408
        %v637 = vunpack.c.0.s8 %v636
        %v638 = vlaneseq
        %v639 = vshrl.u32 %v638, 7
        %v640 = vsub.s32 %v637, %v639
        %v641 = vrot.slane %v633, %v640
        %v643 = vunpack.c.l.s4 1934713408
        %v644 = vunpack.c.0.s8 %v643
        %v645 = vlaneseq
        %v646 = vshrl.u32 %v645, 7
        %v647 = vsub.s32 %v644, %v646
        %v648 = vrot.slane %v634, %v647
        %v649 = vcombine.high %v625, 0.0
        %v650 = vcombine.high %v632, 0.0
        %v651 = vcombine.high %v641, 0.0
        %v652 = vcombine.high %v648, 0.0
        %v653 = vcombine.low %v289, %v342
        %v654 = vcombine.high %v289, %v342
        %v656 = vunpack.c.l.s4 1983009808
        %v657 = vunpack.c.0.s8 %v656
        %v658 = vlaneseq
        %v659 = vshrl.u32 %v658, 7
        %v660 = vsub.s32 %v657, %v659
        %v661 = vrot.slane %v653, %v660
        %v663 = vunpack.c.l.s4 1983009808
        %v664 = vunpack.c.0.s8 %v663
        %v665 = vlaneseq
        %v666 = vshrl.u32 %v665, 7
        %v667 = vsub.s32 %v664, %v666
        %v668 = vrot.slane %v654, %v667
        %v669 = vcombine.low %v318, %v366
        %v670 = vcombine.high %v318, %v366
        %v672 = vunpack.c.l.s4 1983009808
        %v673 = vunpack.c.0.s8 %v672
        %v674 = vlaneseq
        %v675 = vshrl.u32 %v674, 7
        %v676 = vsub.s32 %v673, %v675
        %v677 = vrot.slane %v669, %v676
        %v679 = vunpack.c.l.s4 1983009808
        %v680 = vunpack.c.0.s8 %v679
        %v681 = vlaneseq
        %v682 = vshrl.u32 %v681, 7
        %v683 = vsub.s32 %v680, %v682
        %v684 = vrot.slane %v670, %v683
        %v685 = vcombine.low %v661, %v677
        %v686 = vcombine.high %v661, %v677
        %v688 = vunpack.c.l.s4 1934713408
        %v689 = vunpack.c.0.s8 %v688
        %v690 = vlaneseq
        %v691 = vshrl.u32 %v690, 7
        %v692 = vsub.s32 %v689, %v691
        %v693 = vrot.slane %v685, %v692
        %v695 = vunpack.c.l.s4 1934713408
        %v696 = vunpack.c.0.s8 %v695
        %v697 = vlaneseq
        %v698 = vshrl.u32 %v697, 7
        %v699 = vsub.s32 %v696, %v698
        %v700 = vrot.slane %v686, %v699
        %v701 = vcombine.low %v668, %v684
        %v702 = vcombine.high %v668, %v684
        %v704 = vunpack.c.l.s4 1934713408
        %v705 = vunpack.c.0.s8 %v704
        %v706 = vlaneseq
        %v707 = vshrl.u32 %v706, 7
        %v708 = vsub.s32 %v705, %v707
        %v709 = vrot.slane %v701, %v708
        %v711 = vunpack.c.l.s4 1934713408
        %v712 = vunpack.c.0.s8 %v711
        %v713 = vlaneseq
        %v714 = vshrl.u32 %v713, 7
        %v715 = vsub.s32 %v712, %v714
        %v716 = vrot.slane %v702, %v715
        %v717 = vcombine.high %v693, 0.0
        %v718 = vcombine.high %v700, 0.0
        %v719 = vcombine.high %v709, 0.0
        %v720 = vcombine.high %v716, 0.0
        %v721 = vcombine.low %v290, %v344
        %v722 = vcombine.high %v290, %v344
        %v724 = vunpack.c.l.s4 1983009808
        %v725 = vunpack.c.0.s8 %v724
        %v726 = vlaneseq
        %v727 = vshrl.u32 %v726, 7
        %v728 = vsub.s32 %v725, %v727
        %v729 = vrot.slane %v721, %v728
        %v731 = vunpack.c.l.s4 1983009808
        %v732 = vunpack.c.0.s8 %v731
        %v733 = vlaneseq
        %v734 = vshrl.u32 %v733, 7
        %v735 = vsub.s32 %v732, %v734
        %v736 = vrot.slane %v722, %v735
        %v737 = vcombine.low %v320, %v368
        %v738 = vcombine.high %v320, %v368
        %v740 = vunpack.c.l.s4 1983009808
        %v741 = vunpack.c.0.s8 %v740
        %v742 = vlaneseq
        %v743 = vshrl.u32 %v742, 7
        %v744 = vsub.s32 %v741, %v743
        %v745 = vrot.slane %v737, %v744
        %v747 = vunpack.c.l.s4 1983009808
        %v748 = vunpack.c.0.s8 %v747
        %v749 = vlaneseq
        %v750 = vshrl.u32 %v749, 7
        %v751 = vsub.s32 %v748, %v750
        %v752 = vrot.slane %v738, %v751
        %v753 = vcombine.low %v729, %v745
        %v754 = vcombine.high %v729, %v745
        %v756 = vunpack.c.l.s4 1934713408
        %v757 = vunpack.c.0.s8 %v756
        %v758 = vlaneseq
        %v759 = vshrl.u32 %v758, 7
        %v760 = vsub.s32 %v757, %v759
        %v761 = vrot.slane %v753, %v760
        %v763 = vunpack.c.l.s4 1934713408
        %v764 = vunpack.c.0.s8 %v763
        %v765 = vlaneseq
        %v766 = vshrl.u32 %v765, 7
        %v767 = vsub.s32 %v764, %v766
        %v768 = vrot.slane %v754, %v767
        %v769 = vcombine.low %v736, %v752
        %v770 = vcombine.high %v736, %v752
        %v772 = vunpack.c.l.s4 1934713408
        %v773 = vunpack.c.0.s8 %v772
        %v774 = vlaneseq
        %v775 = vshrl.u32 %v774, 7
        %v776 = vsub.s32 %v773, %v775
        %v777 = vrot.slane %v769, %v776
        %v779 = vunpack.c.l.s4 1934713408
        %v780 = vunpack.c.0.s8 %v779
        %v781 = vlaneseq
        %v782 = vshrl.u32 %v781, 7
        %v783 = vsub.s32 %v780, %v782
        %v784 = vrot.slane %v770, %v783
        %v785 = vcombine.high %v761, 0.0
        %v786 = vcombine.high %v768, 0.0
        %v787 = vcombine.high %v777, 0.0
        %v788 = vcombine.high %v784, 0.0
        %v789 = vcombine.low %v291, %v346
        %v790 = vcombine.high %v291, %v346
        %v792 = vunpack.c.l.s4 1983009808
        %v793 = vunpack.c.0.s8 %v792
        %v794 = vlaneseq
        %v795 = vshrl.u32 %v794, 7
        %v796 = vsub.s32 %v793, %v795
        %v797 = vrot.slane %v789, %v796
        %v799 = vunpack.c.l.s4 1983009808
        %v800 = vunpack.c.0.s8 %v799
        %v801 = vlaneseq
        %v802 = vshrl.u32 %v801, 7
        %v803 = vsub.s32 %v800, %v802
        %v804 = vrot.slane %v790, %v803
        %v805 = vcombine.low %v322, %v370
        %v806 = vcombine.high %v322, %v370
        %v808 = vunpack.c.l.s4 1983009808
        %v809 = vunpack.c.0.s8 %v808
        %v810 = vlaneseq
        %v811 = vshrl.u32 %v810, 7
        %v812 = vsub.s32 %v809, %v811
        %v813 = vrot.slane %v805, %v812
        %v815 = vunpack.c.l.s4 1983009808
        %v816 = vunpack.c.0.s8 %v815
        %v817 = vlaneseq
        %v818 = vshrl.u32 %v817, 7
        %v819 = vsub.s32 %v816, %v818
        %v820 = vrot.slane %v806, %v819
        %v821 = vcombine.low %v797, %v813
        %v822 = vcombine.high %v797, %v813
        %v824 = vunpack.c.l.s4 1934713408
        %v825 = vunpack.c.0.s8 %v824
        %v826 = vlaneseq
        %v827 = vshrl.u32 %v826, 7
        %v828 = vsub.s32 %v825, %v827
        %v829 = vrot.slane %v821, %v828
        %v831 = vunpack.c.l.s4 1934713408
        %v832 = vunpack.c.0.s8 %v831
        %v833 = vlaneseq
        %v834 = vshrl.u32 %v833, 7
        %v835 = vsub.s32 %v832, %v834
        %v836 = vrot.slane %v822, %v835
        %v837 = vcombine.low %v804, %v820
        %v838 = vcombine.high %v804, %v820
        %v840 = vunpack.c.l.s4 1934713408
        %v841 = vunpack.c.0.s8 %v840
        %v842 = vlaneseq
        %v843 = vshrl.u32 %v842, 7
        %v844 = vsub.s32 %v841, %v843
        %v845 = vrot.slane %v837, %v844
        %v847 = vunpack.c.l.s4 1934713408
        %v848 = vunpack.c.0.s8 %v847
        %v849 = vlaneseq
        %v850 = vshrl.u32 %v849, 7
        %v851 = vsub.s32 %v848, %v850
        %v852 = vrot.slane %v838, %v851
        %v853 = vcombine.high %v829, 0.0
        %v854 = vcombine.high %v836, 0.0
        %v855 = vcombine.high %v845, 0.0
        %v856 = vcombine.high %v852, 0.0
        %v857 = vcombine.low %v292, %v348
        %v858 = vcombine.high %v292, %v348
        %v860 = vunpack.c.l.s4 1983009808
        %v861 = vunpack.c.0.s8 %v860
        %v862 = vlaneseq
        %v863 = vshrl.u32 %v862, 7
        %v864 = vsub.s32 %v861, %v863
        %v865 = vrot.slane %v857, %v864
        %v867 = vunpack.c.l.s4 1983009808
        %v868 = vunpack.c.0.s8 %v867
        %v869 = vlaneseq
        %v870 = vshrl.u32 %v869, 7
        %v871 = vsub.s32 %v868, %v870
        %v872 = vrot.slane %v858, %v871
        %v873 = vcombine.low %v324, %v372
        %v874 = vcombine.high %v324, %v372
        %v876 = vunpack.c.l.s4 1983009808
        %v877 = vunpack.c.0.s8 %v876
        %v878 = vlaneseq
        %v879 = vshrl.u32 %v878, 7
        %v880 = vsub.s32 %v877, %v879
        %v881 = vrot.slane %v873, %v880
        %v883 = vunpack.c.l.s4 1983009808
        %v884 = vunpack.c.0.s8 %v883
        %v885 = vlaneseq
        %v886 = vshrl.u32 %v885, 7
        %v887 = vsub.s32 %v884, %v886
        %v888 = vrot.slane %v874, %v887
        %v889 = vcombine.low %v865, %v881
        %v890 = vcombine.high %v865, %v881
        %v892 = vunpack.c.l.s4 1934713408
        %v893 = vunpack.c.0.s8 %v892
        %v894 = vlaneseq
        %v895 = vshrl.u32 %v894, 7
        %v896 = vsub.s32 %v893, %v895
        %v897 = vrot.slane %v889, %v896
        %v899 = vunpack.c.l.s4 1934713408
        %v900 = vunpack.c.0.s8 %v899
        %v901 = vlaneseq
        %v902 = vshrl.u32 %v901, 7
        %v903 = vsub.s32 %v900, %v902
        %v904 = vrot.slane %v890, %v903
        %v905 = vcombine.low %v872, %v888
        %v906 = vcombine.high %v872, %v888
        %v908 = vunpack.c.l.s4 1934713408
        %v909 = vunpack.c.0.s8 %v908
        %v910 = vlaneseq
        %v911 = vshrl.u32 %v910, 7
        %v912 = vsub.s32 %v909, %v911
        %v913 = vrot.slane %v905, %v912
        %v915 = vunpack.c.l.s4 1934713408
        %v916 = vunpack.c.0.s8 %v915
        %v917 = vlaneseq
        %v918 = vshrl.u32 %v917, 7
        %v919 = vsub.s32 %v916, %v918
        %v920 = vrot.slane %v906, %v919
        %v921 = vcombine.high %v897, 0.0
        %v922 = vcombine.high %v904, 0.0
        %v923 = vcombine.high %v913, 0.0
        %v924 = vcombine.high %v920, 0.0
        %vm925 = vcmask 257024
        %v926 = vsel %vm925, %v421, -inf
        %927 = vmax.xlane.f32.xlu0 %v926
        %v928 = vpop.xlane.xlu0 %927
        %v929 = vsel %vm925, %v445, -inf
        %930 = vmax.xlane.f32.xlu0 %v929
        %v931 = vpop.xlane.xlu0 %930
        %v932 = vsel %vm925, %v428, -inf
        %933 = vmax.xlane.f32.xlu0 %v932
        %v934 = vpop.xlane.xlu0 %933
        %v935 = vsel %vm925, %v446, -inf
        %936 = vmax.xlane.f32.xlu0 %v935
        %v937 = vpop.xlane.xlu0 %936
        %v938 = vsel %vm925, %v437, -inf
        %939 = vmax.xlane.f32.xlu0 %v938
        %v940 = vpop.xlane.xlu0 %939
        %v941 = vsel %vm925, %v447, -inf
        %942 = vmax.xlane.f32.xlu0 %v941
        %v943 = vpop.xlane.xlu0 %942
        %v944 = vsel %vm925, %v444, -inf
        %945 = vmax.xlane.f32.xlu0 %v944
        %v946 = vpop.xlane.xlu0 %945
        %v947 = vsel %vm925, %v448, -inf
        %948 = vmax.xlane.f32.xlu0 %v947
        %v949 = vpop.xlane.xlu0 %948
        %v950 = vsel %vm925, %v489, -inf
        %951 = vmax.xlane.f32.xlu0 %v950
        %v952 = vpop.xlane.xlu0 %951
        %v953 = vsel %vm925, %v513, -inf
        %954 = vmax.xlane.f32.xlu0 %v953
        %v955 = vpop.xlane.xlu0 %954
        %v956 = vsel %vm925, %v496, -inf
        %957 = vmax.xlane.f32.xlu0 %v956
        %v958 = vpop.xlane.xlu0 %957
        %v959 = vsel %vm925, %v514, -inf
        %960 = vmax.xlane.f32.xlu0 %v959
        %v961 = vpop.xlane.xlu0 %960
        %v962 = vsel %vm925, %v505, -inf
        %963 = vmax.xlane.f32.xlu0 %v962
        %v964 = vpop.xlane.xlu0 %963
        %v965 = vsel %vm925, %v515, -inf
        %966 = vmax.xlane.f32.xlu0 %v965
        %v967 = vpop.xlane.xlu0 %966
        %v968 = vsel %vm925, %v512, -inf
        %969 = vmax.xlane.f32.xlu0 %v968
        %v970 = vpop.xlane.xlu0 %969
        %v971 = vsel %vm925, %v516, -inf
        %972 = vmax.xlane.f32.xlu0 %v971
        %v973 = vpop.xlane.xlu0 %972
        %v974 = vsel %vm925, %v557, -inf
        %975 = vmax.xlane.f32.xlu0 %v974
        %v976 = vpop.xlane.xlu0 %975
        %v977 = vsel %vm925, %v581, -inf
        %978 = vmax.xlane.f32.xlu0 %v977
        %v979 = vpop.xlane.xlu0 %978
        %v980 = vsel %vm925, %v564, -inf
        %981 = vmax.xlane.f32.xlu0 %v980
        %v982 = vpop.xlane.xlu0 %981
        %v983 = vsel %vm925, %v582, -inf
        %984 = vmax.xlane.f32.xlu0 %v983
        %v985 = vpop.xlane.xlu0 %984
        %v986 = vsel %vm925, %v573, -inf
        %987 = vmax.xlane.f32.xlu0 %v986
        %v988 = vpop.xlane.xlu0 %987
        %v989 = vsel %vm925, %v583, -inf
        %990 = vmax.xlane.f32.xlu0 %v989
        %v991 = vpop.xlane.xlu0 %990
        %v992 = vsel %vm925, %v580, -inf
        %993 = vmax.xlane.f32.xlu0 %v992
        %v994 = vpop.xlane.xlu0 %993
        %v995 = vsel %vm925, %v584, -inf
        %996 = vmax.xlane.f32.xlu0 %v995
        %v997 = vpop.xlane.xlu0 %996
        %v998 = vsel %vm925, %v625, -inf
        %999 = vmax.xlane.f32.xlu0 %v998
        %v1000 = vpop.xlane.xlu0 %999
        %v1001 = vsel %vm925, %v649, -inf
        %1002 = vmax.xlane.f32.xlu0 %v1001
        %v1003 = vpop.xlane.xlu0 %1002
        %v1004 = vsel %vm925, %v632, -inf
        %1005 = vmax.xlane.f32.xlu0 %v1004
        %v1006 = vpop.xlane.xlu0 %1005
        %v1007 = vsel %vm925, %v650, -inf
        %1008 = vmax.xlane.f32.xlu0 %v1007
        %v1009 = vpop.xlane.xlu0 %1008
        %v1010 = vsel %vm925, %v641, -inf
        %1011 = vmax.xlane.f32.xlu0 %v1010
        %v1012 = vpop.xlane.xlu0 %1011
        %v1013 = vsel %vm925, %v651, -inf
        %1014 = vmax.xlane.f32.xlu0 %v1013
        %v1015 = vpop.xlane.xlu0 %1014
        %v1016 = vsel %vm925, %v648, -inf
        %1017 = vmax.xlane.f32.xlu0 %v1016
        %v1018 = vpop.xlane.xlu0 %1017
        %v1019 = vsel %vm925, %v652, -inf
        %1020 = vmax.xlane.f32.xlu0 %v1019
        %v1021 = vpop.xlane.xlu0 %1020
        %v1022 = vsel %vm925, %v693, -inf
        %1023 = vmax.xlane.f32.xlu0 %v1022
        %v1024 = vpop.xlane.xlu0 %1023
        %v1025 = vsel %vm925, %v717, -inf
        %1026 = vmax.xlane.f32.xlu0 %v1025
        %v1027 = vpop.xlane.xlu0 %1026
        %v1028 = vsel %vm925, %v700, -inf
        %1029 = vmax.xlane.f32.xlu0 %v1028
        %v1030 = vpop.xlane.xlu0 %1029
        %v1031 = vsel %vm925, %v718, -inf
        %1032 = vmax.xlane.f32.xlu0 %v1031
        %v1033 = vpop.xlane.xlu0 %1032
        %v1034 = vsel %vm925, %v709, -inf
        %1035 = vmax.xlane.f32.xlu0 %v1034
        %v1036 = vpop.xlane.xlu0 %1035
        %v1037 = vsel %vm925, %v719, -inf
        %1038 = vmax.xlane.f32.xlu0 %v1037
        %v1039 = vpop.xlane.xlu0 %1038
        %v1040 = vsel %vm925, %v716, -inf
        %1041 = vmax.xlane.f32.xlu0 %v1040
        %v1042 = vpop.xlane.xlu0 %1041
        %v1043 = vsel %vm925, %v720, -inf
        %1044 = vmax.xlane.f32.xlu0 %v1043
        %v1045 = vpop.xlane.xlu0 %1044
        %v1046 = vsel %vm925, %v761, -inf
        %1047 = vmax.xlane.f32.xlu0 %v1046
        %v1048 = vpop.xlane.xlu0 %1047
        %v1049 = vsel %vm925, %v785, -inf
        %1050 = vmax.xlane.f32.xlu0 %v1049
        %v1051 = vpop.xlane.xlu0 %1050
        %v1052 = vsel %vm925, %v768, -inf
        %1053 = vmax.xlane.f32.xlu0 %v1052
        %v1054 = vpop.xlane.xlu0 %1053
        %v1055 = vsel %vm925, %v786, -inf
        %1056 = vmax.xlane.f32.xlu0 %v1055
        %v1057 = vpop.xlane.xlu0 %1056
        %v1058 = vsel %vm925, %v777, -inf
        %1059 = vmax.xlane.f32.xlu0 %v1058
        %v1060 = vpop.xlane.xlu0 %1059
        %v1061 = vsel %vm925, %v787, -inf
        %1062 = vmax.xlane.f32.xlu0 %v1061
        %v1063 = vpop.xlane.xlu0 %1062
        %v1064 = vsel %vm925, %v784, -inf
        %1065 = vmax.xlane.f32.xlu0 %v1064
        %v1066 = vpop.xlane.xlu0 %1065
        %v1067 = vsel %vm925, %v788, -inf
        %1068 = vmax.xlane.f32.xlu0 %v1067
        %v1069 = vpop.xlane.xlu0 %1068
        %v1070 = vsel %vm925, %v829, -inf
        %1071 = vmax.xlane.f32.xlu0 %v1070
        %v1072 = vpop.xlane.xlu0 %1071
        %v1073 = vsel %vm925, %v853, -inf
        %1074 = vmax.xlane.f32.xlu0 %v1073
        %v1075 = vpop.xlane.xlu0 %1074
        %v1076 = vsel %vm925, %v836, -inf
        %1077 = vmax.xlane.f32.xlu0 %v1076
        %v1078 = vpop.xlane.xlu0 %1077
        %v1079 = vsel %vm925, %v854, -inf
        %1080 = vmax.xlane.f32.xlu0 %v1079
        %v1081 = vpop.xlane.xlu0 %1080
        %v1082 = vsel %vm925, %v845, -inf
        %1083 = vmax.xlane.f32.xlu0 %v1082
        %v1084 = vpop.xlane.xlu0 %1083
        %v1085 = vsel %vm925, %v855, -inf
        %1086 = vmax.xlane.f32.xlu0 %v1085
        %v1087 = vpop.xlane.xlu0 %1086
        %v1088 = vsel %vm925, %v852, -inf
        %1089 = vmax.xlane.f32.xlu0 %v1088
        %v1090 = vpop.xlane.xlu0 %1089
        %v1091 = vsel %vm925, %v856, -inf
        %1092 = vmax.xlane.f32.xlu0 %v1091
        %v1093 = vpop.xlane.xlu0 %1092
        %v1094 = vsel %vm925, %v897, -inf
        %1095 = vmax.xlane.f32.xlu0 %v1094
        %v1096 = vpop.xlane.xlu0 %1095
        %v1097 = vsel %vm925, %v921, -inf
        %1098 = vmax.xlane.f32.xlu0 %v1097
        %v1099 = vpop.xlane.xlu0 %1098
        %v1100 = vsel %vm925, %v904, -inf
        %1101 = vmax.xlane.f32.xlu0 %v1100
        %v1102 = vpop.xlane.xlu0 %1101
        %v1103 = vsel %vm925, %v922, -inf
        %1104 = vmax.xlane.f32.xlu0 %v1103
        %v1105 = vpop.xlane.xlu0 %1104
        %v1106 = vsel %vm925, %v913, -inf
        %1107 = vmax.xlane.f32.xlu0 %v1106
        %v1108 = vpop.xlane.xlu0 %1107
        %v1109 = vsel %vm925, %v923, -inf
        %1110 = vmax.xlane.f32.xlu0 %v1109
        %v1111 = vpop.xlane.xlu0 %1110
        %v1112 = vsel %vm925, %v920, -inf
        %1113 = vmax.xlane.f32.xlu0 %v1112
        %v1114 = vpop.xlane.xlu0 %1113
        %v1115 = vsel %vm925, %v924, -inf
        %1116 = vmax.xlane.f32.xlu0 %v1115
        %v1117 = vpop.xlane.xlu0 %1116
        %1126 = vrot.lane.b32.xlu0 %v293, 96
        %v1127 = vpop.permute.xlu0 %1126
        %1128 = vrot.lane.b32.xlu0 %v294, 96
        %v1129 = vpop.permute.xlu0 %1128
        %1130 = vrot.lane.b32.xlu0 %v295, 96
        %v1131 = vpop.permute.xlu0 %1130
        %1132 = vrot.lane.b32.xlu0 %v296, 96
        %v1133 = vpop.permute.xlu0 %1132
        %1134 = vrot.lane.b32.xlu0 %v297, 96
        %v1135 = vpop.permute.xlu0 %1134
        %1136 = vrot.lane.b32.xlu0 %v298, 96
        %v1137 = vpop.permute.xlu0 %1136
        %1138 = vrot.lane.b32.xlu0 %v299, 96
        %v1139 = vpop.permute.xlu0 %1138
        %1140 = vrot.lane.b32.xlu0 %v300, 96
        %v1141 = vpop.permute.xlu0 %1140
        %1150 = vrot.lane.b32.xlu0 %v293, 64
        %v1151 = vpop.permute.xlu0 %1150
        %1152 = vrot.lane.b32.xlu0 %v294, 64
        %v1153 = vpop.permute.xlu0 %1152
        %1154 = vrot.lane.b32.xlu0 %v295, 64
        %v1155 = vpop.permute.xlu0 %1154
        %1156 = vrot.lane.b32.xlu0 %v296, 64
        %v1157 = vpop.permute.xlu0 %1156
        %1158 = vrot.lane.b32.xlu0 %v297, 64
        %v1159 = vpop.permute.xlu0 %1158
        %1160 = vrot.lane.b32.xlu0 %v298, 64
        %v1161 = vpop.permute.xlu0 %1160
        %1162 = vrot.lane.b32.xlu0 %v299, 64
        %v1163 = vpop.permute.xlu0 %1162
        %1164 = vrot.lane.b32.xlu0 %v300, 64
        %v1165 = vpop.permute.xlu0 %1164
        %1174 = vrot.lane.b32.xlu0 %v293, 32
        %v1175 = vpop.permute.xlu0 %1174
        %1176 = vrot.lane.b32.xlu0 %v294, 32
        %v1177 = vpop.permute.xlu0 %1176
        %1178 = vrot.lane.b32.xlu0 %v295, 32
        %v1179 = vpop.permute.xlu0 %1178
        %1180 = vrot.lane.b32.xlu0 %v296, 32
        %v1181 = vpop.permute.xlu0 %1180
        %1182 = vrot.lane.b32.xlu0 %v297, 32
        %v1183 = vpop.permute.xlu0 %1182
        %1184 = vrot.lane.b32.xlu0 %v298, 32
        %v1185 = vpop.permute.xlu0 %1184
        %1186 = vrot.lane.b32.xlu0 %v299, 32
        %v1187 = vpop.permute.xlu0 %1186
        %1188 = vrot.lane.b32.xlu0 %v300, 32
        %v1189 = vpop.permute.xlu0 %1188
        %v1198 = vcombine.low %v293, %v1151
        %v1199 = vcombine.high %v293, %v1151
        %v1201 = vunpack.c.l.s4 1983009808
        %v1202 = vunpack.c.0.s8 %v1201
        %v1203 = vlaneseq
        %v1204 = vshrl.u32 %v1203, 7
        %v1205 = vsub.s32 %v1202, %v1204
        %v1206 = vrot.slane %v1198, %v1205
        %v1208 = vunpack.c.l.s4 1983009808
        %v1209 = vunpack.c.0.s8 %v1208
        %v1210 = vlaneseq
        %v1211 = vshrl.u32 %v1210, 7
        %v1212 = vsub.s32 %v1209, %v1211
        %v1213 = vrot.slane %v1199, %v1212
        %v1214 = vcombine.low %v1127, %v1175
        %v1215 = vcombine.high %v1127, %v1175
        %v1217 = vunpack.c.l.s4 1983009808
        %v1218 = vunpack.c.0.s8 %v1217
        %v1219 = vlaneseq
        %v1220 = vshrl.u32 %v1219, 7
        %v1221 = vsub.s32 %v1218, %v1220
        %v1222 = vrot.slane %v1214, %v1221
        %v1224 = vunpack.c.l.s4 1983009808
        %v1225 = vunpack.c.0.s8 %v1224
        %v1226 = vlaneseq
        %v1227 = vshrl.u32 %v1226, 7
        %v1228 = vsub.s32 %v1225, %v1227
        %v1229 = vrot.slane %v1215, %v1228
        %v1230 = vcombine.low %v1206, %v1222
        %v1231 = vcombine.high %v1206, %v1222
        %v1233 = vunpack.c.l.s4 1934713408
        %v1234 = vunpack.c.0.s8 %v1233
        %v1235 = vlaneseq
        %v1236 = vshrl.u32 %v1235, 7
        %v1237 = vsub.s32 %v1234, %v1236
        %v1238 = vrot.slane %v1230, %v1237
        %v1240 = vunpack.c.l.s4 1934713408
        %v1241 = vunpack.c.0.s8 %v1240
        %v1242 = vlaneseq
        %v1243 = vshrl.u32 %v1242, 7
        %v1244 = vsub.s32 %v1241, %v1243
        %v1245 = vrot.slane %v1231, %v1244
        %v1246 = vcombine.low %v1213, %v1229
        %v1247 = vcombine.high %v1213, %v1229
        %v1249 = vunpack.c.l.s4 1934713408
        %v1250 = vunpack.c.0.s8 %v1249
        %v1251 = vlaneseq
        %v1252 = vshrl.u32 %v1251, 7
        %v1253 = vsub.s32 %v1250, %v1252
        %v1254 = vrot.slane %v1246, %v1253
        %v1256 = vunpack.c.l.s4 1934713408
        %v1257 = vunpack.c.0.s8 %v1256
        %v1258 = vlaneseq
        %v1259 = vshrl.u32 %v1258, 7
        %v1260 = vsub.s32 %v1257, %v1259
        %v1261 = vrot.slane %v1247, %v1260
        %v1262 = vcombine.high %v1238, 0.0
        %v1263 = vcombine.high %v1245, 0.0
        %v1264 = vcombine.high %v1254, 0.0
        %v1265 = vcombine.high %v1261, 0.0
        %v1266 = vcombine.low %v294, %v1153
        %v1267 = vcombine.high %v294, %v1153
        %v1269 = vunpack.c.l.s4 1983009808
        %v1270 = vunpack.c.0.s8 %v1269
        %v1271 = vlaneseq
        %v1272 = vshrl.u32 %v1271, 7
        %v1273 = vsub.s32 %v1270, %v1272
        %v1274 = vrot.slane %v1266, %v1273
        %v1276 = vunpack.c.l.s4 1983009808
        %v1277 = vunpack.c.0.s8 %v1276
        %v1278 = vlaneseq
        %v1279 = vshrl.u32 %v1278, 7
        %v1280 = vsub.s32 %v1277, %v1279
        %v1281 = vrot.slane %v1267, %v1280
        %v1282 = vcombine.low %v1129, %v1177
        %v1283 = vcombine.high %v1129, %v1177
        %v1285 = vunpack.c.l.s4 1983009808
        %v1286 = vunpack.c.0.s8 %v1285
        %v1287 = vlaneseq
        %v1288 = vshrl.u32 %v1287, 7
        %v1289 = vsub.s32 %v1286, %v1288
        %v1290 = vrot.slane %v1282, %v1289
        %v1292 = vunpack.c.l.s4 1983009808
        %v1293 = vunpack.c.0.s8 %v1292
        %v1294 = vlaneseq
        %v1295 = vshrl.u32 %v1294, 7
        %v1296 = vsub.s32 %v1293, %v1295
        %v1297 = vrot.slane %v1283, %v1296
        %v1298 = vcombine.low %v1274, %v1290
        %v1299 = vcombine.high %v1274, %v1290
        %v1301 = vunpack.c.l.s4 1934713408
        %v1302 = vunpack.c.0.s8 %v1301
        %v1303 = vlaneseq
        %v1304 = vshrl.u32 %v1303, 7
        %v1305 = vsub.s32 %v1302, %v1304
        %v1306 = vrot.slane %v1298, %v1305
        %v1308 = vunpack.c.l.s4 1934713408
        %v1309 = vunpack.c.0.s8 %v1308
        %v1310 = vlaneseq
        %v1311 = vshrl.u32 %v1310, 7
        %v1312 = vsub.s32 %v1309, %v1311
        %v1313 = vrot.slane %v1299, %v1312
        %v1314 = vcombine.low %v1281, %v1297
        %v1315 = vcombine.high %v1281, %v1297
        %v1317 = vunpack.c.l.s4 1934713408
        %v1318 = vunpack.c.0.s8 %v1317
        %v1319 = vlaneseq
        %v1320 = vshrl.u32 %v1319, 7
        %v1321 = vsub.s32 %v1318, %v1320
        %v1322 = vrot.slane %v1314, %v1321
        %v1324 = vunpack.c.l.s4 1934713408
        %v1325 = vunpack.c.0.s8 %v1324
        %v1326 = vlaneseq
        %v1327 = vshrl.u32 %v1326, 7
        %v1328 = vsub.s32 %v1325, %v1327
        %v1329 = vrot.slane %v1315, %v1328
        %v1330 = vcombine.high %v1306, 0.0
        %v1331 = vcombine.high %v1313, 0.0
        %v1332 = vcombine.high %v1322, 0.0
        %v1333 = vcombine.high %v1329, 0.0
        %v1334 = vcombine.low %v295, %v1155
        %v1335 = vcombine.high %v295, %v1155
        %v1337 = vunpack.c.l.s4 1983009808
        %v1338 = vunpack.c.0.s8 %v1337
        %v1339 = vlaneseq
        %v1340 = vshrl.u32 %v1339, 7
        %v1341 = vsub.s32 %v1338, %v1340
        %v1342 = vrot.slane %v1334, %v1341
        %v1344 = vunpack.c.l.s4 1983009808
        %v1345 = vunpack.c.0.s8 %v1344
        %v1346 = vlaneseq
        %v1347 = vshrl.u32 %v1346, 7
        %v1348 = vsub.s32 %v1345, %v1347
        %v1349 = vrot.slane %v1335, %v1348
        %v1350 = vcombine.low %v1131, %v1179
        %v1351 = vcombine.high %v1131, %v1179
        %v1353 = vunpack.c.l.s4 1983009808
        %v1354 = vunpack.c.0.s8 %v1353
        %v1355 = vlaneseq
        %v1356 = vshrl.u32 %v1355, 7
        %v1357 = vsub.s32 %v1354, %v1356
        %v1358 = vrot.slane %v1350, %v1357
        %v1360 = vunpack.c.l.s4 1983009808
        %v1361 = vunpack.c.0.s8 %v1360
        %v1362 = vlaneseq
        %v1363 = vshrl.u32 %v1362, 7
        %v1364 = vsub.s32 %v1361, %v1363
        %v1365 = vrot.slane %v1351, %v1364
        %v1366 = vcombine.low %v1342, %v1358
        %v1367 = vcombine.high %v1342, %v1358
        %v1369 = vunpack.c.l.s4 1934713408
        %v1370 = vunpack.c.0.s8 %v1369
        %v1371 = vlaneseq
        %v1372 = vshrl.u32 %v1371, 7
        %v1373 = vsub.s32 %v1370, %v1372
        %v1374 = vrot.slane %v1366, %v1373
        %v1376 = vunpack.c.l.s4 1934713408
        %v1377 = vunpack.c.0.s8 %v1376
        %v1378 = vlaneseq
        %v1379 = vshrl.u32 %v1378, 7
        %v1380 = vsub.s32 %v1377, %v1379
        %v1381 = vrot.slane %v1367, %v1380
        %v1382 = vcombine.low %v1349, %v1365
        %v1383 = vcombine.high %v1349, %v1365
        %v1385 = vunpack.c.l.s4 1934713408
        %v1386 = vunpack.c.0.s8 %v1385
        %v1387 = vlaneseq
        %v1388 = vshrl.u32 %v1387, 7
        %v1389 = vsub.s32 %v1386, %v1388
        %v1390 = vrot.slane %v1382, %v1389
        %v1392 = vunpack.c.l.s4 1934713408
        %v1393 = vunpack.c.0.s8 %v1392
        %v1394 = vlaneseq
        %v1395 = vshrl.u32 %v1394, 7
        %v1396 = vsub.s32 %v1393, %v1395
        %v1397 = vrot.slane %v1383, %v1396
        %v1398 = vcombine.high %v1374, 0.0
        %v1399 = vcombine.high %v1381, 0.0
        %v1400 = vcombine.high %v1390, 0.0
        %v1401 = vcombine.high %v1397, 0.0
        %v1402 = vcombine.low %v296, %v1157
        %v1403 = vcombine.high %v296, %v1157
        %v1405 = vunpack.c.l.s4 1983009808
        %v1406 = vunpack.c.0.s8 %v1405
        %v1407 = vlaneseq
        %v1408 = vshrl.u32 %v1407, 7
        %v1409 = vsub.s32 %v1406, %v1408
        %v1410 = vrot.slane %v1402, %v1409
        %v1412 = vunpack.c.l.s4 1983009808
        %v1413 = vunpack.c.0.s8 %v1412
        %v1414 = vlaneseq
        %v1415 = vshrl.u32 %v1414, 7
        %v1416 = vsub.s32 %v1413, %v1415
        %v1417 = vrot.slane %v1403, %v1416
        %v1418 = vcombine.low %v1133, %v1181
        %v1419 = vcombine.high %v1133, %v1181
        %v1421 = vunpack.c.l.s4 1983009808
        %v1422 = vunpack.c.0.s8 %v1421
        %v1423 = vlaneseq
        %v1424 = vshrl.u32 %v1423, 7
        %v1425 = vsub.s32 %v1422, %v1424
        %v1426 = vrot.slane %v1418, %v1425
        %v1428 = vunpack.c.l.s4 1983009808
        %v1429 = vunpack.c.0.s8 %v1428
        %v1430 = vlaneseq
        %v1431 = vshrl.u32 %v1430, 7
        %v1432 = vsub.s32 %v1429, %v1431
        %v1433 = vrot.slane %v1419, %v1432
        %v1434 = vcombine.low %v1410, %v1426
        %v1435 = vcombine.high %v1410, %v1426
        %v1437 = vunpack.c.l.s4 1934713408
        %v1438 = vunpack.c.0.s8 %v1437
        %v1439 = vlaneseq
        %v1440 = vshrl.u32 %v1439, 7
        %v1441 = vsub.s32 %v1438, %v1440
        %v1442 = vrot.slane %v1434, %v1441
        %v1444 = vunpack.c.l.s4 1934713408
        %v1445 = vunpack.c.0.s8 %v1444
        %v1446 = vlaneseq
        %v1447 = vshrl.u32 %v1446, 7
        %v1448 = vsub.s32 %v1445, %v1447
        %v1449 = vrot.slane %v1435, %v1448
        %v1450 = vcombine.low %v1417, %v1433
        %v1451 = vcombine.high %v1417, %v1433
        %v1453 = vunpack.c.l.s4 1934713408
        %v1454 = vunpack.c.0.s8 %v1453
        %v1455 = vlaneseq
        %v1456 = vshrl.u32 %v1455, 7
        %v1457 = vsub.s32 %v1454, %v1456
        %v1458 = vrot.slane %v1450, %v1457
        %v1460 = vunpack.c.l.s4 1934713408
        %v1461 = vunpack.c.0.s8 %v1460
        %v1462 = vlaneseq
        %v1463 = vshrl.u32 %v1462, 7
        %v1464 = vsub.s32 %v1461, %v1463
        %v1465 = vrot.slane %v1451, %v1464
        %v1466 = vcombine.high %v1442, 0.0
        %v1467 = vcombine.high %v1449, 0.0
        %v1468 = vcombine.high %v1458, 0.0
        %v1469 = vcombine.high %v1465, 0.0
        %v1470 = vcombine.low %v297, %v1159
        %v1471 = vcombine.high %v297, %v1159
        %v1473 = vunpack.c.l.s4 1983009808
        %v1474 = vunpack.c.0.s8 %v1473
        %v1475 = vlaneseq
        %v1476 = vshrl.u32 %v1475, 7
        %v1477 = vsub.s32 %v1474, %v1476
        %v1478 = vrot.slane %v1470, %v1477
        %v1480 = vunpack.c.l.s4 1983009808
        %v1481 = vunpack.c.0.s8 %v1480
        %v1482 = vlaneseq
        %v1483 = vshrl.u32 %v1482, 7
        %v1484 = vsub.s32 %v1481, %v1483
        %v1485 = vrot.slane %v1471, %v1484
        %v1486 = vcombine.low %v1135, %v1183
        %v1487 = vcombine.high %v1135, %v1183
        %v1489 = vunpack.c.l.s4 1983009808
        %v1490 = vunpack.c.0.s8 %v1489
        %v1491 = vlaneseq
        %v1492 = vshrl.u32 %v1491, 7
        %v1493 = vsub.s32 %v1490, %v1492
        %v1494 = vrot.slane %v1486, %v1493
        %v1496 = vunpack.c.l.s4 1983009808
        %v1497 = vunpack.c.0.s8 %v1496
        %v1498 = vlaneseq
        %v1499 = vshrl.u32 %v1498, 7
        %v1500 = vsub.s32 %v1497, %v1499
        %v1501 = vrot.slane %v1487, %v1500
        %v1502 = vcombine.low %v1478, %v1494
        %v1503 = vcombine.high %v1478, %v1494
        %v1505 = vunpack.c.l.s4 1934713408
        %v1506 = vunpack.c.0.s8 %v1505
        %v1507 = vlaneseq
        %v1508 = vshrl.u32 %v1507, 7
        %v1509 = vsub.s32 %v1506, %v1508
        %v1510 = vrot.slane %v1502, %v1509
        %v1512 = vunpack.c.l.s4 1934713408
        %v1513 = vunpack.c.0.s8 %v1512
        %v1514 = vlaneseq
        %v1515 = vshrl.u32 %v1514, 7
        %v1516 = vsub.s32 %v1513, %v1515
        %v1517 = vrot.slane %v1503, %v1516
        %v1518 = vcombine.low %v1485, %v1501
        %v1519 = vcombine.high %v1485, %v1501
        %v1521 = vunpack.c.l.s4 1934713408
        %v1522 = vunpack.c.0.s8 %v1521
        %v1523 = vlaneseq
        %v1524 = vshrl.u32 %v1523, 7
        %v1525 = vsub.s32 %v1522, %v1524
        %v1526 = vrot.slane %v1518, %v1525
        %v1528 = vunpack.c.l.s4 1934713408
        %v1529 = vunpack.c.0.s8 %v1528
        %v1530 = vlaneseq
        %v1531 = vshrl.u32 %v1530, 7
        %v1532 = vsub.s32 %v1529, %v1531
        %v1533 = vrot.slane %v1519, %v1532
        %v1534 = vcombine.high %v1510, 0.0
        %v1535 = vcombine.high %v1517, 0.0
        %v1536 = vcombine.high %v1526, 0.0
        %v1537 = vcombine.high %v1533, 0.0
        %v1538 = vcombine.low %v298, %v1161
        %v1539 = vcombine.high %v298, %v1161
        %v1541 = vunpack.c.l.s4 1983009808
        %v1542 = vunpack.c.0.s8 %v1541
        %v1543 = vlaneseq
        %v1544 = vshrl.u32 %v1543, 7
        %v1545 = vsub.s32 %v1542, %v1544
        %v1546 = vrot.slane %v1538, %v1545
        %v1548 = vunpack.c.l.s4 1983009808
        %v1549 = vunpack.c.0.s8 %v1548
        %v1550 = vlaneseq
        %v1551 = vshrl.u32 %v1550, 7
        %v1552 = vsub.s32 %v1549, %v1551
        %v1553 = vrot.slane %v1539, %v1552
        %v1554 = vcombine.low %v1137, %v1185
        %v1555 = vcombine.high %v1137, %v1185
        %v1557 = vunpack.c.l.s4 1983009808
        %v1558 = vunpack.c.0.s8 %v1557
        %v1559 = vlaneseq
        %v1560 = vshrl.u32 %v1559, 7
        %v1561 = vsub.s32 %v1558, %v1560
        %v1562 = vrot.slane %v1554, %v1561
        %v1564 = vunpack.c.l.s4 1983009808
        %v1565 = vunpack.c.0.s8 %v1564
        %v1566 = vlaneseq
        %v1567 = vshrl.u32 %v1566, 7
        %v1568 = vsub.s32 %v1565, %v1567
        %v1569 = vrot.slane %v1555, %v1568
        %v1570 = vcombine.low %v1546, %v1562
        %v1571 = vcombine.high %v1546, %v1562
        %v1573 = vunpack.c.l.s4 1934713408
        %v1574 = vunpack.c.0.s8 %v1573
        %v1575 = vlaneseq
        %v1576 = vshrl.u32 %v1575, 7
        %v1577 = vsub.s32 %v1574, %v1576
        %v1578 = vrot.slane %v1570, %v1577
        %v1580 = vunpack.c.l.s4 1934713408
        %v1581 = vunpack.c.0.s8 %v1580
        %v1582 = vlaneseq
        %v1583 = vshrl.u32 %v1582, 7
        %v1584 = vsub.s32 %v1581, %v1583
        %v1585 = vrot.slane %v1571, %v1584
        %v1586 = vcombine.low %v1553, %v1569
        %v1587 = vcombine.high %v1553, %v1569
        %v1589 = vunpack.c.l.s4 1934713408
        %v1590 = vunpack.c.0.s8 %v1589
        %v1591 = vlaneseq
        %v1592 = vshrl.u32 %v1591, 7
        %v1593 = vsub.s32 %v1590, %v1592
        %v1594 = vrot.slane %v1586, %v1593
        %v1596 = vunpack.c.l.s4 1934713408
        %v1597 = vunpack.c.0.s8 %v1596
        %v1598 = vlaneseq
        %v1599 = vshrl.u32 %v1598, 7
        %v1600 = vsub.s32 %v1597, %v1599
        %v1601 = vrot.slane %v1587, %v1600
        %v1602 = vcombine.high %v1578, 0.0
        %v1603 = vcombine.high %v1585, 0.0
        %v1604 = vcombine.high %v1594, 0.0
        %v1605 = vcombine.high %v1601, 0.0
        %v1606 = vcombine.low %v299, %v1163
        %v1607 = vcombine.high %v299, %v1163
        %v1609 = vunpack.c.l.s4 1983009808
        %v1610 = vunpack.c.0.s8 %v1609
        %v1611 = vlaneseq
        %v1612 = vshrl.u32 %v1611, 7
        %v1613 = vsub.s32 %v1610, %v1612
        %v1614 = vrot.slane %v1606, %v1613
        %v1616 = vunpack.c.l.s4 1983009808
        %v1617 = vunpack.c.0.s8 %v1616
        %v1618 = vlaneseq
        %v1619 = vshrl.u32 %v1618, 7
        %v1620 = vsub.s32 %v1617, %v1619
        %v1621 = vrot.slane %v1607, %v1620
        %v1622 = vcombine.low %v1139, %v1187
        %v1623 = vcombine.high %v1139, %v1187
        %v1625 = vunpack.c.l.s4 1983009808
        %v1626 = vunpack.c.0.s8 %v1625
        %v1627 = vlaneseq
        %v1628 = vshrl.u32 %v1627, 7
        %v1629 = vsub.s32 %v1626, %v1628
        %v1630 = vrot.slane %v1622, %v1629
        %v1632 = vunpack.c.l.s4 1983009808
        %v1633 = vunpack.c.0.s8 %v1632
        %v1634 = vlaneseq
        %v1635 = vshrl.u32 %v1634, 7
        %v1636 = vsub.s32 %v1633, %v1635
        %v1637 = vrot.slane %v1623, %v1636
        %v1638 = vcombine.low %v1614, %v1630
        %v1639 = vcombine.high %v1614, %v1630
        %v1641 = vunpack.c.l.s4 1934713408
        %v1642 = vunpack.c.0.s8 %v1641
        %v1643 = vlaneseq
        %v1644 = vshrl.u32 %v1643, 7
        %v1645 = vsub.s32 %v1642, %v1644
        %v1646 = vrot.slane %v1638, %v1645
        %v1648 = vunpack.c.l.s4 1934713408
        %v1649 = vunpack.c.0.s8 %v1648
        %v1650 = vlaneseq
        %v1651 = vshrl.u32 %v1650, 7
        %v1652 = vsub.s32 %v1649, %v1651
        %v1653 = vrot.slane %v1639, %v1652
        %v1654 = vcombine.low %v1621, %v1637
        %v1655 = vcombine.high %v1621, %v1637
        %v1657 = vunpack.c.l.s4 1934713408
        %v1658 = vunpack.c.0.s8 %v1657
        %v1659 = vlaneseq
        %v1660 = vshrl.u32 %v1659, 7
        %v1661 = vsub.s32 %v1658, %v1660
        %v1662 = vrot.slane %v1654, %v1661
        %v1664 = vunpack.c.l.s4 1934713408
        %v1665 = vunpack.c.0.s8 %v1664
        %v1666 = vlaneseq
        %v1667 = vshrl.u32 %v1666, 7
        %v1668 = vsub.s32 %v1665, %v1667
        %v1669 = vrot.slane %v1655, %v1668
        %v1670 = vcombine.high %v1646, 0.0
        %v1671 = vcombine.high %v1653, 0.0
        %v1672 = vcombine.high %v1662, 0.0
        %v1673 = vcombine.high %v1669, 0.0
        %v1674 = vcombine.low %v300, %v1165
        %v1675 = vcombine.high %v300, %v1165
        %v1677 = vunpack.c.l.s4 1983009808
        %v1678 = vunpack.c.0.s8 %v1677
        %v1679 = vlaneseq
        %v1680 = vshrl.u32 %v1679, 7
        %v1681 = vsub.s32 %v1678, %v1680
        %v1682 = vrot.slane %v1674, %v1681
        %v1684 = vunpack.c.l.s4 1983009808
        %v1685 = vunpack.c.0.s8 %v1684
        %v1686 = vlaneseq
        %v1687 = vshrl.u32 %v1686, 7
        %v1688 = vsub.s32 %v1685, %v1687
        %v1689 = vrot.slane %v1675, %v1688
        %v1690 = vcombine.low %v1141, %v1189
        %v1691 = vcombine.high %v1141, %v1189
        %v1693 = vunpack.c.l.s4 1983009808
        %v1694 = vunpack.c.0.s8 %v1693
        %v1695 = vlaneseq
        %v1696 = vshrl.u32 %v1695, 7
        %v1697 = vsub.s32 %v1694, %v1696
        %v1698 = vrot.slane %v1690, %v1697
        %v1700 = vunpack.c.l.s4 1983009808
        %v1701 = vunpack.c.0.s8 %v1700
        %v1702 = vlaneseq
        %v1703 = vshrl.u32 %v1702, 7
        %v1704 = vsub.s32 %v1701, %v1703
        %v1705 = vrot.slane %v1691, %v1704
        %v1706 = vcombine.low %v1682, %v1698
        %v1707 = vcombine.high %v1682, %v1698
        %v1709 = vunpack.c.l.s4 1934713408
        %v1710 = vunpack.c.0.s8 %v1709
        %v1711 = vlaneseq
        %v1712 = vshrl.u32 %v1711, 7
        %v1713 = vsub.s32 %v1710, %v1712
        %v1714 = vrot.slane %v1706, %v1713
        %v1716 = vunpack.c.l.s4 1934713408
        %v1717 = vunpack.c.0.s8 %v1716
        %v1718 = vlaneseq
        %v1719 = vshrl.u32 %v1718, 7
        %v1720 = vsub.s32 %v1717, %v1719
        %v1721 = vrot.slane %v1707, %v1720
        %v1722 = vcombine.low %v1689, %v1705
        %v1723 = vcombine.high %v1689, %v1705
        %v1725 = vunpack.c.l.s4 1934713408
        %v1726 = vunpack.c.0.s8 %v1725
        %v1727 = vlaneseq
        %v1728 = vshrl.u32 %v1727, 7
        %v1729 = vsub.s32 %v1726, %v1728
        %v1730 = vrot.slane %v1722, %v1729
        %v1732 = vunpack.c.l.s4 1934713408
        %v1733 = vunpack.c.0.s8 %v1732
        %v1734 = vlaneseq
        %v1735 = vshrl.u32 %v1734, 7
        %v1736 = vsub.s32 %v1733, %v1735
        %v1737 = vrot.slane %v1723, %v1736
        %v1738 = vcombine.high %v1714, 0.0
        %v1739 = vcombine.high %v1721, 0.0
        %v1740 = vcombine.high %v1730, 0.0
        %v1741 = vcombine.high %v1737, 0.0
        %v1742 = vsel %vm925, %v1238, -inf
        %1743 = vmax.xlane.f32.xlu0 %v1742
        %v1744 = vpop.xlane.xlu0 %1743
        %v1745 = vsel %vm925, %v1262, -inf
        %1746 = vmax.xlane.f32.xlu0 %v1745
        %v1747 = vpop.xlane.xlu0 %1746
        %v1748 = vsel %vm925, %v1245, -inf
        %1749 = vmax.xlane.f32.xlu0 %v1748
        %v1750 = vpop.xlane.xlu0 %1749
        %v1751 = vsel %vm925, %v1263, -inf
        %1752 = vmax.xlane.f32.xlu0 %v1751
        %v1753 = vpop.xlane.xlu0 %1752
        %v1754 = vsel %vm925, %v1254, -inf
        %1755 = vmax.xlane.f32.xlu0 %v1754
        %v1756 = vpop.xlane.xlu0 %1755
        %v1757 = vsel %vm925, %v1264, -inf
        %1758 = vmax.xlane.f32.xlu0 %v1757
        %v1759 = vpop.xlane.xlu0 %1758
        %v1760 = vsel %vm925, %v1261, -inf
        %1761 = vmax.xlane.f32.xlu0 %v1760
        %v1762 = vpop.xlane.xlu0 %1761
        %v1763 = vsel %vm925, %v1265, -inf
        %1764 = vmax.xlane.f32.xlu0 %v1763
        %v1765 = vpop.xlane.xlu0 %1764
        %v1766 = vsel %vm925, %v1306, -inf
        %1767 = vmax.xlane.f32.xlu0 %v1766
        %v1768 = vpop.xlane.xlu0 %1767
        %v1769 = vsel %vm925, %v1330, -inf
        %1770 = vmax.xlane.f32.xlu0 %v1769
        %v1771 = vpop.xlane.xlu0 %1770
        %v1772 = vsel %vm925, %v1313, -inf
        %1773 = vmax.xlane.f32.xlu0 %v1772
        %v1774 = vpop.xlane.xlu0 %1773
        %v1775 = vsel %vm925, %v1331, -inf
        %1776 = vmax.xlane.f32.xlu0 %v1775
        %v1777 = vpop.xlane.xlu0 %1776
        %v1778 = vsel %vm925, %v1322, -inf
        %1779 = vmax.xlane.f32.xlu0 %v1778
        %v1780 = vpop.xlane.xlu0 %1779
        %v1781 = vsel %vm925, %v1332, -inf
        %1782 = vmax.xlane.f32.xlu0 %v1781
        %v1783 = vpop.xlane.xlu0 %1782
        %v1784 = vsel %vm925, %v1329, -inf
        %1785 = vmax.xlane.f32.xlu0 %v1784
        %v1786 = vpop.xlane.xlu0 %1785
        %v1787 = vsel %vm925, %v1333, -inf
        %1788 = vmax.xlane.f32.xlu0 %v1787
        %v1789 = vpop.xlane.xlu0 %1788
        %v1790 = vsel %vm925, %v1374, -inf
        %1791 = vmax.xlane.f32.xlu0 %v1790
        %v1792 = vpop.xlane.xlu0 %1791
        %v1793 = vsel %vm925, %v1398, -inf
        %1794 = vmax.xlane.f32.xlu0 %v1793
        %v1795 = vpop.xlane.xlu0 %1794
        %v1796 = vsel %vm925, %v1381, -inf
        %1797 = vmax.xlane.f32.xlu0 %v1796
        %v1798 = vpop.xlane.xlu0 %1797
        %v1799 = vsel %vm925, %v1399, -inf
        %1800 = vmax.xlane.f32.xlu0 %v1799
        %v1801 = vpop.xlane.xlu0 %1800
        %v1802 = vsel %vm925, %v1390, -inf
        %1803 = vmax.xlane.f32.xlu0 %v1802
        %v1804 = vpop.xlane.xlu0 %1803
        %v1805 = vsel %vm925, %v1400, -inf
        %1806 = vmax.xlane.f32.xlu0 %v1805
        %v1807 = vpop.xlane.xlu0 %1806
        %v1808 = vsel %vm925, %v1397, -inf
        %1809 = vmax.xlane.f32.xlu0 %v1808
        %v1810 = vpop.xlane.xlu0 %1809
        %v1811 = vsel %vm925, %v1401, -inf
        %1812 = vmax.xlane.f32.xlu0 %v1811
        %v1813 = vpop.xlane.xlu0 %1812
        %v1814 = vsel %vm925, %v1442, -inf
        %1815 = vmax.xlane.f32.xlu0 %v1814
        %v1816 = vpop.xlane.xlu0 %1815
        %v1817 = vsel %vm925, %v1466, -inf
        %1818 = vmax.xlane.f32.xlu0 %v1817
        %v1819 = vpop.xlane.xlu0 %1818
        %v1820 = vsel %vm925, %v1449, -inf
        %1821 = vmax.xlane.f32.xlu0 %v1820
        %v1822 = vpop.xlane.xlu0 %1821
        %v1823 = vsel %vm925, %v1467, -inf
        %1824 = vmax.xlane.f32.xlu0 %v1823
        %v1825 = vpop.xlane.xlu0 %1824
        %v1826 = vsel %vm925, %v1458, -inf
        %1827 = vmax.xlane.f32.xlu0 %v1826
        %v1828 = vpop.xlane.xlu0 %1827
        %v1829 = vsel %vm925, %v1468, -inf
        %1830 = vmax.xlane.f32.xlu0 %v1829
        %v1831 = vpop.xlane.xlu0 %1830
        %v1832 = vsel %vm925, %v1465, -inf
        %1833 = vmax.xlane.f32.xlu0 %v1832
        %v1834 = vpop.xlane.xlu0 %1833
        %v1835 = vsel %vm925, %v1469, -inf
        %1836 = vmax.xlane.f32.xlu0 %v1835
        %v1837 = vpop.xlane.xlu0 %1836
        %v1838 = vsel %vm925, %v1510, -inf
        %1839 = vmax.xlane.f32.xlu0 %v1838
        %v1840 = vpop.xlane.xlu0 %1839
        %v1841 = vsel %vm925, %v1534, -inf
        %1842 = vmax.xlane.f32.xlu0 %v1841
        %v1843 = vpop.xlane.xlu0 %1842
        %v1844 = vsel %vm925, %v1517, -inf
        %1845 = vmax.xlane.f32.xlu0 %v1844
        %v1846 = vpop.xlane.xlu0 %1845
        %v1847 = vsel %vm925, %v1535, -inf
        %1848 = vmax.xlane.f32.xlu0 %v1847
        %v1849 = vpop.xlane.xlu0 %1848
        %v1850 = vsel %vm925, %v1526, -inf
        %1851 = vmax.xlane.f32.xlu0 %v1850
        %v1852 = vpop.xlane.xlu0 %1851
        %v1853 = vsel %vm925, %v1536, -inf
        %1854 = vmax.xlane.f32.xlu0 %v1853
        %v1855 = vpop.xlane.xlu0 %1854
        %v1856 = vsel %vm925, %v1533, -inf
        %1857 = vmax.xlane.f32.xlu0 %v1856
        %v1858 = vpop.xlane.xlu0 %1857
        %v1859 = vsel %vm925, %v1537, -inf
        %1860 = vmax.xlane.f32.xlu0 %v1859
        %v1861 = vpop.xlane.xlu0 %1860
        %v1862 = vsel %vm925, %v1578, -inf
        %1863 = vmax.xlane.f32.xlu0 %v1862
        %v1864 = vpop.xlane.xlu0 %1863
        %v1865 = vsel %vm925, %v1602, -inf
        %1866 = vmax.xlane.f32.xlu0 %v1865
        %v1867 = vpop.xlane.xlu0 %1866
        %v1868 = vsel %vm925, %v1585, -inf
        %1869 = vmax.xlane.f32.xlu0 %v1868
        %v1870 = vpop.xlane.xlu0 %1869
        %v1871 = vsel %vm925, %v1603, -inf
        %1872 = vmax.xlane.f32.xlu0 %v1871
        %v1873 = vpop.xlane.xlu0 %1872
        %v1874 = vsel %vm925, %v1594, -inf
        %1875 = vmax.xlane.f32.xlu0 %v1874
        %v1876 = vpop.xlane.xlu0 %1875
        %v1877 = vsel %vm925, %v1604, -inf
        %1878 = vmax.xlane.f32.xlu0 %v1877
        %v1879 = vpop.xlane.xlu0 %1878
        %v1880 = vsel %vm925, %v1601, -inf
        %1881 = vmax.xlane.f32.xlu0 %v1880
        %v1882 = vpop.xlane.xlu0 %1881
        %v1883 = vsel %vm925, %v1605, -inf
        %1884 = vmax.xlane.f32.xlu0 %v1883
        %v1885 = vpop.xlane.xlu0 %1884
        %v1886 = vsel %vm925, %v1646, -inf
        %1887 = vmax.xlane.f32.xlu0 %v1886
        %v1888 = vpop.xlane.xlu0 %1887
        %v1889 = vsel %vm925, %v1670, -inf
        %1890 = vmax.xlane.f32.xlu0 %v1889
        %v1891 = vpop.xlane.xlu0 %1890
        %v1892 = vsel %vm925, %v1653, -inf
        %1893 = vmax.xlane.f32.xlu0 %v1892
        %v1894 = vpop.xlane.xlu0 %1893
        %v1895 = vsel %vm925, %v1671, -inf
        %1896 = vmax.xlane.f32.xlu0 %v1895
        %v1897 = vpop.xlane.xlu0 %1896
        %v1898 = vsel %vm925, %v1662, -inf
        %1899 = vmax.xlane.f32.xlu0 %v1898
        %v1900 = vpop.xlane.xlu0 %1899
        %v1901 = vsel %vm925, %v1672, -inf
        %1902 = vmax.xlane.f32.xlu0 %v1901
        %v1903 = vpop.xlane.xlu0 %1902
        %v1904 = vsel %vm925, %v1669, -inf
        %1905 = vmax.xlane.f32.xlu0 %v1904
        %v1906 = vpop.xlane.xlu0 %1905
        %v1907 = vsel %vm925, %v1673, -inf
        %1908 = vmax.xlane.f32.xlu0 %v1907
        %v1909 = vpop.xlane.xlu0 %1908
        %v1910 = vsel %vm925, %v1714, -inf
        %1911 = vmax.xlane.f32.xlu0 %v1910
        %v1912 = vpop.xlane.xlu0 %1911
        %v1913 = vsel %vm925, %v1738, -inf
        %1914 = vmax.xlane.f32.xlu0 %v1913
        %v1915 = vpop.xlane.xlu0 %1914
        %v1916 = vsel %vm925, %v1721, -inf
        %1917 = vmax.xlane.f32.xlu0 %v1916
        %v1918 = vpop.xlane.xlu0 %1917
        %v1919 = vsel %vm925, %v1739, -inf
        %1920 = vmax.xlane.f32.xlu0 %v1919
        %v1921 = vpop.xlane.xlu0 %1920
        %v1922 = vsel %vm925, %v1730, -inf
        %1923 = vmax.xlane.f32.xlu0 %v1922
        %v1924 = vpop.xlane.xlu0 %1923
        %v1925 = vsel %vm925, %v1740, -inf
        %1926 = vmax.xlane.f32.xlu0 %v1925
        %v1927 = vpop.xlane.xlu0 %1926
        %v1928 = vsel %vm925, %v1737, -inf
        %1929 = vmax.xlane.f32.xlu0 %v1928
        %v1930 = vpop.xlane.xlu0 %1929
        %v1931 = vsel %vm925, %v1741, -inf
        %1932 = vmax.xlane.f32.xlu0 %v1931
        %v1933 = vpop.xlane.xlu0 %1932
        %v1934 = vld [vmem:[#allocation7] sm:$0xf]
        %v1999 = vlaneseq
        %v2000 = vand.u32 %v1999, 127
        %v2001 = vlaneseq
        %v2002 = vshrl.u32 %v2001, 7
        %v2003 = vsub.s32 %v2000, %v2002
        %v2004 = vrot.slane %v928, %v2003
        %v2005 = vlaneseq
        %v2006 = vshrl.u32 %v2005, 7
        %v2007 = vsub.s32 %v2000, %v2006
        %v2008 = vrot.slane %v931, %v2007
        %v2009 = vlaneseq
        %v2010 = vshrl.u32 %v2009, 7
        %v2011 = vsub.s32 %v2000, %v2010
        %v2012 = vrot.slane %v934, %v2011
        %v2013 = vlaneseq
        %v2014 = vshrl.u32 %v2013, 7
        %v2015 = vsub.s32 %v2000, %v2014
        %v2016 = vrot.slane %v937, %v2015
        %v2017 = vlaneseq
        %v2018 = vshrl.u32 %v2017, 7
        %v2019 = vsub.s32 %v2000, %v2018
        %v2020 = vrot.slane %v940, %v2019
        %v2021 = vlaneseq
        %v2022 = vshrl.u32 %v2021, 7
        %v2023 = vsub.s32 %v2000, %v2022
        %v2024 = vrot.slane %v943, %v2023
        %v2025 = vlaneseq
        %v2026 = vshrl.u32 %v2025, 7
        %v2027 = vsub.s32 %v2000, %v2026
        %v2028 = vrot.slane %v946, %v2027
        %v2029 = vlaneseq
        %v2030 = vshrl.u32 %v2029, 7
        %v2031 = vsub.s32 %v2000, %v2030
        %v2032 = vrot.slane %v949, %v2031
        %v2033 = vlaneseq
        %v2034 = vshrl.u32 %v2033, 7
        %v2035 = vsub.s32 %v2000, %v2034
        %v2036 = vrot.slane %v952, %v2035
        %v2037 = vlaneseq
        %v2038 = vshrl.u32 %v2037, 7
        %v2039 = vsub.s32 %v2000, %v2038
        %v2040 = vrot.slane %v955, %v2039
        %v2041 = vlaneseq
        %v2042 = vshrl.u32 %v2041, 7
        %v2043 = vsub.s32 %v2000, %v2042
        %v2044 = vrot.slane %v958, %v2043
        %v2045 = vlaneseq
        %v2046 = vshrl.u32 %v2045, 7
        %v2047 = vsub.s32 %v2000, %v2046
        %v2048 = vrot.slane %v961, %v2047
        %v2049 = vlaneseq
        %v2050 = vshrl.u32 %v2049, 7
        %v2051 = vsub.s32 %v2000, %v2050
        %v2052 = vrot.slane %v964, %v2051
        %v2053 = vlaneseq
        %v2054 = vshrl.u32 %v2053, 7
        %v2055 = vsub.s32 %v2000, %v2054
        %v2056 = vrot.slane %v967, %v2055
        %v2057 = vlaneseq
        %v2058 = vshrl.u32 %v2057, 7
        %v2059 = vsub.s32 %v2000, %v2058
        %v2060 = vrot.slane %v970, %v2059
        %v2061 = vlaneseq
        %v2062 = vshrl.u32 %v2061, 7
        %v2063 = vsub.s32 %v2000, %v2062
        %v2064 = vrot.slane %v973, %v2063
        %v2065 = vlaneseq
        %v2066 = vshrl.u32 %v2065, 7
        %v2067 = vsub.s32 %v2000, %v2066
        %v2068 = vrot.slane %v976, %v2067
        %v2069 = vlaneseq
        %v2070 = vshrl.u32 %v2069, 7
        %v2071 = vsub.s32 %v2000, %v2070
        %v2072 = vrot.slane %v979, %v2071
        %v2073 = vlaneseq
        %v2074 = vshrl.u32 %v2073, 7
        %v2075 = vsub.s32 %v2000, %v2074
        %v2076 = vrot.slane %v982, %v2075
        %v2077 = vlaneseq
        %v2078 = vshrl.u32 %v2077, 7
        %v2079 = vsub.s32 %v2000, %v2078
        %v2080 = vrot.slane %v985, %v2079
        %v2081 = vlaneseq
        %v2082 = vshrl.u32 %v2081, 7
        %v2083 = vsub.s32 %v2000, %v2082
        %v2084 = vrot.slane %v988, %v2083
        %v2085 = vlaneseq
        %v2086 = vshrl.u32 %v2085, 7
        %v2087 = vsub.s32 %v2000, %v2086
        %v2088 = vrot.slane %v991, %v2087
        %v2089 = vlaneseq
        %v2090 = vshrl.u32 %v2089, 7
        %v2091 = vsub.s32 %v2000, %v2090
        %v2092 = vrot.slane %v994, %v2091
        %v2093 = vlaneseq
        %v2094 = vshrl.u32 %v2093, 7
        %v2095 = vsub.s32 %v2000, %v2094
        %v2096 = vrot.slane %v997, %v2095
        %v2097 = vlaneseq
        %v2098 = vshrl.u32 %v2097, 7
        %v2099 = vsub.s32 %v2000, %v2098
        %v2100 = vrot.slane %v1000, %v2099
        %v2101 = vlaneseq
        %v2102 = vshrl.u32 %v2101, 7
        %v2103 = vsub.s32 %v2000, %v2102
        %v2104 = vrot.slane %v1003, %v2103
        %v2105 = vlaneseq
        %v2106 = vshrl.u32 %v2105, 7
        %v2107 = vsub.s32 %v2000, %v2106
        %v2108 = vrot.slane %v1006, %v2107
        %v2109 = vlaneseq
        %v2110 = vshrl.u32 %v2109, 7
        %v2111 = vsub.s32 %v2000, %v2110
        %v2112 = vrot.slane %v1009, %v2111
        %v2113 = vlaneseq
        %v2114 = vshrl.u32 %v2113, 7
        %v2115 = vsub.s32 %v2000, %v2114
        %v2116 = vrot.slane %v1012, %v2115
        %v2117 = vlaneseq
        %v2118 = vshrl.u32 %v2117, 7
        %v2119 = vsub.s32 %v2000, %v2118
        %v2120 = vrot.slane %v1015, %v2119
        %v2121 = vlaneseq
        %v2122 = vshrl.u32 %v2121, 7
        %v2123 = vsub.s32 %v2000, %v2122
        %v2124 = vrot.slane %v1018, %v2123
        %v2125 = vlaneseq
        %v2126 = vshrl.u32 %v2125, 7
        %v2127 = vsub.s32 %v2000, %v2126
        %v2128 = vrot.slane %v1021, %v2127
        %v2129 = vlaneseq
        %v2130 = vshrl.u32 %v2129, 7
        %v2131 = vsub.s32 %v2000, %v2130
        %v2132 = vrot.slane %v1024, %v2131
        %v2133 = vlaneseq
        %v2134 = vshrl.u32 %v2133, 7
        %v2135 = vsub.s32 %v2000, %v2134
        %v2136 = vrot.slane %v1027, %v2135
        %v2137 = vlaneseq
        %v2138 = vshrl.u32 %v2137, 7
        %v2139 = vsub.s32 %v2000, %v2138
        %v2140 = vrot.slane %v1030, %v2139
        %v2141 = vlaneseq
        %v2142 = vshrl.u32 %v2141, 7
        %v2143 = vsub.s32 %v2000, %v2142
        %v2144 = vrot.slane %v1033, %v2143
        %v2145 = vlaneseq
        %v2146 = vshrl.u32 %v2145, 7
        %v2147 = vsub.s32 %v2000, %v2146
        %v2148 = vrot.slane %v1036, %v2147
        %v2149 = vlaneseq
        %v2150 = vshrl.u32 %v2149, 7
        %v2151 = vsub.s32 %v2000, %v2150
        %v2152 = vrot.slane %v1039, %v2151
        %v2153 = vlaneseq
        %v2154 = vshrl.u32 %v2153, 7
        %v2155 = vsub.s32 %v2000, %v2154
        %v2156 = vrot.slane %v1042, %v2155
        %v2157 = vlaneseq
        %v2158 = vshrl.u32 %v2157, 7
        %v2159 = vsub.s32 %v2000, %v2158
        %v2160 = vrot.slane %v1045, %v2159
        %v2161 = vlaneseq
        %v2162 = vshrl.u32 %v2161, 7
        %v2163 = vsub.s32 %v2000, %v2162
        %v2164 = vrot.slane %v1048, %v2163
        %v2165 = vlaneseq
        %v2166 = vshrl.u32 %v2165, 7
        %v2167 = vsub.s32 %v2000, %v2166
        %v2168 = vrot.slane %v1051, %v2167
        %v2169 = vlaneseq
        %v2170 = vshrl.u32 %v2169, 7
        %v2171 = vsub.s32 %v2000, %v2170
        %v2172 = vrot.slane %v1054, %v2171
        %v2173 = vlaneseq
        %v2174 = vshrl.u32 %v2173, 7
        %v2175 = vsub.s32 %v2000, %v2174
        %v2176 = vrot.slane %v1057, %v2175
        %v2177 = vlaneseq
        %v2178 = vshrl.u32 %v2177, 7
        %v2179 = vsub.s32 %v2000, %v2178
        %v2180 = vrot.slane %v1060, %v2179
        %v2181 = vlaneseq
        %v2182 = vshrl.u32 %v2181, 7
        %v2183 = vsub.s32 %v2000, %v2182
        %v2184 = vrot.slane %v1063, %v2183
        %v2185 = vlaneseq
        %v2186 = vshrl.u32 %v2185, 7
        %v2187 = vsub.s32 %v2000, %v2186
        %v2188 = vrot.slane %v1066, %v2187
        %v2189 = vlaneseq
        %v2190 = vshrl.u32 %v2189, 7
        %v2191 = vsub.s32 %v2000, %v2190
        %v2192 = vrot.slane %v1069, %v2191
        %v2193 = vlaneseq
        %v2194 = vshrl.u32 %v2193, 7
        %v2195 = vsub.s32 %v2000, %v2194
        %v2196 = vrot.slane %v1072, %v2195
        %v2197 = vlaneseq
        %v2198 = vshrl.u32 %v2197, 7
        %v2199 = vsub.s32 %v2000, %v2198
        %v2200 = vrot.slane %v1075, %v2199
        %v2201 = vlaneseq
        %v2202 = vshrl.u32 %v2201, 7
        %v2203 = vsub.s32 %v2000, %v2202
        %v2204 = vrot.slane %v1078, %v2203
        %v2205 = vlaneseq
        %v2206 = vshrl.u32 %v2205, 7
        %v2207 = vsub.s32 %v2000, %v2206
        %v2208 = vrot.slane %v1081, %v2207
        %v2209 = vlaneseq
        %v2210 = vshrl.u32 %v2209, 7
        %v2211 = vsub.s32 %v2000, %v2210
        %v2212 = vrot.slane %v1084, %v2211
        %v2213 = vlaneseq
        %v2214 = vshrl.u32 %v2213, 7
        %v2215 = vsub.s32 %v2000, %v2214
        %v2216 = vrot.slane %v1087, %v2215
        %v2217 = vlaneseq
        %v2218 = vshrl.u32 %v2217, 7
        %v2219 = vsub.s32 %v2000, %v2218
        %v2220 = vrot.slane %v1090, %v2219
        %v2221 = vlaneseq
        %v2222 = vshrl.u32 %v2221, 7
        %v2223 = vsub.s32 %v2000, %v2222
        %v2224 = vrot.slane %v1093, %v2223
        %v2225 = vlaneseq
        %v2226 = vshrl.u32 %v2225, 7
        %v2227 = vsub.s32 %v2000, %v2226
        %v2228 = vrot.slane %v1096, %v2227
        %v2229 = vlaneseq
        %v2230 = vshrl.u32 %v2229, 7
        %v2231 = vsub.s32 %v2000, %v2230
        %v2232 = vrot.slane %v1099, %v2231
        %v2233 = vlaneseq
        %v2234 = vshrl.u32 %v2233, 7
        %v2235 = vsub.s32 %v2000, %v2234
        %v2236 = vrot.slane %v1102, %v2235
        %v2237 = vlaneseq
        %v2238 = vshrl.u32 %v2237, 7
        %v2239 = vsub.s32 %v2000, %v2238
        %v2240 = vrot.slane %v1105, %v2239
        %v2241 = vlaneseq
        %v2242 = vshrl.u32 %v2241, 7
        %v2243 = vsub.s32 %v2000, %v2242
        %v2244 = vrot.slane %v1108, %v2243
        %v2245 = vlaneseq
        %v2246 = vshrl.u32 %v2245, 7
        %v2247 = vsub.s32 %v2000, %v2246
        %v2248 = vrot.slane %v1111, %v2247
        %v2249 = vlaneseq
        %v2250 = vshrl.u32 %v2249, 7
        %v2251 = vsub.s32 %v2000, %v2250
        %v2252 = vrot.slane %v1114, %v2251
        %v2253 = vlaneseq
        %v2254 = vshrl.u32 %v2253, 7
        %v2255 = vsub.s32 %v2000, %v2254
        %v2256 = vrot.slane %v1117, %v2255
        %vm2257 = vcmask 1041409
        %v2258 = vsel %vm2257, %v2008, %v2004
        %vm2259 = vcmask 1042434
        %v2260 = vsel %vm2259, %v2012, %v2258
        %vm2261 = vcmask 1043459
        %v2262 = vsel %vm2261, %v2016, %v2260
        %vm2263 = vcmask 1044484
        %v2264 = vsel %vm2263, %v2020, %v2262
        %vm2265 = vcmask 1045509
        %v2266 = vsel %vm2265, %v2024, %v2264
        %vm2267 = vcmask 1046534
        %v2268 = vsel %vm2267, %v2028, %v2266
        %vm2269 = vcmask 1047559
        %v2270 = vsel %vm2269, %v2032, %v2268
        %v2271 = vsel %vm2257, %v2040, %v2036
        %v2272 = vsel %vm2259, %v2044, %v2271
        %v2273 = vsel %vm2261, %v2048, %v2272
        %v2274 = vsel %vm2263, %v2052, %v2273
        %v2275 = vsel %vm2265, %v2056, %v2274
        %v2276 = vsel %vm2267, %v2060, %v2275
        %v2277 = vsel %vm2269, %v2064, %v2276
        %v2278 = vsel %vm2257, %v2072, %v2068
        %v2279 = vsel %vm2259, %v2076, %v2278
        %v2280 = vsel %vm2261, %v2080, %v2279
        %v2281 = vsel %vm2263, %v2084, %v2280
        %v2282 = vsel %vm2265, %v2088, %v2281
        %v2283 = vsel %vm2267, %v2092, %v2282
        %v2284 = vsel %vm2269, %v2096, %v2283
        %v2285 = vsel %vm2257, %v2104, %v2100
        %v2286 = vsel %vm2259, %v2108, %v2285
        %v2287 = vsel %vm2261, %v2112, %v2286
        %v2288 = vsel %vm2263, %v2116, %v2287
        %v2289 = vsel %vm2265, %v2120, %v2288
        %v2290 = vsel %vm2267, %v2124, %v2289
        %v2291 = vsel %vm2269, %v2128, %v2290
        %v2292 = vsel %vm2257, %v2136, %v2132
        %v2293 = vsel %vm2259, %v2140, %v2292
        %v2294 = vsel %vm2261, %v2144, %v2293
        %v2295 = vsel %vm2263, %v2148, %v2294
        %v2296 = vsel %vm2265, %v2152, %v2295
        %v2297 = vsel %vm2267, %v2156, %v2296
        %v2298 = vsel %vm2269, %v2160, %v2297
        %v2299 = vsel %vm2257, %v2168, %v2164
        %v2300 = vsel %vm2259, %v2172, %v2299
        %v2301 = vsel %vm2261, %v2176, %v2300
        %v2302 = vsel %vm2263, %v2180, %v2301
        %v2303 = vsel %vm2265, %v2184, %v2302
        %v2304 = vsel %vm2267, %v2188, %v2303
        %v2305 = vsel %vm2269, %v2192, %v2304
        %v2306 = vsel %vm2257, %v2200, %v2196
        %v2307 = vsel %vm2259, %v2204, %v2306
        %v2308 = vsel %vm2261, %v2208, %v2307
        %v2309 = vsel %vm2263, %v2212, %v2308
        %v2310 = vsel %vm2265, %v2216, %v2309
        %v2311 = vsel %vm2267, %v2220, %v2310
        %v2312 = vsel %vm2269, %v2224, %v2311
        %v2313 = vsel %vm2257, %v2232, %v2228
        %v2314 = vsel %vm2259, %v2236, %v2313
        %v2315 = vsel %vm2261, %v2240, %v2314
        %v2316 = vsel %vm2263, %v2244, %v2315
        %v2317 = vsel %vm2265, %v2248, %v2316
        %v2318 = vsel %vm2267, %v2252, %v2317
        %v2319 = vsel %vm2269, %v2256, %v2318
        %vm2320 = vcmask 31744
        %v2321 = vsel %vm2320, %v2270, 0
        %v2323 = vsel %vm2320, %v2277, 0
        %v2325 = vsel %vm2320, %v2284, 0
        %v2327 = vsel %vm2320, %v2291, 0
        %v2329 = vsel %vm2320, %v2298, 0
        %v2331 = vsel %vm2320, %v2305, 0
        %v2333 = vsel %vm2320, %v2312, 0
        %v2335 = vsel %vm2320, %v2319, 0
        %vm2337 = vcmask 1043456
        %v2339 = vsel %vm2337, %v1934, 0
        %2341 = vmatprep.subr.mxu0 0.0
        %v2342 = vand.u32 %v2339, 4294901760
        %2343 = vmatpush1.msra.mxu0 %v2342
        %2344 = vmatprep.subr.mxu0 0.0
        %2345 = vmatpush1.msra.mxu0 0.0
        %2346 = vmatprep.subr.mxu0 0.0
        %2347 = vmatpush1.msra.mxu0 0.0
        %2348 = vmatprep.subr.mxu0 0.0
        %2349 = vmatpush1.msra.mxu0 0.0
        %2350 = vmatprep.subr.mxu0 0.0
        %2351 = vmatpush1.msra.mxu0 0.0
        %2352 = vmatprep.subr.mxu0 0.0
        %2353 = vmatpush1.msra.mxu0 0.0
        %2354 = vmatprep.subr.mxu0 0.0
        %2355 = vmatpush1.msra.mxu0 0.0
        %2356 = vmatprep.subr.mxu0 0.0
        %2357 = vmatpush1.msra.mxu0 0.0
        %2358 = vmatprep.subr.mxu0 0.0
        %2359 = vmatpush1.msra.mxu0 0.0
        %2360 = vmatprep.subr.mxu0 0.0
        %2361 = vmatpush1.msra.mxu0 0.0
        %2362 = vmatprep.subr.mxu0 0.0
        %2363 = vmatpush1.msra.mxu0 0.0
        %2364 = vmatprep.subr.mxu0 0.0
        %2365 = vmatpush1.msra.mxu0 0.0
        %2366 = vmatprep.subr.mxu0 0.0
        %2367 = vmatpush1.msra.mxu0 0.0
        %2368 = vmatprep.subr.mxu0 0.0
        %2369 = vmatpush1.msra.mxu0 0.0
        %2370 = vmatprep.subr.mxu0 0.0
        %2371 = vmatpush1.msra.mxu0 0.0
        %2372 = vmatprep.subr.mxu0 0.0
        %2373 = vmatpush1.msra.mxu0 0.0
        %2374 = vmatprep.subr.mxu0 0.0
        %2375 = vmatpush1.msra.mxu0 0.0
        %2376 = vmatprep.subr.mxu0 0.0
        %2377 = vmatpush1.msra.mxu0 0.0
        %2378 = vmatprep.subr.mxu0 0.0
        %2379 = vmatpush1.msra.mxu0 0.0
        %2380 = vmatprep.subr.mxu0 0.0
        %2381 = vmatpush1.msra.mxu0 0.0
        %2382 = vmatprep.subr.mxu0 0.0
        %2383 = vmatpush1.msra.mxu0 0.0
        %2384 = vmatprep.subr.mxu0 0.0
        %2385 = vmatpush1.msra.mxu0 0.0
        %2386 = vmatprep.subr.mxu0 0.0
        %2387 = vmatpush1.msra.mxu0 0.0
        %2388 = vmatprep.subr.mxu0 0.0
        %2389 = vmatpush1.msra.mxu0 0.0
        %2390 = vmatprep.subr.mxu0 0.0
        %2391 = vmatpush1.msra.mxu0 0.0
        %2392 = vmatprep.subr.mxu0 0.0
        %2393 = vmatpush1.msra.mxu0 0.0
        %2394 = vmatprep.subr.mxu0 0.0
        %2395 = vmatpush1.msra.mxu0 0.0
        %2396 = vmatprep.subr.mxu0 0.0
        %2397 = vmatpush1.msra.mxu0 0.0
        %2398 = vmatprep.subr.mxu0 0.0
        %2399 = vmatpush1.msra.mxu0 0.0
        %2400 = vmatprep.subr.mxu0 0.0
        %2401 = vmatpush1.msra.mxu0 0.0
        %2402 = vmatprep.subr.mxu0 0.0
        %2403 = vmatpush1.msra.mxu0 0.0
        %2404 = vmatprep.subr.mxu0 0.0
        %2405 = vmatpush1.msra.mxu0 0.0
        %2406 = vmatprep.mubr.f32.mxu0 0.0
        %v2407 = vand.u32 %v2321, 4294901760
        %v2408 = vsub.f32 %v2321, %v2407
        %v2409 = vand.u32 %v2408, 4294901760
        %v2410 = vsub.f32 %v2408, %v2409
        %v2411 = vand.u32 %v2410, 4294901760
        %2412 = vmatmul.mubr.f32.gmra.mrb[0].mxu0 %v2411
        %v2413 = vpop.f32.mrb[0].mxu0
        %v2414 = vadd.f32 0.0, %v2413
        %v2415 = vpop.f32.mrb[0].mxu0
        %2416 = vmatprep.mubr.f32.mxu0 0.0
        %v2417 = vand.u32 %v2323, 4294901760
        %v2418 = vsub.f32 %v2323, %v2417
        %v2419 = vand.u32 %v2418, 4294901760
        %v2420 = vsub.f32 %v2418, %v2419
        %v2421 = vand.u32 %v2420, 4294901760
        %2422 = vmatmul.mubr.f32.gmra.mrb[0].mxu0 %v2421
        %v2423 = vpop.f32.mrb[0].mxu0
        %v2424 = vadd.f32 0.0, %v2423
        %v2425 = vpop.f32.mrb[0].mxu0
        %2426 = vmatprep.mubr.f32.mxu0 0.0
        %v2427 = vand.u32 %v2325, 4294901760
        %v2428 = vsub.f32 %v2325, %v2427
        %v2429 = vand.u32 %v2428, 4294901760
        %v2430 = vsub.f32 %v2428, %v2429
        %v2431 = vand.u32 %v2430, 4294901760
        %2432 = vmatmul.mubr.f32.gmra.mrb[0].mxu0 %v2431
        %v2433 = vpop.f32.mrb[0].mxu0
        %v2434 = vadd.f32 0.0, %v2433
        %v2435 = vpop.f32.mrb[0].mxu0
        %2436 = vmatprep.mubr.f32.mxu0 0.0
        %v2437 = vand.u32 %v2327, 4294901760
        %v2438 = vsub.f32 %v2327, %v2437
        %v2439 = vand.u32 %v2438, 4294901760
        %v2440 = vsub.f32 %v2438, %v2439
        %v2441 = vand.u32 %v2440, 4294901760
        %2442 = vmatmul.mubr.f32.gmra.mrb[0].mxu0 %v2441
        %v2443 = vpop.f32.mrb[0].mxu0
        %v2444 = vadd.f32 0.0, %v2443
        %v2445 = vpop.f32.mrb[0].mxu0
        %2446 = vmatprep.mubr.f32.mxu0 0.0
        %v2447 = vand.u32 %v2329, 4294901760
        %v2448 = vsub.f32 %v2329, %v2447
        %v2449 = vand.u32 %v2448, 4294901760
        %v2450 = vsub.f32 %v2448, %v2449
        %v2451 = vand.u32 %v2450, 4294901760
        %2452 = vmatmul.mubr.f32.gmra.mrb[0].mxu0 %v2451
        %v2453 = vpop.f32.mrb[0].mxu0
        %v2454 = vadd.f32 0.0, %v2453
        %v2455 = vpop.f32.mrb[0].mxu0
        %2456 = vmatprep.mubr.f32.mxu0 0.0
        %v2457 = vand.u32 %v2331, 4294901760
        %v2458 = vsub.f32 %v2331, %v2457
        %v2459 = vand.u32 %v2458, 4294901760
        %v2460 = vsub.f32 %v2458, %v2459
        %v2461 = vand.u32 %v2460, 4294901760
        %2462 = vmatmul.mubr.f32.gmra.mrb[0].mxu0 %v2461
        %v2463 = vpop.f32.mrb[0].mxu0
        %v2464 = vadd.f32 0.0, %v2463
        %v2465 = vpop.f32.mrb[0].mxu0
        %2466 = vmatprep.mubr.f32.mxu0 0.0
        %v2467 = vand.u32 %v2333, 4294901760
        %v2468 = vsub.f32 %v2333, %v2467
        %v2469 = vand.u32 %v2468, 4294901760
        %v2470 = vsub.f32 %v2468, %v2469
        %v2471 = vand.u32 %v2470, 4294901760
        %2472 = vmatmul.mubr.f32.gmra.mrb[0].mxu0 %v2471
        %v2473 = vpop.f32.mrb[0].mxu0
        %v2474 = vadd.f32 0.0, %v2473
        %v2475 = vpop.f32.mrb[0].mxu0
        %2476 = vmatprep.mubr.f32.mxu0 0.0
        %v2477 = vand.u32 %v2335, 4294901760
        %v2478 = vsub.f32 %v2335, %v2477
        %v2479 = vand.u32 %v2478, 4294901760
        %v2480 = vsub.f32 %v2478, %v2479
        %v2481 = vand.u32 %v2480, 4294901760
        %2482 = vmatmul.mubr.f32.gmra.mrb[0].mxu0 %v2481
        %v2483 = vpop.f32.mrb[0].mxu0
        %v2484 = vadd.f32 0.0, %v2483
        %v2485 = vpop.f32.mrb[0].mxu0
        %2486 = vdwg.mxu0
        %2487 = vmatprep.subr.mxu0 0.0
        %v2488 = vand.u32 %v2339, 4294901760
        %v2489 = vsub.f32 %v2339, %v2488
        %v2490 = vand.u32 %v2489, 4294901760
        %v2491 = vsub.f32 %v2489, %v2490
        %v2492 = vand.u32 %v2491, 4294901760
        %2493 = vmatpush1.msra.mxu0 %v2492
        %2494 = vmatprep.subr.mxu0 0.0
        %2495 = vmatpush1.msra.mxu0 0.0
        %2496 = vmatprep.subr.mxu0 0.0
        %2497 = vmatpush1.msra.mxu0 0.0
        %2498 = vmatprep.subr.mxu0 0.0
        %2499 = vmatpush1.msra.mxu0 0.0
        %2500 = vmatprep.subr.mxu0 0.0
        %2501 = vmatpush1.msra.mxu0 0.0
        %2502 = vmatprep.subr.mxu0 0.0
        %2503 = vmatpush1.msra.mxu0 0.0
        %2504 = vmatprep.subr.mxu0 0.0
        %2505 = vmatpush1.msra.mxu0 0.0
        %2506 = vmatprep.subr.mxu0 0.0
        %2507 = vmatpush1.msra.mxu0 0.0
        %2508 = vmatprep.subr.mxu0 0.0
        %2509 = vmatpush1.msra.mxu0 0.0
        %2510 = vmatprep.subr.mxu0 0.0
        %2511 = vmatpush1.msra.mxu0 0.0
        %2512 = vmatprep.subr.mxu0 0.0
        %2513 = vmatpush1.msra.mxu0 0.0
        %2514 = vmatprep.subr.mxu0 0.0
        %2515 = vmatpush1.msra.mxu0 0.0
        %2516 = vmatprep.subr.mxu0 0.0
        %2517 = vmatpush1.msra.mxu0 0.0
        %2518 = vmatprep.subr.mxu0 0.0
        %2519 = vmatpush1.msra.mxu0 0.0
        %2520 = vmatprep.subr.mxu0 0.0
        %2521 = vmatpush1.msra.mxu0 0.0
        %2522 = vmatprep.subr.mxu0 0.0
        %2523 = vmatpush1.msra.mxu0 0.0
        %2524 = vmatprep.subr.mxu0 0.0
        %2525 = vmatpush1.msra.mxu0 0.0
        %2526 = vmatprep.subr.mxu0 0.0
        %2527 = vmatpush1.msra.mxu0 0.0
        %2528 = vmatprep.subr.mxu0 0.0
        %2529 = vmatpush1.msra.mxu0 0.0
        %2530 = vmatprep.subr.mxu0 0.0
        %2531 = vmatpush1.msra.mxu0 0.0
        %2532 = vmatprep.subr.mxu0 0.0
        %2533 = vmatpush1.msra.mxu0 0.0
        %2534 = vmatprep.subr.mxu0 0.0
        %2535 = vmatpush1.msra.mxu0 0.0
        %2536 = vmatprep.subr.mxu0 0.0
        %2537 = vmatpush1.msra.mxu0 0.0
        %2538 = vmatprep.subr.mxu0 0.0
        %2539 = vmatpush1.msra.mxu0 0.0
        %2540 = vmatprep.subr.mxu0 0.0
        %2541 = vmatpush1.msra.mxu0 0.0
        %2542 = vmatprep.subr.mxu0 0.0
        %2543 = vmatpush1.msra.mxu0 0.0
        %2544 = vmatprep.subr.mxu0 0.0
        %2545 = vmatpush1.msra.mxu0 0.0
        %2546 = vmatprep.subr.mxu0 0.0
        %2547 = vmatpush1.msra.mxu0 0.0
        %2548 = vmatprep.subr.mxu0 0.0
        %2549 = vmatpush1.msra.mxu0 0.0
        %2550 = vmatprep.subr.mxu0 0.0
        %2551 = vmatpush1.msra.mxu0 0.0
        %2552 = vmatprep.subr.mxu0 0.0
        %2553 = vmatpush1.msra.mxu0 0.0
        %2554 = vmatprep.subr.mxu0 0.0
        %2555 = vmatpush1.msra.mxu0 0.0
        %2556 = vmatprep.mubr.f32.mxu0 0.0
        %v2557 = vand.u32 %v2321, 4294901760
        %2558 = vmatmul.mubr.f32.gmra.mrb[0].mxu0 %v2557
        %v2559 = vpop.f32.mrb[0].mxu0
        %v2560 = vadd.f32 %v2414, %v2559
        %v2561 = vpop.f32.mrb[0].mxu0
        %2562 = vmatprep.mubr.f32.mxu0 0.0
        %v2563 = vand.u32 %v2323, 4294901760
        %2564 = vmatmul.mubr.f32.gmra.mrb[0].mxu0 %v2563
        %v2565 = vpop.f32.mrb[0].mxu0
        %v2566 = vadd.f32 %v2424, %v2565
        %v2567 = vpop.f32.mrb[0].mxu0
        %2568 = vmatprep.mubr.f32.mxu0 0.0
        %v2569 = vand.u32 %v2325, 4294901760
        %2570 = vmatmul.mubr.f32.gmra.mrb[0].mxu0 %v2569
        %v2571 = vpop.f32.mrb[0].mxu0
        %v2572 = vadd.f32 %v2434, %v2571
        %v2573 = vpop.f32.mrb[0].mxu0
        %2574 = vmatprep.mubr.f32.mxu0 0.0
        %v2575 = vand.u32 %v2327, 4294901760
        %2576 = vmatmul.mubr.f32.gmra.mrb[0].mxu0 %v2575
        %v2577 = vpop.f32.mrb[0].mxu0
        %v2578 = vadd.f32 %v2444, %v2577
        %v2579 = vpop.f32.mrb[0].mxu0
        %2580 = vmatprep.mubr.f32.mxu0 0.0
        %v2581 = vand.u32 %v2329, 4294901760
        %2582 = vmatmul.mubr.f32.gmra.mrb[0].mxu0 %v2581
        %v2583 = vpop.f32.mrb[0].mxu0
        %v2584 = vadd.f32 %v2454, %v2583
        %v2585 = vpop.f32.mrb[0].mxu0
        %2586 = vmatprep.mubr.f32.mxu0 0.0
        %v2587 = vand.u32 %v2331, 4294901760
        %2588 = vmatmul.mubr.f32.gmra.mrb[0].mxu0 %v2587
        %v2589 = vpop.f32.mrb[0].mxu0
        %v2590 = vadd.f32 %v2464, %v2589
        %v2591 = vpop.f32.mrb[0].mxu0
        %2592 = vmatprep.mubr.f32.mxu0 0.0
        %v2593 = vand.u32 %v2333, 4294901760
        %2594 = vmatmul.mubr.f32.gmra.mrb[0].mxu0 %v2593
        %v2595 = vpop.f32.mrb[0].mxu0
        %v2596 = vadd.f32 %v2474, %v2595
        %v2597 = vpop.f32.mrb[0].mxu0
        %2598 = vmatprep.mubr.f32.mxu0 0.0
        %v2599 = vand.u32 %v2335, 4294901760
        %2600 = vmatmul.mubr.f32.gmra.mrb[0].mxu0 %v2599
        %v2601 = vpop.f32.mrb[0].mxu0
        %v2602 = vadd.f32 %v2484, %v2601
        %v2603 = vpop.f32.mrb[0].mxu0
        %2604 = vdwg.mxu0
        %2605 = vmatprep.subr.mxu0 0.0
        %v2606 = vand.u32 %v2339, 4294901760
        %v2607 = vsub.f32 %v2339, %v2606
        %2608 = vmatpush1.msra.mxu0 %v2607
        %2609 = vmatprep.subr.mxu0 0.0
        %2610 = vmatpush1.msra.mxu0 0.0
        %2611 = vmatprep.subr.mxu0 0.0
        %2612 = vmatpush1.msra.mxu0 0.0
        %2613 = vmatprep.subr.mxu0 0.0
        %2614 = vmatpush1.msra.mxu0 0.0
        %2615 = vmatprep.subr.mxu0 0.0
        %2616 = vmatpush1.msra.mxu0 0.0
        %2617 = vmatprep.subr.mxu0 0.0
        %2618 = vmatpush1.msra.mxu0 0.0
        %2619 = vmatprep.subr.mxu0 0.0
        %2620 = vmatpush1.msra.mxu0 0.0
        %2621 = vmatprep.subr.mxu0 0.0
        %2622 = vmatpush1.msra.mxu0 0.0
        %2623 = vmatprep.subr.mxu0 0.0
        %2624 = vmatpush1.msra.mxu0 0.0
        %2625 = vmatprep.subr.mxu0 0.0
        %2626 = vmatpush1.msra.mxu0 0.0
        %2627 = vmatprep.subr.mxu0 0.0
        %2628 = vmatpush1.msra.mxu0 0.0
        %2629 = vmatprep.subr.mxu0 0.0
        %2630 = vmatpush1.msra.mxu0 0.0
        %2631 = vmatprep.subr.mxu0 0.0
        %2632 = vmatpush1.msra.mxu0 0.0
        %2633 = vmatprep.subr.mxu0 0.0
        %2634 = vmatpush1.msra.mxu0 0.0
        %2635 = vmatprep.subr.mxu0 0.0
        %2636 = vmatpush1.msra.mxu0 0.0
        %2637 = vmatprep.subr.mxu0 0.0
        %2638 = vmatpush1.msra.mxu0 0.0
        %2639 = vmatprep.subr.mxu0 0.0
        %2640 = vmatpush1.msra.mxu0 0.0
        %2641 = vmatprep.subr.mxu0 0.0
        %2642 = vmatpush1.msra.mxu0 0.0
        %2643 = vmatprep.subr.mxu0 0.0
        %2644 = vmatpush1.msra.mxu0 0.0
        %2645 = vmatprep.subr.mxu0 0.0
        %2646 = vmatpush1.msra.mxu0 0.0
        %2647 = vmatprep.subr.mxu0 0.0
        %2648 = vmatpush1.msra.mxu0 0.0
        %2649 = vmatprep.subr.mxu0 0.0
        %2650 = vmatpush1.msra.mxu0 0.0
        %2651 = vmatprep.subr.mxu0 0.0
        %2652 = vmatpush1.msra.mxu0 0.0
        %2653 = vmatprep.subr.mxu0 0.0
        %2654 = vmatpush1.msra.mxu0 0.0
        %2655 = vmatprep.subr.mxu0 0.0
        %2656 = vmatpush1.msra.mxu0 0.0
        %2657 = vmatprep.subr.mxu0 0.0
        %2658 = vmatpush1.msra.mxu0 0.0
        %2659 = vmatprep.subr.mxu0 0.0
        %2660 = vmatpush1.msra.mxu0 0.0
        %2661 = vmatprep.subr.mxu0 0.0
        %2662 = vmatpush1.msra.mxu0 0.0
        %2663 = vmatprep.subr.mxu0 0.0
        %2664 = vmatpush1.msra.mxu0 0.0
        %2665 = vmatprep.subr.mxu0 0.0
        %2666 = vmatpush1.msra.mxu0 0.0
        %2667 = vmatprep.subr.mxu0 0.0
        %2668 = vmatpush1.msra.mxu0 0.0
        %2669 = vmatprep.subr.mxu0 0.0
        %2670 = vmatpush1.msra.mxu0 0.0
        %2671 = vmatprep.mubr.f32.mxu0 0.0
        %v2672 = vand.u32 %v2321, 4294901760
        %v2673 = vsub.f32 %v2321, %v2672
        %2674 = vmatmul.mubr.f32.gmra.mrb[0].mxu0 %v2673
        %v2675 = vpop.f32.mrb[0].mxu0
        %v2676 = vadd.f32 %v2560, %v2675
        %v2677 = vpop.f32.mrb[0].mxu0
        %2678 = vmatprep.mubr.f32.mxu0 0.0
        %v2679 = vand.u32 %v2323, 4294901760
        %v2680 = vsub.f32 %v2323, %v2679
        %2681 = vmatmul.mubr.f32.gmra.mrb[0].mxu0 %v2680
        %v2682 = vpop.f32.mrb[0].mxu0
        %v2683 = vadd.f32 %v2566, %v2682
        %v2684 = vpop.f32.mrb[0].mxu0
        %2685 = vmatprep.mubr.f32.mxu0 0.0
        %v2686 = vand.u32 %v2325, 4294901760
        %v2687 = vsub.f32 %v2325, %v2686
        %2688 = vmatmul.mubr.f32.gmra.mrb[0].mxu0 %v2687
        %v2689 = vpop.f32.mrb[0].mxu0
        %v2690 = vadd.f32 %v2572, %v2689
        %v2691 = vpop.f32.mrb[0].mxu0
        %2692 = vmatprep.mubr.f32.mxu0 0.0
        %v2693 = vand.u32 %v2327, 4294901760
        %v2694 = vsub.f32 %v2327, %v2693
        %2695 = vmatmul.mubr.f32.gmra.mrb[0].mxu0 %v2694
        %v2696 = vpop.f32.mrb[0].mxu0
        %v2697 = vadd.f32 %v2578, %v2696
        %v2698 = vpop.f32.mrb[0].mxu0
        %2699 = vmatprep.mubr.f32.mxu0 0.0
        %v2700 = vand.u32 %v2329, 4294901760
        %v2701 = vsub.f32 %v2329, %v2700
        %2702 = vmatmul.mubr.f32.gmra.mrb[0].mxu0 %v2701
        %v2703 = vpop.f32.mrb[0].mxu0
        %v2704 = vadd.f32 %v2584, %v2703
        %v2705 = vpop.f32.mrb[0].mxu0
        %2706 = vmatprep.mubr.f32.mxu0 0.0
        %v2707 = vand.u32 %v2331, 4294901760
        %v2708 = vsub.f32 %v2331, %v2707
        %2709 = vmatmul.mubr.f32.gmra.mrb[0].mxu0 %v2708
        %v2710 = vpop.f32.mrb[0].mxu0
        %v2711 = vadd.f32 %v2590, %v2710
        %v2712 = vpop.f32.mrb[0].mxu0
        %2713 = vmatprep.mubr.f32.mxu0 0.0
        %v2714 = vand.u32 %v2333, 4294901760
        %v2715 = vsub.f32 %v2333, %v2714
        %2716 = vmatmul.mubr.f32.gmra.mrb[0].mxu0 %v2715
        %v2717 = vpop.f32.mrb[0].mxu0
        %v2718 = vadd.f32 %v2596, %v2717
        %v2719 = vpop.f32.mrb[0].mxu0
        %2720 = vmatprep.mubr.f32.mxu0 0.0
        %v2721 = vand.u32 %v2335, 4294901760
        %v2722 = vsub.f32 %v2335, %v2721
        %2723 = vmatmul.mubr.f32.gmra.mrb[0].mxu0 %v2722
        %v2724 = vpop.f32.mrb[0].mxu0
        %v2725 = vadd.f32 %v2602, %v2724
        %v2726 = vpop.f32.mrb[0].mxu0
        %2727 = vdwg.mxu0
        %2728 = vmatprep.subr.mxu0 0.0
        %v2729 = vand.u32 %v2339, 4294901760
        %2730 = vmatpush1.msra.mxu0 %v2729
        %2731 = vmatprep.subr.mxu0 0.0
        %2732 = vmatpush1.msra.mxu0 0.0
        %2733 = vmatprep.subr.mxu0 0.0
        %2734 = vmatpush1.msra.mxu0 0.0
        %2735 = vmatprep.subr.mxu0 0.0
        %2736 = vmatpush1.msra.mxu0 0.0
        %2737 = vmatprep.subr.mxu0 0.0
        %2738 = vmatpush1.msra.mxu0 0.0
        %2739 = vmatprep.subr.mxu0 0.0
        %2740 = vmatpush1.msra.mxu0 0.0
        %2741 = vmatprep.subr.mxu0 0.0
        %2742 = vmatpush1.msra.mxu0 0.0
        %2743 = vmatprep.subr.mxu0 0.0
        %2744 = vmatpush1.msra.mxu0 0.0
        %2745 = vmatprep.subr.mxu0 0.0
        %2746 = vmatpush1.msra.mxu0 0.0
        %2747 = vmatprep.subr.mxu0 0.0
        %2748 = vmatpush1.msra.mxu0 0.0
        %2749 = vmatprep.subr.mxu0 0.0
        %2750 = vmatpush1.msra.mxu0 0.0
        %2751 = vmatprep.subr.mxu0 0.0
        %2752 = vmatpush1.msra.mxu0 0.0
        %2753 = vmatprep.subr.mxu0 0.0
        %2754 = vmatpush1.msra.mxu0 0.0
        %2755 = vmatprep.subr.mxu0 0.0
        %2756 = vmatpush1.msra.mxu0 0.0
        %2757 = vmatprep.subr.mxu0 0.0
        %2758 = vmatpush1.msra.mxu0 0.0
        %2759 = vmatprep.subr.mxu0 0.0
        %2760 = vmatpush1.msra.mxu0 0.0
        %2761 = vmatprep.subr.mxu0 0.0
        %2762 = vmatpush1.msra.mxu0 0.0
        %2763 = vmatprep.subr.mxu0 0.0
        %2764 = vmatpush1.msra.mxu0 0.0
        %2765 = vmatprep.subr.mxu0 0.0
        %2766 = vmatpush1.msra.mxu0 0.0
        %2767 = vmatprep.subr.mxu0 0.0
        %2768 = vmatpush1.msra.mxu0 0.0
        %2769 = vmatprep.subr.mxu0 0.0
        %2770 = vmatpush1.msra.mxu0 0.0
        %2771 = vmatprep.subr.mxu0 0.0
        %2772 = vmatpush1.msra.mxu0 0.0
        %2773 = vmatprep.subr.mxu0 0.0
        %2774 = vmatpush1.msra.mxu0 0.0
        %2775 = vmatprep.subr.mxu0 0.0
        %2776 = vmatpush1.msra.mxu0 0.0
        %2777 = vmatprep.subr.mxu0 0.0
        %2778 = vmatpush1.msra.mxu0 0.0
        %2779 = vmatprep.subr.mxu0 0.0
        %2780 = vmatpush1.msra.mxu0 0.0
        %2781 = vmatprep.subr.mxu0 0.0
        %2782 = vmatpush1.msra.mxu0 0.0
        %2783 = vmatprep.subr.mxu0 0.0
        %2784 = vmatpush1.msra.mxu0 0.0
        %2785 = vmatprep.subr.mxu0 0.0
        %2786 = vmatpush1.msra.mxu0 0.0
        %2787 = vmatprep.subr.mxu0 0.0
        %2788 = vmatpush1.msra.mxu0 0.0
        %2789 = vmatprep.subr.mxu0 0.0
        %2790 = vmatpush1.msra.mxu0 0.0
        %2791 = vmatprep.subr.mxu0 0.0
        %2792 = vmatpush1.msra.mxu0 0.0
        %2793 = vmatprep.mubr.f32.mxu0 0.0
        %v2794 = vand.u32 %v2321, 4294901760
        %v2795 = vsub.f32 %v2321, %v2794
        %v2796 = vand.u32 %v2795, 4294901760
        %2797 = vmatmul.mubr.f32.gmra.mrb[0].mxu0 %v2796
        %v2798 = vpop.f32.mrb[0].mxu0
        %v2799 = vadd.f32 %v2676, %v2798
        %v2800 = vpop.f32.mrb[0].mxu0
        %2801 = vmatprep.mubr.f32.mxu0 0.0
        %v2802 = vand.u32 %v2323, 4294901760
        %v2803 = vsub.f32 %v2323, %v2802
        %v2804 = vand.u32 %v2803, 4294901760
        %2805 = vmatmul.mubr.f32.gmra.mrb[0].mxu0 %v2804
        %v2806 = vpop.f32.mrb[0].mxu0
        %v2807 = vadd.f32 %v2683, %v2806
        %v2808 = vpop.f32.mrb[0].mxu0
        %2809 = vmatprep.mubr.f32.mxu0 0.0
        %v2810 = vand.u32 %v2325, 4294901760
        %v2811 = vsub.f32 %v2325, %v2810
        %v2812 = vand.u32 %v2811, 4294901760
        %2813 = vmatmul.mubr.f32.gmra.mrb[0].mxu0 %v2812
        %v2814 = vpop.f32.mrb[0].mxu0
        %v2815 = vadd.f32 %v2690, %v2814
        %v2816 = vpop.f32.mrb[0].mxu0
        %2817 = vmatprep.mubr.f32.mxu0 0.0
        %v2818 = vand.u32 %v2327, 4294901760
        %v2819 = vsub.f32 %v2327, %v2818
        %v2820 = vand.u32 %v2819, 4294901760
        %2821 = vmatmul.mubr.f32.gmra.mrb[0].mxu0 %v2820
        %v2822 = vpop.f32.mrb[0].mxu0
        %v2823 = vadd.f32 %v2697, %v2822
        %v2824 = vpop.f32.mrb[0].mxu0
        %2825 = vmatprep.mubr.f32.mxu0 0.0
        %v2826 = vand.u32 %v2329, 4294901760
        %v2827 = vsub.f32 %v2329, %v2826
        %v2828 = vand.u32 %v2827, 4294901760
        %2829 = vmatmul.mubr.f32.gmra.mrb[0].mxu0 %v2828
        %v2830 = vpop.f32.mrb[0].mxu0
        %v2831 = vadd.f32 %v2704, %v2830
        %v2832 = vpop.f32.mrb[0].mxu0
        %2833 = vmatprep.mubr.f32.mxu0 0.0
        %v2834 = vand.u32 %v2331, 4294901760
        %v2835 = vsub.f32 %v2331, %v2834
        %v2836 = vand.u32 %v2835, 4294901760
        %2837 = vmatmul.mubr.f32.gmra.mrb[0].mxu0 %v2836
        %v2838 = vpop.f32.mrb[0].mxu0
        %v2839 = vadd.f32 %v2711, %v2838
        %v2840 = vpop.f32.mrb[0].mxu0
        %2841 = vmatprep.mubr.f32.mxu0 0.0
        %v2842 = vand.u32 %v2333, 4294901760
        %v2843 = vsub.f32 %v2333, %v2842
        %v2844 = vand.u32 %v2843, 4294901760
        %2845 = vmatmul.mubr.f32.gmra.mrb[0].mxu0 %v2844
        %v2846 = vpop.f32.mrb[0].mxu0
        %v2847 = vadd.f32 %v2718, %v2846
        %v2848 = vpop.f32.mrb[0].mxu0
        %2849 = vmatprep.mubr.f32.mxu0 0.0
        %v2850 = vand.u32 %v2335, 4294901760
        %v2851 = vsub.f32 %v2335, %v2850
        %v2852 = vand.u32 %v2851, 4294901760
        %2853 = vmatmul.mubr.f32.gmra.mrb[0].mxu0 %v2852
        %v2854 = vpop.f32.mrb[0].mxu0
        %v2855 = vadd.f32 %v2725, %v2854
        %v2856 = vpop.f32.mrb[0].mxu0
        %2857 = vdwg.mxu0
        %2858 = vmatprep.subr.mxu0 0.0
        %v2859 = vand.u32 %v2339, 4294901760
        %v2860 = vsub.f32 %v2339, %v2859
        %v2861 = vand.u32 %v2860, 4294901760
        %2862 = vmatpush1.msra.mxu0 %v2861
        %2863 = vmatprep.subr.mxu0 0.0
        %2864 = vmatpush1.msra.mxu0 0.0
        %2865 = vmatprep.subr.mxu0 0.0
        %2866 = vmatpush1.msra.mxu0 0.0
        %2867 = vmatprep.subr.mxu0 0.0
        %2868 = vmatpush1.msra.mxu0 0.0
        %2869 = vmatprep.subr.mxu0 0.0
        %2870 = vmatpush1.msra.mxu0 0.0
        %2871 = vmatprep.subr.mxu0 0.0
        %2872 = vmatpush1.msra.mxu0 0.0
        %2873 = vmatprep.subr.mxu0 0.0
        %2874 = vmatpush1.msra.mxu0 0.0
        %2875 = vmatprep.subr.mxu0 0.0
        %2876 = vmatpush1.msra.mxu0 0.0
        %2877 = vmatprep.subr.mxu0 0.0
        %2878 = vmatpush1.msra.mxu0 0.0
        %2879 = vmatprep.subr.mxu0 0.0
        %2880 = vmatpush1.msra.mxu0 0.0
        %2881 = vmatprep.subr.mxu0 0.0
        %2882 = vmatpush1.msra.mxu0 0.0
        %2883 = vmatprep.subr.mxu0 0.0
        %2884 = vmatpush1.msra.mxu0 0.0
        %2885 = vmatprep.subr.mxu0 0.0
        %2886 = vmatpush1.msra.mxu0 0.0
        %2887 = vmatprep.subr.mxu0 0.0
        %2888 = vmatpush1.msra.mxu0 0.0
        %2889 = vmatprep.subr.mxu0 0.0
        %2890 = vmatpush1.msra.mxu0 0.0
        %2891 = vmatprep.subr.mxu0 0.0
        %2892 = vmatpush1.msra.mxu0 0.0
        %2893 = vmatprep.subr.mxu0 0.0
        %2894 = vmatpush1.msra.mxu0 0.0
        %2895 = vmatprep.subr.mxu0 0.0
        %2896 = vmatpush1.msra.mxu0 0.0
        %2897 = vmatprep.subr.mxu0 0.0
        %2898 = vmatpush1.msra.mxu0 0.0
        %2899 = vmatprep.subr.mxu0 0.0
        %2900 = vmatpush1.msra.mxu0 0.0
        %2901 = vmatprep.subr.mxu0 0.0
        %2902 = vmatpush1.msra.mxu0 0.0
        %2903 = vmatprep.subr.mxu0 0.0
        %2904 = vmatpush1.msra.mxu0 0.0
        %2905 = vmatprep.subr.mxu0 0.0
        %2906 = vmatpush1.msra.mxu0 0.0
        %2907 = vmatprep.subr.mxu0 0.0
        %2908 = vmatpush1.msra.mxu0 0.0
        %2909 = vmatprep.subr.mxu0 0.0
        %2910 = vmatpush1.msra.mxu0 0.0
        %2911 = vmatprep.subr.mxu0 0.0
        %2912 = vmatpush1.msra.mxu0 0.0
        %2913 = vmatprep.subr.mxu0 0.0
        %2914 = vmatpush1.msra.mxu0 0.0
        %2915 = vmatprep.subr.mxu0 0.0
        %2916 = vmatpush1.msra.mxu0 0.0
        %2917 = vmatprep.subr.mxu0 0.0
        %2918 = vmatpush1.msra.mxu0 0.0
        %2919 = vmatprep.subr.mxu0 0.0
        %2920 = vmatpush1.msra.mxu0 0.0
        %2921 = vmatprep.subr.mxu0 0.0
        %2922 = vmatpush1.msra.mxu0 0.0
        %2923 = vmatprep.subr.mxu0 0.0
        %2924 = vmatpush1.msra.mxu0 0.0
        %2925 = vmatprep.mubr.f32.mxu0 0.0
        %v2926 = vand.u32 %v2321, 4294901760
        %2927 = vmatmul.mubr.f32.gmra.mrb[0].mxu0 %v2926
        %v2928 = vpop.f32.mrb[0].mxu0
        %v2929 = vadd.f32 %v2799, %v2928
        %v2930 = vpop.f32.mrb[0].mxu0
        %2931 = vmatprep.mubr.f32.mxu0 0.0
        %v2932 = vand.u32 %v2323, 4294901760
        %2933 = vmatmul.mubr.f32.gmra.mrb[0].mxu0 %v2932
        %v2934 = vpop.f32.mrb[0].mxu0
        %v2935 = vadd.f32 %v2807, %v2934
        %v2936 = vpop.f32.mrb[0].mxu0
        %2937 = vmatprep.mubr.f32.mxu0 0.0
        %v2938 = vand.u32 %v2325, 4294901760
        %2939 = vmatmul.mubr.f32.gmra.mrb[0].mxu0 %v2938
        %v2940 = vpop.f32.mrb[0].mxu0
        %v2941 = vadd.f32 %v2815, %v2940
        %v2942 = vpop.f32.mrb[0].mxu0
        %2943 = vmatprep.mubr.f32.mxu0 0.0
        %v2944 = vand.u32 %v2327, 4294901760
        %2945 = vmatmul.mubr.f32.gmra.mrb[0].mxu0 %v2944
        %v2946 = vpop.f32.mrb[0].mxu0
        %v2947 = vadd.f32 %v2823, %v2946
        %v2948 = vpop.f32.mrb[0].mxu0
        %2949 = vmatprep.mubr.f32.mxu0 0.0
        %v2950 = vand.u32 %v2329, 4294901760
        %2951 = vmatmul.mubr.f32.gmra.mrb[0].mxu0 %v2950
        %v2952 = vpop.f32.mrb[0].mxu0
        %v2953 = vadd.f32 %v2831, %v2952
        %v2954 = vpop.f32.mrb[0].mxu0
        %2955 = vmatprep.mubr.f32.mxu0 0.0
        %v2956 = vand.u32 %v2331, 4294901760
        %2957 = vmatmul.mubr.f32.gmra.mrb[0].mxu0 %v2956
        %v2958 = vpop.f32.mrb[0].mxu0
        %v2959 = vadd.f32 %v2839, %v2958
        %v2960 = vpop.f32.mrb[0].mxu0
        %2961 = vmatprep.mubr.f32.mxu0 0.0
        %v2962 = vand.u32 %v2333, 4294901760
        %2963 = vmatmul.mubr.f32.gmra.mrb[0].mxu0 %v2962
        %v2964 = vpop.f32.mrb[0].mxu0
        %v2965 = vadd.f32 %v2847, %v2964
        %v2966 = vpop.f32.mrb[0].mxu0
        %2967 = vmatprep.mubr.f32.mxu0 0.0
        %v2968 = vand.u32 %v2335, 4294901760
        %2969 = vmatmul.mubr.f32.gmra.mrb[0].mxu0 %v2968
        %v2970 = vpop.f32.mrb[0].mxu0
        %v2971 = vadd.f32 %v2855, %v2970
        %v2972 = vpop.f32.mrb[0].mxu0
        %2973 = vdwg.mxu0
        %2974 = vmatprep.subr.mxu0 0.0
        %v2975 = vand.u32 %v2339, 4294901760
        %2976 = vmatpush1.msra.mxu0 %v2975
        %2977 = vmatprep.subr.mxu0 0.0
        %2978 = vmatpush1.msra.mxu0 0.0
        %2979 = vmatprep.subr.mxu0 0.0
        %2980 = vmatpush1.msra.mxu0 0.0
        %2981 = vmatprep.subr.mxu0 0.0
        %2982 = vmatpush1.msra.mxu0 0.0
        %2983 = vmatprep.subr.mxu0 0.0
        %2984 = vmatpush1.msra.mxu0 0.0
        %2985 = vmatprep.subr.mxu0 0.0
        %2986 = vmatpush1.msra.mxu0 0.0
        %2987 = vmatprep.subr.mxu0 0.0
        %2988 = vmatpush1.msra.mxu0 0.0
        %2989 = vmatprep.subr.mxu0 0.0
        %2990 = vmatpush1.msra.mxu0 0.0
        %2991 = vmatprep.subr.mxu0 0.0
        %2992 = vmatpush1.msra.mxu0 0.0
        %2993 = vmatprep.subr.mxu0 0.0
        %2994 = vmatpush1.msra.mxu0 0.0
        %2995 = vmatprep.subr.mxu0 0.0
        %2996 = vmatpush1.msra.mxu0 0.0
        %2997 = vmatprep.subr.mxu0 0.0
        %2998 = vmatpush1.msra.mxu0 0.0
        %2999 = vmatprep.subr.mxu0 0.0
        %3000 = vmatpush1.msra.mxu0 0.0
        %3001 = vmatprep.subr.mxu0 0.0
        %3002 = vmatpush1.msra.mxu0 0.0
        %3003 = vmatprep.subr.mxu0 0.0
        %3004 = vmatpush1.msra.mxu0 0.0
        %3005 = vmatprep.subr.mxu0 0.0
        %3006 = vmatpush1.msra.mxu0 0.0
        %3007 = vmatprep.subr.mxu0 0.0
        %3008 = vmatpush1.msra.mxu0 0.0
        %3009 = vmatprep.subr.mxu0 0.0
        %3010 = vmatpush1.msra.mxu0 0.0
        %3011 = vmatprep.subr.mxu0 0.0
        %3012 = vmatpush1.msra.mxu0 0.0
        %3013 = vmatprep.subr.mxu0 0.0
        %3014 = vmatpush1.msra.mxu0 0.0
        %3015 = vmatprep.subr.mxu0 0.0
        %3016 = vmatpush1.msra.mxu0 0.0
        %3017 = vmatprep.subr.mxu0 0.0
        %3018 = vmatpush1.msra.mxu0 0.0
        %3019 = vmatprep.subr.mxu0 0.0
        %3020 = vmatpush1.msra.mxu0 0.0
        %3021 = vmatprep.subr.mxu0 0.0
        %3022 = vmatpush1.msra.mxu0 0.0
        %3023 = vmatprep.subr.mxu0 0.0
        %3024 = vmatpush1.msra.mxu0 0.0
        %3025 = vmatprep.subr.mxu0 0.0
        %3026 = vmatpush1.msra.mxu0 0.0
        %3027 = vmatprep.subr.mxu0 0.0
        %3028 = vmatpush1.msra.mxu0 0.0
        %3029 = vmatprep.subr.mxu0 0.0
        %3030 = vmatpush1.msra.mxu0 0.0
        %3031 = vmatprep.subr.mxu0 0.0
        %3032 = vmatpush1.msra.mxu0 0.0
        %3033 = vmatprep.subr.mxu0 0.0
        %3034 = vmatpush1.msra.mxu0 0.0
        %3035 = vmatprep.subr.mxu0 0.0
        %3036 = vmatpush1.msra.mxu0 0.0
        %3037 = vmatprep.subr.mxu0 0.0
        %3038 = vmatpush1.msra.mxu0 0.0
        %3039 = vmatprep.mubr.f32.mxu0 0.0
        %v3040 = vand.u32 %v2321, 4294901760
        %3041 = vmatmul.mubr.f32.gmra.mrb[0].mxu0 %v3040
        %v3042 = vpop.f32.mrb[0].mxu0
        %v3043 = vadd.f32 %v2929, %v3042
        %v3044 = vpop.f32.mrb[0].mxu0
        %3045 = vmatprep.mubr.f32.mxu0 0.0
        %v3046 = vand.u32 %v2323, 4294901760
        %3047 = vmatmul.mubr.f32.gmra.mrb[0].mxu0 %v3046
        %v3048 = vpop.f32.mrb[0].mxu0
        %v3049 = vadd.f32 %v2935, %v3048
        %v3050 = vpop.f32.mrb[0].mxu0
        %3051 = vmatprep.mubr.f32.mxu0 0.0
        %v3052 = vand.u32 %v2325, 4294901760
        %3053 = vmatmul.mubr.f32.gmra.mrb[0].mxu0 %v3052
        %v3054 = vpop.f32.mrb[0].mxu0
        %v3055 = vadd.f32 %v2941, %v3054
        %v3056 = vpop.f32.mrb[0].mxu0
        %3057 = vmatprep.mubr.f32.mxu0 0.0
        %v3058 = vand.u32 %v2327, 4294901760
        %3059 = vmatmul.mubr.f32.gmra.mrb[0].mxu0 %v3058
        %v3060 = vpop.f32.mrb[0].mxu0
        %v3061 = vadd.f32 %v2947, %v3060
        %v3062 = vpop.f32.mrb[0].mxu0
        %3063 = vmatprep.mubr.f32.mxu0 0.0
        %v3064 = vand.u32 %v2329, 4294901760
        %3065 = vmatmul.mubr.f32.gmra.mrb[0].mxu0 %v3064
        %v3066 = vpop.f32.mrb[0].mxu0
        %v3067 = vadd.f32 %v2953, %v3066
        %v3068 = vpop.f32.mrb[0].mxu0
        %3069 = vmatprep.mubr.f32.mxu0 0.0
        %v3070 = vand.u32 %v2331, 4294901760
        %3071 = vmatmul.mubr.f32.gmra.mrb[0].mxu0 %v3070
        %v3072 = vpop.f32.mrb[0].mxu0
        %v3073 = vadd.f32 %v2959, %v3072
        %v3074 = vpop.f32.mrb[0].mxu0
        %3075 = vmatprep.mubr.f32.mxu0 0.0
        %v3076 = vand.u32 %v2333, 4294901760
        %3077 = vmatmul.mubr.f32.gmra.mrb[0].mxu0 %v3076
        %v3078 = vpop.f32.mrb[0].mxu0
        %v3079 = vadd.f32 %v2965, %v3078
        %v3080 = vpop.f32.mrb[0].mxu0
        %3081 = vmatprep.mubr.f32.mxu0 0.0
        %v3082 = vand.u32 %v2335, 4294901760
        %3083 = vmatmul.mubr.f32.gmra.mrb[0].mxu0 %v3082
        %v3084 = vpop.f32.mrb[0].mxu0
        %v3085 = vadd.f32 %v2971, %v3084
        %v3086 = vpop.f32.mrb[0].mxu0
        %3087 = vdwg.mxu0
        %v3152 = vlaneseq
        %v3153 = vshrl.u32 %v3152, 7
        %v3154 = vsub.s32 %v2000, %v3153
        %v3155 = vrot.slane %v1744, %v3154
        %v3156 = vlaneseq
        %v3157 = vshrl.u32 %v3156, 7
        %v3158 = vsub.s32 %v2000, %v3157
        %v3159 = vrot.slane %v1747, %v3158
        %v3160 = vlaneseq
        %v3161 = vshrl.u32 %v3160, 7
        %v3162 = vsub.s32 %v2000, %v3161
        %v3163 = vrot.slane %v1750, %v3162
        %v3164 = vlaneseq
        %v3165 = vshrl.u32 %v3164, 7
        %v3166 = vsub.s32 %v2000, %v3165
        %v3167 = vrot.slane %v1753, %v3166
        %v3168 = vlaneseq
        %v3169 = vshrl.u32 %v3168, 7
        %v3170 = vsub.s32 %v2000, %v3169
        %v3171 = vrot.slane %v1756, %v3170
        %v3172 = vlaneseq
        %v3173 = vshrl.u32 %v3172, 7
        %v3174 = vsub.s32 %v2000, %v3173
        %v3175 = vrot.slane %v1759, %v3174
        %v3176 = vlaneseq
        %v3177 = vshrl.u32 %v3176, 7
        %v3178 = vsub.s32 %v2000, %v3177
        %v3179 = vrot.slane %v1762, %v3178
        %v3180 = vlaneseq
        %v3181 = vshrl.u32 %v3180, 7
        %v3182 = vsub.s32 %v2000, %v3181
        %v3183 = vrot.slane %v1765, %v3182
        %v3184 = vlaneseq
        %v3185 = vshrl.u32 %v3184, 7
        %v3186 = vsub.s32 %v2000, %v3185
        %v3187 = vrot.slane %v1768, %v3186
        %v3188 = vlaneseq
        %v3189 = vshrl.u32 %v3188, 7
        %v3190 = vsub.s32 %v2000, %v3189
        %v3191 = vrot.slane %v1771, %v3190
        %v3192 = vlaneseq
        %v3193 = vshrl.u32 %v3192, 7
        %v3194 = vsub.s32 %v2000, %v3193
        %v3195 = vrot.slane %v1774, %v3194
        %v3196 = vlaneseq
        %v3197 = vshrl.u32 %v3196, 7
        %v3198 = vsub.s32 %v2000, %v3197
        %v3199 = vrot.slane %v1777, %v3198
        %v3200 = vlaneseq
        %v3201 = vshrl.u32 %v3200, 7
        %v3202 = vsub.s32 %v2000, %v3201
        %v3203 = vrot.slane %v1780, %v3202
        %v3204 = vlaneseq
        %v3205 = vshrl.u32 %v3204, 7
        %v3206 = vsub.s32 %v2000, %v3205
        %v3207 = vrot.slane %v1783, %v3206
        %v3208 = vlaneseq
        %v3209 = vshrl.u32 %v3208, 7
        %v3210 = vsub.s32 %v2000, %v3209
        %v3211 = vrot.slane %v1786, %v3210
        %v3212 = vlaneseq
        %v3213 = vshrl.u32 %v3212, 7
        %v3214 = vsub.s32 %v2000, %v3213
        %v3215 = vrot.slane %v1789, %v3214
        %v3216 = vlaneseq
        %v3217 = vshrl.u32 %v3216, 7
        %v3218 = vsub.s32 %v2000, %v3217
        %v3219 = vrot.slane %v1792, %v3218
        %v3220 = vlaneseq
        %v3221 = vshrl.u32 %v3220, 7
        %v3222 = vsub.s32 %v2000, %v3221
        %v3223 = vrot.slane %v1795, %v3222
        %v3224 = vlaneseq
        %v3225 = vshrl.u32 %v3224, 7
        %v3226 = vsub.s32 %v2000, %v3225
        %v3227 = vrot.slane %v1798, %v3226
        %v3228 = vlaneseq
        %v3229 = vshrl.u32 %v3228, 7
        %v3230 = vsub.s32 %v2000, %v3229
        %v3231 = vrot.slane %v1801, %v3230
        %v3232 = vlaneseq
        %v3233 = vshrl.u32 %v3232, 7
        %v3234 = vsub.s32 %v2000, %v3233
        %v3235 = vrot.slane %v1804, %v3234
        %v3236 = vlaneseq
        %v3237 = vshrl.u32 %v3236, 7
        %v3238 = vsub.s32 %v2000, %v3237
        %v3239 = vrot.slane %v1807, %v3238
        %v3240 = vlaneseq
        %v3241 = vshrl.u32 %v3240, 7
        %v3242 = vsub.s32 %v2000, %v3241
        %v3243 = vrot.slane %v1810, %v3242
        %v3244 = vlaneseq
        %v3245 = vshrl.u32 %v3244, 7
        %v3246 = vsub.s32 %v2000, %v3245
        %v3247 = vrot.slane %v1813, %v3246
        %v3248 = vlaneseq
        %v3249 = vshrl.u32 %v3248, 7
        %v3250 = vsub.s32 %v2000, %v3249
        %v3251 = vrot.slane %v1816, %v3250
        %v3252 = vlaneseq
        %v3253 = vshrl.u32 %v3252, 7
        %v3254 = vsub.s32 %v2000, %v3253
        %v3255 = vrot.slane %v1819, %v3254
        %v3256 = vlaneseq
        %v3257 = vshrl.u32 %v3256, 7
        %v3258 = vsub.s32 %v2000, %v3257
        %v3259 = vrot.slane %v1822, %v3258
        %v3260 = vlaneseq
        %v3261 = vshrl.u32 %v3260, 7
        %v3262 = vsub.s32 %v2000, %v3261
        %v3263 = vrot.slane %v1825, %v3262
        %v3264 = vlaneseq
        %v3265 = vshrl.u32 %v3264, 7
        %v3266 = vsub.s32 %v2000, %v3265
        %v3267 = vrot.slane %v1828, %v3266
        %v3268 = vlaneseq
        %v3269 = vshrl.u32 %v3268, 7
        %v3270 = vsub.s32 %v2000, %v3269
        %v3271 = vrot.slane %v1831, %v3270
        %v3272 = vlaneseq
        %v3273 = vshrl.u32 %v3272, 7
        %v3274 = vsub.s32 %v2000, %v3273
        %v3275 = vrot.slane %v1834, %v3274
        %v3276 = vlaneseq
        %v3277 = vshrl.u32 %v3276, 7
        %v3278 = vsub.s32 %v2000, %v3277
        %v3279 = vrot.slane %v1837, %v3278
        %v3280 = vlaneseq
        %v3281 = vshrl.u32 %v3280, 7
        %v3282 = vsub.s32 %v2000, %v3281
        %v3283 = vrot.slane %v1840, %v3282
        %v3284 = vlaneseq
        %v3285 = vshrl.u32 %v3284, 7
        %v3286 = vsub.s32 %v2000, %v3285
        %v3287 = vrot.slane %v1843, %v3286
        %v3288 = vlaneseq
        %v3289 = vshrl.u32 %v3288, 7
        %v3290 = vsub.s32 %v2000, %v3289
        %v3291 = vrot.slane %v1846, %v3290
        %v3292 = vlaneseq
        %v3293 = vshrl.u32 %v3292, 7
        %v3294 = vsub.s32 %v2000, %v3293
        %v3295 = vrot.slane %v1849, %v3294
        %v3296 = vlaneseq
        %v3297 = vshrl.u32 %v3296, 7
        %v3298 = vsub.s32 %v2000, %v3297
        %v3299 = vrot.slane %v1852, %v3298
        %v3300 = vlaneseq
        %v3301 = vshrl.u32 %v3300, 7
        %v3302 = vsub.s32 %v2000, %v3301
        %v3303 = vrot.slane %v1855, %v3302
        %v3304 = vlaneseq
        %v3305 = vshrl.u32 %v3304, 7
        %v3306 = vsub.s32 %v2000, %v3305
        %v3307 = vrot.slane %v1858, %v3306
        %v3308 = vlaneseq
        %v3309 = vshrl.u32 %v3308, 7
        %v3310 = vsub.s32 %v2000, %v3309
        %v3311 = vrot.slane %v1861, %v3310
        %v3312 = vlaneseq
        %v3313 = vshrl.u32 %v3312, 7
        %v3314 = vsub.s32 %v2000, %v3313
        %v3315 = vrot.slane %v1864, %v3314
        %v3316 = vlaneseq
        %v3317 = vshrl.u32 %v3316, 7
        %v3318 = vsub.s32 %v2000, %v3317
        %v3319 = vrot.slane %v1867, %v3318
        %v3320 = vlaneseq
        %v3321 = vshrl.u32 %v3320, 7
        %v3322 = vsub.s32 %v2000, %v3321
        %v3323 = vrot.slane %v1870, %v3322
        %v3324 = vlaneseq
        %v3325 = vshrl.u32 %v3324, 7
        %v3326 = vsub.s32 %v2000, %v3325
        %v3327 = vrot.slane %v1873, %v3326
        %v3328 = vlaneseq
        %v3329 = vshrl.u32 %v3328, 7
        %v3330 = vsub.s32 %v2000, %v3329
        %v3331 = vrot.slane %v1876, %v3330
        %v3332 = vlaneseq
        %v3333 = vshrl.u32 %v3332, 7
        %v3334 = vsub.s32 %v2000, %v3333
        %v3335 = vrot.slane %v1879, %v3334
        %v3336 = vlaneseq
        %v3337 = vshrl.u32 %v3336, 7
        %v3338 = vsub.s32 %v2000, %v3337
        %v3339 = vrot.slane %v1882, %v3338
        %v3340 = vlaneseq
        %v3341 = vshrl.u32 %v3340, 7
        %v3342 = vsub.s32 %v2000, %v3341
        %v3343 = vrot.slane %v1885, %v3342
        %v3344 = vlaneseq
        %v3345 = vshrl.u32 %v3344, 7
        %v3346 = vsub.s32 %v2000, %v3345
        %v3347 = vrot.slane %v1888, %v3346
        %v3348 = vlaneseq
        %v3349 = vshrl.u32 %v3348, 7
        %v3350 = vsub.s32 %v2000, %v3349
        %v3351 = vrot.slane %v1891, %v3350
        %v3352 = vlaneseq
        %v3353 = vshrl.u32 %v3352, 7
        %v3354 = vsub.s32 %v2000, %v3353
        %v3355 = vrot.slane %v1894, %v3354
        %v3356 = vlaneseq
        %v3357 = vshrl.u32 %v3356, 7
        %v3358 = vsub.s32 %v2000, %v3357
        %v3359 = vrot.slane %v1897, %v3358
        %v3360 = vlaneseq
        %v3361 = vshrl.u32 %v3360, 7
        %v3362 = vsub.s32 %v2000, %v3361
        %v3363 = vrot.slane %v1900, %v3362
        %v3364 = vlaneseq
        %v3365 = vshrl.u32 %v3364, 7
        %v3366 = vsub.s32 %v2000, %v3365
        %v3367 = vrot.slane %v1903, %v3366
        %v3368 = vlaneseq
        %v3369 = vshrl.u32 %v3368, 7
        %v3370 = vsub.s32 %v2000, %v3369
        %v3371 = vrot.slane %v1906, %v3370
        %v3372 = vlaneseq
        %v3373 = vshrl.u32 %v3372, 7
        %v3374 = vsub.s32 %v2000, %v3373
        %v3375 = vrot.slane %v1909, %v3374
        %v3376 = vlaneseq
        %v3377 = vshrl.u32 %v3376, 7
        %v3378 = vsub.s32 %v2000, %v3377
        %v3379 = vrot.slane %v1912, %v3378
        %v3380 = vlaneseq
        %v3381 = vshrl.u32 %v3380, 7
        %v3382 = vsub.s32 %v2000, %v3381
        %v3383 = vrot.slane %v1915, %v3382
        %v3384 = vlaneseq
        %v3385 = vshrl.u32 %v3384, 7
        %v3386 = vsub.s32 %v2000, %v3385
        %v3387 = vrot.slane %v1918, %v3386
        %v3388 = vlaneseq
        %v3389 = vshrl.u32 %v3388, 7
        %v3390 = vsub.s32 %v2000, %v3389
        %v3391 = vrot.slane %v1921, %v3390
        %v3392 = vlaneseq
        %v3393 = vshrl.u32 %v3392, 7
        %v3394 = vsub.s32 %v2000, %v3393
        %v3395 = vrot.slane %v1924, %v3394
        %v3396 = vlaneseq
        %v3397 = vshrl.u32 %v3396, 7
        %v3398 = vsub.s32 %v2000, %v3397
        %v3399 = vrot.slane %v1927, %v3398
        %v3400 = vlaneseq
        %v3401 = vshrl.u32 %v3400, 7
        %v3402 = vsub.s32 %v2000, %v3401
        %v3403 = vrot.slane %v1930, %v3402
        %v3404 = vlaneseq
        %v3405 = vshrl.u32 %v3404, 7
        %v3406 = vsub.s32 %v2000, %v3405
        %v3407 = vrot.slane %v1933, %v3406
        %v3408 = vsel %vm2257, %v3159, %v3155
        %v3409 = vsel %vm2259, %v3163, %v3408
        %v3410 = vsel %vm2261, %v3167, %v3409
        %v3411 = vsel %vm2263, %v3171, %v3410
        %v3412 = vsel %vm2265, %v3175, %v3411
        %v3413 = vsel %vm2267, %v3179, %v3412
        %v3414 = vsel %vm2269, %v3183, %v3413
        %v3415 = vsel %vm2257, %v3191, %v3187
        %v3416 = vsel %vm2259, %v3195, %v3415
        %v3417 = vsel %vm2261, %v3199, %v3416
        %v3418 = vsel %vm2263, %v3203, %v3417
        %v3419 = vsel %vm2265, %v3207, %v3418
        %v3420 = vsel %vm2267, %v3211, %v3419
        %v3421 = vsel %vm2269, %v3215, %v3420
        %v3422 = vsel %vm2257, %v3223, %v3219
        %v3423 = vsel %vm2259, %v3227, %v3422
        %v3424 = vsel %vm2261, %v3231, %v3423
        %v3425 = vsel %vm2263, %v3235, %v3424
        %v3426 = vsel %vm2265, %v3239, %v3425
        %v3427 = vsel %vm2267, %v3243, %v3426
        %v3428 = vsel %vm2269, %v3247, %v3427
        %v3429 = vsel %vm2257, %v3255, %v3251
        %v3430 = vsel %vm2259, %v3259, %v3429
        %v3431 = vsel %vm2261, %v3263, %v3430
        %v3432 = vsel %vm2263, %v3267, %v3431
        %v3433 = vsel %vm2265, %v3271, %v3432
        %v3434 = vsel %vm2267, %v3275, %v3433
        %v3435 = vsel %vm2269, %v3279, %v3434
        %v3436 = vsel %vm2257, %v3287, %v3283
        %v3437 = vsel %vm2259, %v3291, %v3436
        %v3438 = vsel %vm2261, %v3295, %v3437
        %v3439 = vsel %vm2263, %v3299, %v3438
        %v3440 = vsel %vm2265, %v3303, %v3439
        %v3441 = vsel %vm2267, %v3307, %v3440
        %v3442 = vsel %vm2269, %v3311, %v3441
        %v3443 = vsel %vm2257, %v3319, %v3315
        %v3444 = vsel %vm2259, %v3323, %v3443
        %v3445 = vsel %vm2261, %v3327, %v3444
        %v3446 = vsel %vm2263, %v3331, %v3445
        %v3447 = vsel %vm2265, %v3335, %v3446
        %v3448 = vsel %vm2267, %v3339, %v3447
        %v3449 = vsel %vm2269, %v3343, %v3448
        %v3450 = vsel %vm2257, %v3351, %v3347
        %v3451 = vsel %vm2259, %v3355, %v3450
        %v3452 = vsel %vm2261, %v3359, %v3451
        %v3453 = vsel %vm2263, %v3363, %v3452
        %v3454 = vsel %vm2265, %v3367, %v3453
        %v3455 = vsel %vm2267, %v3371, %v3454
        %v3456 = vsel %vm2269, %v3375, %v3455
        %v3457 = vsel %vm2257, %v3383, %v3379
        %v3458 = vsel %vm2259, %v3387, %v3457
        %v3459 = vsel %vm2261, %v3391, %v3458
        %v3460 = vsel %vm2263, %v3395, %v3459
        %v3461 = vsel %vm2265, %v3399, %v3460
        %v3462 = vsel %vm2267, %v3403, %v3461
        %v3463 = vsel %vm2269, %v3407, %v3462
        %v3464 = vsel %vm2320, %v3414, 0
        %v3466 = vsel %vm2320, %v3421, 0
        %v3468 = vsel %vm2320, %v3428, 0
        %v3470 = vsel %vm2320, %v3435, 0
        %v3472 = vsel %vm2320, %v3442, 0
        %v3474 = vsel %vm2320, %v3449, 0
        %v3476 = vsel %vm2320, %v3456, 0
        %v3478 = vsel %vm2320, %v3463, 0
        %3480 = vmatprep.subr.mxu0 0.0
        %v3481 = vand.u32 %v2339, 4294901760
        %3482 = vmatpush1.msra.mxu0 %v3481
        %3483 = vmatprep.subr.mxu0 0.0
        %3484 = vmatpush1.msra.mxu0 0.0
        %3485 = vmatprep.subr.mxu0 0.0
        %3486 = vmatpush1.msra.mxu0 0.0
        %3487 = vmatprep.subr.mxu0 0.0
        %3488 = vmatpush1.msra.mxu0 0.0
        %3489 = vmatprep.subr.mxu0 0.0
        %3490 = vmatpush1.msra.mxu0 0.0
        %3491 = vmatprep.subr.mxu0 0.0
        %3492 = vmatpush1.msra.mxu0 0.0
        %3493 = vmatprep.subr.mxu0 0.0
        %3494 = vmatpush1.msra.mxu0 0.0
        %3495 = vmatprep.subr.mxu0 0.0
        %3496 = vmatpush1.msra.mxu0 0.0
        %3497 = vmatprep.subr.mxu0 0.0
        %3498 = vmatpush1.msra.mxu0 0.0
        %3499 = vmatprep.subr.mxu0 0.0
        %3500 = vmatpush1.msra.mxu0 0.0
        %3501 = vmatprep.subr.mxu0 0.0
        %3502 = vmatpush1.msra.mxu0 0.0
        %3503 = vmatprep.subr.mxu0 0.0
        %3504 = vmatpush1.msra.mxu0 0.0
        %3505 = vmatprep.subr.mxu0 0.0
        %3506 = vmatpush1.msra.mxu0 0.0
        %3507 = vmatprep.subr.mxu0 0.0
        %3508 = vmatpush1.msra.mxu0 0.0
        %3509 = vmatprep.subr.mxu0 0.0
        %3510 = vmatpush1.msra.mxu0 0.0
        %3511 = vmatprep.subr.mxu0 0.0
        %3512 = vmatpush1.msra.mxu0 0.0
        %3513 = vmatprep.subr.mxu0 0.0
        %3514 = vmatpush1.msra.mxu0 0.0
        %3515 = vmatprep.subr.mxu0 0.0
        %3516 = vmatpush1.msra.mxu0 0.0
        %3517 = vmatprep.subr.mxu0 0.0
        %3518 = vmatpush1.msra.mxu0 0.0
        %3519 = vmatprep.subr.mxu0 0.0
        %3520 = vmatpush1.msra.mxu0 0.0
        %3521 = vmatprep.subr.mxu0 0.0
        %3522 = vmatpush1.msra.mxu0 0.0
        %3523 = vmatprep.subr.mxu0 0.0
        %3524 = vmatpush1.msra.mxu0 0.0
        %3525 = vmatprep.subr.mxu0 0.0
        %3526 = vmatpush1.msra.mxu0 0.0
        %3527 = vmatprep.subr.mxu0 0.0
        %3528 = vmatpush1.msra.mxu0 0.0
        %3529 = vmatprep.subr.mxu0 0.0
        %3530 = vmatpush1.msra.mxu0 0.0
        %3531 = vmatprep.subr.mxu0 0.0
        %3532 = vmatpush1.msra.mxu0 0.0
        %3533 = vmatprep.subr.mxu0 0.0
        %3534 = vmatpush1.msra.mxu0 0.0
        %3535 = vmatprep.subr.mxu0 0.0
        %3536 = vmatpush1.msra.mxu0 0.0
        %3537 = vmatprep.subr.mxu0 0.0
        %3538 = vmatpush1.msra.mxu0 0.0
        %3539 = vmatprep.subr.mxu0 0.0
        %3540 = vmatpush1.msra.mxu0 0.0
        %3541 = vmatprep.subr.mxu0 0.0
        %3542 = vmatpush1.msra.mxu0 0.0
        %3543 = vmatprep.subr.mxu0 0.0
        %3544 = vmatpush1.msra.mxu0 0.0
        %3545 = vmatprep.mubr.f32.mxu0 0.0
        %v3546 = vand.u32 %v3464, 4294901760
        %v3547 = vsub.f32 %v3464, %v3546
        %v3548 = vand.u32 %v3547, 4294901760
        %v3549 = vsub.f32 %v3547, %v3548
        %v3550 = vand.u32 %v3549, 4294901760
        %3551 = vmatmul.mubr.f32.gmra.mrb[0].mxu0 %v3550
        %v3552 = vpop.f32.mrb[0].mxu0
        %v3553 = vadd.f32 0.0, %v3552
        %v3554 = vpop.f32.mrb[0].mxu0
        %3555 = vmatprep.mubr.f32.mxu0 0.0
        %v3556 = vand.u32 %v3466, 4294901760
        %v3557 = vsub.f32 %v3466, %v3556
        %v3558 = vand.u32 %v3557, 4294901760
        %v3559 = vsub.f32 %v3557, %v3558
        %v3560 = vand.u32 %v3559, 4294901760
        %3561 = vmatmul.mubr.f32.gmra.mrb[0].mxu0 %v3560
        %v3562 = vpop.f32.mrb[0].mxu0
        %v3563 = vadd.f32 0.0, %v3562
        %v3564 = vpop.f32.mrb[0].mxu0
        %3565 = vmatprep.mubr.f32.mxu0 0.0
        %v3566 = vand.u32 %v3468, 4294901760
        %v3567 = vsub.f32 %v3468, %v3566
        %v3568 = vand.u32 %v3567, 4294901760
        %v3569 = vsub.f32 %v3567, %v3568
        %v3570 = vand.u32 %v3569, 4294901760
        %3571 = vmatmul.mubr.f32.gmra.mrb[0].mxu0 %v3570
        %v3572 = vpop.f32.mrb[0].mxu0
        %v3573 = vadd.f32 0.0, %v3572
        %v3574 = vpop.f32.mrb[0].mxu0
        %3575 = vmatprep.mubr.f32.mxu0 0.0
        %v3576 = vand.u32 %v3470, 4294901760
        %v3577 = vsub.f32 %v3470, %v3576
        %v3578 = vand.u32 %v3577, 4294901760
        %v3579 = vsub.f32 %v3577, %v3578
        %v3580 = vand.u32 %v3579, 4294901760
        %3581 = vmatmul.mubr.f32.gmra.mrb[0].mxu0 %v3580
        %v3582 = vpop.f32.mrb[0].mxu0
        %v3583 = vadd.f32 0.0, %v3582
        %v3584 = vpop.f32.mrb[0].mxu0
        %3585 = vmatprep.mubr.f32.mxu0 0.0
        %v3586 = vand.u32 %v3472, 4294901760
        %v3587 = vsub.f32 %v3472, %v3586
        %v3588 = vand.u32 %v3587, 4294901760
        %v3589 = vsub.f32 %v3587, %v3588
        %v3590 = vand.u32 %v3589, 4294901760
        %3591 = vmatmul.mubr.f32.gmra.mrb[0].mxu0 %v3590
        %v3592 = vpop.f32.mrb[0].mxu0
        %v3593 = vadd.f32 0.0, %v3592
        %v3594 = vpop.f32.mrb[0].mxu0
        %3595 = vmatprep.mubr.f32.mxu0 0.0
        %v3596 = vand.u32 %v3474, 4294901760
        %v3597 = vsub.f32 %v3474, %v3596
        %v3598 = vand.u32 %v3597, 4294901760
        %v3599 = vsub.f32 %v3597, %v3598
        %v3600 = vand.u32 %v3599, 4294901760
        %3601 = vmatmul.mubr.f32.gmra.mrb[0].mxu0 %v3600
        %v3602 = vpop.f32.mrb[0].mxu0
        %v3603 = vadd.f32 0.0, %v3602
        %v3604 = vpop.f32.mrb[0].mxu0
        %3605 = vmatprep.mubr.f32.mxu0 0.0
        %v3606 = vand.u32 %v3476, 4294901760
        %v3607 = vsub.f32 %v3476, %v3606
        %v3608 = vand.u32 %v3607, 4294901760
        %v3609 = vsub.f32 %v3607, %v3608
        %v3610 = vand.u32 %v3609, 4294901760
        %3611 = vmatmul.mubr.f32.gmra.mrb[0].mxu0 %v3610
        %v3612 = vpop.f32.mrb[0].mxu0
        %v3613 = vadd.f32 0.0, %v3612
        %v3614 = vpop.f32.mrb[0].mxu0
        %3615 = vmatprep.mubr.f32.mxu0 0.0
        %v3616 = vand.u32 %v3478, 4294901760
        %v3617 = vsub.f32 %v3478, %v3616
        %v3618 = vand.u32 %v3617, 4294901760
        %v3619 = vsub.f32 %v3617, %v3618
        %v3620 = vand.u32 %v3619, 4294901760
        %3621 = vmatmul.mubr.f32.gmra.mrb[0].mxu0 %v3620
        %v3622 = vpop.f32.mrb[0].mxu0
        %v3623 = vadd.f32 0.0, %v3622
        %v3624 = vpop.f32.mrb[0].mxu0
        %3625 = vdwg.mxu0
        %3626 = vmatprep.subr.mxu0 0.0
        %v3627 = vand.u32 %v2339, 4294901760
        %v3628 = vsub.f32 %v2339, %v3627
        %v3629 = vand.u32 %v3628, 4294901760
        %v3630 = vsub.f32 %v3628, %v3629
        %v3631 = vand.u32 %v3630, 4294901760
        %3632 = vmatpush1.msra.mxu0 %v3631
        %3633 = vmatprep.subr.mxu0 0.0
        %3634 = vmatpush1.msra.mxu0 0.0
        %3635 = vmatprep.subr.mxu0 0.0
        %3636 = vmatpush1.msra.mxu0 0.0
        %3637 = vmatprep.subr.mxu0 0.0
        %3638 = vmatpush1.msra.mxu0 0.0
        %3639 = vmatprep.subr.mxu0 0.0
        %3640 = vmatpush1.msra.mxu0 0.0
        %3641 = vmatprep.subr.mxu0 0.0
        %3642 = vmatpush1.msra.mxu0 0.0
        %3643 = vmatprep.subr.mxu0 0.0
        %3644 = vmatpush1.msra.mxu0 0.0
        %3645 = vmatprep.subr.mxu0 0.0
        %3646 = vmatpush1.msra.mxu0 0.0
        %3647 = vmatprep.subr.mxu0 0.0
        %3648 = vmatpush1.msra.mxu0 0.0
        %3649 = vmatprep.subr.mxu0 0.0
        %3650 = vmatpush1.msra.mxu0 0.0
        %3651 = vmatprep.subr.mxu0 0.0
        %3652 = vmatpush1.msra.mxu0 0.0
        %3653 = vmatprep.subr.mxu0 0.0
        %3654 = vmatpush1.msra.mxu0 0.0
        %3655 = vmatprep.subr.mxu0 0.0
        %3656 = vmatpush1.msra.mxu0 0.0
        %3657 = vmatprep.subr.mxu0 0.0
        %3658 = vmatpush1.msra.mxu0 0.0
        %3659 = vmatprep.subr.mxu0 0.0
        %3660 = vmatpush1.msra.mxu0 0.0
        %3661 = vmatprep.subr.mxu0 0.0
        %3662 = vmatpush1.msra.mxu0 0.0
        %3663 = vmatprep.subr.mxu0 0.0
        %3664 = vmatpush1.msra.mxu0 0.0
        %3665 = vmatprep.subr.mxu0 0.0
        %3666 = vmatpush1.msra.mxu0 0.0
        %3667 = vmatprep.subr.mxu0 0.0
        %3668 = vmatpush1.msra.mxu0 0.0
        %3669 = vmatprep.subr.mxu0 0.0
        %3670 = vmatpush1.msra.mxu0 0.0
        %3671 = vmatprep.subr.mxu0 0.0
        %3672 = vmatpush1.msra.mxu0 0.0
        %3673 = vmatprep.subr.mxu0 0.0
        %3674 = vmatpush1.msra.mxu0 0.0
        %3675 = vmatprep.subr.mxu0 0.0
        %3676 = vmatpush1.msra.mxu0 0.0
        %3677 = vmatprep.subr.mxu0 0.0
        %3678 = vmatpush1.msra.mxu0 0.0
        %3679 = vmatprep.subr.mxu0 0.0
        %3680 = vmatpush1.msra.mxu0 0.0
        %3681 = vmatprep.subr.mxu0 0.0
        %3682 = vmatpush1.msra.mxu0 0.0
        %3683 = vmatprep.subr.mxu0 0.0
        %3684 = vmatpush1.msra.mxu0 0.0
        %3685 = vmatprep.subr.mxu0 0.0
        %3686 = vmatpush1.msra.mxu0 0.0
        %3687 = vmatprep.subr.mxu0 0.0
        %3688 = vmatpush1.msra.mxu0 0.0
        %3689 = vmatprep.subr.mxu0 0.0
        %3690 = vmatpush1.msra.mxu0 0.0
        %3691 = vmatprep.subr.mxu0 0.0
        %3692 = vmatpush1.msra.mxu0 0.0
        %3693 = vmatprep.subr.mxu0 0.0
        %3694 = vmatpush1.msra.mxu0 0.0
        %3695 = vmatprep.mubr.f32.mxu0 0.0
        %v3696 = vand.u32 %v3464, 4294901760
        %3697 = vmatmul.mubr.f32.gmra.mrb[0].mxu0 %v3696
        %v3698 = vpop.f32.mrb[0].mxu0
        %v3699 = vadd.f32 %v3553, %v3698
        %v3700 = vpop.f32.mrb[0].mxu0
        %3701 = vmatprep.mubr.f32.mxu0 0.0
        %v3702 = vand.u32 %v3466, 4294901760
        %3703 = vmatmul.mubr.f32.gmra.mrb[0].mxu0 %v3702
        %v3704 = vpop.f32.mrb[0].mxu0
        %v3705 = vadd.f32 %v3563, %v3704
        %v3706 = vpop.f32.mrb[0].mxu0
        %3707 = vmatprep.mubr.f32.mxu0 0.0
        %v3708 = vand.u32 %v3468, 4294901760
        %3709 = vmatmul.mubr.f32.gmra.mrb[0].mxu0 %v3708
        %v3710 = vpop.f32.mrb[0].mxu0
        %v3711 = vadd.f32 %v3573, %v3710
        %v3712 = vpop.f32.mrb[0].mxu0
        %3713 = vmatprep.mubr.f32.mxu0 0.0
        %v3714 = vand.u32 %v3470, 4294901760
        %3715 = vmatmul.mubr.f32.gmra.mrb[0].mxu0 %v3714
        %v3716 = vpop.f32.mrb[0].mxu0
        %v3717 = vadd.f32 %v3583, %v3716
        %v3718 = vpop.f32.mrb[0].mxu0
        %3719 = vmatprep.mubr.f32.mxu0 0.0
        %v3720 = vand.u32 %v3472, 4294901760
        %3721 = vmatmul.mubr.f32.gmra.mrb[0].mxu0 %v3720
        %v3722 = vpop.f32.mrb[0].mxu0
        %v3723 = vadd.f32 %v3593, %v3722
        %v3724 = vpop.f32.mrb[0].mxu0
        %3725 = vmatprep.mubr.f32.mxu0 0.0
        %v3726 = vand.u32 %v3474, 4294901760
        %3727 = vmatmul.mubr.f32.gmra.mrb[0].mxu0 %v3726
        %v3728 = vpop.f32.mrb[0].mxu0
        %v3729 = vadd.f32 %v3603, %v3728
        %v3730 = vpop.f32.mrb[0].mxu0
        %3731 = vmatprep.mubr.f32.mxu0 0.0
        %v3732 = vand.u32 %v3476, 4294901760
        %3733 = vmatmul.mubr.f32.gmra.mrb[0].mxu0 %v3732
        %v3734 = vpop.f32.mrb[0].mxu0
        %v3735 = vadd.f32 %v3613, %v3734
        %v3736 = vpop.f32.mrb[0].mxu0
        %3737 = vmatprep.mubr.f32.mxu0 0.0
        %v3738 = vand.u32 %v3478, 4294901760
        %3739 = vmatmul.mubr.f32.gmra.mrb[0].mxu0 %v3738
        %v3740 = vpop.f32.mrb[0].mxu0
        %v3741 = vadd.f32 %v3623, %v3740
        %v3742 = vpop.f32.mrb[0].mxu0
        %3743 = vdwg.mxu0
        %3744 = vmatprep.subr.mxu0 0.0
        %v3745 = vand.u32 %v2339, 4294901760
        %v3746 = vsub.f32 %v2339, %v3745
        %3747 = vmatpush1.msra.mxu0 %v3746
        %3748 = vmatprep.subr.mxu0 0.0
        %3749 = vmatpush1.msra.mxu0 0.0
        %3750 = vmatprep.subr.mxu0 0.0
        %3751 = vmatpush1.msra.mxu0 0.0
        %3752 = vmatprep.subr.mxu0 0.0
        %3753 = vmatpush1.msra.mxu0 0.0
        %3754 = vmatprep.subr.mxu0 0.0
        %3755 = vmatpush1.msra.mxu0 0.0
        %3756 = vmatprep.subr.mxu0 0.0
        %3757 = vmatpush1.msra.mxu0 0.0
        %3758 = vmatprep.subr.mxu0 0.0
        %3759 = vmatpush1.msra.mxu0 0.0
        %3760 = vmatprep.subr.mxu0 0.0
        %3761 = vmatpush1.msra.mxu0 0.0
        %3762 = vmatprep.subr.mxu0 0.0
        %3763 = vmatpush1.msra.mxu0 0.0
        %3764 = vmatprep.subr.mxu0 0.0
        %3765 = vmatpush1.msra.mxu0 0.0
        %3766 = vmatprep.subr.mxu0 0.0
        %3767 = vmatpush1.msra.mxu0 0.0
        %3768 = vmatprep.subr.mxu0 0.0
        %3769 = vmatpush1.msra.mxu0 0.0
        %3770 = vmatprep.subr.mxu0 0.0
        %3771 = vmatpush1.msra.mxu0 0.0
        %3772 = vmatprep.subr.mxu0 0.0
        %3773 = vmatpush1.msra.mxu0 0.0
        %3774 = vmatprep.subr.mxu0 0.0
        %3775 = vmatpush1.msra.mxu0 0.0
        %3776 = vmatprep.subr.mxu0 0.0
        %3777 = vmatpush1.msra.mxu0 0.0
        %3778 = vmatprep.subr.mxu0 0.0
        %3779 = vmatpush1.msra.mxu0 0.0
        %3780 = vmatprep.subr.mxu0 0.0
        %3781 = vmatpush1.msra.mxu0 0.0
        %3782 = vmatprep.subr.mxu0 0.0
        %3783 = vmatpush1.msra.mxu0 0.0
        %3784 = vmatprep.subr.mxu0 0.0
        %3785 = vmatpush1.msra.mxu0 0.0
        %3786 = vmatprep.subr.mxu0 0.0
        %3787 = vmatpush1.msra.mxu0 0.0
        %3788 = vmatprep.subr.mxu0 0.0
        %3789 = vmatpush1.msra.mxu0 0.0
        %3790 = vmatprep.subr.mxu0 0.0
        %3791 = vmatpush1.msra.mxu0 0.0
        %3792 = vmatprep.subr.mxu0 0.0
        %3793 = vmatpush1.msra.mxu0 0.0
        %3794 = vmatprep.subr.mxu0 0.0
        %3795 = vmatpush1.msra.mxu0 0.0
        %3796 = vmatprep.subr.mxu0 0.0
        %3797 = vmatpush1.msra.mxu0 0.0
        %3798 = vmatprep.subr.mxu0 0.0
        %3799 = vmatpush1.msra.mxu0 0.0
        %3800 = vmatprep.subr.mxu0 0.0
        %3801 = vmatpush1.msra.mxu0 0.0
        %3802 = vmatprep.subr.mxu0 0.0
        %3803 = vmatpush1.msra.mxu0 0.0
        %3804 = vmatprep.subr.mxu0 0.0
        %3805 = vmatpush1.msra.mxu0 0.0
        %3806 = vmatprep.subr.mxu0 0.0
        %3807 = vmatpush1.msra.mxu0 0.0
        %3808 = vmatprep.subr.mxu0 0.0
        %3809 = vmatpush1.msra.mxu0 0.0
        %3810 = vmatprep.mubr.f32.mxu0 0.0
        %v3811 = vand.u32 %v3464, 4294901760
        %v3812 = vsub.f32 %v3464, %v3811
        %3813 = vmatmul.mubr.f32.gmra.mrb[0].mxu0 %v3812
        %v3814 = vpop.f32.mrb[0].mxu0
        %v3815 = vadd.f32 %v3699, %v3814
        %v3816 = vpop.f32.mrb[0].mxu0
        %3817 = vmatprep.mubr.f32.mxu0 0.0
        %v3818 = vand.u32 %v3466, 4294901760
        %v3819 = vsub.f32 %v3466, %v3818
        %3820 = vmatmul.mubr.f32.gmra.mrb[0].mxu0 %v3819
        %v3821 = vpop.f32.mrb[0].mxu0
        %v3822 = vadd.f32 %v3705, %v3821
        %v3823 = vpop.f32.mrb[0].mxu0
        %3824 = vmatprep.mubr.f32.mxu0 0.0
        %v3825 = vand.u32 %v3468, 4294901760
        %v3826 = vsub.f32 %v3468, %v3825
        %3827 = vmatmul.mubr.f32.gmra.mrb[0].mxu0 %v3826
        %v3828 = vpop.f32.mrb[0].mxu0
        %v3829 = vadd.f32 %v3711, %v3828
        %v3830 = vpop.f32.mrb[0].mxu0
        %3831 = vmatprep.mubr.f32.mxu0 0.0
        %v3832 = vand.u32 %v3470, 4294901760
        %v3833 = vsub.f32 %v3470, %v3832
        %3834 = vmatmul.mubr.f32.gmra.mrb[0].mxu0 %v3833
        %v3835 = vpop.f32.mrb[0].mxu0
        %v3836 = vadd.f32 %v3717, %v3835
        %v3837 = vpop.f32.mrb[0].mxu0
        %3838 = vmatprep.mubr.f32.mxu0 0.0
        %v3839 = vand.u32 %v3472, 4294901760
        %v3840 = vsub.f32 %v3472, %v3839
        %3841 = vmatmul.mubr.f32.gmra.mrb[0].mxu0 %v3840
        %v3842 = vpop.f32.mrb[0].mxu0
        %v3843 = vadd.f32 %v3723, %v3842
        %v3844 = vpop.f32.mrb[0].mxu0
        %3845 = vmatprep.mubr.f32.mxu0 0.0
        %v3846 = vand.u32 %v3474, 4294901760
        %v3847 = vsub.f32 %v3474, %v3846
        %3848 = vmatmul.mubr.f32.gmra.mrb[0].mxu0 %v3847
        %v3849 = vpop.f32.mrb[0].mxu0
        %v3850 = vadd.f32 %v3729, %v3849
        %v3851 = vpop.f32.mrb[0].mxu0
        %3852 = vmatprep.mubr.f32.mxu0 0.0
        %v3853 = vand.u32 %v3476, 4294901760
        %v3854 = vsub.f32 %v3476, %v3853
        %3855 = vmatmul.mubr.f32.gmra.mrb[0].mxu0 %v3854
        %v3856 = vpop.f32.mrb[0].mxu0
        %v3857 = vadd.f32 %v3735, %v3856
        %v3858 = vpop.f32.mrb[0].mxu0
        %3859 = vmatprep.mubr.f32.mxu0 0.0
        %v3860 = vand.u32 %v3478, 4294901760
        %v3861 = vsub.f32 %v3478, %v3860
        %3862 = vmatmul.mubr.f32.gmra.mrb[0].mxu0 %v3861
        %v3863 = vpop.f32.mrb[0].mxu0
        %v3864 = vadd.f32 %v3741, %v3863
        %v3865 = vpop.f32.mrb[0].mxu0
        %3866 = vdwg.mxu0
        %3867 = vmatprep.subr.mxu0 0.0
        %v3868 = vand.u32 %v2339, 4294901760
        %3869 = vmatpush1.msra.mxu0 %v3868
        %3870 = vmatprep.subr.mxu0 0.0
        %3871 = vmatpush1.msra.mxu0 0.0
        %3872 = vmatprep.subr.mxu0 0.0
        %3873 = vmatpush1.msra.mxu0 0.0
        %3874 = vmatprep.subr.mxu0 0.0
        %3875 = vmatpush1.msra.mxu0 0.0
        %3876 = vmatprep.subr.mxu0 0.0
        %3877 = vmatpush1.msra.mxu0 0.0
        %3878 = vmatprep.subr.mxu0 0.0
        %3879 = vmatpush1.msra.mxu0 0.0
        %3880 = vmatprep.subr.mxu0 0.0
        %3881 = vmatpush1.msra.mxu0 0.0
        %3882 = vmatprep.subr.mxu0 0.0
        %3883 = vmatpush1.msra.mxu0 0.0
        %3884 = vmatprep.subr.mxu0 0.0
        %3885 = vmatpush1.msra.mxu0 0.0
        %3886 = vmatprep.subr.mxu0 0.0
        %3887 = vmatpush1.msra.mxu0 0.0
        %3888 = vmatprep.subr.mxu0 0.0
        %3889 = vmatpush1.msra.mxu0 0.0
        %3890 = vmatprep.subr.mxu0 0.0
        %3891 = vmatpush1.msra.mxu0 0.0
        %3892 = vmatprep.subr.mxu0 0.0
        %3893 = vmatpush1.msra.mxu0 0.0
        %3894 = vmatprep.subr.mxu0 0.0
        %3895 = vmatpush1.msra.mxu0 0.0
        %3896 = vmatprep.subr.mxu0 0.0
        %3897 = vmatpush1.msra.mxu0 0.0
        %3898 = vmatprep.subr.mxu0 0.0
        %3899 = vmatpush1.msra.mxu0 0.0
        %3900 = vmatprep.subr.mxu0 0.0
        %3901 = vmatpush1.msra.mxu0 0.0
        %3902 = vmatprep.subr.mxu0 0.0
        %3903 = vmatpush1.msra.mxu0 0.0
        %3904 = vmatprep.subr.mxu0 0.0
        %3905 = vmatpush1.msra.mxu0 0.0
        %3906 = vmatprep.subr.mxu0 0.0
        %3907 = vmatpush1.msra.mxu0 0.0
        %3908 = vmatprep.subr.mxu0 0.0
        %3909 = vmatpush1.msra.mxu0 0.0
        %3910 = vmatprep.subr.mxu0 0.0
        %3911 = vmatpush1.msra.mxu0 0.0
        %3912 = vmatprep.subr.mxu0 0.0
        %3913 = vmatpush1.msra.mxu0 0.0
        %3914 = vmatprep.subr.mxu0 0.0
        %3915 = vmatpush1.msra.mxu0 0.0
        %3916 = vmatprep.subr.mxu0 0.0
        %3917 = vmatpush1.msra.mxu0 0.0
        %3918 = vmatprep.subr.mxu0 0.0
        %3919 = vmatpush1.msra.mxu0 0.0
        %3920 = vmatprep.subr.mxu0 0.0
        %3921 = vmatpush1.msra.mxu0 0.0
        %3922 = vmatprep.subr.mxu0 0.0
        %3923 = vmatpush1.msra.mxu0 0.0
        %3924 = vmatprep.subr.mxu0 0.0
        %3925 = vmatpush1.msra.mxu0 0.0
        %3926 = vmatprep.subr.mxu0 0.0
        %3927 = vmatpush1.msra.mxu0 0.0
        %3928 = vmatprep.subr.mxu0 0.0
        %3929 = vmatpush1.msra.mxu0 0.0
        %3930 = vmatprep.subr.mxu0 0.0
        %3931 = vmatpush1.msra.mxu0 0.0
        %3932 = vmatprep.mubr.f32.mxu0 0.0
        %v3933 = vand.u32 %v3464, 4294901760
        %v3934 = vsub.f32 %v3464, %v3933
        %v3935 = vand.u32 %v3934, 4294901760
        %3936 = vmatmul.mubr.f32.gmra.mrb[0].mxu0 %v3935
        %v3937 = vpop.f32.mrb[0].mxu0
        %v3938 = vadd.f32 %v3815, %v3937
        %v3939 = vpop.f32.mrb[0].mxu0
        %3940 = vmatprep.mubr.f32.mxu0 0.0
        %v3941 = vand.u32 %v3466, 4294901760
        %v3942 = vsub.f32 %v3466, %v3941
        %v3943 = vand.u32 %v3942, 4294901760
        %3944 = vmatmul.mubr.f32.gmra.mrb[0].mxu0 %v3943
        %v3945 = vpop.f32.mrb[0].mxu0
        %v3946 = vadd.f32 %v3822, %v3945
        %v3947 = vpop.f32.mrb[0].mxu0
        %3948 = vmatprep.mubr.f32.mxu0 0.0
        %v3949 = vand.u32 %v3468, 4294901760
        %v3950 = vsub.f32 %v3468, %v3949
        %v3951 = vand.u32 %v3950, 4294901760
        %3952 = vmatmul.mubr.f32.gmra.mrb[0].mxu0 %v3951
        %v3953 = vpop.f32.mrb[0].mxu0
        %v3954 = vadd.f32 %v3829, %v3953
        %v3955 = vpop.f32.mrb[0].mxu0
        %3956 = vmatprep.mubr.f32.mxu0 0.0
        %v3957 = vand.u32 %v3470, 4294901760
        %v3958 = vsub.f32 %v3470, %v3957
        %v3959 = vand.u32 %v3958, 4294901760
        %3960 = vmatmul.mubr.f32.gmra.mrb[0].mxu0 %v3959
        %v3961 = vpop.f32.mrb[0].mxu0
        %v3962 = vadd.f32 %v3836, %v3961
        %v3963 = vpop.f32.mrb[0].mxu0
        %3964 = vmatprep.mubr.f32.mxu0 0.0
        %v3965 = vand.u32 %v3472, 4294901760
        %v3966 = vsub.f32 %v3472, %v3965
        %v3967 = vand.u32 %v3966, 4294901760
        %3968 = vmatmul.mubr.f32.gmra.mrb[0].mxu0 %v3967
        %v3969 = vpop.f32.mrb[0].mxu0
        %v3970 = vadd.f32 %v3843, %v3969
        %v3971 = vpop.f32.mrb[0].mxu0
        %3972 = vmatprep.mubr.f32.mxu0 0.0
        %v3973 = vand.u32 %v3474, 4294901760
        %v3974 = vsub.f32 %v3474, %v3973
        %v3975 = vand.u32 %v3974, 4294901760
        %3976 = vmatmul.mubr.f32.gmra.mrb[0].mxu0 %v3975
        %v3977 = vpop.f32.mrb[0].mxu0
        %v3978 = vadd.f32 %v3850, %v3977
        %v3979 = vpop.f32.mrb[0].mxu0
        %3980 = vmatprep.mubr.f32.mxu0 0.0
        %v3981 = vand.u32 %v3476, 4294901760
        %v3982 = vsub.f32 %v3476, %v3981
        %v3983 = vand.u32 %v3982, 4294901760
        %3984 = vmatmul.mubr.f32.gmra.mrb[0].mxu0 %v3983
        %v3985 = vpop.f32.mrb[0].mxu0
        %v3986 = vadd.f32 %v3857, %v3985
        %v3987 = vpop.f32.mrb[0].mxu0
        %3988 = vmatprep.mubr.f32.mxu0 0.0
        %v3989 = vand.u32 %v3478, 4294901760
        %v3990 = vsub.f32 %v3478, %v3989
        %v3991 = vand.u32 %v3990, 4294901760
        %3992 = vmatmul.mubr.f32.gmra.mrb[0].mxu0 %v3991
        %v3993 = vpop.f32.mrb[0].mxu0
        %v3994 = vadd.f32 %v3864, %v3993
        %v3995 = vpop.f32.mrb[0].mxu0
        %3996 = vdwg.mxu0
        %3997 = vmatprep.subr.mxu0 0.0
        %v3998 = vand.u32 %v2339, 4294901760
        %v3999 = vsub.f32 %v2339, %v3998
        %v4000 = vand.u32 %v3999, 4294901760
        %4001 = vmatpush1.msra.mxu0 %v4000
        %4002 = vmatprep.subr.mxu0 0.0
        %4003 = vmatpush1.msra.mxu0 0.0
        %4004 = vmatprep.subr.mxu0 0.0
        %4005 = vmatpush1.msra.mxu0 0.0
        %4006 = vmatprep.subr.mxu0 0.0
        %4007 = vmatpush1.msra.mxu0 0.0
        %4008 = vmatprep.subr.mxu0 0.0
        %4009 = vmatpush1.msra.mxu0 0.0
        %4010 = vmatprep.subr.mxu0 0.0
        %4011 = vmatpush1.msra.mxu0 0.0
        %4012 = vmatprep.subr.mxu0 0.0
        %4013 = vmatpush1.msra.mxu0 0.0
        %4014 = vmatprep.subr.mxu0 0.0
        %4015 = vmatpush1.msra.mxu0 0.0
        %4016 = vmatprep.subr.mxu0 0.0
        %4017 = vmatpush1.msra.mxu0 0.0
        %4018 = vmatprep.subr.mxu0 0.0
        %4019 = vmatpush1.msra.mxu0 0.0
        %4020 = vmatprep.subr.mxu0 0.0
        %4021 = vmatpush1.msra.mxu0 0.0
        %4022 = vmatprep.subr.mxu0 0.0
        %4023 = vmatpush1.msra.mxu0 0.0
        %4024 = vmatprep.subr.mxu0 0.0
        %4025 = vmatpush1.msra.mxu0 0.0
        %4026 = vmatprep.subr.mxu0 0.0
        %4027 = vmatpush1.msra.mxu0 0.0
        %4028 = vmatprep.subr.mxu0 0.0
        %4029 = vmatpush1.msra.mxu0 0.0
        %4030 = vmatprep.subr.mxu0 0.0
        %4031 = vmatpush1.msra.mxu0 0.0
        %4032 = vmatprep.subr.mxu0 0.0
        %4033 = vmatpush1.msra.mxu0 0.0
        %4034 = vmatprep.subr.mxu0 0.0
        %4035 = vmatpush1.msra.mxu0 0.0
        %4036 = vmatprep.subr.mxu0 0.0
        %4037 = vmatpush1.msra.mxu0 0.0
        %4038 = vmatprep.subr.mxu0 0.0
        %4039 = vmatpush1.msra.mxu0 0.0
        %4040 = vmatprep.subr.mxu0 0.0
        %4041 = vmatpush1.msra.mxu0 0.0
        %4042 = vmatprep.subr.mxu0 0.0
        %4043 = vmatpush1.msra.mxu0 0.0
        %4044 = vmatprep.subr.mxu0 0.0
        %4045 = vmatpush1.msra.mxu0 0.0
        %4046 = vmatprep.subr.mxu0 0.0
        %4047 = vmatpush1.msra.mxu0 0.0
        %4048 = vmatprep.subr.mxu0 0.0
        %4049 = vmatpush1.msra.mxu0 0.0
        %4050 = vmatprep.subr.mxu0 0.0
        %4051 = vmatpush1.msra.mxu0 0.0
        %4052 = vmatprep.subr.mxu0 0.0
        %4053 = vmatpush1.msra.mxu0 0.0
        %4054 = vmatprep.subr.mxu0 0.0
        %4055 = vmatpush1.msra.mxu0 0.0
        %4056 = vmatprep.subr.mxu0 0.0
        %4057 = vmatpush1.msra.mxu0 0.0
        %4058 = vmatprep.subr.mxu0 0.0
        %4059 = vmatpush1.msra.mxu0 0.0
        %4060 = vmatprep.subr.mxu0 0.0
        %4061 = vmatpush1.msra.mxu0 0.0
        %4062 = vmatprep.subr.mxu0 0.0
        %4063 = vmatpush1.msra.mxu0 0.0
        %4064 = vmatprep.mubr.f32.mxu0 0.0
        %v4065 = vand.u32 %v3464, 4294901760
        %4066 = vmatmul.mubr.f32.gmra.mrb[0].mxu0 %v4065
        %v4067 = vpop.f32.mrb[0].mxu0
        %v4068 = vadd.f32 %v3938, %v4067
        %v4069 = vpop.f32.mrb[0].mxu0
        %4070 = vmatprep.mubr.f32.mxu0 0.0
        %v4071 = vand.u32 %v3466, 4294901760
        %4072 = vmatmul.mubr.f32.gmra.mrb[0].mxu0 %v4071
        %v4073 = vpop.f32.mrb[0].mxu0
        %v4074 = vadd.f32 %v3946, %v4073
        %v4075 = vpop.f32.mrb[0].mxu0
        %4076 = vmatprep.mubr.f32.mxu0 0.0
        %v4077 = vand.u32 %v3468, 4294901760
        %4078 = vmatmul.mubr.f32.gmra.mrb[0].mxu0 %v4077
        %v4079 = vpop.f32.mrb[0].mxu0
        %v4080 = vadd.f32 %v3954, %v4079
        %v4081 = vpop.f32.mrb[0].mxu0
        %4082 = vmatprep.mubr.f32.mxu0 0.0
        %v4083 = vand.u32 %v3470, 4294901760
        %4084 = vmatmul.mubr.f32.gmra.mrb[0].mxu0 %v4083
        %v4085 = vpop.f32.mrb[0].mxu0
        %v4086 = vadd.f32 %v3962, %v4085
        %v4087 = vpop.f32.mrb[0].mxu0
        %4088 = vmatprep.mubr.f32.mxu0 0.0
        %v4089 = vand.u32 %v3472, 4294901760
        %4090 = vmatmul.mubr.f32.gmra.mrb[0].mxu0 %v4089
        %v4091 = vpop.f32.mrb[0].mxu0
        %v4092 = vadd.f32 %v3970, %v4091
        %v4093 = vpop.f32.mrb[0].mxu0
        %4094 = vmatprep.mubr.f32.mxu0 0.0
        %v4095 = vand.u32 %v3474, 4294901760
        %4096 = vmatmul.mubr.f32.gmra.mrb[0].mxu0 %v4095
        %v4097 = vpop.f32.mrb[0].mxu0
        %v4098 = vadd.f32 %v3978, %v4097
        %v4099 = vpop.f32.mrb[0].mxu0
        %4100 = vmatprep.mubr.f32.mxu0 0.0
        %v4101 = vand.u32 %v3476, 4294901760
        %4102 = vmatmul.mubr.f32.gmra.mrb[0].mxu0 %v4101
        %v4103 = vpop.f32.mrb[0].mxu0
        %v4104 = vadd.f32 %v3986, %v4103
        %v4105 = vpop.f32.mrb[0].mxu0
        %4106 = vmatprep.mubr.f32.mxu0 0.0
        %v4107 = vand.u32 %v3478, 4294901760
        %4108 = vmatmul.mubr.f32.gmra.mrb[0].mxu0 %v4107
        %v4109 = vpop.f32.mrb[0].mxu0
        %v4110 = vadd.f32 %v3994, %v4109
        %v4111 = vpop.f32.mrb[0].mxu0
        %4112 = vdwg.mxu0
        %4113 = vmatprep.subr.mxu0 0.0
        %v4114 = vand.u32 %v2339, 4294901760
        %4115 = vmatpush1.msra.mxu0 %v4114
        %4116 = vmatprep.subr.mxu0 0.0
        %4117 = vmatpush1.msra.mxu0 0.0
        %4118 = vmatprep.subr.mxu0 0.0
        %4119 = vmatpush1.msra.mxu0 0.0
        %4120 = vmatprep.subr.mxu0 0.0
        %4121 = vmatpush1.msra.mxu0 0.0
        %4122 = vmatprep.subr.mxu0 0.0
        %4123 = vmatpush1.msra.mxu0 0.0
        %4124 = vmatprep.subr.mxu0 0.0
        %4125 = vmatpush1.msra.mxu0 0.0
        %4126 = vmatprep.subr.mxu0 0.0
        %4127 = vmatpush1.msra.mxu0 0.0
        %4128 = vmatprep.subr.mxu0 0.0
        %4129 = vmatpush1.msra.mxu0 0.0
        %4130 = vmatprep.subr.mxu0 0.0
        %4131 = vmatpush1.msra.mxu0 0.0
        %4132 = vmatprep.subr.mxu0 0.0
        %4133 = vmatpush1.msra.mxu0 0.0
        %4134 = vmatprep.subr.mxu0 0.0
        %4135 = vmatpush1.msra.mxu0 0.0
        %4136 = vmatprep.subr.mxu0 0.0
        %4137 = vmatpush1.msra.mxu0 0.0
        %4138 = vmatprep.subr.mxu0 0.0
        %4139 = vmatpush1.msra.mxu0 0.0
        %4140 = vmatprep.subr.mxu0 0.0
        %4141 = vmatpush1.msra.mxu0 0.0
        %4142 = vmatprep.subr.mxu0 0.0
        %4143 = vmatpush1.msra.mxu0 0.0
        %4144 = vmatprep.subr.mxu0 0.0
        %4145 = vmatpush1.msra.mxu0 0.0
        %4146 = vmatprep.subr.mxu0 0.0
        %4147 = vmatpush1.msra.mxu0 0.0
        %4148 = vmatprep.subr.mxu0 0.0
        %4149 = vmatpush1.msra.mxu0 0.0
        %4150 = vmatprep.subr.mxu0 0.0
        %4151 = vmatpush1.msra.mxu0 0.0
        %4152 = vmatprep.subr.mxu0 0.0
        %4153 = vmatpush1.msra.mxu0 0.0
        %4154 = vmatprep.subr.mxu0 0.0
        %4155 = vmatpush1.msra.mxu0 0.0
        %4156 = vmatprep.subr.mxu0 0.0
        %4157 = vmatpush1.msra.mxu0 0.0
        %4158 = vmatprep.subr.mxu0 0.0
        %4159 = vmatpush1.msra.mxu0 0.0
        %4160 = vmatprep.subr.mxu0 0.0
        %4161 = vmatpush1.msra.mxu0 0.0
        %4162 = vmatprep.subr.mxu0 0.0
        %4163 = vmatpush1.msra.mxu0 0.0
        %4164 = vmatprep.subr.mxu0 0.0
        %4165 = vmatpush1.msra.mxu0 0.0
        %4166 = vmatprep.subr.mxu0 0.0
        %4167 = vmatpush1.msra.mxu0 0.0
        %4168 = vmatprep.subr.mxu0 0.0
        %4169 = vmatpush1.msra.mxu0 0.0
        %4170 = vmatprep.subr.mxu0 0.0
        %4171 = vmatpush1.msra.mxu0 0.0
        %4172 = vmatprep.subr.mxu0 0.0
        %4173 = vmatpush1.msra.mxu0 0.0
        %4174 = vmatprep.subr.mxu0 0.0
        %4175 = vmatpush1.msra.mxu0 0.0
        %4176 = vmatprep.subr.mxu0 0.0
        %4177 = vmatpush1.msra.mxu0 0.0
        %4178 = vmatprep.mubr.f32.mxu0 0.0
        %v4179 = vand.u32 %v3464, 4294901760
        %4180 = vmatmul.mubr.f32.gmra.mrb[0].mxu0 %v4179
        %v4181 = vpop.f32.mrb[0].mxu0
        %v4182 = vadd.f32 %v4068, %v4181
        %v4183 = vpop.f32.mrb[0].mxu0
        %4184 = vmatprep.mubr.f32.mxu0 0.0
        %v4185 = vand.u32 %v3466, 4294901760
        %4186 = vmatmul.mubr.f32.gmra.mrb[0].mxu0 %v4185
        %v4187 = vpop.f32.mrb[0].mxu0
        %v4188 = vadd.f32 %v4074, %v4187
        %v4189 = vpop.f32.mrb[0].mxu0
        %4190 = vmatprep.mubr.f32.mxu0 0.0
        %v4191 = vand.u32 %v3468, 4294901760
        %4192 = vmatmul.mubr.f32.gmra.mrb[0].mxu0 %v4191
        %v4193 = vpop.f32.mrb[0].mxu0
        %v4194 = vadd.f32 %v4080, %v4193
        %v4195 = vpop.f32.mrb[0].mxu0
        %4196 = vmatprep.mubr.f32.mxu0 0.0
        %v4197 = vand.u32 %v3470, 4294901760
        %4198 = vmatmul.mubr.f32.gmra.mrb[0].mxu0 %v4197
        %v4199 = vpop.f32.mrb[0].mxu0
        %v4200 = vadd.f32 %v4086, %v4199
        %v4201 = vpop.f32.mrb[0].mxu0
        %4202 = vmatprep.mubr.f32.mxu0 0.0
        %v4203 = vand.u32 %v3472, 4294901760
        %4204 = vmatmul.mubr.f32.gmra.mrb[0].mxu0 %v4203
        %v4205 = vpop.f32.mrb[0].mxu0
        %v4206 = vadd.f32 %v4092, %v4205
        %v4207 = vpop.f32.mrb[0].mxu0
        %4208 = vmatprep.mubr.f32.mxu0 0.0
        %v4209 = vand.u32 %v3474, 4294901760
        %4210 = vmatmul.mubr.f32.gmra.mrb[0].mxu0 %v4209
        %v4211 = vpop.f32.mrb[0].mxu0
        %v4212 = vadd.f32 %v4098, %v4211
        %v4213 = vpop.f32.mrb[0].mxu0
        %4214 = vmatprep.mubr.f32.mxu0 0.0
        %v4215 = vand.u32 %v3476, 4294901760
        %4216 = vmatmul.mubr.f32.gmra.mrb[0].mxu0 %v4215
        %v4217 = vpop.f32.mrb[0].mxu0
        %v4218 = vadd.f32 %v4104, %v4217
        %v4219 = vpop.f32.mrb[0].mxu0
        %4220 = vmatprep.mubr.f32.mxu0 0.0
        %v4221 = vand.u32 %v3478, 4294901760
        %4222 = vmatmul.mubr.f32.gmra.mrb[0].mxu0 %v4221
        %v4223 = vpop.f32.mrb[0].mxu0
        %v4224 = vadd.f32 %v4110, %v4223
        %v4225 = vpop.f32.mrb[0].mxu0
        %4226 = vdwg.mxu0
        %v4227 = vsub.f32 %v285, %v3043
        %v4228 = vsub.f32 %v286, %v3049
        %v4229 = vsub.f32 %v287, %v3055
        %v4230 = vsub.f32 %v288, %v3061
        %v4231 = vsub.f32 %v289, %v3067
        %v4232 = vsub.f32 %v290, %v3073
        %v4233 = vsub.f32 %v291, %v3079
        %v4234 = vsub.f32 %v292, %v3085
        %v4235 = vmul.f32 %v4227, 1.442695
        %v4236 = vpow.pop %v4235
        %v4237 = vmul.f32 %v4228, 1.442695
        %v4238 = vpow.pop %v4237
        %v4239 = vmul.f32 %v4229, 1.442695
        %v4240 = vpow.pop %v4239
        %v4241 = vmul.f32 %v4230, 1.442695
        %v4242 = vpow.pop %v4241
        %v4243 = vmul.f32 %v4231, 1.442695
        %v4244 = vpow.pop %v4243
        %v4245 = vmul.f32 %v4232, 1.442695
        %v4246 = vpow.pop %v4245
        %v4247 = vmul.f32 %v4233, 1.442695
        %v4248 = vpow.pop %v4247
        %v4249 = vmul.f32 %v4234, 1.442695
        %v4250 = vpow.pop %v4249
        %v4251 = vsub.f32 %v293, %v4182
        %v4252 = vsub.f32 %v294, %v4188
        %v4253 = vsub.f32 %v295, %v4194
        %v4254 = vsub.f32 %v296, %v4200
        %v4255 = vsub.f32 %v297, %v4206
        %v4256 = vsub.f32 %v298, %v4212
        %v4257 = vsub.f32 %v299, %v4218
        %v4258 = vsub.f32 %v300, %v4224
        %v4259 = vmul.f32 %v4251, 1.442695
        %v4260 = vpow.pop %v4259
        %v4261 = vmul.f32 %v4252, 1.442695
        %v4262 = vpow.pop %v4261
        %v4263 = vmul.f32 %v4253, 1.442695
        %v4264 = vpow.pop %v4263
        %v4265 = vmul.f32 %v4254, 1.442695
        %v4266 = vpow.pop %v4265
        %v4267 = vmul.f32 %v4255, 1.442695
        %v4268 = vpow.pop %v4267
        %v4269 = vmul.f32 %v4256, 1.442695
        %v4270 = vpow.pop %v4269
        %v4271 = vmul.f32 %v4257, 1.442695
        %v4272 = vpow.pop %v4271
        %v4273 = vmul.f32 %v4258, 1.442695
        %v4274 = vpow.pop %v4273
        %v4275 = vsub.f32 %v285, %v293
        %v4276 = vsub.f32 %v286, %v294
        %v4277 = vsub.f32 %v287, %v295
        %v4278 = vsub.f32 %v288, %v296
        %v4279 = vsub.f32 %v289, %v297
        %v4280 = vsub.f32 %v290, %v298
        %v4281 = vsub.f32 %v291, %v299
        %v4282 = vsub.f32 %v292, %v300
        %v4283 = vmul.f32 %v4236, %v4275
        %v4284 = vmul.f32 %v4238, %v4276
        %v4285 = vmul.f32 %v4240, %v4277
        %v4286 = vmul.f32 %v4242, %v4278
        %v4287 = vmul.f32 %v4244, %v4279
        %v4288 = vmul.f32 %v4246, %v4280
        %v4289 = vmul.f32 %v4248, %v4281
        %v4290 = vmul.f32 %v4250, %v4282
        %v4291 = vld [vmem:[#allocation8] sm:$0xff]
        %v4292 = vld [vmem:[#allocation8 + $0x8] sm:$0xff]
        %v4293 = vld [vmem:[#allocation8 + $0x10] sm:$0xff]
        %v4294 = vld [vmem:[#allocation8 + $0x18] sm:$0xff]
        %v4295 = vld [vmem:[#allocation8 + $0x20] sm:$0xff]
        %v4296 = vld [vmem:[#allocation8 + $0x28] sm:$0xff]
        %v4297 = vld [vmem:[#allocation8 + $0x30] sm:$0xff]
        %v4298 = vld [vmem:[#allocation8 + $0x38] sm:$0xff]
        %v4299 = vld [vmem:[#allocation8 + $0x40] sm:$0xff]
        %v4300 = vld [vmem:[#allocation8 + $0x48] sm:$0xff]
        %v4301 = vld [vmem:[#allocation8 + $0x50] sm:$0xff]
        %v4302 = vld [vmem:[#allocation8 + $0x58] sm:$0xff]
        %v4303 = vld [vmem:[#allocation8 + $0x60] sm:$0xff]
        %v4304 = vld [vmem:[#allocation8 + $0x68] sm:$0xff]
        %v4305 = vld [vmem:[#allocation8 + $0x70] sm:$0xff]
        %v4306 = vld [vmem:[#allocation8 + $0x78] sm:$0xff]
        %4307 = vmatprep.subr.mxu0 0.0
        %v4308 = vand.u32 %v4291, 4294901760
        %4309 = vmatpush1.msra.mxu0 %v4308
        %4310 = vmatprep.subr.mxu0 0.0
        %v4311 = vand.u32 %v4292, 4294901760
        %4312 = vmatpush1.msra.mxu0 %v4311
        %4313 = vmatprep.subr.mxu0 0.0
        %v4314 = vand.u32 %v4293, 4294901760
        %4315 = vmatpush1.msra.mxu0 %v4314
        %4316 = vmatprep.subr.mxu0 0.0
        %v4317 = vand.u32 %v4294, 4294901760
        %4318 = vmatpush1.msra.mxu0 %v4317
        %4319 = vmatprep.subr.mxu0 0.0
        %v4320 = vand.u32 %v4295, 4294901760
        %4321 = vmatpush1.msra.mxu0 %v4320
        %4322 = vmatprep.subr.mxu0 0.0
        %v4323 = vand.u32 %v4296, 4294901760
        %4324 = vmatpush1.msra.mxu0 %v4323
        %4325 = vmatprep.subr.mxu0 0.0
        %v4326 = vand.u32 %v4297, 4294901760
        %4327 = vmatpush1.msra.mxu0 %v4326
        %4328 = vmatprep.subr.mxu0 0.0
        %v4329 = vand.u32 %v4298, 4294901760
        %4330 = vmatpush1.msra.mxu0 %v4329
        %4331 = vmatprep.subr.mxu0 0.0
        %v4332 = vand.u32 %v4299, 4294901760
        %4333 = vmatpush1.msra.mxu0 %v4332
        %4334 = vmatprep.subr.mxu0 0.0
        %v4335 = vand.u32 %v4300, 4294901760
        %4336 = vmatpush1.msra.mxu0 %v4335
        %4337 = vmatprep.subr.mxu0 0.0
        %v4338 = vand.u32 %v4301, 4294901760
        %4339 = vmatpush1.msra.mxu0 %v4338
        %4340 = vmatprep.subr.mxu0 0.0
        %v4341 = vand.u32 %v4302, 4294901760
        %4342 = vmatpush1.msra.mxu0 %v4341
        %4343 = vmatprep.subr.mxu0 0.0
        %v4344 = vand.u32 %v4303, 4294901760
        %4345 = vmatpush1.msra.mxu0 %v4344
        %4346 = vmatprep.subr.mxu0 0.0
        %v4347 = vand.u32 %v4304, 4294901760
        %4348 = vmatpush1.msra.mxu0 %v4347
        %4349 = vmatprep.subr.mxu0 0.0
        %v4350 = vand.u32 %v4305, 4294901760
        %4351 = vmatpush1.msra.mxu0 %v4350
        %4352 = vmatprep.subr.mxu0 0.0
        %v4353 = vand.u32 %v4306, 4294901760
        %4354 = vmatpush1.msra.mxu0 %v4353
        %4355 = vmatprep.subr.mxu0 0.0
        %4356 = vmatpush1.msra.mxu0 0.0
        %4357 = vmatprep.subr.mxu0 0.0
        %4358 = vmatpush1.msra.mxu0 0.0
        %4359 = vmatprep.subr.mxu0 0.0
        %4360 = vmatpush1.msra.mxu0 0.0
        %4361 = vmatprep.subr.mxu0 0.0
        %4362 = vmatpush1.msra.mxu0 0.0
        %4363 = vmatprep.subr.mxu0 0.0
        %4364 = vmatpush1.msra.mxu0 0.0
        %4365 = vmatprep.subr.mxu0 0.0
        %4366 = vmatpush1.msra.mxu0 0.0
        %4367 = vmatprep.subr.mxu0 0.0
        %4368 = vmatpush1.msra.mxu0 0.0
        %4369 = vmatprep.subr.mxu0 0.0
        %4370 = vmatpush1.msra.mxu0 0.0
        %4371 = vmatprep.subr.mxu0 0.0
        %4372 = vmatpush1.msra.mxu0 0.0
        %4373 = vmatprep.subr.mxu0 0.0
        %4374 = vmatpush1.msra.mxu0 0.0
        %4375 = vmatprep.subr.mxu0 0.0
        %4376 = vmatpush1.msra.mxu0 0.0
        %4377 = vmatprep.subr.mxu0 0.0
        %4378 = vmatpush1.msra.mxu0 0.0
        %4379 = vmatprep.subr.mxu0 0.0
        %4380 = vmatpush1.msra.mxu0 0.0
        %4381 = vmatprep.subr.mxu0 0.0
        %4382 = vmatpush1.msra.mxu0 0.0
        %4383 = vmatprep.subr.mxu0 0.0
        %4384 = vmatpush1.msra.mxu0 0.0
        %4385 = vmatprep.subr.mxu0 0.0
        %4386 = vmatpush1.msra.mxu0 0.0
        %4387 = vmatprep.mubr.f32.mxu0 0.0
        %v4388 = vand.u32 %v4236, 4294901760
        %v4389 = vsub.f32 %v4236, %v4388
        %v4390 = vand.u32 %v4389, 4294901760
        %v4391 = vsub.f32 %v4389, %v4390
        %v4392 = vand.u32 %v4391, 4294901760
        %4393 = vmatmul.mubr.f32.gmra.mrb[0].mxu0 %v4392
        %v4394 = vpop.f32.mrb[0].mxu0
        %v4395 = vadd.f32 0.0, %v4394
        %v4396 = vpop.f32.mrb[0].mxu0
        %4397 = vmatprep.mubr.f32.mxu0 0.0
        %v4398 = vand.u32 %v4238, 4294901760
        %v4399 = vsub.f32 %v4238, %v4398
        %v4400 = vand.u32 %v4399, 4294901760
        %v4401 = vsub.f32 %v4399, %v4400
        %v4402 = vand.u32 %v4401, 4294901760
        %4403 = vmatmul.mubr.f32.gmra.mrb[0].mxu0 %v4402
        %v4404 = vpop.f32.mrb[0].mxu0
        %v4405 = vadd.f32 0.0, %v4404
        %v4406 = vpop.f32.mrb[0].mxu0
        %4407 = vmatprep.mubr.f32.mxu0 0.0
        %v4408 = vand.u32 %v4240, 4294901760
        %v4409 = vsub.f32 %v4240, %v4408
        %v4410 = vand.u32 %v4409, 4294901760
        %v4411 = vsub.f32 %v4409, %v4410
        %v4412 = vand.u32 %v4411, 4294901760
        %4413 = vmatmul.mubr.f32.gmra.mrb[0].mxu0 %v4412
        %v4414 = vpop.f32.mrb[0].mxu0
        %v4415 = vadd.f32 0.0, %v4414
        %v4416 = vpop.f32.mrb[0].mxu0
        %4417 = vmatprep.mubr.f32.mxu0 0.0
        %v4418 = vand.u32 %v4242, 4294901760
        %v4419 = vsub.f32 %v4242, %v4418
        %v4420 = vand.u32 %v4419, 4294901760
        %v4421 = vsub.f32 %v4419, %v4420
        %v4422 = vand.u32 %v4421, 4294901760
        %4423 = vmatmul.mubr.f32.gmra.mrb[0].mxu0 %v4422
        %v4424 = vpop.f32.mrb[0].mxu0
        %v4425 = vadd.f32 0.0, %v4424
        %v4426 = vpop.f32.mrb[0].mxu0
        %4427 = vmatprep.mubr.f32.mxu0 0.0
        %v4428 = vand.u32 %v4244, 4294901760
        %v4429 = vsub.f32 %v4244, %v4428
        %v4430 = vand.u32 %v4429, 4294901760
        %v4431 = vsub.f32 %v4429, %v4430
        %v4432 = vand.u32 %v4431, 4294901760
        %4433 = vmatmul.mubr.f32.gmra.mrb[0].mxu0 %v4432
        %v4434 = vpop.f32.mrb[0].mxu0
        %v4435 = vadd.f32 0.0, %v4434
        %v4436 = vpop.f32.mrb[0].mxu0
        %4437 = vmatprep.mubr.f32.mxu0 0.0
        %v4438 = vand.u32 %v4246, 4294901760
        %v4439 = vsub.f32 %v4246, %v4438
        %v4440 = vand.u32 %v4439, 4294901760
        %v4441 = vsub.f32 %v4439, %v4440
        %v4442 = vand.u32 %v4441, 4294901760
        %4443 = vmatmul.mubr.f32.gmra.mrb[0].mxu0 %v4442
        %v4444 = vpop.f32.mrb[0].mxu0
        %v4445 = vadd.f32 0.0, %v4444
        %v4446 = vpop.f32.mrb[0].mxu0
        %4447 = vmatprep.mubr.f32.mxu0 0.0
        %v4448 = vand.u32 %v4248, 4294901760
        %v4449 = vsub.f32 %v4248, %v4448
        %v4450 = vand.u32 %v4449, 4294901760
        %v4451 = vsub.f32 %v4449, %v4450
        %v4452 = vand.u32 %v4451, 4294901760
        %4453 = vmatmul.mubr.f32.gmra.mrb[0].mxu0 %v4452
        %v4454 = vpop.f32.mrb[0].mxu0
        %v4455 = vadd.f32 0.0, %v4454
        %v4456 = vpop.f32.mrb[0].mxu0
        %4457 = vmatprep.mubr.f32.mxu0 0.0
        %v4458 = vand.u32 %v4250, 4294901760
        %v4459 = vsub.f32 %v4250, %v4458
        %v4460 = vand.u32 %v4459, 4294901760
        %v4461 = vsub.f32 %v4459, %v4460
        %v4462 = vand.u32 %v4461, 4294901760
        %4463 = vmatmul.mubr.f32.gmra.mrb[0].mxu0 %v4462
        %v4464 = vpop.f32.mrb[0].mxu0
        %v4465 = vadd.f32 0.0, %v4464
        %v4466 = vpop.f32.mrb[0].mxu0
        %4467 = vdwg.mxu0
        %4468 = vmatprep.subr.mxu0 0.0
        %v4469 = vand.u32 %v4291, 4294901760
        %v4470 = vsub.f32 %v4291, %v4469
        %v4471 = vand.u32 %v4470, 4294901760
        %v4472 = vsub.f32 %v4470, %v4471
        %v4473 = vand.u32 %v4472, 4294901760
        %4474 = vmatpush1.msra.mxu0 %v4473
        %4475 = vmatprep.subr.mxu0 0.0
        %v4476 = vand.u32 %v4292, 4294901760
        %v4477 = vsub.f32 %v4292, %v4476
        %v4478 = vand.u32 %v4477, 4294901760
        %v4479 = vsub.f32 %v4477, %v4478
        %v4480 = vand.u32 %v4479, 4294901760
        %4481 = vmatpush1.msra.mxu0 %v4480
        %4482 = vmatprep.subr.mxu0 0.0
        %v4483 = vand.u32 %v4293, 4294901760
        %v4484 = vsub.f32 %v4293, %v4483
        %v4485 = vand.u32 %v4484, 4294901760
        %v4486 = vsub.f32 %v4484, %v4485
        %v4487 = vand.u32 %v4486, 4294901760
        %4488 = vmatpush1.msra.mxu0 %v4487
        %4489 = vmatprep.subr.mxu0 0.0
        %v4490 = vand.u32 %v4294, 4294901760
        %v4491 = vsub.f32 %v4294, %v4490
        %v4492 = vand.u32 %v4491, 4294901760
        %v4493 = vsub.f32 %v4491, %v4492
        %v4494 = vand.u32 %v4493, 4294901760
        %4495 = vmatpush1.msra.mxu0 %v4494
        %4496 = vmatprep.subr.mxu0 0.0
        %v4497 = vand.u32 %v4295, 4294901760
        %v4498 = vsub.f32 %v4295, %v4497
        %v4499 = vand.u32 %v4498, 4294901760
        %v4500 = vsub.f32 %v4498, %v4499
        %v4501 = vand.u32 %v4500, 4294901760
        %4502 = vmatpush1.msra.mxu0 %v4501
        %4503 = vmatprep.subr.mxu0 0.0
        %v4504 = vand.u32 %v4296, 4294901760
        %v4505 = vsub.f32 %v4296, %v4504
        %v4506 = vand.u32 %v4505, 4294901760
        %v4507 = vsub.f32 %v4505, %v4506
        %v4508 = vand.u32 %v4507, 4294901760
        %4509 = vmatpush1.msra.mxu0 %v4508
        %4510 = vmatprep.subr.mxu0 0.0
        %v4511 = vand.u32 %v4297, 4294901760
        %v4512 = vsub.f32 %v4297, %v4511
        %v4513 = vand.u32 %v4512, 4294901760
        %v4514 = vsub.f32 %v4512, %v4513
        %v4515 = vand.u32 %v4514, 4294901760
        %4516 = vmatpush1.msra.mxu0 %v4515
        %4517 = vmatprep.subr.mxu0 0.0
        %v4518 = vand.u32 %v4298, 4294901760
        %v4519 = vsub.f32 %v4298, %v4518
        %v4520 = vand.u32 %v4519, 4294901760
        %v4521 = vsub.f32 %v4519, %v4520
        %v4522 = vand.u32 %v4521, 4294901760
        %4523 = vmatpush1.msra.mxu0 %v4522
        %4524 = vmatprep.subr.mxu0 0.0
        %v4525 = vand.u32 %v4299, 4294901760
        %v4526 = vsub.f32 %v4299, %v4525
        %v4527 = vand.u32 %v4526, 4294901760
        %v4528 = vsub.f32 %v4526, %v4527
        %v4529 = vand.u32 %v4528, 4294901760
        %4530 = vmatpush1.msra.mxu0 %v4529
        %4531 = vmatprep.subr.mxu0 0.0
        %v4532 = vand.u32 %v4300, 4294901760
        %v4533 = vsub.f32 %v4300, %v4532
        %v4534 = vand.u32 %v4533, 4294901760
        %v4535 = vsub.f32 %v4533, %v4534
        %v4536 = vand.u32 %v4535, 4294901760
        %4537 = vmatpush1.msra.mxu0 %v4536
        %4538 = vmatprep.subr.mxu0 0.0
        %v4539 = vand.u32 %v4301, 4294901760
        %v4540 = vsub.f32 %v4301, %v4539
        %v4541 = vand.u32 %v4540, 4294901760
        %v4542 = vsub.f32 %v4540, %v4541
        %v4543 = vand.u32 %v4542, 4294901760
        %4544 = vmatpush1.msra.mxu0 %v4543
        %4545 = vmatprep.subr.mxu0 0.0
        %v4546 = vand.u32 %v4302, 4294901760
        %v4547 = vsub.f32 %v4302, %v4546
        %v4548 = vand.u32 %v4547, 4294901760
        %v4549 = vsub.f32 %v4547, %v4548
        %v4550 = vand.u32 %v4549, 4294901760
        %4551 = vmatpush1.msra.mxu0 %v4550
        %4552 = vmatprep.subr.mxu0 0.0
        %v4553 = vand.u32 %v4303, 4294901760
        %v4554 = vsub.f32 %v4303, %v4553
        %v4555 = vand.u32 %v4554, 4294901760
        %v4556 = vsub.f32 %v4554, %v4555
        %v4557 = vand.u32 %v4556, 4294901760
        %4558 = vmatpush1.msra.mxu0 %v4557
        %4559 = vmatprep.subr.mxu0 0.0
        %v4560 = vand.u32 %v4304, 4294901760
        %v4561 = vsub.f32 %v4304, %v4560
        %v4562 = vand.u32 %v4561, 4294901760
        %v4563 = vsub.f32 %v4561, %v4562
        %v4564 = vand.u32 %v4563, 4294901760
        %4565 = vmatpush1.msra.mxu0 %v4564
        %4566 = vmatprep.subr.mxu0 0.0
        %v4567 = vand.u32 %v4305, 4294901760
        %v4568 = vsub.f32 %v4305, %v4567
        %v4569 = vand.u32 %v4568, 4294901760
        %v4570 = vsub.f32 %v4568, %v4569
        %v4571 = vand.u32 %v4570, 4294901760
        %4572 = vmatpush1.msra.mxu0 %v4571
        %4573 = vmatprep.subr.mxu0 0.0
        %v4574 = vand.u32 %v4306, 4294901760
        %v4575 = vsub.f32 %v4306, %v4574
        %v4576 = vand.u32 %v4575, 4294901760
        %v4577 = vsub.f32 %v4575, %v4576
        %v4578 = vand.u32 %v4577, 4294901760
        %4579 = vmatpush1.msra.mxu0 %v4578
        %4580 = vmatprep.subr.mxu0 0.0
        %4581 = vmatpush1.msra.mxu0 0.0
        %4582 = vmatprep.subr.mxu0 0.0
        %4583 = vmatpush1.msra.mxu0 0.0
        %4584 = vmatprep.subr.mxu0 0.0
        %4585 = vmatpush1.msra.mxu0 0.0
        %4586 = vmatprep.subr.mxu0 0.0
        %4587 = vmatpush1.msra.mxu0 0.0
        %4588 = vmatprep.subr.mxu0 0.0
        %4589 = vmatpush1.msra.mxu0 0.0
        %4590 = vmatprep.subr.mxu0 0.0
        %4591 = vmatpush1.msra.mxu0 0.0
        %4592 = vmatprep.subr.mxu0 0.0
        %4593 = vmatpush1.msra.mxu0 0.0
        %4594 = vmatprep.subr.mxu0 0.0
        %4595 = vmatpush1.msra.mxu0 0.0
        %4596 = vmatprep.subr.mxu0 0.0
        %4597 = vmatpush1.msra.mxu0 0.0
        %4598 = vmatprep.subr.mxu0 0.0
        %4599 = vmatpush1.msra.mxu0 0.0
        %4600 = vmatprep.subr.mxu0 0.0
        %4601 = vmatpush1.msra.mxu0 0.0
        %4602 = vmatprep.subr.mxu0 0.0
        %4603 = vmatpush1.msra.mxu0 0.0
        %4604 = vmatprep.subr.mxu0 0.0
        %4605 = vmatpush1.msra.mxu0 0.0
        %4606 = vmatprep.subr.mxu0 0.0
        %4607 = vmatpush1.msra.mxu0 0.0
        %4608 = vmatprep.subr.mxu0 0.0
        %4609 = vmatpush1.msra.mxu0 0.0
        %4610 = vmatprep.subr.mxu0 0.0
        %4611 = vmatpush1.msra.mxu0 0.0
        %4612 = vmatprep.mubr.f32.mxu0 0.0
        %v4613 = vand.u32 %v4236, 4294901760
        %4614 = vmatmul.mubr.f32.gmra.mrb[0].mxu0 %v4613
        %v4615 = vpop.f32.mrb[0].mxu0
        %v4616 = vadd.f32 %v4395, %v4615
        %v4617 = vpop.f32.mrb[0].mxu0
        %4618 = vmatprep.mubr.f32.mxu0 0.0
        %v4619 = vand.u32 %v4238, 4294901760
        %4620 = vmatmul.mubr.f32.gmra.mrb[0].mxu0 %v4619
        %v4621 = vpop.f32.mrb[0].mxu0
        %v4622 = vadd.f32 %v4405, %v4621
        %v4623 = vpop.f32.mrb[0].mxu0
        %4624 = vmatprep.mubr.f32.mxu0 0.0
        %v4625 = vand.u32 %v4240, 4294901760
        %4626 = vmatmul.mubr.f32.gmra.mrb[0].mxu0 %v4625
        %v4627 = vpop.f32.mrb[0].mxu0
        %v4628 = vadd.f32 %v4415, %v4627
        %v4629 = vpop.f32.mrb[0].mxu0
        %4630 = vmatprep.mubr.f32.mxu0 0.0
        %v4631 = vand.u32 %v4242, 4294901760
        %4632 = vmatmul.mubr.f32.gmra.mrb[0].mxu0 %v4631
        %v4633 = vpop.f32.mrb[0].mxu0
        %v4634 = vadd.f32 %v4425, %v4633
        %v4635 = vpop.f32.mrb[0].mxu0
        %4636 = vmatprep.mubr.f32.mxu0 0.0
        %v4637 = vand.u32 %v4244, 4294901760
        %4638 = vmatmul.mubr.f32.gmra.mrb[0].mxu0 %v4637
        %v4639 = vpop.f32.mrb[0].mxu0
        %v4640 = vadd.f32 %v4435, %v4639
        %v4641 = vpop.f32.mrb[0].mxu0
        %4642 = vmatprep.mubr.f32.mxu0 0.0
        %v4643 = vand.u32 %v4246, 4294901760
        %4644 = vmatmul.mubr.f32.gmra.mrb[0].mxu0 %v4643
        %v4645 = vpop.f32.mrb[0].mxu0
        %v4646 = vadd.f32 %v4445, %v4645
        %v4647 = vpop.f32.mrb[0].mxu0
        %4648 = vmatprep.mubr.f32.mxu0 0.0
        %v4649 = vand.u32 %v4248, 4294901760
        %4650 = vmatmul.mubr.f32.gmra.mrb[0].mxu0 %v4649
        %v4651 = vpop.f32.mrb[0].mxu0
        %v4652 = vadd.f32 %v4455, %v4651
        %v4653 = vpop.f32.mrb[0].mxu0
        %4654 = vmatprep.mubr.f32.mxu0 0.0
        %v4655 = vand.u32 %v4250, 4294901760
        %4656 = vmatmul.mubr.f32.gmra.mrb[0].mxu0 %v4655
        %v4657 = vpop.f32.mrb[0].mxu0
        %v4658 = vadd.f32 %v4465, %v4657
        %v4659 = vpop.f32.mrb[0].mxu0
        %4660 = vdwg.mxu0
        %4661 = vmatprep.subr.mxu0 0.0
        %v4662 = vand.u32 %v4291, 4294901760
        %v4663 = vsub.f32 %v4291, %v4662
        %4664 = vmatpush1.msra.mxu0 %v4663
        %4665 = vmatprep.subr.mxu0 0.0
        %v4666 = vand.u32 %v4292, 4294901760
        %v4667 = vsub.f32 %v4292, %v4666
        %4668 = vmatpush1.msra.mxu0 %v4667
        %4669 = vmatprep.subr.mxu0 0.0
        %v4670 = vand.u32 %v4293, 4294901760
        %v4671 = vsub.f32 %v4293, %v4670
        %4672 = vmatpush1.msra.mxu0 %v4671
        %4673 = vmatprep.subr.mxu0 0.0
        %v4674 = vand.u32 %v4294, 4294901760
        %v4675 = vsub.f32 %v4294, %v4674
        %4676 = vmatpush1.msra.mxu0 %v4675
        %4677 = vmatprep.subr.mxu0 0.0
        %v4678 = vand.u32 %v4295, 4294901760
        %v4679 = vsub.f32 %v4295, %v4678
        %4680 = vmatpush1.msra.mxu0 %v4679
        %4681 = vmatprep.subr.mxu0 0.0
        %v4682 = vand.u32 %v4296, 4294901760
        %v4683 = vsub.f32 %v4296, %v4682
        %4684 = vmatpush1.msra.mxu0 %v4683
        %4685 = vmatprep.subr.mxu0 0.0
        %v4686 = vand.u32 %v4297, 4294901760
        %v4687 = vsub.f32 %v4297, %v4686
        %4688 = vmatpush1.msra.mxu0 %v4687
        %4689 = vmatprep.subr.mxu0 0.0
        %v4690 = vand.u32 %v4298, 4294901760
        %v4691 = vsub.f32 %v4298, %v4690
        %4692 = vmatpush1.msra.mxu0 %v4691
        %4693 = vmatprep.subr.mxu0 0.0
        %v4694 = vand.u32 %v4299, 4294901760
        %v4695 = vsub.f32 %v4299, %v4694
        %4696 = vmatpush1.msra.mxu0 %v4695
        %4697 = vmatprep.subr.mxu0 0.0
        %v4698 = vand.u32 %v4300, 4294901760
        %v4699 = vsub.f32 %v4300, %v4698
        %4700 = vmatpush1.msra.mxu0 %v4699
        %4701 = vmatprep.subr.mxu0 0.0
        %v4702 = vand.u32 %v4301, 4294901760
        %v4703 = vsub.f32 %v4301, %v4702
        %4704 = vmatpush1.msra.mxu0 %v4703
        %4705 = vmatprep.subr.mxu0 0.0
        %v4706 = vand.u32 %v4302, 4294901760
        %v4707 = vsub.f32 %v4302, %v4706
        %4708 = vmatpush1.msra.mxu0 %v4707
        %4709 = vmatprep.subr.mxu0 0.0
        %v4710 = vand.u32 %v4303, 4294901760
        %v4711 = vsub.f32 %v4303, %v4710
        %4712 = vmatpush1.msra.mxu0 %v4711
        %4713 = vmatprep.subr.mxu0 0.0
        %v4714 = vand.u32 %v4304, 4294901760
        %v4715 = vsub.f32 %v4304, %v4714
        %4716 = vmatpush1.msra.mxu0 %v4715
        %4717 = vmatprep.subr.mxu0 0.0
        %v4718 = vand.u32 %v4305, 4294901760
        %v4719 = vsub.f32 %v4305, %v4718
        %4720 = vmatpush1.msra.mxu0 %v4719
        %4721 = vmatprep.subr.mxu0 0.0
        %v4722 = vand.u32 %v4306, 4294901760
        %v4723 = vsub.f32 %v4306, %v4722
        %4724 = vmatpush1.msra.mxu0 %v4723
        %4725 = vmatprep.subr.mxu0 0.0
        %4726 = vmatpush1.msra.mxu0 0.0
        %4727 = vmatprep.subr.mxu0 0.0
        %4728 = vmatpush1.msra.mxu0 0.0
        %4729 = vmatprep.subr.mxu0 0.0
        %4730 = vmatpush1.msra.mxu0 0.0
        %4731 = vmatprep.subr.mxu0 0.0
        %4732 = vmatpush1.msra.mxu0 0.0
        %4733 = vmatprep.subr.mxu0 0.0
        %4734 = vmatpush1.msra.mxu0 0.0
        %4735 = vmatprep.subr.mxu0 0.0
        %4736 = vmatpush1.msra.mxu0 0.0
        %4737 = vmatprep.subr.mxu0 0.0
        %4738 = vmatpush1.msra.mxu0 0.0
        %4739 = vmatprep.subr.mxu0 0.0
        %4740 = vmatpush1.msra.mxu0 0.0
        %4741 = vmatprep.subr.mxu0 0.0
        %4742 = vmatpush1.msra.mxu0 0.0
        %4743 = vmatprep.subr.mxu0 0.0
        %4744 = vmatpush1.msra.mxu0 0.0
        %4745 = vmatprep.subr.mxu0 0.0
        %4746 = vmatpush1.msra.mxu0 0.0
        %4747 = vmatprep.subr.mxu0 0.0
        %4748 = vmatpush1.msra.mxu0 0.0
        %4749 = vmatprep.subr.mxu0 0.0
        %4750 = vmatpush1.msra.mxu0 0.0
        %4751 = vmatprep.subr.mxu0 0.0
        %4752 = vmatpush1.msra.mxu0 0.0
        %4753 = vmatprep.subr.mxu0 0.0
        %4754 = vmatpush1.msra.mxu0 0.0
        %4755 = vmatprep.subr.mxu0 0.0
        %4756 = vmatpush1.msra.mxu0 0.0
        %4757 = vmatprep.mubr.f32.mxu0 0.0
        %v4758 = vand.u32 %v4236, 4294901760
        %v4759 = vsub.f32 %v4236, %v4758
        %4760 = vmatmul.mubr.f32.gmra.mrb[0].mxu0 %v4759
        %v4761 = vpop.f32.mrb[0].mxu0
        %v4762 = vadd.f32 %v4616, %v4761
        %v4763 = vpop.f32.mrb[0].mxu0
        %4764 = vmatprep.mubr.f32.mxu0 0.0
        %v4765 = vand.u32 %v4238, 4294901760
        %v4766 = vsub.f32 %v4238, %v4765
        %4767 = vmatmul.mubr.f32.gmra.mrb[0].mxu0 %v4766
        %v4768 = vpop.f32.mrb[0].mxu0
        %v4769 = vadd.f32 %v4622, %v4768
        %v4770 = vpop.f32.mrb[0].mxu0
        %4771 = vmatprep.mubr.f32.mxu0 0.0
        %v4772 = vand.u32 %v4240, 4294901760
        %v4773 = vsub.f32 %v4240, %v4772
        %4774 = vmatmul.mubr.f32.gmra.mrb[0].mxu0 %v4773
        %v4775 = vpop.f32.mrb[0].mxu0
        %v4776 = vadd.f32 %v4628, %v4775
        %v4777 = vpop.f32.mrb[0].mxu0
        %4778 = vmatprep.mubr.f32.mxu0 0.0
        %v4779 = vand.u32 %v4242, 4294901760
        %v4780 = vsub.f32 %v4242, %v4779
        %4781 = vmatmul.mubr.f32.gmra.mrb[0].mxu0 %v4780
        %v4782 = vpop.f32.mrb[0].mxu0
        %v4783 = vadd.f32 %v4634, %v4782
        %v4784 = vpop.f32.mrb[0].mxu0
        %4785 = vmatprep.mubr.f32.mxu0 0.0
        %v4786 = vand.u32 %v4244, 4294901760
        %v4787 = vsub.f32 %v4244, %v4786
        %4788 = vmatmul.mubr.f32.gmra.mrb[0].mxu0 %v4787
        %v4789 = vpop.f32.mrb[0].mxu0
        %v4790 = vadd.f32 %v4640, %v4789
        %v4791 = vpop.f32.mrb[0].mxu0
        %4792 = vmatprep.mubr.f32.mxu0 0.0
        %v4793 = vand.u32 %v4246, 4294901760
        %v4794 = vsub.f32 %v4246, %v4793
        %4795 = vmatmul.mubr.f32.gmra.mrb[0].mxu0 %v4794
        %v4796 = vpop.f32.mrb[0].mxu0
        %v4797 = vadd.f32 %v4646, %v4796
        %v4798 = vpop.f32.mrb[0].mxu0
        %4799 = vmatprep.mubr.f32.mxu0 0.0
        %v4800 = vand.u32 %v4248, 4294901760
        %v4801 = vsub.f32 %v4248, %v4800
        %4802 = vmatmul.mubr.f32.gmra.mrb[0].mxu0 %v4801
        %v4803 = vpop.f32.mrb[0].mxu0
        %v4804 = vadd.f32 %v4652, %v4803
        %v4805 = vpop.f32.mrb[0].mxu0
        %4806 = vmatprep.mubr.f32.mxu0 0.0
        %v4807 = vand.u32 %v4250, 4294901760
        %v4808 = vsub.f32 %v4250, %v4807
        %4809 = vmatmul.mubr.f32.gmra.mrb[0].mxu0 %v4808
        %v4810 = vpop.f32.mrb[0].mxu0
        %v4811 = vadd.f32 %v4658, %v4810
        %v4812 = vpop.f32.mrb[0].mxu0
        %4813 = vdwg.mxu0
        %4814 = vmatprep.subr.mxu0 0.0
        %v4815 = vand.u32 %v4291, 4294901760
        %4816 = vmatpush1.msra.mxu0 %v4815
        %4817 = vmatprep.subr.mxu0 0.0
        %v4818 = vand.u32 %v4292, 4294901760
        %4819 = vmatpush1.msra.mxu0 %v4818
        %4820 = vmatprep.subr.mxu0 0.0
        %v4821 = vand.u32 %v4293, 4294901760
        %4822 = vmatpush1.msra.mxu0 %v4821
        %4823 = vmatprep.subr.mxu0 0.0
        %v4824 = vand.u32 %v4294, 4294901760
        %4825 = vmatpush1.msra.mxu0 %v4824
        %4826 = vmatprep.subr.mxu0 0.0
        %v4827 = vand.u32 %v4295, 4294901760
        %4828 = vmatpush1.msra.mxu0 %v4827
        %4829 = vmatprep.subr.mxu0 0.0
        %v4830 = vand.u32 %v4296, 4294901760
        %4831 = vmatpush1.msra.mxu0 %v4830
        %4832 = vmatprep.subr.mxu0 0.0
        %v4833 = vand.u32 %v4297, 4294901760
        %4834 = vmatpush1.msra.mxu0 %v4833
        %4835 = vmatprep.subr.mxu0 0.0
        %v4836 = vand.u32 %v4298, 4294901760
        %4837 = vmatpush1.msra.mxu0 %v4836
        %4838 = vmatprep.subr.mxu0 0.0
        %v4839 = vand.u32 %v4299, 4294901760
        %4840 = vmatpush1.msra.mxu0 %v4839
        %4841 = vmatprep.subr.mxu0 0.0
        %v4842 = vand.u32 %v4300, 4294901760
        %4843 = vmatpush1.msra.mxu0 %v4842
        %4844 = vmatprep.subr.mxu0 0.0
        %v4845 = vand.u32 %v4301, 4294901760
        %4846 = vmatpush1.msra.mxu0 %v4845
        %4847 = vmatprep.subr.mxu0 0.0
        %v4848 = vand.u32 %v4302, 4294901760
        %4849 = vmatpush1.msra.mxu0 %v4848
        %4850 = vmatprep.subr.mxu0 0.0
        %v4851 = vand.u32 %v4303, 4294901760
        %4852 = vmatpush1.msra.mxu0 %v4851
        %4853 = vmatprep.subr.mxu0 0.0
        %v4854 = vand.u32 %v4304, 4294901760
        %4855 = vmatpush1.msra.mxu0 %v4854
        %4856 = vmatprep.subr.mxu0 0.0
        %v4857 = vand.u32 %v4305, 4294901760
        %4858 = vmatpush1.msra.mxu0 %v4857
        %4859 = vmatprep.subr.mxu0 0.0
        %v4860 = vand.u32 %v4306, 4294901760
        %4861 = vmatpush1.msra.mxu0 %v4860
        %4862 = vmatprep.subr.mxu0 0.0
        %4863 = vmatpush1.msra.mxu0 0.0
        %4864 = vmatprep.subr.mxu0 0.0
        %4865 = vmatpush1.msra.mxu0 0.0
        %4866 = vmatprep.subr.mxu0 0.0
        %4867 = vmatpush1.msra.mxu0 0.0
        %4868 = vmatprep.subr.mxu0 0.0
        %4869 = vmatpush1.msra.mxu0 0.0
        %4870 = vmatprep.subr.mxu0 0.0
        %4871 = vmatpush1.msra.mxu0 0.0
        %4872 = vmatprep.subr.mxu0 0.0
        %4873 = vmatpush1.msra.mxu0 0.0
        %4874 = vmatprep.subr.mxu0 0.0
        %4875 = vmatpush1.msra.mxu0 0.0
        %4876 = vmatprep.subr.mxu0 0.0
        %4877 = vmatpush1.msra.mxu0 0.0
        %4878 = vmatprep.subr.mxu0 0.0
        %4879 = vmatpush1.msra.mxu0 0.0
        %4880 = vmatprep.subr.mxu0 0.0
        %4881 = vmatpush1.msra.mxu0 0.0
        %4882 = vmatprep.subr.mxu0 0.0
        %4883 = vmatpush1.msra.mxu0 0.0
        %4884 = vmatprep.subr.mxu0 0.0
        %4885 = vmatpush1.msra.mxu0 0.0
        %4886 = vmatprep.subr.mxu0 0.0
        %4887 = vmatpush1.msra.mxu0 0.0
        %4888 = vmatprep.subr.mxu0 0.0
        %4889 = vmatpush1.msra.mxu0 0.0
        %4890 = vmatprep.subr.mxu0 0.0
        %4891 = vmatpush1.msra.mxu0 0.0
        %4892 = vmatprep.subr.mxu0 0.0
        %4893 = vmatpush1.msra.mxu0 0.0
        %4894 = vmatprep.mubr.f32.mxu0 0.0
        %v4895 = vand.u32 %v4236, 4294901760
        %v4896 = vsub.f32 %v4236, %v4895
        %v4897 = vand.u32 %v4896, 4294901760
        %4898 = vmatmul.mubr.f32.gmra.mrb[0].mxu0 %v4897
        %v4899 = vpop.f32.mrb[0].mxu0
        %v4900 = vadd.f32 %v4762, %v4899
        %v4901 = vpop.f32.mrb[0].mxu0
        %4902 = vmatprep.mubr.f32.mxu0 0.0
        %v4903 = vand.u32 %v4238, 4294901760
        %v4904 = vsub.f32 %v4238, %v4903
        %v4905 = vand.u32 %v4904, 4294901760
        %4906 = vmatmul.mubr.f32.gmra.mrb[0].mxu0 %v4905
        %v4907 = vpop.f32.mrb[0].mxu0
        %v4908 = vadd.f32 %v4769, %v4907
        %v4909 = vpop.f32.mrb[0].mxu0
        %4910 = vmatprep.mubr.f32.mxu0 0.0
        %v4911 = vand.u32 %v4240, 4294901760
        %v4912 = vsub.f32 %v4240, %v4911
        %v4913 = vand.u32 %v4912, 4294901760
        %4914 = vmatmul.mubr.f32.gmra.mrb[0].mxu0 %v4913
        %v4915 = vpop.f32.mrb[0].mxu0
        %v4916 = vadd.f32 %v4776, %v4915
        %v4917 = vpop.f32.mrb[0].mxu0
        %4918 = vmatprep.mubr.f32.mxu0 0.0
        %v4919 = vand.u32 %v4242, 4294901760
        %v4920 = vsub.f32 %v4242, %v4919
        %v4921 = vand.u32 %v4920, 4294901760
        %4922 = vmatmul.mubr.f32.gmra.mrb[0].mxu0 %v4921
        %v4923 = vpop.f32.mrb[0].mxu0
        %v4924 = vadd.f32 %v4783, %v4923
        %v4925 = vpop.f32.mrb[0].mxu0
        %4926 = vmatprep.mubr.f32.mxu0 0.0
        %v4927 = vand.u32 %v4244, 4294901760
        %v4928 = vsub.f32 %v4244, %v4927
        %v4929 = vand.u32 %v4928, 4294901760
        %4930 = vmatmul.mubr.f32.gmra.mrb[0].mxu0 %v4929
        %v4931 = vpop.f32.mrb[0].mxu0
        %v4932 = vadd.f32 %v4790, %v4931
        %v4933 = vpop.f32.mrb[0].mxu0
        %4934 = vmatprep.mubr.f32.mxu0 0.0
        %v4935 = vand.u32 %v4246, 4294901760
        %v4936 = vsub.f32 %v4246, %v4935
        %v4937 = vand.u32 %v4936, 4294901760
        %4938 = vmatmul.mubr.f32.gmra.mrb[0].mxu0 %v4937
        %v4939 = vpop.f32.mrb[0].mxu0
        %v4940 = vadd.f32 %v4797, %v4939
        %v4941 = vpop.f32.mrb[0].mxu0
        %4942 = vmatprep.mubr.f32.mxu0 0.0
        %v4943 = vand.u32 %v4248, 4294901760
        %v4944 = vsub.f32 %v4248, %v4943
        %v4945 = vand.u32 %v4944, 4294901760
        %4946 = vmatmul.mubr.f32.gmra.mrb[0].mxu0 %v4945
        %v4947 = vpop.f32.mrb[0].mxu0
        %v4948 = vadd.f32 %v4804, %v4947
        %v4949 = vpop.f32.mrb[0].mxu0
        %4950 = vmatprep.mubr.f32.mxu0 0.0
        %v4951 = vand.u32 %v4250, 4294901760
        %v4952 = vsub.f32 %v4250, %v4951
        %v4953 = vand.u32 %v4952, 4294901760
        %4954 = vmatmul.mubr.f32.gmra.mrb[0].mxu0 %v4953
        %v4955 = vpop.f32.mrb[0].mxu0
        %v4956 = vadd.f32 %v4811, %v4955
        %v4957 = vpop.f32.mrb[0].mxu0
        %4958 = vdwg.mxu0
        %4959 = vmatprep.subr.mxu0 0.0
        %v4960 = vand.u32 %v4291, 4294901760
        %v4961 = vsub.f32 %v4291, %v4960
        %v4962 = vand.u32 %v4961, 4294901760
        %4963 = vmatpush1.msra.mxu0 %v4962
        %4964 = vmatprep.subr.mxu0 0.0
        %v4965 = vand.u32 %v4292, 4294901760
        %v4966 = vsub.f32 %v4292, %v4965
        %v4967 = vand.u32 %v4966, 4294901760
        %4968 = vmatpush1.msra.mxu0 %v4967
        %4969 = vmatprep.subr.mxu0 0.0
        %v4970 = vand.u32 %v4293, 4294901760
        %v4971 = vsub.f32 %v4293, %v4970
        %v4972 = vand.u32 %v4971, 4294901760
        %4973 = vmatpush1.msra.mxu0 %v4972
        %4974 = vmatprep.subr.mxu0 0.0
        %v4975 = vand.u32 %v4294, 4294901760
        %v4976 = vsub.f32 %v4294, %v4975
        %v4977 = vand.u32 %v4976, 4294901760
        %4978 = vmatpush1.msra.mxu0 %v4977
        %4979 = vmatprep.subr.mxu0 0.0
        %v4980 = vand.u32 %v4295, 4294901760
        %v4981 = vsub.f32 %v4295, %v4980
        %v4982 = vand.u32 %v4981, 4294901760
        %4983 = vmatpush1.msra.mxu0 %v4982
        %4984 = vmatprep.subr.mxu0 0.0
        %v4985 = vand.u32 %v4296, 4294901760
        %v4986 = vsub.f32 %v4296, %v4985
        %v4987 = vand.u32 %v4986, 4294901760
        %4988 = vmatpush1.msra.mxu0 %v4987
        %4989 = vmatprep.subr.mxu0 0.0
        %v4990 = vand.u32 %v4297, 4294901760
        %v4991 = vsub.f32 %v4297, %v4990
        %v4992 = vand.u32 %v4991, 4294901760
        %4993 = vmatpush1.msra.mxu0 %v4992
        %4994 = vmatprep.subr.mxu0 0.0
        %v4995 = vand.u32 %v4298, 4294901760
        %v4996 = vsub.f32 %v4298, %v4995
        %v4997 = vand.u32 %v4996, 4294901760
        %4998 = vmatpush1.msra.mxu0 %v4997
        %4999 = vmatprep.subr.mxu0 0.0
        %v5000 = vand.u32 %v4299, 4294901760
        %v5001 = vsub.f32 %v4299, %v5000
        %v5002 = vand.u32 %v5001, 4294901760
        %5003 = vmatpush1.msra.mxu0 %v5002
        %5004 = vmatprep.subr.mxu0 0.0
        %v5005 = vand.u32 %v4300, 4294901760
        %v5006 = vsub.f32 %v4300, %v5005
        %v5007 = vand.u32 %v5006, 4294901760
        %5008 = vmatpush1.msra.mxu0 %v5007
        %5009 = vmatprep.subr.mxu0 0.0
        %v5010 = vand.u32 %v4301, 4294901760
        %v5011 = vsub.f32 %v4301, %v5010
        %v5012 = vand.u32 %v5011, 4294901760
        %5013 = vmatpush1.msra.mxu0 %v5012
        %5014 = vmatprep.subr.mxu0 0.0
        %v5015 = vand.u32 %v4302, 4294901760
        %v5016 = vsub.f32 %v4302, %v5015
        %v5017 = vand.u32 %v5016, 4294901760
        %5018 = vmatpush1.msra.mxu0 %v5017
        %5019 = vmatprep.subr.mxu0 0.0
        %v5020 = vand.u32 %v4303, 4294901760
        %v5021 = vsub.f32 %v4303, %v5020
        %v5022 = vand.u32 %v5021, 4294901760
        %5023 = vmatpush1.msra.mxu0 %v5022
        %5024 = vmatprep.subr.mxu0 0.0
        %v5025 = vand.u32 %v4304, 4294901760
        %v5026 = vsub.f32 %v4304, %v5025
        %v5027 = vand.u32 %v5026, 4294901760
        %5028 = vmatpush1.msra.mxu0 %v5027
        %5029 = vmatprep.subr.mxu0 0.0
        %v5030 = vand.u32 %v4305, 4294901760
        %v5031 = vsub.f32 %v4305, %v5030
        %v5032 = vand.u32 %v5031, 4294901760
        %5033 = vmatpush1.msra.mxu0 %v5032
        %5034 = vmatprep.subr.mxu0 0.0
        %v5035 = vand.u32 %v4306, 4294901760
        %v5036 = vsub.f32 %v4306, %v5035
        %v5037 = vand.u32 %v5036, 4294901760
        %5038 = vmatpush1.msra.mxu0 %v5037
        %5039 = vmatprep.subr.mxu0 0.0
        %5040 = vmatpush1.msra.mxu0 0.0
        %5041 = vmatprep.subr.mxu0 0.0
        %5042 = vmatpush1.msra.mxu0 0.0
        %5043 = vmatprep.subr.mxu0 0.0
        %5044 = vmatpush1.msra.mxu0 0.0
        %5045 = vmatprep.subr.mxu0 0.0
        %5046 = vmatpush1.msra.mxu0 0.0
        %5047 = vmatprep.subr.mxu0 0.0
        %5048 = vmatpush1.msra.mxu0 0.0
        %5049 = vmatprep.subr.mxu0 0.0
        %5050 = vmatpush1.msra.mxu0 0.0
        %5051 = vmatprep.subr.mxu0 0.0
        %5052 = vmatpush1.msra.mxu0 0.0
        %5053 = vmatprep.subr.mxu0 0.0
        %5054 = vmatpush1.msra.mxu0 0.0
        %5055 = vmatprep.subr.mxu0 0.0
        %5056 = vmatpush1.msra.mxu0 0.0
        %5057 = vmatprep.subr.mxu0 0.0
        %5058 = vmatpush1.msra.mxu0 0.0
        %5059 = vmatprep.subr.mxu0 0.0
        %5060 = vmatpush1.msra.mxu0 0.0
        %5061 = vmatprep.subr.mxu0 0.0
        %5062 = vmatpush1.msra.mxu0 0.0
        %5063 = vmatprep.subr.mxu0 0.0
        %5064 = vmatpush1.msra.mxu0 0.0
        %5065 = vmatprep.subr.mxu0 0.0
        %5066 = vmatpush1.msra.mxu0 0.0
        %5067 = vmatprep.subr.mxu0 0.0
        %5068 = vmatpush1.msra.mxu0 0.0
        %5069 = vmatprep.subr.mxu0 0.0
        %5070 = vmatpush1.msra.mxu0 0.0
        %5071 = vmatprep.mubr.f32.mxu0 0.0
        %v5072 = vand.u32 %v4236, 4294901760
        %5073 = vmatmul.mubr.f32.gmra.mrb[0].mxu0 %v5072
        %v5074 = vpop.f32.mrb[0].mxu0
        %v5075 = vadd.f32 %v4900, %v5074
        %v5076 = vpop.f32.mrb[0].mxu0
        %5077 = vmatprep.mubr.f32.mxu0 0.0
        %v5078 = vand.u32 %v4238, 4294901760
        %5079 = vmatmul.mubr.f32.gmra.mrb[0].mxu0 %v5078
        %v5080 = vpop.f32.mrb[0].mxu0
        %v5081 = vadd.f32 %v4908, %v5080
        %v5082 = vpop.f32.mrb[0].mxu0
        %5083 = vmatprep.mubr.f32.mxu0 0.0
        %v5084 = vand.u32 %v4240, 4294901760
        %5085 = vmatmul.mubr.f32.gmra.mrb[0].mxu0 %v5084
        %v5086 = vpop.f32.mrb[0].mxu0
        %v5087 = vadd.f32 %v4916, %v5086
        %v5088 = vpop.f32.mrb[0].mxu0
        %5089 = vmatprep.mubr.f32.mxu0 0.0
        %v5090 = vand.u32 %v4242, 4294901760
        %5091 = vmatmul.mubr.f32.gmra.mrb[0].mxu0 %v5090
        %v5092 = vpop.f32.mrb[0].mxu0
        %v5093 = vadd.f32 %v4924, %v5092
        %v5094 = vpop.f32.mrb[0].mxu0
        %5095 = vmatprep.mubr.f32.mxu0 0.0
        %v5096 = vand.u32 %v4244, 4294901760
        %5097 = vmatmul.mubr.f32.gmra.mrb[0].mxu0 %v5096
        %v5098 = vpop.f32.mrb[0].mxu0
        %v5099 = vadd.f32 %v4932, %v5098
        %v5100 = vpop.f32.mrb[0].mxu0
        %5101 = vmatprep.mubr.f32.mxu0 0.0
        %v5102 = vand.u32 %v4246, 4294901760
        %5103 = vmatmul.mubr.f32.gmra.mrb[0].mxu0 %v5102
        %v5104 = vpop.f32.mrb[0].mxu0
        %v5105 = vadd.f32 %v4940, %v5104
        %v5106 = vpop.f32.mrb[0].mxu0
        %5107 = vmatprep.mubr.f32.mxu0 0.0
        %v5108 = vand.u32 %v4248, 4294901760
        %5109 = vmatmul.mubr.f32.gmra.mrb[0].mxu0 %v5108
        %v5110 = vpop.f32.mrb[0].mxu0
        %v5111 = vadd.f32 %v4948, %v5110
        %v5112 = vpop.f32.mrb[0].mxu0
        %5113 = vmatprep.mubr.f32.mxu0 0.0
        %v5114 = vand.u32 %v4250, 4294901760
        %5115 = vmatmul.mubr.f32.gmra.mrb[0].mxu0 %v5114
        %v5116 = vpop.f32.mrb[0].mxu0
        %v5117 = vadd.f32 %v4956, %v5116
        %v5118 = vpop.f32.mrb[0].mxu0
        %5119 = vdwg.mxu0
        %5120 = vmatprep.subr.mxu0 0.0
        %v5121 = vand.u32 %v4291, 4294901760
        %5122 = vmatpush1.msra.mxu0 %v5121
        %5123 = vmatprep.subr.mxu0 0.0
        %v5124 = vand.u32 %v4292, 4294901760
        %5125 = vmatpush1.msra.mxu0 %v5124
        %5126 = vmatprep.subr.mxu0 0.0
        %v5127 = vand.u32 %v4293, 4294901760
        %5128 = vmatpush1.msra.mxu0 %v5127
        %5129 = vmatprep.subr.mxu0 0.0
        %v5130 = vand.u32 %v4294, 4294901760
        %5131 = vmatpush1.msra.mxu0 %v5130
        %5132 = vmatprep.subr.mxu0 0.0
        %v5133 = vand.u32 %v4295, 4294901760
        %5134 = vmatpush1.msra.mxu0 %v5133
        %5135 = vmatprep.subr.mxu0 0.0
        %v5136 = vand.u32 %v4296, 4294901760
        %5137 = vmatpush1.msra.mxu0 %v5136
        %5138 = vmatprep.subr.mxu0 0.0
        %v5139 = vand.u32 %v4297, 4294901760
        %5140 = vmatpush1.msra.mxu0 %v5139
        %5141 = vmatprep.subr.mxu0 0.0
        %v5142 = vand.u32 %v4298, 4294901760
        %5143 = vmatpush1.msra.mxu0 %v5142
        %5144 = vmatprep.subr.mxu0 0.0
        %v5145 = vand.u32 %v4299, 4294901760
        %5146 = vmatpush1.msra.mxu0 %v5145
        %5147 = vmatprep.subr.mxu0 0.0
        %v5148 = vand.u32 %v4300, 4294901760
        %5149 = vmatpush1.msra.mxu0 %v5148
        %5150 = vmatprep.subr.mxu0 0.0
        %v5151 = vand.u32 %v4301, 4294901760
        %5152 = vmatpush1.msra.mxu0 %v5151
        %5153 = vmatprep.subr.mxu0 0.0
        %v5154 = vand.u32 %v4302, 4294901760
        %5155 = vmatpush1.msra.mxu0 %v5154
        %5156 = vmatprep.subr.mxu0 0.0
        %v5157 = vand.u32 %v4303, 4294901760
        %5158 = vmatpush1.msra.mxu0 %v5157
        %5159 = vmatprep.subr.mxu0 0.0
        %v5160 = vand.u32 %v4304, 4294901760
        %5161 = vmatpush1.msra.mxu0 %v5160
        %5162 = vmatprep.subr.mxu0 0.0
        %v5163 = vand.u32 %v4305, 4294901760
        %5164 = vmatpush1.msra.mxu0 %v5163
        %5165 = vmatprep.subr.mxu0 0.0
        %v5166 = vand.u32 %v4306, 4294901760
        %5167 = vmatpush1.msra.mxu0 %v5166
        %5168 = vmatprep.subr.mxu0 0.0
        %5169 = vmatpush1.msra.mxu0 0.0
        %5170 = vmatprep.subr.mxu0 0.0
        %5171 = vmatpush1.msra.mxu0 0.0
        %5172 = vmatprep.subr.mxu0 0.0
        %5173 = vmatpush1.msra.mxu0 0.0
        %5174 = vmatprep.subr.mxu0 0.0
        %5175 = vmatpush1.msra.mxu0 0.0
        %5176 = vmatprep.subr.mxu0 0.0
        %5177 = vmatpush1.msra.mxu0 0.0
        %5178 = vmatprep.subr.mxu0 0.0
        %5179 = vmatpush1.msra.mxu0 0.0
        %5180 = vmatprep.subr.mxu0 0.0
        %5181 = vmatpush1.msra.mxu0 0.0
        %5182 = vmatprep.subr.mxu0 0.0
        %5183 = vmatpush1.msra.mxu0 0.0
        %5184 = vmatprep.subr.mxu0 0.0
        %5185 = vmatpush1.msra.mxu0 0.0
        %5186 = vmatprep.subr.mxu0 0.0
        %5187 = vmatpush1.msra.mxu0 0.0
        %5188 = vmatprep.subr.mxu0 0.0
        %5189 = vmatpush1.msra.mxu0 0.0
        %5190 = vmatprep.subr.mxu0 0.0
        %5191 = vmatpush1.msra.mxu0 0.0
        %5192 = vmatprep.subr.mxu0 0.0
        %5193 = vmatpush1.msra.mxu0 0.0
        %5194 = vmatprep.subr.mxu0 0.0
        %5195 = vmatpush1.msra.mxu0 0.0
        %5196 = vmatprep.subr.mxu0 0.0
        %5197 = vmatpush1.msra.mxu0 0.0
        %5198 = vmatprep.subr.mxu0 0.0
        %5199 = vmatpush1.msra.mxu0 0.0
        %5200 = vmatprep.mubr.f32.mxu0 0.0
        %v5201 = vand.u32 %v4236, 4294901760
        %5202 = vmatmul.mubr.f32.gmra.mrb[0].mxu0 %v5201
        %v5203 = vpop.f32.mrb[0].mxu0
        %v5204 = vadd.f32 %v5075, %v5203
        %v5205 = vpop.f32.mrb[0].mxu0
        %5206 = vmatprep.mubr.f32.mxu0 0.0
        %v5207 = vand.u32 %v4238, 4294901760
        %5208 = vmatmul.mubr.f32.gmra.mrb[0].mxu0 %v5207
        %v5209 = vpop.f32.mrb[0].mxu0
        %v5210 = vadd.f32 %v5081, %v5209
        %v5211 = vpop.f32.mrb[0].mxu0
        %5212 = vmatprep.mubr.f32.mxu0 0.0
        %v5213 = vand.u32 %v4240, 4294901760
        %5214 = vmatmul.mubr.f32.gmra.mrb[0].mxu0 %v5213
        %v5215 = vpop.f32.mrb[0].mxu0
        %v5216 = vadd.f32 %v5087, %v5215
        %v5217 = vpop.f32.mrb[0].mxu0
        %5218 = vmatprep.mubr.f32.mxu0 0.0
        %v5219 = vand.u32 %v4242, 4294901760
        %5220 = vmatmul.mubr.f32.gmra.mrb[0].mxu0 %v5219
        %v5221 = vpop.f32.mrb[0].mxu0
        %v5222 = vadd.f32 %v5093, %v5221
        %v5223 = vpop.f32.mrb[0].mxu0
        %5224 = vmatprep.mubr.f32.mxu0 0.0
        %v5225 = vand.u32 %v4244, 4294901760
        %5226 = vmatmul.mubr.f32.gmra.mrb[0].mxu0 %v5225
        %v5227 = vpop.f32.mrb[0].mxu0
        %v5228 = vadd.f32 %v5099, %v5227
        %v5229 = vpop.f32.mrb[0].mxu0
        %5230 = vmatprep.mubr.f32.mxu0 0.0
        %v5231 = vand.u32 %v4246, 4294901760
        %5232 = vmatmul.mubr.f32.gmra.mrb[0].mxu0 %v5231
        %v5233 = vpop.f32.mrb[0].mxu0
        %v5234 = vadd.f32 %v5105, %v5233
        %v5235 = vpop.f32.mrb[0].mxu0
        %5236 = vmatprep.mubr.f32.mxu0 0.0
        %v5237 = vand.u32 %v4248, 4294901760
        %5238 = vmatmul.mubr.f32.gmra.mrb[0].mxu0 %v5237
        %v5239 = vpop.f32.mrb[0].mxu0
        %v5240 = vadd.f32 %v5111, %v5239
        %v5241 = vpop.f32.mrb[0].mxu0
        %5242 = vmatprep.mubr.f32.mxu0 0.0
        %v5243 = vand.u32 %v4250, 4294901760
        %5244 = vmatmul.mubr.f32.gmra.mrb[0].mxu0 %v5243
        %v5245 = vpop.f32.mrb[0].mxu0
        %v5246 = vadd.f32 %v5117, %v5245
        %v5247 = vpop.f32.mrb[0].mxu0
        %5248 = vdwg.mxu0
        %5249 = vmatprep.subr.mxu0 0.0
        %v5250 = vand.u32 %v4291, 4294901760
        %5251 = vmatpush1.msra.mxu0 %v5250
        %5252 = vmatprep.subr.mxu0 0.0
        %v5253 = vand.u32 %v4292, 4294901760
        %5254 = vmatpush1.msra.mxu0 %v5253
        %5255 = vmatprep.subr.mxu0 0.0
        %v5256 = vand.u32 %v4293, 4294901760
        %5257 = vmatpush1.msra.mxu0 %v5256
        %5258 = vmatprep.subr.mxu0 0.0
        %v5259 = vand.u32 %v4294, 4294901760
        %5260 = vmatpush1.msra.mxu0 %v5259
        %5261 = vmatprep.subr.mxu0 0.0
        %v5262 = vand.u32 %v4295, 4294901760
        %5263 = vmatpush1.msra.mxu0 %v5262
        %5264 = vmatprep.subr.mxu0 0.0
        %v5265 = vand.u32 %v4296, 4294901760
        %5266 = vmatpush1.msra.mxu0 %v5265
        %5267 = vmatprep.subr.mxu0 0.0
        %v5268 = vand.u32 %v4297, 4294901760
        %5269 = vmatpush1.msra.mxu0 %v5268
        %5270 = vmatprep.subr.mxu0 0.0
        %v5271 = vand.u32 %v4298, 4294901760
        %5272 = vmatpush1.msra.mxu0 %v5271
        %5273 = vmatprep.subr.mxu0 0.0
        %v5274 = vand.u32 %v4299, 4294901760
        %5275 = vmatpush1.msra.mxu0 %v5274
        %5276 = vmatprep.subr.mxu0 0.0
        %v5277 = vand.u32 %v4300, 4294901760
        %5278 = vmatpush1.msra.mxu0 %v5277
        %5279 = vmatprep.subr.mxu0 0.0
        %v5280 = vand.u32 %v4301, 4294901760
        %5281 = vmatpush1.msra.mxu0 %v5280
        %5282 = vmatprep.subr.mxu0 0.0
        %v5283 = vand.u32 %v4302, 4294901760
        %5284 = vmatpush1.msra.mxu0 %v5283
        %5285 = vmatprep.subr.mxu0 0.0
        %v5286 = vand.u32 %v4303, 4294901760
        %5287 = vmatpush1.msra.mxu0 %v5286
        %5288 = vmatprep.subr.mxu0 0.0
        %v5289 = vand.u32 %v4304, 4294901760
        %5290 = vmatpush1.msra.mxu0 %v5289
        %5291 = vmatprep.subr.mxu0 0.0
        %v5292 = vand.u32 %v4305, 4294901760
        %5293 = vmatpush1.msra.mxu0 %v5292
        %5294 = vmatprep.subr.mxu0 0.0
        %v5295 = vand.u32 %v4306, 4294901760
        %5296 = vmatpush1.msra.mxu0 %v5295
        %5297 = vmatprep.subr.mxu0 0.0
        %5298 = vmatpush1.msra.mxu0 0.0
        %5299 = vmatprep.subr.mxu0 0.0
        %5300 = vmatpush1.msra.mxu0 0.0
        %5301 = vmatprep.subr.mxu0 0.0
        %5302 = vmatpush1.msra.mxu0 0.0
        %5303 = vmatprep.subr.mxu0 0.0
        %5304 = vmatpush1.msra.mxu0 0.0
        %5305 = vmatprep.subr.mxu0 0.0
        %5306 = vmatpush1.msra.mxu0 0.0
        %5307 = vmatprep.subr.mxu0 0.0
        %5308 = vmatpush1.msra.mxu0 0.0
        %5309 = vmatprep.subr.mxu0 0.0
        %5310 = vmatpush1.msra.mxu0 0.0
        %5311 = vmatprep.subr.mxu0 0.0
        %5312 = vmatpush1.msra.mxu0 0.0
        %5313 = vmatprep.subr.mxu0 0.0
        %5314 = vmatpush1.msra.mxu0 0.0
        %5315 = vmatprep.subr.mxu0 0.0
        %5316 = vmatpush1.msra.mxu0 0.0
        %5317 = vmatprep.subr.mxu0 0.0
        %5318 = vmatpush1.msra.mxu0 0.0
        %5319 = vmatprep.subr.mxu0 0.0
        %5320 = vmatpush1.msra.mxu0 0.0
        %5321 = vmatprep.subr.mxu0 0.0
        %5322 = vmatpush1.msra.mxu0 0.0
        %5323 = vmatprep.subr.mxu0 0.0
        %5324 = vmatpush1.msra.mxu0 0.0
        %5325 = vmatprep.subr.mxu0 0.0
        %5326 = vmatpush1.msra.mxu0 0.0
        %5327 = vmatprep.subr.mxu0 0.0
        %5328 = vmatpush1.msra.mxu0 0.0
        %5329 = vmatprep.mubr.f32.mxu0 0.0
        %v5330 = vand.u32 %v4260, 4294901760
        %v5331 = vsub.f32 %v4260, %v5330
        %v5332 = vand.u32 %v5331, 4294901760
        %v5333 = vsub.f32 %v5331, %v5332
        %v5334 = vand.u32 %v5333, 4294901760
        %5335 = vmatmul.mubr.f32.gmra.mrb[0].mxu0 %v5334
        %v5336 = vpop.f32.mrb[0].mxu0
        %v5337 = vadd.f32 0.0, %v5336
        %v5338 = vpop.f32.mrb[0].mxu0
        %5339 = vmatprep.mubr.f32.mxu0 0.0
        %v5340 = vand.u32 %v4262, 4294901760
        %v5341 = vsub.f32 %v4262, %v5340
        %v5342 = vand.u32 %v5341, 4294901760
        %v5343 = vsub.f32 %v5341, %v5342
        %v5344 = vand.u32 %v5343, 4294901760
        %5345 = vmatmul.mubr.f32.gmra.mrb[0].mxu0 %v5344
        %v5346 = vpop.f32.mrb[0].mxu0
        %v5347 = vadd.f32 0.0, %v5346
        %v5348 = vpop.f32.mrb[0].mxu0
        %5349 = vmatprep.mubr.f32.mxu0 0.0
        %v5350 = vand.u32 %v4264, 4294901760
        %v5351 = vsub.f32 %v4264, %v5350
        %v5352 = vand.u32 %v5351, 4294901760
        %v5353 = vsub.f32 %v5351, %v5352
        %v5354 = vand.u32 %v5353, 4294901760
        %5355 = vmatmul.mubr.f32.gmra.mrb[0].mxu0 %v5354
        %v5356 = vpop.f32.mrb[0].mxu0
        %v5357 = vadd.f32 0.0, %v5356
        %v5358 = vpop.f32.mrb[0].mxu0
        %5359 = vmatprep.mubr.f32.mxu0 0.0
        %v5360 = vand.u32 %v4266, 4294901760
        %v5361 = vsub.f32 %v4266, %v5360
        %v5362 = vand.u32 %v5361, 4294901760
        %v5363 = vsub.f32 %v5361, %v5362
        %v5364 = vand.u32 %v5363, 4294901760
        %5365 = vmatmul.mubr.f32.gmra.mrb[0].mxu0 %v5364
        %v5366 = vpop.f32.mrb[0].mxu0
        %v5367 = vadd.f32 0.0, %v5366
        %v5368 = vpop.f32.mrb[0].mxu0
        %5369 = vmatprep.mubr.f32.mxu0 0.0
        %v5370 = vand.u32 %v4268, 4294901760
        %v5371 = vsub.f32 %v4268, %v5370
        %v5372 = vand.u32 %v5371, 4294901760
        %v5373 = vsub.f32 %v5371, %v5372
        %v5374 = vand.u32 %v5373, 4294901760
        %5375 = vmatmul.mubr.f32.gmra.mrb[0].mxu0 %v5374
        %v5376 = vpop.f32.mrb[0].mxu0
        %v5377 = vadd.f32 0.0, %v5376
        %v5378 = vpop.f32.mrb[0].mxu0
        %5379 = vmatprep.mubr.f32.mxu0 0.0
        %v5380 = vand.u32 %v4270, 4294901760
        %v5381 = vsub.f32 %v4270, %v5380
        %v5382 = vand.u32 %v5381, 4294901760
        %v5383 = vsub.f32 %v5381, %v5382
        %v5384 = vand.u32 %v5383, 4294901760
        %5385 = vmatmul.mubr.f32.gmra.mrb[0].mxu0 %v5384
        %v5386 = vpop.f32.mrb[0].mxu0
        %v5387 = vadd.f32 0.0, %v5386
        %v5388 = vpop.f32.mrb[0].mxu0
        %5389 = vmatprep.mubr.f32.mxu0 0.0
        %v5390 = vand.u32 %v4272, 4294901760
        %v5391 = vsub.f32 %v4272, %v5390
        %v5392 = vand.u32 %v5391, 4294901760
        %v5393 = vsub.f32 %v5391, %v5392
        %v5394 = vand.u32 %v5393, 4294901760
        %5395 = vmatmul.mubr.f32.gmra.mrb[0].mxu0 %v5394
        %v5396 = vpop.f32.mrb[0].mxu0
        %v5397 = vadd.f32 0.0, %v5396
        %v5398 = vpop.f32.mrb[0].mxu0
        %5399 = vmatprep.mubr.f32.mxu0 0.0
        %v5400 = vand.u32 %v4274, 4294901760
        %v5401 = vsub.f32 %v4274, %v5400
        %v5402 = vand.u32 %v5401, 4294901760
        %v5403 = vsub.f32 %v5401, %v5402
        %v5404 = vand.u32 %v5403, 4294901760
        %5405 = vmatmul.mubr.f32.gmra.mrb[0].mxu0 %v5404
        %v5406 = vpop.f32.mrb[0].mxu0
        %v5407 = vadd.f32 0.0, %v5406
        %v5408 = vpop.f32.mrb[0].mxu0
        %5409 = vdwg.mxu0
        %5410 = vmatprep.subr.mxu0 0.0
        %v5411 = vand.u32 %v4291, 4294901760
        %v5412 = vsub.f32 %v4291, %v5411
        %v5413 = vand.u32 %v5412, 4294901760
        %v5414 = vsub.f32 %v5412, %v5413
        %v5415 = vand.u32 %v5414, 4294901760
        %5416 = vmatpush1.msra.mxu0 %v5415
        %5417 = vmatprep.subr.mxu0 0.0
        %v5418 = vand.u32 %v4292, 4294901760
        %v5419 = vsub.f32 %v4292, %v5418
        %v5420 = vand.u32 %v5419, 4294901760
        %v5421 = vsub.f32 %v5419, %v5420
        %v5422 = vand.u32 %v5421, 4294901760
        %5423 = vmatpush1.msra.mxu0 %v5422
        %5424 = vmatprep.subr.mxu0 0.0
        %v5425 = vand.u32 %v4293, 4294901760
        %v5426 = vsub.f32 %v4293, %v5425
        %v5427 = vand.u32 %v5426, 4294901760
        %v5428 = vsub.f32 %v5426, %v5427
        %v5429 = vand.u32 %v5428, 4294901760
        %5430 = vmatpush1.msra.mxu0 %v5429
        %5431 = vmatprep.subr.mxu0 0.0
        %v5432 = vand.u32 %v4294, 4294901760
        %v5433 = vsub.f32 %v4294, %v5432
        %v5434 = vand.u32 %v5433, 4294901760
        %v5435 = vsub.f32 %v5433, %v5434
        %v5436 = vand.u32 %v5435, 4294901760
        %5437 = vmatpush1.msra.mxu0 %v5436
        %5438 = vmatprep.subr.mxu0 0.0
        %v5439 = vand.u32 %v4295, 4294901760
        %v5440 = vsub.f32 %v4295, %v5439
        %v5441 = vand.u32 %v5440, 4294901760
        %v5442 = vsub.f32 %v5440, %v5441
        %v5443 = vand.u32 %v5442, 4294901760
        %5444 = vmatpush1.msra.mxu0 %v5443
        %5445 = vmatprep.subr.mxu0 0.0
        %v5446 = vand.u32 %v4296, 4294901760
        %v5447 = vsub.f32 %v4296, %v5446
        %v5448 = vand.u32 %v5447, 4294901760
        %v5449 = vsub.f32 %v5447, %v5448
        %v5450 = vand.u32 %v5449, 4294901760
        %5451 = vmatpush1.msra.mxu0 %v5450
        %5452 = vmatprep.subr.mxu0 0.0
        %v5453 = vand.u32 %v4297, 4294901760
        %v5454 = vsub.f32 %v4297, %v5453
        %v5455 = vand.u32 %v5454, 4294901760
        %v5456 = vsub.f32 %v5454, %v5455
        %v5457 = vand.u32 %v5456, 4294901760
        %5458 = vmatpush1.msra.mxu0 %v5457
        %5459 = vmatprep.subr.mxu0 0.0
        %v5460 = vand.u32 %v4298, 4294901760
        %v5461 = vsub.f32 %v4298, %v5460
        %v5462 = vand.u32 %v5461, 4294901760
        %v5463 = vsub.f32 %v5461, %v5462
        %v5464 = vand.u32 %v5463, 4294901760
        %5465 = vmatpush1.msra.mxu0 %v5464
        %5466 = vmatprep.subr.mxu0 0.0
        %v5467 = vand.u32 %v4299, 4294901760
        %v5468 = vsub.f32 %v4299, %v5467
        %v5469 = vand.u32 %v5468, 4294901760
        %v5470 = vsub.f32 %v5468, %v5469
        %v5471 = vand.u32 %v5470, 4294901760
        %5472 = vmatpush1.msra.mxu0 %v5471
        %5473 = vmatprep.subr.mxu0 0.0
        %v5474 = vand.u32 %v4300, 4294901760
        %v5475 = vsub.f32 %v4300, %v5474
        %v5476 = vand.u32 %v5475, 4294901760
        %v5477 = vsub.f32 %v5475, %v5476
        %v5478 = vand.u32 %v5477, 4294901760
        %5479 = vmatpush1.msra.mxu0 %v5478
        %5480 = vmatprep.subr.mxu0 0.0
        %v5481 = vand.u32 %v4301, 4294901760
        %v5482 = vsub.f32 %v4301, %v5481
        %v5483 = vand.u32 %v5482, 4294901760
        %v5484 = vsub.f32 %v5482, %v5483
        %v5485 = vand.u32 %v5484, 4294901760
        %5486 = vmatpush1.msra.mxu0 %v5485
        %5487 = vmatprep.subr.mxu0 0.0
        %v5488 = vand.u32 %v4302, 4294901760
        %v5489 = vsub.f32 %v4302, %v5488
        %v5490 = vand.u32 %v5489, 4294901760
        %v5491 = vsub.f32 %v5489, %v5490
        %v5492 = vand.u32 %v5491, 4294901760
        %5493 = vmatpush1.msra.mxu0 %v5492
        %5494 = vmatprep.subr.mxu0 0.0
        %v5495 = vand.u32 %v4303, 4294901760
        %v5496 = vsub.f32 %v4303, %v5495
        %v5497 = vand.u32 %v5496, 4294901760
        %v5498 = vsub.f32 %v5496, %v5497
        %v5499 = vand.u32 %v5498, 4294901760
        %5500 = vmatpush1.msra.mxu0 %v5499
        %5501 = vmatprep.subr.mxu0 0.0
        %v5502 = vand.u32 %v4304, 4294901760
        %v5503 = vsub.f32 %v4304, %v5502
        %v5504 = vand.u32 %v5503, 4294901760
        %v5505 = vsub.f32 %v5503, %v5504
        %v5506 = vand.u32 %v5505, 4294901760
        %5507 = vmatpush1.msra.mxu0 %v5506
        %5508 = vmatprep.subr.mxu0 0.0
        %v5509 = vand.u32 %v4305, 4294901760
        %v5510 = vsub.f32 %v4305, %v5509
        %v5511 = vand.u32 %v5510, 4294901760
        %v5512 = vsub.f32 %v5510, %v5511
        %v5513 = vand.u32 %v5512, 4294901760
        %5514 = vmatpush1.msra.mxu0 %v5513
        %5515 = vmatprep.subr.mxu0 0.0
        %v5516 = vand.u32 %v4306, 4294901760
        %v5517 = vsub.f32 %v4306, %v5516
        %v5518 = vand.u32 %v5517, 4294901760
        %v5519 = vsub.f32 %v5517, %v5518
        %v5520 = vand.u32 %v5519, 4294901760
        %5521 = vmatpush1.msra.mxu0 %v5520
        %5522 = vmatprep.subr.mxu0 0.0
        %5523 = vmatpush1.msra.mxu0 0.0
        %5524 = vmatprep.subr.mxu0 0.0
        %5525 = vmatpush1.msra.mxu0 0.0
        %5526 = vmatprep.subr.mxu0 0.0
        %5527 = vmatpush1.msra.mxu0 0.0
        %5528 = vmatprep.subr.mxu0 0.0
        %5529 = vmatpush1.msra.mxu0 0.0
        %5530 = vmatprep.subr.mxu0 0.0
        %5531 = vmatpush1.msra.mxu0 0.0
        %5532 = vmatprep.subr.mxu0 0.0
        %5533 = vmatpush1.msra.mxu0 0.0
        %5534 = vmatprep.subr.mxu0 0.0
        %5535 = vmatpush1.msra.mxu0 0.0
        %5536 = vmatprep.subr.mxu0 0.0
        %5537 = vmatpush1.msra.mxu0 0.0
        %5538 = vmatprep.subr.mxu0 0.0
        %5539 = vmatpush1.msra.mxu0 0.0
        %5540 = vmatprep.subr.mxu0 0.0
        %5541 = vmatpush1.msra.mxu0 0.0
        %5542 = vmatprep.subr.mxu0 0.0
        %5543 = vmatpush1.msra.mxu0 0.0
        %5544 = vmatprep.subr.mxu0 0.0
        %5545 = vmatpush1.msra.mxu0 0.0
        %5546 = vmatprep.subr.mxu0 0.0
        %5547 = vmatpush1.msra.mxu0 0.0
        %5548 = vmatprep.subr.mxu0 0.0
        %5549 = vmatpush1.msra.mxu0 0.0
        %5550 = vmatprep.subr.mxu0 0.0
        %5551 = vmatpush1.msra.mxu0 0.0
        %5552 = vmatprep.subr.mxu0 0.0
        %5553 = vmatpush1.msra.mxu0 0.0
        %5554 = vmatprep.mubr.f32.mxu0 0.0
        %v5555 = vand.u32 %v4260, 4294901760
        %5556 = vmatmul.mubr.f32.gmra.mrb[0].mxu0 %v5555
        %v5557 = vpop.f32.mrb[0].mxu0
        %v5558 = vadd.f32 %v5337, %v5557
        %v5559 = vpop.f32.mrb[0].mxu0
        %5560 = vmatprep.mubr.f32.mxu0 0.0
        %v5561 = vand.u32 %v4262, 4294901760
        %5562 = vmatmul.mubr.f32.gmra.mrb[0].mxu0 %v5561
        %v5563 = vpop.f32.mrb[0].mxu0
        %v5564 = vadd.f32 %v5347, %v5563
        %v5565 = vpop.f32.mrb[0].mxu0
        %5566 = vmatprep.mubr.f32.mxu0 0.0
        %v5567 = vand.u32 %v4264, 4294901760
        %5568 = vmatmul.mubr.f32.gmra.mrb[0].mxu0 %v5567
        %v5569 = vpop.f32.mrb[0].mxu0
        %v5570 = vadd.f32 %v5357, %v5569
        %v5571 = vpop.f32.mrb[0].mxu0
        %5572 = vmatprep.mubr.f32.mxu0 0.0
        %v5573 = vand.u32 %v4266, 4294901760
        %5574 = vmatmul.mubr.f32.gmra.mrb[0].mxu0 %v5573
        %v5575 = vpop.f32.mrb[0].mxu0
        %v5576 = vadd.f32 %v5367, %v5575
        %v5577 = vpop.f32.mrb[0].mxu0
        %5578 = vmatprep.mubr.f32.mxu0 0.0
        %v5579 = vand.u32 %v4268, 4294901760
        %5580 = vmatmul.mubr.f32.gmra.mrb[0].mxu0 %v5579
        %v5581 = vpop.f32.mrb[0].mxu0
        %v5582 = vadd.f32 %v5377, %v5581
        %v5583 = vpop.f32.mrb[0].mxu0
        %5584 = vmatprep.mubr.f32.mxu0 0.0
        %v5585 = vand.u32 %v4270, 4294901760
        %5586 = vmatmul.mubr.f32.gmra.mrb[0].mxu0 %v5585
        %v5587 = vpop.f32.mrb[0].mxu0
        %v5588 = vadd.f32 %v5387, %v5587
        %v5589 = vpop.f32.mrb[0].mxu0
        %5590 = vmatprep.mubr.f32.mxu0 0.0
        %v5591 = vand.u32 %v4272, 4294901760
        %5592 = vmatmul.mubr.f32.gmra.mrb[0].mxu0 %v5591
        %v5593 = vpop.f32.mrb[0].mxu0
        %v5594 = vadd.f32 %v5397, %v5593
        %v5595 = vpop.f32.mrb[0].mxu0
        %5596 = vmatprep.mubr.f32.mxu0 0.0
        %v5597 = vand.u32 %v4274, 4294901760
        %5598 = vmatmul.mubr.f32.gmra.mrb[0].mxu0 %v5597
        %v5599 = vpop.f32.mrb[0].mxu0
        %v5600 = vadd.f32 %v5407, %v5599
        %v5601 = vpop.f32.mrb[0].mxu0
        %5602 = vdwg.mxu0
        %5603 = vmatprep.subr.mxu0 0.0
        %v5604 = vand.u32 %v4291, 4294901760
        %v5605 = vsub.f32 %v4291, %v5604
        %5606 = vmatpush1.msra.mxu0 %v5605
        %5607 = vmatprep.subr.mxu0 0.0
        %v5608 = vand.u32 %v4292, 4294901760
        %v5609 = vsub.f32 %v4292, %v5608
        %5610 = vmatpush1.msra.mxu0 %v5609
        %5611 = vmatprep.subr.mxu0 0.0
        %v5612 = vand.u32 %v4293, 4294901760
        %v5613 = vsub.f32 %v4293, %v5612
        %5614 = vmatpush1.msra.mxu0 %v5613
        %5615 = vmatprep.subr.mxu0 0.0
        %v5616 = vand.u32 %v4294, 4294901760
        %v5617 = vsub.f32 %v4294, %v5616
        %5618 = vmatpush1.msra.mxu0 %v5617
        %5619 = vmatprep.subr.mxu0 0.0
        %v5620 = vand.u32 %v4295, 4294901760
        %v5621 = vsub.f32 %v4295, %v5620
        %5622 = vmatpush1.msra.mxu0 %v5621
        %5623 = vmatprep.subr.mxu0 0.0
        %v5624 = vand.u32 %v4296, 4294901760
        %v5625 = vsub.f32 %v4296, %v5624
        %5626 = vmatpush1.msra.mxu0 %v5625
        %5627 = vmatprep.subr.mxu0 0.0
        %v5628 = vand.u32 %v4297, 4294901760
        %v5629 = vsub.f32 %v4297, %v5628
        %5630 = vmatpush1.msra.mxu0 %v5629
        %5631 = vmatprep.subr.mxu0 0.0
        %v5632 = vand.u32 %v4298, 4294901760
        %v5633 = vsub.f32 %v4298, %v5632
        %5634 = vmatpush1.msra.mxu0 %v5633
        %5635 = vmatprep.subr.mxu0 0.0
        %v5636 = vand.u32 %v4299, 4294901760
        %v5637 = vsub.f32 %v4299, %v5636
        %5638 = vmatpush1.msra.mxu0 %v5637
        %5639 = vmatprep.subr.mxu0 0.0
        %v5640 = vand.u32 %v4300, 4294901760
        %v5641 = vsub.f32 %v4300, %v5640
        %5642 = vmatpush1.msra.mxu0 %v5641
        %5643 = vmatprep.subr.mxu0 0.0
        %v5644 = vand.u32 %v4301, 4294901760
        %v5645 = vsub.f32 %v4301, %v5644
        %5646 = vmatpush1.msra.mxu0 %v5645
        %5647 = vmatprep.subr.mxu0 0.0
        %v5648 = vand.u32 %v4302, 4294901760
        %v5649 = vsub.f32 %v4302, %v5648
        %5650 = vmatpush1.msra.mxu0 %v5649
        %5651 = vmatprep.subr.mxu0 0.0
        %v5652 = vand.u32 %v4303, 4294901760
        %v5653 = vsub.f32 %v4303, %v5652
        %5654 = vmatpush1.msra.mxu0 %v5653
        %5655 = vmatprep.subr.mxu0 0.0
        %v5656 = vand.u32 %v4304, 4294901760
        %v5657 = vsub.f32 %v4304, %v5656
        %5658 = vmatpush1.msra.mxu0 %v5657
        %5659 = vmatprep.subr.mxu0 0.0
        %v5660 = vand.u32 %v4305, 4294901760
        %v5661 = vsub.f32 %v4305, %v5660
        %5662 = vmatpush1.msra.mxu0 %v5661
        %5663 = vmatprep.subr.mxu0 0.0
        %v5664 = vand.u32 %v4306, 4294901760
        %v5665 = vsub.f32 %v4306, %v5664
        %5666 = vmatpush1.msra.mxu0 %v5665
        %5667 = vmatprep.subr.mxu0 0.0
        %5668 = vmatpush1.msra.mxu0 0.0
        %5669 = vmatprep.subr.mxu0 0.0
        %5670 = vmatpush1.msra.mxu0 0.0
        %5671 = vmatprep.subr.mxu0 0.0
        %5672 = vmatpush1.msra.mxu0 0.0
        %5673 = vmatprep.subr.mxu0 0.0
        %5674 = vmatpush1.msra.mxu0 0.0
        %5675 = vmatprep.subr.mxu0 0.0
        %5676 = vmatpush1.msra.mxu0 0.0
        %5677 = vmatprep.subr.mxu0 0.0
        %5678 = vmatpush1.msra.mxu0 0.0
        %5679 = vmatprep.subr.mxu0 0.0
        %5680 = vmatpush1.msra.mxu0 0.0
        %5681 = vmatprep.subr.mxu0 0.0
        %5682 = vmatpush1.msra.mxu0 0.0
        %5683 = vmatprep.subr.mxu0 0.0
        %5684 = vmatpush1.msra.mxu0 0.0
        %5685 = vmatprep.subr.mxu0 0.0
        %5686 = vmatpush1.msra.mxu0 0.0
        %5687 = vmatprep.subr.mxu0 0.0
        %5688 = vmatpush1.msra.mxu0 0.0
        %5689 = vmatprep.subr.mxu0 0.0
        %5690 = vmatpush1.msra.mxu0 0.0
        %5691 = vmatprep.subr.mxu0 0.0
        %5692 = vmatpush1.msra.mxu0 0.0
        %5693 = vmatprep.subr.mxu0 0.0
        %5694 = vmatpush1.msra.mxu0 0.0
        %5695 = vmatprep.subr.mxu0 0.0
        %5696 = vmatpush1.msra.mxu0 0.0
        %5697 = vmatprep.subr.mxu0 0.0
        %5698 = vmatpush1.msra.mxu0 0.0
        %5699 = vmatprep.mubr.f32.mxu0 0.0
        %v5700 = vand.u32 %v4260, 4294901760
        %v5701 = vsub.f32 %v4260, %v5700
        %5702 = vmatmul.mubr.f32.gmra.mrb[0].mxu0 %v5701
        %v5703 = vpop.f32.mrb[0].mxu0
        %v5704 = vadd.f32 %v5558, %v5703
        %v5705 = vpop.f32.mrb[0].mxu0
        %5706 = vmatprep.mubr.f32.mxu0 0.0
        %v5707 = vand.u32 %v4262, 4294901760
        %v5708 = vsub.f32 %v4262, %v5707
        %5709 = vmatmul.mubr.f32.gmra.mrb[0].mxu0 %v5708
        %v5710 = vpop.f32.mrb[0].mxu0
        %v5711 = vadd.f32 %v5564, %v5710
        %v5712 = vpop.f32.mrb[0].mxu0
        %5713 = vmatprep.mubr.f32.mxu0 0.0
        %v5714 = vand.u32 %v4264, 4294901760
        %v5715 = vsub.f32 %v4264, %v5714
        %5716 = vmatmul.mubr.f32.gmra.mrb[0].mxu0 %v5715
        %v5717 = vpop.f32.mrb[0].mxu0
        %v5718 = vadd.f32 %v5570, %v5717
        %v5719 = vpop.f32.mrb[0].mxu0
        %5720 = vmatprep.mubr.f32.mxu0 0.0
        %v5721 = vand.u32 %v4266, 4294901760
        %v5722 = vsub.f32 %v4266, %v5721
        %5723 = vmatmul.mubr.f32.gmra.mrb[0].mxu0 %v5722
        %v5724 = vpop.f32.mrb[0].mxu0
        %v5725 = vadd.f32 %v5576, %v5724
        %v5726 = vpop.f32.mrb[0].mxu0
        %5727 = vmatprep.mubr.f32.mxu0 0.0
        %v5728 = vand.u32 %v4268, 4294901760
        %v5729 = vsub.f32 %v4268, %v5728
        %5730 = vmatmul.mubr.f32.gmra.mrb[0].mxu0 %v5729
        %v5731 = vpop.f32.mrb[0].mxu0
        %v5732 = vadd.f32 %v5582, %v5731
        %v5733 = vpop.f32.mrb[0].mxu0
        %5734 = vmatprep.mubr.f32.mxu0 0.0
        %v5735 = vand.u32 %v4270, 4294901760
        %v5736 = vsub.f32 %v4270, %v5735
        %5737 = vmatmul.mubr.f32.gmra.mrb[0].mxu0 %v5736
        %v5738 = vpop.f32.mrb[0].mxu0
        %v5739 = vadd.f32 %v5588, %v5738
        %v5740 = vpop.f32.mrb[0].mxu0
        %5741 = vmatprep.mubr.f32.mxu0 0.0
        %v5742 = vand.u32 %v4272, 4294901760
        %v5743 = vsub.f32 %v4272, %v5742
        %5744 = vmatmul.mubr.f32.gmra.mrb[0].mxu0 %v5743
        %v5745 = vpop.f32.mrb[0].mxu0
        %v5746 = vadd.f32 %v5594, %v5745
        %v5747 = vpop.f32.mrb[0].mxu0
        %5748 = vmatprep.mubr.f32.mxu0 0.0
        %v5749 = vand.u32 %v4274, 4294901760
        %v5750 = vsub.f32 %v4274, %v5749
        %5751 = vmatmul.mubr.f32.gmra.mrb[0].mxu0 %v5750
        %v5752 = vpop.f32.mrb[0].mxu0
        %v5753 = vadd.f32 %v5600, %v5752
        %v5754 = vpop.f32.mrb[0].mxu0
        %5755 = vdwg.mxu0
        %5756 = vmatprep.subr.mxu0 0.0
        %v5757 = vand.u32 %v4291, 4294901760
        %5758 = vmatpush1.msra.mxu0 %v5757
        %5759 = vmatprep.subr.mxu0 0.0
        %v5760 = vand.u32 %v4292, 4294901760
        %5761 = vmatpush1.msra.mxu0 %v5760
        %5762 = vmatprep.subr.mxu0 0.0
        %v5763 = vand.u32 %v4293, 4294901760
        %5764 = vmatpush1.msra.mxu0 %v5763
        %5765 = vmatprep.subr.mxu0 0.0
        %v5766 = vand.u32 %v4294, 4294901760
        %5767 = vmatpush1.msra.mxu0 %v5766
        %5768 = vmatprep.subr.mxu0 0.0
        %v5769 = vand.u32 %v4295, 4294901760
        %5770 = vmatpush1.msra.mxu0 %v5769
        %5771 = vmatprep.subr.mxu0 0.0
        %v5772 = vand.u32 %v4296, 4294901760
        %5773 = vmatpush1.msra.mxu0 %v5772
        %5774 = vmatprep.subr.mxu0 0.0
        %v5775 = vand.u32 %v4297, 4294901760
        %5776 = vmatpush1.msra.mxu0 %v5775
        %5777 = vmatprep.subr.mxu0 0.0
        %v5778 = vand.u32 %v4298, 4294901760
        %5779 = vmatpush1.msra.mxu0 %v5778
        %5780 = vmatprep.subr.mxu0 0.0
        %v5781 = vand.u32 %v4299, 4294901760
        %5782 = vmatpush1.msra.mxu0 %v5781
        %5783 = vmatprep.subr.mxu0 0.0
        %v5784 = vand.u32 %v4300, 4294901760
        %5785 = vmatpush1.msra.mxu0 %v5784
        %5786 = vmatprep.subr.mxu0 0.0
        %v5787 = vand.u32 %v4301, 4294901760
        %5788 = vmatpush1.msra.mxu0 %v5787
        %5789 = vmatprep.subr.mxu0 0.0
        %v5790 = vand.u32 %v4302, 4294901760
        %5791 = vmatpush1.msra.mxu0 %v5790
        %5792 = vmatprep.subr.mxu0 0.0
        %v5793 = vand.u32 %v4303, 4294901760
        %5794 = vmatpush1.msra.mxu0 %v5793
        %5795 = vmatprep.subr.mxu0 0.0
        %v5796 = vand.u32 %v4304, 4294901760
        %5797 = vmatpush1.msra.mxu0 %v5796
        %5798 = vmatprep.subr.mxu0 0.0
        %v5799 = vand.u32 %v4305, 4294901760
        %5800 = vmatpush1.msra.mxu0 %v5799
        %5801 = vmatprep.subr.mxu0 0.0
        %v5802 = vand.u32 %v4306, 4294901760
        %5803 = vmatpush1.msra.mxu0 %v5802
        %5804 = vmatprep.subr.mxu0 0.0
        %5805 = vmatpush1.msra.mxu0 0.0
        %5806 = vmatprep.subr.mxu0 0.0
        %5807 = vmatpush1.msra.mxu0 0.0
        %5808 = vmatprep.subr.mxu0 0.0
        %5809 = vmatpush1.msra.mxu0 0.0
        %5810 = vmatprep.subr.mxu0 0.0
        %5811 = vmatpush1.msra.mxu0 0.0
        %5812 = vmatprep.subr.mxu0 0.0
        %5813 = vmatpush1.msra.mxu0 0.0
        %5814 = vmatprep.subr.mxu0 0.0
        %5815 = vmatpush1.msra.mxu0 0.0
        %5816 = vmatprep.subr.mxu0 0.0
        %5817 = vmatpush1.msra.mxu0 0.0
        %5818 = vmatprep.subr.mxu0 0.0
        %5819 = vmatpush1.msra.mxu0 0.0
        %5820 = vmatprep.subr.mxu0 0.0
        %5821 = vmatpush1.msra.mxu0 0.0
        %5822 = vmatprep.subr.mxu0 0.0
        %5823 = vmatpush1.msra.mxu0 0.0
        %5824 = vmatprep.subr.mxu0 0.0
        %5825 = vmatpush1.msra.mxu0 0.0
        %5826 = vmatprep.subr.mxu0 0.0
        %5827 = vmatpush1.msra.mxu0 0.0
        %5828 = vmatprep.subr.mxu0 0.0
        %5829 = vmatpush1.msra.mxu0 0.0
        %5830 = vmatprep.subr.mxu0 0.0
        %5831 = vmatpush1.msra.mxu0 0.0
        %5832 = vmatprep.subr.mxu0 0.0
        %5833 = vmatpush1.msra.mxu0 0.0
        %5834 = vmatprep.subr.mxu0 0.0
        %5835 = vmatpush1.msra.mxu0 0.0
        %5836 = vmatprep.mubr.f32.mxu0 0.0
        %v5837 = vand.u32 %v4260, 4294901760
        %v5838 = vsub.f32 %v4260, %v5837
        %v5839 = vand.u32 %v5838, 4294901760
        %5840 = vmatmul.mubr.f32.gmra.mrb[0].mxu0 %v5839
        %v5841 = vpop.f32.mrb[0].mxu0
        %v5842 = vadd.f32 %v5704, %v5841
        %v5843 = vpop.f32.mrb[0].mxu0
        %5844 = vmatprep.mubr.f32.mxu0 0.0
        %v5845 = vand.u32 %v4262, 4294901760
        %v5846 = vsub.f32 %v4262, %v5845
        %v5847 = vand.u32 %v5846, 4294901760
        %5848 = vmatmul.mubr.f32.gmra.mrb[0].mxu0 %v5847
        %v5849 = vpop.f32.mrb[0].mxu0
        %v5850 = vadd.f32 %v5711, %v5849
        %v5851 = vpop.f32.mrb[0].mxu0
        %5852 = vmatprep.mubr.f32.mxu0 0.0
        %v5853 = vand.u32 %v4264, 4294901760
        %v5854 = vsub.f32 %v4264, %v5853
        %v5855 = vand.u32 %v5854, 4294901760
        %5856 = vmatmul.mubr.f32.gmra.mrb[0].mxu0 %v5855
        %v5857 = vpop.f32.mrb[0].mxu0
        %v5858 = vadd.f32 %v5718, %v5857
        %v5859 = vpop.f32.mrb[0].mxu0
        %5860 = vmatprep.mubr.f32.mxu0 0.0
        %v5861 = vand.u32 %v4266, 4294901760
        %v5862 = vsub.f32 %v4266, %v5861
        %v5863 = vand.u32 %v5862, 4294901760
        %5864 = vmatmul.mubr.f32.gmra.mrb[0].mxu0 %v5863
        %v5865 = vpop.f32.mrb[0].mxu0
        %v5866 = vadd.f32 %v5725, %v5865
        %v5867 = vpop.f32.mrb[0].mxu0
        %5868 = vmatprep.mubr.f32.mxu0 0.0
        %v5869 = vand.u32 %v4268, 4294901760
        %v5870 = vsub.f32 %v4268, %v5869
        %v5871 = vand.u32 %v5870, 4294901760
        %5872 = vmatmul.mubr.f32.gmra.mrb[0].mxu0 %v5871
        %v5873 = vpop.f32.mrb[0].mxu0
        %v5874 = vadd.f32 %v5732, %v5873
        %v5875 = vpop.f32.mrb[0].mxu0
        %5876 = vmatprep.mubr.f32.mxu0 0.0
        %v5877 = vand.u32 %v4270, 4294901760
        %v5878 = vsub.f32 %v4270, %v5877
        %v5879 = vand.u32 %v5878, 4294901760
        %5880 = vmatmul.mubr.f32.gmra.mrb[0].mxu0 %v5879
        %v5881 = vpop.f32.mrb[0].mxu0
        %v5882 = vadd.f32 %v5739, %v5881
        %v5883 = vpop.f32.mrb[0].mxu0
        %5884 = vmatprep.mubr.f32.mxu0 0.0
        %v5885 = vand.u32 %v4272, 4294901760
        %v5886 = vsub.f32 %v4272, %v5885
        %v5887 = vand.u32 %v5886, 4294901760
        %5888 = vmatmul.mubr.f32.gmra.mrb[0].mxu0 %v5887
        %v5889 = vpop.f32.mrb[0].mxu0
        %v5890 = vadd.f32 %v5746, %v5889
        %v5891 = vpop.f32.mrb[0].mxu0
        %5892 = vmatprep.mubr.f32.mxu0 0.0
        %v5893 = vand.u32 %v4274, 4294901760
        %v5894 = vsub.f32 %v4274, %v5893
        %v5895 = vand.u32 %v5894, 4294901760
        %5896 = vmatmul.mubr.f32.gmra.mrb[0].mxu0 %v5895
        %v5897 = vpop.f32.mrb[0].mxu0
        %v5898 = vadd.f32 %v5753, %v5897
        %v5899 = vpop.f32.mrb[0].mxu0
        %5900 = vdwg.mxu0
        %5901 = vmatprep.subr.mxu0 0.0
        %v5902 = vand.u32 %v4291, 4294901760
        %v5903 = vsub.f32 %v4291, %v5902
        %v5904 = vand.u32 %v5903, 4294901760
        %5905 = vmatpush1.msra.mxu0 %v5904
        %5906 = vmatprep.subr.mxu0 0.0
        %v5907 = vand.u32 %v4292, 4294901760
        %v5908 = vsub.f32 %v4292, %v5907
        %v5909 = vand.u32 %v5908, 4294901760
        %5910 = vmatpush1.msra.mxu0 %v5909
        %5911 = vmatprep.subr.mxu0 0.0
        %v5912 = vand.u32 %v4293, 4294901760
        %v5913 = vsub.f32 %v4293, %v5912
        %v5914 = vand.u32 %v5913, 4294901760
        %5915 = vmatpush1.msra.mxu0 %v5914
        %5916 = vmatprep.subr.mxu0 0.0
        %v5917 = vand.u32 %v4294, 4294901760
        %v5918 = vsub.f32 %v4294, %v5917
        %v5919 = vand.u32 %v5918, 4294901760
        %5920 = vmatpush1.msra.mxu0 %v5919
        %5921 = vmatprep.subr.mxu0 0.0
        %v5922 = vand.u32 %v4295, 4294901760
        %v5923 = vsub.f32 %v4295, %v5922
        %v5924 = vand.u32 %v5923, 4294901760
        %5925 = vmatpush1.msra.mxu0 %v5924
        %5926 = vmatprep.subr.mxu0 0.0
        %v5927 = vand.u32 %v4296, 4294901760
        %v5928 = vsub.f32 %v4296, %v5927
        %v5929 = vand.u32 %v5928, 4294901760
        %5930 = vmatpush1.msra.mxu0 %v5929
        %5931 = vmatprep.subr.mxu0 0.0
        %v5932 = vand.u32 %v4297, 4294901760
        %v5933 = vsub.f32 %v4297, %v5932
        %v5934 = vand.u32 %v5933, 4294901760
        %5935 = vmatpush1.msra.mxu0 %v5934
        %5936 = vmatprep.subr.mxu0 0.0
        %v5937 = vand.u32 %v4298, 4294901760
        %v5938 = vsub.f32 %v4298, %v5937
        %v5939 = vand.u32 %v5938, 4294901760
        %5940 = vmatpush1.msra.mxu0 %v5939
        %5941 = vmatprep.subr.mxu0 0.0
        %v5942 = vand.u32 %v4299, 4294901760
        %v5943 = vsub.f32 %v4299, %v5942
        %v5944 = vand.u32 %v5943, 4294901760
        %5945 = vmatpush1.msra.mxu0 %v5944
        %5946 = vmatprep.subr.mxu0 0.0
        %v5947 = vand.u32 %v4300, 4294901760
        %v5948 = vsub.f32 %v4300, %v5947
        %v5949 = vand.u32 %v5948, 4294901760
        %5950 = vmatpush1.msra.mxu0 %v5949
        %5951 = vmatprep.subr.mxu0 0.0
        %v5952 = vand.u32 %v4301, 4294901760
        %v5953 = vsub.f32 %v4301, %v5952
        %v5954 = vand.u32 %v5953, 4294901760
        %5955 = vmatpush1.msra.mxu0 %v5954
        %5956 = vmatprep.subr.mxu0 0.0
        %v5957 = vand.u32 %v4302, 4294901760
        %v5958 = vsub.f32 %v4302, %v5957
        %v5959 = vand.u32 %v5958, 4294901760
        %5960 = vmatpush1.msra.mxu0 %v5959
        %5961 = vmatprep.subr.mxu0 0.0
        %v5962 = vand.u32 %v4303, 4294901760
        %v5963 = vsub.f32 %v4303, %v5962
        %v5964 = vand.u32 %v5963, 4294901760
        %5965 = vmatpush1.msra.mxu0 %v5964
        %5966 = vmatprep.subr.mxu0 0.0
        %v5967 = vand.u32 %v4304, 4294901760
        %v5968 = vsub.f32 %v4304, %v5967
        %v5969 = vand.u32 %v5968, 4294901760
        %5970 = vmatpush1.msra.mxu0 %v5969
        %5971 = vmatprep.subr.mxu0 0.0
        %v5972 = vand.u32 %v4305, 4294901760
        %v5973 = vsub.f32 %v4305, %v5972
        %v5974 = vand.u32 %v5973, 4294901760
        %5975 = vmatpush1.msra.mxu0 %v5974
        %5976 = vmatprep.subr.mxu0 0.0
        %v5977 = vand.u32 %v4306, 4294901760
        %v5978 = vsub.f32 %v4306, %v5977
        %v5979 = vand.u32 %v5978, 4294901760
        %5980 = vmatpush1.msra.mxu0 %v5979
        %5981 = vmatprep.subr.mxu0 0.0
        %5982 = vmatpush1.msra.mxu0 0.0
        %5983 = vmatprep.subr.mxu0 0.0
        %5984 = vmatpush1.msra.mxu0 0.0
        %5985 = vmatprep.subr.mxu0 0.0
        %5986 = vmatpush1.msra.mxu0 0.0
        %5987 = vmatprep.subr.mxu0 0.0
        %5988 = vmatpush1.msra.mxu0 0.0
        %5989 = vmatprep.subr.mxu0 0.0
        %5990 = vmatpush1.msra.mxu0 0.0
        %5991 = vmatprep.subr.mxu0 0.0
        %5992 = vmatpush1.msra.mxu0 0.0
        %5993 = vmatprep.subr.mxu0 0.0
        %5994 = vmatpush1.msra.mxu0 0.0
        %5995 = vmatprep.subr.mxu0 0.0
        %5996 = vmatpush1.msra.mxu0 0.0
        %5997 = vmatprep.subr.mxu0 0.0
        %5998 = vmatpush1.msra.mxu0 0.0
        %5999 = vmatprep.subr.mxu0 0.0
        %6000 = vmatpush1.msra.mxu0 0.0
        %6001 = vmatprep.subr.mxu0 0.0
        %6002 = vmatpush1.msra.mxu0 0.0
        %6003 = vmatprep.subr.mxu0 0.0
        %6004 = vmatpush1.msra.mxu0 0.0
        %6005 = vmatprep.subr.mxu0 0.0
        %6006 = vmatpush1.msra.mxu0 0.0
        %6007 = vmatprep.subr.mxu0 0.0
        %6008 = vmatpush1.msra.mxu0 0.0
        %6009 = vmatprep.subr.mxu0 0.0
        %6010 = vmatpush1.msra.mxu0 0.0
        %6011 = vmatprep.subr.mxu0 0.0
        %6012 = vmatpush1.msra.mxu0 0.0
        %6013 = vmatprep.mubr.f32.mxu0 0.0
        %v6014 = vand.u32 %v4260, 4294901760
        %6015 = vmatmul.mubr.f32.gmra.mrb[0].mxu0 %v6014
        %v6016 = vpop.f32.mrb[0].mxu0
        %v6017 = vadd.f32 %v5842, %v6016
        %v6018 = vpop.f32.mrb[0].mxu0
        %6019 = vmatprep.mubr.f32.mxu0 0.0
        %v6020 = vand.u32 %v4262, 4294901760
        %6021 = vmatmul.mubr.f32.gmra.mrb[0].mxu0 %v6020
        %v6022 = vpop.f32.mrb[0].mxu0
        %v6023 = vadd.f32 %v5850, %v6022
        %v6024 = vpop.f32.mrb[0].mxu0
        %6025 = vmatprep.mubr.f32.mxu0 0.0
        %v6026 = vand.u32 %v4264, 4294901760
        %6027 = vmatmul.mubr.f32.gmra.mrb[0].mxu0 %v6026
        %v6028 = vpop.f32.mrb[0].mxu0
        %v6029 = vadd.f32 %v5858, %v6028
        %v6030 = vpop.f32.mrb[0].mxu0
        %6031 = vmatprep.mubr.f32.mxu0 0.0
        %v6032 = vand.u32 %v4266, 4294901760
        %6033 = vmatmul.mubr.f32.gmra.mrb[0].mxu0 %v6032
        %v6034 = vpop.f32.mrb[0].mxu0
        %v6035 = vadd.f32 %v5866, %v6034
        %v6036 = vpop.f32.mrb[0].mxu0
        %6037 = vmatprep.mubr.f32.mxu0 0.0
        %v6038 = vand.u32 %v4268, 4294901760
        %6039 = vmatmul.mubr.f32.gmra.mrb[0].mxu0 %v6038
        %v6040 = vpop.f32.mrb[0].mxu0
        %v6041 = vadd.f32 %v5874, %v6040
        %v6042 = vpop.f32.mrb[0].mxu0
        %6043 = vmatprep.mubr.f32.mxu0 0.0
        %v6044 = vand.u32 %v4270, 4294901760
        %6045 = vmatmul.mubr.f32.gmra.mrb[0].mxu0 %v6044
        %v6046 = vpop.f32.mrb[0].mxu0
        %v6047 = vadd.f32 %v5882, %v6046
        %v6048 = vpop.f32.mrb[0].mxu0
        %6049 = vmatprep.mubr.f32.mxu0 0.0
        %v6050 = vand.u32 %v4272, 4294901760
        %6051 = vmatmul.mubr.f32.gmra.mrb[0].mxu0 %v6050
        %v6052 = vpop.f32.mrb[0].mxu0
        %v6053 = vadd.f32 %v5890, %v6052
        %v6054 = vpop.f32.mrb[0].mxu0
        %6055 = vmatprep.mubr.f32.mxu0 0.0
        %v6056 = vand.u32 %v4274, 4294901760
        %6057 = vmatmul.mubr.f32.gmra.mrb[0].mxu0 %v6056
        %v6058 = vpop.f32.mrb[0].mxu0
        %v6059 = vadd.f32 %v5898, %v6058
        %v6060 = vpop.f32.mrb[0].mxu0
        %6061 = vdwg.mxu0
        %6062 = vmatprep.subr.mxu0 0.0
        %v6063 = vand.u32 %v4291, 4294901760
        %6064 = vmatpush1.msra.mxu0 %v6063
        %6065 = vmatprep.subr.mxu0 0.0
        %v6066 = vand.u32 %v4292, 4294901760
        %6067 = vmatpush1.msra.mxu0 %v6066
        %6068 = vmatprep.subr.mxu0 0.0
        %v6069 = vand.u32 %v4293, 4294901760
        %6070 = vmatpush1.msra.mxu0 %v6069
        %6071 = vmatprep.subr.mxu0 0.0
        %v6072 = vand.u32 %v4294, 4294901760
        %6073 = vmatpush1.msra.mxu0 %v6072
        %6074 = vmatprep.subr.mxu0 0.0
        %v6075 = vand.u32 %v4295, 4294901760
        %6076 = vmatpush1.msra.mxu0 %v6075
        %6077 = vmatprep.subr.mxu0 0.0
        %v6078 = vand.u32 %v4296, 4294901760
        %6079 = vmatpush1.msra.mxu0 %v6078
        %6080 = vmatprep.subr.mxu0 0.0
        %v6081 = vand.u32 %v4297, 4294901760
        %6082 = vmatpush1.msra.mxu0 %v6081
        %6083 = vmatprep.subr.mxu0 0.0
        %v6084 = vand.u32 %v4298, 4294901760
        %6085 = vmatpush1.msra.mxu0 %v6084
        %6086 = vmatprep.subr.mxu0 0.0
        %v6087 = vand.u32 %v4299, 4294901760
        %6088 = vmatpush1.msra.mxu0 %v6087
        %6089 = vmatprep.subr.mxu0 0.0
        %v6090 = vand.u32 %v4300, 4294901760
        %6091 = vmatpush1.msra.mxu0 %v6090
        %6092 = vmatprep.subr.mxu0 0.0
        %v6093 = vand.u32 %v4301, 4294901760
        %6094 = vmatpush1.msra.mxu0 %v6093
        %6095 = vmatprep.subr.mxu0 0.0
        %v6096 = vand.u32 %v4302, 4294901760
        %6097 = vmatpush1.msra.mxu0 %v6096
        %6098 = vmatprep.subr.mxu0 0.0
        %v6099 = vand.u32 %v4303, 4294901760
        %6100 = vmatpush1.msra.mxu0 %v6099
        %6101 = vmatprep.subr.mxu0 0.0
        %v6102 = vand.u32 %v4304, 4294901760
        %6103 = vmatpush1.msra.mxu0 %v6102
        %6104 = vmatprep.subr.mxu0 0.0
        %v6105 = vand.u32 %v4305, 4294901760
        %6106 = vmatpush1.msra.mxu0 %v6105
        %6107 = vmatprep.subr.mxu0 0.0
        %v6108 = vand.u32 %v4306, 4294901760
        %6109 = vmatpush1.msra.mxu0 %v6108
        %6110 = vmatprep.subr.mxu0 0.0
        %6111 = vmatpush1.msra.mxu0 0.0
        %6112 = vmatprep.subr.mxu0 0.0
        %6113 = vmatpush1.msra.mxu0 0.0
        %6114 = vmatprep.subr.mxu0 0.0
        %6115 = vmatpush1.msra.mxu0 0.0
        %6116 = vmatprep.subr.mxu0 0.0
        %6117 = vmatpush1.msra.mxu0 0.0
        %6118 = vmatprep.subr.mxu0 0.0
        %6119 = vmatpush1.msra.mxu0 0.0
        %6120 = vmatprep.subr.mxu0 0.0
        %6121 = vmatpush1.msra.mxu0 0.0
        %6122 = vmatprep.subr.mxu0 0.0
        %6123 = vmatpush1.msra.mxu0 0.0
        %6124 = vmatprep.subr.mxu0 0.0
        %6125 = vmatpush1.msra.mxu0 0.0
        %6126 = vmatprep.subr.mxu0 0.0
        %6127 = vmatpush1.msra.mxu0 0.0
        %6128 = vmatprep.subr.mxu0 0.0
        %6129 = vmatpush1.msra.mxu0 0.0
        %6130 = vmatprep.subr.mxu0 0.0
        %6131 = vmatpush1.msra.mxu0 0.0
        %6132 = vmatprep.subr.mxu0 0.0
        %6133 = vmatpush1.msra.mxu0 0.0
        %6134 = vmatprep.subr.mxu0 0.0
        %6135 = vmatpush1.msra.mxu0 0.0
        %6136 = vmatprep.subr.mxu0 0.0
        %6137 = vmatpush1.msra.mxu0 0.0
        %6138 = vmatprep.subr.mxu0 0.0
        %6139 = vmatpush1.msra.mxu0 0.0
        %6140 = vmatprep.subr.mxu0 0.0
        %6141 = vmatpush1.msra.mxu0 0.0
        %6142 = vmatprep.mubr.f32.mxu0 0.0
        %v6143 = vand.u32 %v4260, 4294901760
        %6144 = vmatmul.mubr.f32.gmra.mrb[0].mxu0 %v6143
        %v6145 = vpop.f32.mrb[0].mxu0
        %v6146 = vadd.f32 %v6017, %v6145
        %v6147 = vpop.f32.mrb[0].mxu0
        %6148 = vmatprep.mubr.f32.mxu0 0.0
        %v6149 = vand.u32 %v4262, 4294901760
        %6150 = vmatmul.mubr.f32.gmra.mrb[0].mxu0 %v6149
        %v6151 = vpop.f32.mrb[0].mxu0
        %v6152 = vadd.f32 %v6023, %v6151
        %v6153 = vpop.f32.mrb[0].mxu0
        %6154 = vmatprep.mubr.f32.mxu0 0.0
        %v6155 = vand.u32 %v4264, 4294901760
        %6156 = vmatmul.mubr.f32.gmra.mrb[0].mxu0 %v6155
        %v6157 = vpop.f32.mrb[0].mxu0
        %v6158 = vadd.f32 %v6029, %v6157
        %v6159 = vpop.f32.mrb[0].mxu0
        %6160 = vmatprep.mubr.f32.mxu0 0.0
        %v6161 = vand.u32 %v4266, 4294901760
        %6162 = vmatmul.mubr.f32.gmra.mrb[0].mxu0 %v6161
        %v6163 = vpop.f32.mrb[0].mxu0
        %v6164 = vadd.f32 %v6035, %v6163
        %v6165 = vpop.f32.mrb[0].mxu0
        %6166 = vmatprep.mubr.f32.mxu0 0.0
        %v6167 = vand.u32 %v4268, 4294901760
        %6168 = vmatmul.mubr.f32.gmra.mrb[0].mxu0 %v6167
        %v6169 = vpop.f32.mrb[0].mxu0
        %v6170 = vadd.f32 %v6041, %v6169
        %v6171 = vpop.f32.mrb[0].mxu0
        %6172 = vmatprep.mubr.f32.mxu0 0.0
        %v6173 = vand.u32 %v4270, 4294901760
        %6174 = vmatmul.mubr.f32.gmra.mrb[0].mxu0 %v6173
        %v6175 = vpop.f32.mrb[0].mxu0
        %v6176 = vadd.f32 %v6047, %v6175
        %v6177 = vpop.f32.mrb[0].mxu0
        %6178 = vmatprep.mubr.f32.mxu0 0.0
        %v6179 = vand.u32 %v4272, 4294901760
        %6180 = vmatmul.mubr.f32.gmra.mrb[0].mxu0 %v6179
        %v6181 = vpop.f32.mrb[0].mxu0
        %v6182 = vadd.f32 %v6053, %v6181
        %v6183 = vpop.f32.mrb[0].mxu0
        %6184 = vmatprep.mubr.f32.mxu0 0.0
        %v6185 = vand.u32 %v4274, 4294901760
        %6186 = vmatmul.mubr.f32.gmra.mrb[0].mxu0 %v6185
        %v6187 = vpop.f32.mrb[0].mxu0
        %v6188 = vadd.f32 %v6059, %v6187
        %v6189 = vpop.f32.mrb[0].mxu0
        %6190 = vdwg.mxu0
        %6191 = vmatprep.subr.mxu0 0.0
        %v6192 = vand.u32 %v4291, 4294901760
        %6193 = vmatpush1.msra.mxu0 %v6192
        %6194 = vmatprep.subr.mxu0 0.0
        %v6195 = vand.u32 %v4292, 4294901760
        %6196 = vmatpush1.msra.mxu0 %v6195
        %6197 = vmatprep.subr.mxu0 0.0
        %v6198 = vand.u32 %v4293, 4294901760
        %6199 = vmatpush1.msra.mxu0 %v6198
        %6200 = vmatprep.subr.mxu0 0.0
        %v6201 = vand.u32 %v4294, 4294901760
        %6202 = vmatpush1.msra.mxu0 %v6201
        %6203 = vmatprep.subr.mxu0 0.0
        %v6204 = vand.u32 %v4295, 4294901760
        %6205 = vmatpush1.msra.mxu0 %v6204
        %6206 = vmatprep.subr.mxu0 0.0
        %v6207 = vand.u32 %v4296, 4294901760
        %6208 = vmatpush1.msra.mxu0 %v6207
        %6209 = vmatprep.subr.mxu0 0.0
        %v6210 = vand.u32 %v4297, 4294901760
        %6211 = vmatpush1.msra.mxu0 %v6210
        %6212 = vmatprep.subr.mxu0 0.0
        %v6213 = vand.u32 %v4298, 4294901760
        %6214 = vmatpush1.msra.mxu0 %v6213
        %6215 = vmatprep.subr.mxu0 0.0
        %v6216 = vand.u32 %v4299, 4294901760
        %6217 = vmatpush1.msra.mxu0 %v6216
        %6218 = vmatprep.subr.mxu0 0.0
        %v6219 = vand.u32 %v4300, 4294901760
        %6220 = vmatpush1.msra.mxu0 %v6219
        %6221 = vmatprep.subr.mxu0 0.0
        %v6222 = vand.u32 %v4301, 4294901760
        %6223 = vmatpush1.msra.mxu0 %v6222
        %6224 = vmatprep.subr.mxu0 0.0
        %v6225 = vand.u32 %v4302, 4294901760
        %6226 = vmatpush1.msra.mxu0 %v6225
        %6227 = vmatprep.subr.mxu0 0.0
        %v6228 = vand.u32 %v4303, 4294901760
        %6229 = vmatpush1.msra.mxu0 %v6228
        %6230 = vmatprep.subr.mxu0 0.0
        %v6231 = vand.u32 %v4304, 4294901760
        %6232 = vmatpush1.msra.mxu0 %v6231
        %6233 = vmatprep.subr.mxu0 0.0
        %v6234 = vand.u32 %v4305, 4294901760
        %6235 = vmatpush1.msra.mxu0 %v6234
        %6236 = vmatprep.subr.mxu0 0.0
        %v6237 = vand.u32 %v4306, 4294901760
        %6238 = vmatpush1.msra.mxu0 %v6237
        %6239 = vmatprep.subr.mxu0 0.0
        %6240 = vmatpush1.msra.mxu0 0.0
        %6241 = vmatprep.subr.mxu0 0.0
        %6242 = vmatpush1.msra.mxu0 0.0
        %6243 = vmatprep.subr.mxu0 0.0
        %6244 = vmatpush1.msra.mxu0 0.0
        %6245 = vmatprep.subr.mxu0 0.0
        %6246 = vmatpush1.msra.mxu0 0.0
        %6247 = vmatprep.subr.mxu0 0.0
        %6248 = vmatpush1.msra.mxu0 0.0
        %6249 = vmatprep.subr.mxu0 0.0
        %6250 = vmatpush1.msra.mxu0 0.0
        %6251 = vmatprep.subr.mxu0 0.0
        %6252 = vmatpush1.msra.mxu0 0.0
        %6253 = vmatprep.subr.mxu0 0.0
        %6254 = vmatpush1.msra.mxu0 0.0
        %6255 = vmatprep.subr.mxu0 0.0
        %6256 = vmatpush1.msra.mxu0 0.0
        %6257 = vmatprep.subr.mxu0 0.0
        %6258 = vmatpush1.msra.mxu0 0.0
        %6259 = vmatprep.subr.mxu0 0.0
        %6260 = vmatpush1.msra.mxu0 0.0
        %6261 = vmatprep.subr.mxu0 0.0
        %6262 = vmatpush1.msra.mxu0 0.0
        %6263 = vmatprep.subr.mxu0 0.0
        %6264 = vmatpush1.msra.mxu0 0.0
        %6265 = vmatprep.subr.mxu0 0.0
        %6266 = vmatpush1.msra.mxu0 0.0
        %6267 = vmatprep.subr.mxu0 0.0
        %6268 = vmatpush1.msra.mxu0 0.0
        %6269 = vmatprep.subr.mxu0 0.0
        %6270 = vmatpush1.msra.mxu0 0.0
        %6271 = vmatprep.mubr.f32.mxu0 0.0
        %v6272 = vand.u32 %v4283, 4294901760
        %v6273 = vsub.f32 %v4283, %v6272
        %v6274 = vand.u32 %v6273, 4294901760
        %v6275 = vsub.f32 %v6273, %v6274
        %v6276 = vand.u32 %v6275, 4294901760
        %6277 = vmatmul.mubr.f32.gmra.mrb[0].mxu0 %v6276
        %v6278 = vpop.f32.mrb[0].mxu0
        %v6279 = vadd.f32 0.0, %v6278
        %v6280 = vpop.f32.mrb[0].mxu0
        %6281 = vmatprep.mubr.f32.mxu0 0.0
        %v6282 = vand.u32 %v4284, 4294901760
        %v6283 = vsub.f32 %v4284, %v6282
        %v6284 = vand.u32 %v6283, 4294901760
        %v6285 = vsub.f32 %v6283, %v6284
        %v6286 = vand.u32 %v6285, 4294901760
        %6287 = vmatmul.mubr.f32.gmra.mrb[0].mxu0 %v6286
        %v6288 = vpop.f32.mrb[0].mxu0
        %v6289 = vadd.f32 0.0, %v6288
        %v6290 = vpop.f32.mrb[0].mxu0
        %6291 = vmatprep.mubr.f32.mxu0 0.0
        %v6292 = vand.u32 %v4285, 4294901760
        %v6293 = vsub.f32 %v4285, %v6292
        %v6294 = vand.u32 %v6293, 4294901760
        %v6295 = vsub.f32 %v6293, %v6294
        %v6296 = vand.u32 %v6295, 4294901760
        %6297 = vmatmul.mubr.f32.gmra.mrb[0].mxu0 %v6296
        %v6298 = vpop.f32.mrb[0].mxu0
        %v6299 = vadd.f32 0.0, %v6298
        %v6300 = vpop.f32.mrb[0].mxu0
        %6301 = vmatprep.mubr.f32.mxu0 0.0
        %v6302 = vand.u32 %v4286, 4294901760
        %v6303 = vsub.f32 %v4286, %v6302
        %v6304 = vand.u32 %v6303, 4294901760
        %v6305 = vsub.f32 %v6303, %v6304
        %v6306 = vand.u32 %v6305, 4294901760
        %6307 = vmatmul.mubr.f32.gmra.mrb[0].mxu0 %v6306
        %v6308 = vpop.f32.mrb[0].mxu0
        %v6309 = vadd.f32 0.0, %v6308
        %v6310 = vpop.f32.mrb[0].mxu0
        %6311 = vmatprep.mubr.f32.mxu0 0.0
        %v6312 = vand.u32 %v4287, 4294901760
        %v6313 = vsub.f32 %v4287, %v6312
        %v6314 = vand.u32 %v6313, 4294901760
        %v6315 = vsub.f32 %v6313, %v6314
        %v6316 = vand.u32 %v6315, 4294901760
        %6317 = vmatmul.mubr.f32.gmra.mrb[0].mxu0 %v6316
        %v6318 = vpop.f32.mrb[0].mxu0
        %v6319 = vadd.f32 0.0, %v6318
        %v6320 = vpop.f32.mrb[0].mxu0
        %6321 = vmatprep.mubr.f32.mxu0 0.0
        %v6322 = vand.u32 %v4288, 4294901760
        %v6323 = vsub.f32 %v4288, %v6322
        %v6324 = vand.u32 %v6323, 4294901760
        %v6325 = vsub.f32 %v6323, %v6324
        %v6326 = vand.u32 %v6325, 4294901760
        %6327 = vmatmul.mubr.f32.gmra.mrb[0].mxu0 %v6326
        %v6328 = vpop.f32.mrb[0].mxu0
        %v6329 = vadd.f32 0.0, %v6328
        %v6330 = vpop.f32.mrb[0].mxu0
        %6331 = vmatprep.mubr.f32.mxu0 0.0
        %v6332 = vand.u32 %v4289, 4294901760
        %v6333 = vsub.f32 %v4289, %v6332
        %v6334 = vand.u32 %v6333, 4294901760
        %v6335 = vsub.f32 %v6333, %v6334
        %v6336 = vand.u32 %v6335, 4294901760
        %6337 = vmatmul.mubr.f32.gmra.mrb[0].mxu0 %v6336
        %v6338 = vpop.f32.mrb[0].mxu0
        %v6339 = vadd.f32 0.0, %v6338
        %v6340 = vpop.f32.mrb[0].mxu0
        %6341 = vmatprep.mubr.f32.mxu0 0.0
        %v6342 = vand.u32 %v4290, 4294901760
        %v6343 = vsub.f32 %v4290, %v6342
        %v6344 = vand.u32 %v6343, 4294901760
        %v6345 = vsub.f32 %v6343, %v6344
        %v6346 = vand.u32 %v6345, 4294901760
        %6347 = vmatmul.mubr.f32.gmra.mrb[0].mxu0 %v6346
        %v6348 = vpop.f32.mrb[0].mxu0
        %v6349 = vadd.f32 0.0, %v6348
        %v6350 = vpop.f32.mrb[0].mxu0
        %6351 = vdwg.mxu0
        %6352 = vmatprep.subr.mxu0 0.0
        %v6353 = vand.u32 %v4291, 4294901760
        %v6354 = vsub.f32 %v4291, %v6353
        %v6355 = vand.u32 %v6354, 4294901760
        %v6356 = vsub.f32 %v6354, %v6355
        %v6357 = vand.u32 %v6356, 4294901760
        %6358 = vmatpush1.msra.mxu0 %v6357
        %6359 = vmatprep.subr.mxu0 0.0
        %v6360 = vand.u32 %v4292, 4294901760
        %v6361 = vsub.f32 %v4292, %v6360
        %v6362 = vand.u32 %v6361, 4294901760
        %v6363 = vsub.f32 %v6361, %v6362
        %v6364 = vand.u32 %v6363, 4294901760
        %6365 = vmatpush1.msra.mxu0 %v6364
        %6366 = vmatprep.subr.mxu0 0.0
        %v6367 = vand.u32 %v4293, 4294901760
        %v6368 = vsub.f32 %v4293, %v6367
        %v6369 = vand.u32 %v6368, 4294901760
        %v6370 = vsub.f32 %v6368, %v6369
        %v6371 = vand.u32 %v6370, 4294901760
        %6372 = vmatpush1.msra.mxu0 %v6371
        %6373 = vmatprep.subr.mxu0 0.0
        %v6374 = vand.u32 %v4294, 4294901760
        %v6375 = vsub.f32 %v4294, %v6374
        %v6376 = vand.u32 %v6375, 4294901760
        %v6377 = vsub.f32 %v6375, %v6376
        %v6378 = vand.u32 %v6377, 4294901760
        %6379 = vmatpush1.msra.mxu0 %v6378
        %6380 = vmatprep.subr.mxu0 0.0
        %v6381 = vand.u32 %v4295, 4294901760
        %v6382 = vsub.f32 %v4295, %v6381
        %v6383 = vand.u32 %v6382, 4294901760
        %v6384 = vsub.f32 %v6382, %v6383
        %v6385 = vand.u32 %v6384, 4294901760
        %6386 = vmatpush1.msra.mxu0 %v6385
        %6387 = vmatprep.subr.mxu0 0.0
        %v6388 = vand.u32 %v4296, 4294901760
        %v6389 = vsub.f32 %v4296, %v6388
        %v6390 = vand.u32 %v6389, 4294901760
        %v6391 = vsub.f32 %v6389, %v6390
        %v6392 = vand.u32 %v6391, 4294901760
        %6393 = vmatpush1.msra.mxu0 %v6392
        %6394 = vmatprep.subr.mxu0 0.0
        %v6395 = vand.u32 %v4297, 4294901760
        %v6396 = vsub.f32 %v4297, %v6395
        %v6397 = vand.u32 %v6396, 4294901760
        %v6398 = vsub.f32 %v6396, %v6397
        %v6399 = vand.u32 %v6398, 4294901760
        %6400 = vmatpush1.msra.mxu0 %v6399
        %6401 = vmatprep.subr.mxu0 0.0
        %v6402 = vand.u32 %v4298, 4294901760
        %v6403 = vsub.f32 %v4298, %v6402
        %v6404 = vand.u32 %v6403, 4294901760
        %v6405 = vsub.f32 %v6403, %v6404
        %v6406 = vand.u32 %v6405, 4294901760
        %6407 = vmatpush1.msra.mxu0 %v6406
        %6408 = vmatprep.subr.mxu0 0.0
        %v6409 = vand.u32 %v4299, 4294901760
        %v6410 = vsub.f32 %v4299, %v6409
        %v6411 = vand.u32 %v6410, 4294901760
        %v6412 = vsub.f32 %v6410, %v6411
        %v6413 = vand.u32 %v6412, 4294901760
        %6414 = vmatpush1.msra.mxu0 %v6413
        %6415 = vmatprep.subr.mxu0 0.0
        %v6416 = vand.u32 %v4300, 4294901760
        %v6417 = vsub.f32 %v4300, %v6416
        %v6418 = vand.u32 %v6417, 4294901760
        %v6419 = vsub.f32 %v6417, %v6418
        %v6420 = vand.u32 %v6419, 4294901760
        %6421 = vmatpush1.msra.mxu0 %v6420
        %6422 = vmatprep.subr.mxu0 0.0
        %v6423 = vand.u32 %v4301, 4294901760
        %v6424 = vsub.f32 %v4301, %v6423
        %v6425 = vand.u32 %v6424, 4294901760
        %v6426 = vsub.f32 %v6424, %v6425
        %v6427 = vand.u32 %v6426, 4294901760
        %6428 = vmatpush1.msra.mxu0 %v6427
        %6429 = vmatprep.subr.mxu0 0.0
        %v6430 = vand.u32 %v4302, 4294901760
        %v6431 = vsub.f32 %v4302, %v6430
        %v6432 = vand.u32 %v6431, 4294901760
        %v6433 = vsub.f32 %v6431, %v6432
        %v6434 = vand.u32 %v6433, 4294901760
        %6435 = vmatpush1.msra.mxu0 %v6434
        %6436 = vmatprep.subr.mxu0 0.0
        %v6437 = vand.u32 %v4303, 4294901760
        %v6438 = vsub.f32 %v4303, %v6437
        %v6439 = vand.u32 %v6438, 4294901760
        %v6440 = vsub.f32 %v6438, %v6439
        %v6441 = vand.u32 %v6440, 4294901760
        %6442 = vmatpush1.msra.mxu0 %v6441
        %6443 = vmatprep.subr.mxu0 0.0
        %v6444 = vand.u32 %v4304, 4294901760
        %v6445 = vsub.f32 %v4304, %v6444
        %v6446 = vand.u32 %v6445, 4294901760
        %v6447 = vsub.f32 %v6445, %v6446
        %v6448 = vand.u32 %v6447, 4294901760
        %6449 = vmatpush1.msra.mxu0 %v6448
        %6450 = vmatprep.subr.mxu0 0.0
        %v6451 = vand.u32 %v4305, 4294901760
        %v6452 = vsub.f32 %v4305, %v6451
        %v6453 = vand.u32 %v6452, 4294901760
        %v6454 = vsub.f32 %v6452, %v6453
        %v6455 = vand.u32 %v6454, 4294901760
        %6456 = vmatpush1.msra.mxu0 %v6455
        %6457 = vmatprep.subr.mxu0 0.0
        %v6458 = vand.u32 %v4306, 4294901760
        %v6459 = vsub.f32 %v4306, %v6458
        %v6460 = vand.u32 %v6459, 4294901760
        %v6461 = vsub.f32 %v6459, %v6460
        %v6462 = vand.u32 %v6461, 4294901760
        %6463 = vmatpush1.msra.mxu0 %v6462
        %6464 = vmatprep.subr.mxu0 0.0
        %6465 = vmatpush1.msra.mxu0 0.0
        %6466 = vmatprep.subr.mxu0 0.0
        %6467 = vmatpush1.msra.mxu0 0.0
        %6468 = vmatprep.subr.mxu0 0.0
        %6469 = vmatpush1.msra.mxu0 0.0
        %6470 = vmatprep.subr.mxu0 0.0
        %6471 = vmatpush1.msra.mxu0 0.0
        %6472 = vmatprep.subr.mxu0 0.0
        %6473 = vmatpush1.msra.mxu0 0.0
        %6474 = vmatprep.subr.mxu0 0.0
        %6475 = vmatpush1.msra.mxu0 0.0
        %6476 = vmatprep.subr.mxu0 0.0
        %6477 = vmatpush1.msra.mxu0 0.0
        %6478 = vmatprep.subr.mxu0 0.0
        %6479 = vmatpush1.msra.mxu0 0.0
        %6480 = vmatprep.subr.mxu0 0.0
        %6481 = vmatpush1.msra.mxu0 0.0
        %6482 = vmatprep.subr.mxu0 0.0
        %6483 = vmatpush1.msra.mxu0 0.0
        %6484 = vmatprep.subr.mxu0 0.0
        %6485 = vmatpush1.msra.mxu0 0.0
        %6486 = vmatprep.subr.mxu0 0.0
        %6487 = vmatpush1.msra.mxu0 0.0
        %6488 = vmatprep.subr.mxu0 0.0
        %6489 = vmatpush1.msra.mxu0 0.0
        %6490 = vmatprep.subr.mxu0 0.0
        %6491 = vmatpush1.msra.mxu0 0.0
        %6492 = vmatprep.subr.mxu0 0.0
        %6493 = vmatpush1.msra.mxu0 0.0
        %6494 = vmatprep.subr.mxu0 0.0
        %6495 = vmatpush1.msra.mxu0 0.0
        %6496 = vmatprep.mubr.f32.mxu0 0.0
        %v6497 = vand.u32 %v4283, 4294901760
        %6498 = vmatmul.mubr.f32.gmra.mrb[0].mxu0 %v6497
        %v6499 = vpop.f32.mrb[0].mxu0
        %v6500 = vadd.f32 %v6279, %v6499
        %v6501 = vpop.f32.mrb[0].mxu0
        %6502 = vmatprep.mubr.f32.mxu0 0.0
        %v6503 = vand.u32 %v4284, 4294901760
        %6504 = vmatmul.mubr.f32.gmra.mrb[0].mxu0 %v6503
        %v6505 = vpop.f32.mrb[0].mxu0
        %v6506 = vadd.f32 %v6289, %v6505
        %v6507 = vpop.f32.mrb[0].mxu0
        %6508 = vmatprep.mubr.f32.mxu0 0.0
        %v6509 = vand.u32 %v4285, 4294901760
        %6510 = vmatmul.mubr.f32.gmra.mrb[0].mxu0 %v6509
        %v6511 = vpop.f32.mrb[0].mxu0
        %v6512 = vadd.f32 %v6299, %v6511
        %v6513 = vpop.f32.mrb[0].mxu0
        %6514 = vmatprep.mubr.f32.mxu0 0.0
        %v6515 = vand.u32 %v4286, 4294901760
        %6516 = vmatmul.mubr.f32.gmra.mrb[0].mxu0 %v6515
        %v6517 = vpop.f32.mrb[0].mxu0
        %v6518 = vadd.f32 %v6309, %v6517
        %v6519 = vpop.f32.mrb[0].mxu0
        %6520 = vmatprep.mubr.f32.mxu0 0.0
        %v6521 = vand.u32 %v4287, 4294901760
        %6522 = vmatmul.mubr.f32.gmra.mrb[0].mxu0 %v6521
        %v6523 = vpop.f32.mrb[0].mxu0
        %v6524 = vadd.f32 %v6319, %v6523
        %v6525 = vpop.f32.mrb[0].mxu0
        %6526 = vmatprep.mubr.f32.mxu0 0.0
        %v6527 = vand.u32 %v4288, 4294901760
        %6528 = vmatmul.mubr.f32.gmra.mrb[0].mxu0 %v6527
        %v6529 = vpop.f32.mrb[0].mxu0
        %v6530 = vadd.f32 %v6329, %v6529
        %v6531 = vpop.f32.mrb[0].mxu0
        %6532 = vmatprep.mubr.f32.mxu0 0.0
        %v6533 = vand.u32 %v4289, 4294901760
        %6534 = vmatmul.mubr.f32.gmra.mrb[0].mxu0 %v6533
        %v6535 = vpop.f32.mrb[0].mxu0
        %v6536 = vadd.f32 %v6339, %v6535
        %v6537 = vpop.f32.mrb[0].mxu0
        %6538 = vmatprep.mubr.f32.mxu0 0.0
        %v6539 = vand.u32 %v4290, 4294901760
        %6540 = vmatmul.mubr.f32.gmra.mrb[0].mxu0 %v6539
        %v6541 = vpop.f32.mrb[0].mxu0
        %v6542 = vadd.f32 %v6349, %v6541
        %v6543 = vpop.f32.mrb[0].mxu0
        %6544 = vdwg.mxu0
        %6545 = vmatprep.subr.mxu0 0.0
        %v6546 = vand.u32 %v4291, 4294901760
        %v6547 = vsub.f32 %v4291, %v6546
        %6548 = vmatpush1.msra.mxu0 %v6547
        %6549 = vmatprep.subr.mxu0 0.0
        %v6550 = vand.u32 %v4292, 4294901760
        %v6551 = vsub.f32 %v4292, %v6550
        %6552 = vmatpush1.msra.mxu0 %v6551
        %6553 = vmatprep.subr.mxu0 0.0
        %v6554 = vand.u32 %v4293, 4294901760
        %v6555 = vsub.f32 %v4293, %v6554
        %6556 = vmatpush1.msra.mxu0 %v6555
        %6557 = vmatprep.subr.mxu0 0.0
        %v6558 = vand.u32 %v4294, 4294901760
        %v6559 = vsub.f32 %v4294, %v6558
        %6560 = vmatpush1.msra.mxu0 %v6559
        %6561 = vmatprep.subr.mxu0 0.0
        %v6562 = vand.u32 %v4295, 4294901760
        %v6563 = vsub.f32 %v4295, %v6562
        %6564 = vmatpush1.msra.mxu0 %v6563
        %6565 = vmatprep.subr.mxu0 0.0
        %v6566 = vand.u32 %v4296, 4294901760
        %v6567 = vsub.f32 %v4296, %v6566
        %6568 = vmatpush1.msra.mxu0 %v6567
        %6569 = vmatprep.subr.mxu0 0.0
        %v6570 = vand.u32 %v4297, 4294901760
        %v6571 = vsub.f32 %v4297, %v6570
        %6572 = vmatpush1.msra.mxu0 %v6571
        %6573 = vmatprep.subr.mxu0 0.0
        %v6574 = vand.u32 %v4298, 4294901760
        %v6575 = vsub.f32 %v4298, %v6574
        %6576 = vmatpush1.msra.mxu0 %v6575
        %6577 = vmatprep.subr.mxu0 0.0
        %v6578 = vand.u32 %v4299, 4294901760
        %v6579 = vsub.f32 %v4299, %v6578
        %6580 = vmatpush1.msra.mxu0 %v6579
        %6581 = vmatprep.subr.mxu0 0.0
        %v6582 = vand.u32 %v4300, 4294901760
        %v6583 = vsub.f32 %v4300, %v6582
        %6584 = vmatpush1.msra.mxu0 %v6583
        %6585 = vmatprep.subr.mxu0 0.0
        %v6586 = vand.u32 %v4301, 4294901760
        %v6587 = vsub.f32 %v4301, %v6586
        %6588 = vmatpush1.msra.mxu0 %v6587
        %6589 = vmatprep.subr.mxu0 0.0
        %v6590 = vand.u32 %v4302, 4294901760
        %v6591 = vsub.f32 %v4302, %v6590
        %6592 = vmatpush1.msra.mxu0 %v6591
        %6593 = vmatprep.subr.mxu0 0.0
        %v6594 = vand.u32 %v4303, 4294901760
        %v6595 = vsub.f32 %v4303, %v6594
        %6596 = vmatpush1.msra.mxu0 %v6595
        %6597 = vmatprep.subr.mxu0 0.0
        %v6598 = vand.u32 %v4304, 4294901760
        %v6599 = vsub.f32 %v4304, %v6598
        %6600 = vmatpush1.msra.mxu0 %v6599
        %6601 = vmatprep.subr.mxu0 0.0
        %v6602 = vand.u32 %v4305, 4294901760
        %v6603 = vsub.f32 %v4305, %v6602
        %6604 = vmatpush1.msra.mxu0 %v6603
        %6605 = vmatprep.subr.mxu0 0.0
        %v6606 = vand.u32 %v4306, 4294901760
        %v6607 = vsub.f32 %v4306, %v6606
        %6608 = vmatpush1.msra.mxu0 %v6607
        %6609 = vmatprep.subr.mxu0 0.0
        %6610 = vmatpush1.msra.mxu0 0.0
        %6611 = vmatprep.subr.mxu0 0.0
        %6612 = vmatpush1.msra.mxu0 0.0
        %6613 = vmatprep.subr.mxu0 0.0
        %6614 = vmatpush1.msra.mxu0 0.0
        %6615 = vmatprep.subr.mxu0 0.0
        %6616 = vmatpush1.msra.mxu0 0.0
        %6617 = vmatprep.subr.mxu0 0.0
        %6618 = vmatpush1.msra.mxu0 0.0
        %6619 = vmatprep.subr.mxu0 0.0
        %6620 = vmatpush1.msra.mxu0 0.0
        %6621 = vmatprep.subr.mxu0 0.0
        %6622 = vmatpush1.msra.mxu0 0.0
        %6623 = vmatprep.subr.mxu0 0.0
        %6624 = vmatpush1.msra.mxu0 0.0
        %6625 = vmatprep.subr.mxu0 0.0
        %6626 = vmatpush1.msra.mxu0 0.0
        %6627 = vmatprep.subr.mxu0 0.0
        %6628 = vmatpush1.msra.mxu0 0.0
        %6629 = vmatprep.subr.mxu0 0.0
        %6630 = vmatpush1.msra.mxu0 0.0
        %6631 = vmatprep.subr.mxu0 0.0
        %6632 = vmatpush1.msra.mxu0 0.0
        %6633 = vmatprep.subr.mxu0 0.0
        %6634 = vmatpush1.msra.mxu0 0.0
        %6635 = vmatprep.subr.mxu0 0.0
        %6636 = vmatpush1.msra.mxu0 0.0
        %6637 = vmatprep.subr.mxu0 0.0
        %6638 = vmatpush1.msra.mxu0 0.0
        %6639 = vmatprep.subr.mxu0 0.0
        %6640 = vmatpush1.msra.mxu0 0.0
        %6641 = vmatprep.mubr.f32.mxu0 0.0
        %v6642 = vand.u32 %v4283, 4294901760
        %v6643 = vsub.f32 %v4283, %v6642
        %6644 = vmatmul.mubr.f32.gmra.mrb[0].mxu0 %v6643
        %v6645 = vpop.f32.mrb[0].mxu0
        %v6646 = vadd.f32 %v6500, %v6645
        %v6647 = vpop.f32.mrb[0].mxu0
        %6648 = vmatprep.mubr.f32.mxu0 0.0
        %v6649 = vand.u32 %v4284, 4294901760
        %v6650 = vsub.f32 %v4284, %v6649
        %6651 = vmatmul.mubr.f32.gmra.mrb[0].mxu0 %v6650
        %v6652 = vpop.f32.mrb[0].mxu0
        %v6653 = vadd.f32 %v6506, %v6652
        %v6654 = vpop.f32.mrb[0].mxu0
        %6655 = vmatprep.mubr.f32.mxu0 0.0
        %v6656 = vand.u32 %v4285, 4294901760
        %v6657 = vsub.f32 %v4285, %v6656
        %6658 = vmatmul.mubr.f32.gmra.mrb[0].mxu0 %v6657
        %v6659 = vpop.f32.mrb[0].mxu0
        %v6660 = vadd.f32 %v6512, %v6659
        %v6661 = vpop.f32.mrb[0].mxu0
        %6662 = vmatprep.mubr.f32.mxu0 0.0
        %v6663 = vand.u32 %v4286, 4294901760
        %v6664 = vsub.f32 %v4286, %v6663
        %6665 = vmatmul.mubr.f32.gmra.mrb[0].mxu0 %v6664
        %v6666 = vpop.f32.mrb[0].mxu0
        %v6667 = vadd.f32 %v6518, %v6666
        %v6668 = vpop.f32.mrb[0].mxu0
        %6669 = vmatprep.mubr.f32.mxu0 0.0
        %v6670 = vand.u32 %v4287, 4294901760
        %v6671 = vsub.f32 %v4287, %v6670
        %6672 = vmatmul.mubr.f32.gmra.mrb[0].mxu0 %v6671
        %v6673 = vpop.f32.mrb[0].mxu0
        %v6674 = vadd.f32 %v6524, %v6673
        %v6675 = vpop.f32.mrb[0].mxu0
        %6676 = vmatprep.mubr.f32.mxu0 0.0
        %v6677 = vand.u32 %v4288, 4294901760
        %v6678 = vsub.f32 %v4288, %v6677
        %6679 = vmatmul.mubr.f32.gmra.mrb[0].mxu0 %v6678
        %v6680 = vpop.f32.mrb[0].mxu0
        %v6681 = vadd.f32 %v6530, %v6680
        %v6682 = vpop.f32.mrb[0].mxu0
        %6683 = vmatprep.mubr.f32.mxu0 0.0
        %v6684 = vand.u32 %v4289, 4294901760
        %v6685 = vsub.f32 %v4289, %v6684
        %6686 = vmatmul.mubr.f32.gmra.mrb[0].mxu0 %v6685
        %v6687 = vpop.f32.mrb[0].mxu0
        %v6688 = vadd.f32 %v6536, %v6687
        %v6689 = vpop.f32.mrb[0].mxu0
        %6690 = vmatprep.mubr.f32.mxu0 0.0
        %v6691 = vand.u32 %v4290, 4294901760
        %v6692 = vsub.f32 %v4290, %v6691
        %6693 = vmatmul.mubr.f32.gmra.mrb[0].mxu0 %v6692
        %v6694 = vpop.f32.mrb[0].mxu0
        %v6695 = vadd.f32 %v6542, %v6694
        %v6696 = vpop.f32.mrb[0].mxu0
        %6697 = vdwg.mxu0
        %6698 = vmatprep.subr.mxu0 0.0
        %v6699 = vand.u32 %v4291, 4294901760
        %6700 = vmatpush1.msra.mxu0 %v6699
        %6701 = vmatprep.subr.mxu0 0.0
        %v6702 = vand.u32 %v4292, 4294901760
        %6703 = vmatpush1.msra.mxu0 %v6702
        %6704 = vmatprep.subr.mxu0 0.0
        %v6705 = vand.u32 %v4293, 4294901760
        %6706 = vmatpush1.msra.mxu0 %v6705
        %6707 = vmatprep.subr.mxu0 0.0
        %v6708 = vand.u32 %v4294, 4294901760
        %6709 = vmatpush1.msra.mxu0 %v6708
        %6710 = vmatprep.subr.mxu0 0.0
        %v6711 = vand.u32 %v4295, 4294901760
        %6712 = vmatpush1.msra.mxu0 %v6711
        %6713 = vmatprep.subr.mxu0 0.0
        %v6714 = vand.u32 %v4296, 4294901760
        %6715 = vmatpush1.msra.mxu0 %v6714
        %6716 = vmatprep.subr.mxu0 0.0
        %v6717 = vand.u32 %v4297, 4294901760
        %6718 = vmatpush1.msra.mxu0 %v6717
        %6719 = vmatprep.subr.mxu0 0.0
        %v6720 = vand.u32 %v4298, 4294901760
        %6721 = vmatpush1.msra.mxu0 %v6720
        %6722 = vmatprep.subr.mxu0 0.0
        %v6723 = vand.u32 %v4299, 4294901760
        %6724 = vmatpush1.msra.mxu0 %v6723
        %6725 = vmatprep.subr.mxu0 0.0
        %v6726 = vand.u32 %v4300, 4294901760
        %6727 = vmatpush1.msra.mxu0 %v6726
        %6728 = vmatprep.subr.mxu0 0.0
        %v6729 = vand.u32 %v4301, 4294901760
        %6730 = vmatpush1.msra.mxu0 %v6729
        %6731 = vmatprep.subr.mxu0 0.0
        %v6732 = vand.u32 %v4302, 4294901760
        %6733 = vmatpush1.msra.mxu0 %v6732
        %6734 = vmatprep.subr.mxu0 0.0
        %v6735 = vand.u32 %v4303, 4294901760
        %6736 = vmatpush1.msra.mxu0 %v6735
        %6737 = vmatprep.subr.mxu0 0.0
        %v6738 = vand.u32 %v4304, 4294901760
        %6739 = vmatpush1.msra.mxu0 %v6738
        %6740 = vmatprep.subr.mxu0 0.0
        %v6741 = vand.u32 %v4305, 4294901760
        %6742 = vmatpush1.msra.mxu0 %v6741
        %6743 = vmatprep.subr.mxu0 0.0
        %v6744 = vand.u32 %v4306, 4294901760
        %6745 = vmatpush1.msra.mxu0 %v6744
        %6746 = vmatprep.subr.mxu0 0.0
        %6747 = vmatpush1.msra.mxu0 0.0
        %6748 = vmatprep.subr.mxu0 0.0
        %6749 = vmatpush1.msra.mxu0 0.0
        %6750 = vmatprep.subr.mxu0 0.0
        %6751 = vmatpush1.msra.mxu0 0.0
        %6752 = vmatprep.subr.mxu0 0.0
        %6753 = vmatpush1.msra.mxu0 0.0
        %6754 = vmatprep.subr.mxu0 0.0
        %6755 = vmatpush1.msra.mxu0 0.0
        %6756 = vmatprep.subr.mxu0 0.0
        %6757 = vmatpush1.msra.mxu0 0.0
        %6758 = vmatprep.subr.mxu0 0.0
        %6759 = vmatpush1.msra.mxu0 0.0
        %6760 = vmatprep.subr.mxu0 0.0
        %6761 = vmatpush1.msra.mxu0 0.0
        %6762 = vmatprep.subr.mxu0 0.0
        %6763 = vmatpush1.msra.mxu0 0.0
        %6764 = vmatprep.subr.mxu0 0.0
        %6765 = vmatpush1.msra.mxu0 0.0
        %6766 = vmatprep.subr.mxu0 0.0
        %6767 = vmatpush1.msra.mxu0 0.0
        %6768 = vmatprep.subr.mxu0 0.0
        %6769 = vmatpush1.msra.mxu0 0.0
        %6770 = vmatprep.subr.mxu0 0.0
        %6771 = vmatpush1.msra.mxu0 0.0
        %6772 = vmatprep.subr.mxu0 0.0
        %6773 = vmatpush1.msra.mxu0 0.0
        %6774 = vmatprep.subr.mxu0 0.0
        %6775 = vmatpush1.msra.mxu0 0.0
        %6776 = vmatprep.subr.mxu0 0.0
        %6777 = vmatpush1.msra.mxu0 0.0
        %6778 = vmatprep.mubr.f32.mxu0 0.0
        %v6779 = vand.u32 %v4283, 4294901760
        %v6780 = vsub.f32 %v4283, %v6779
        %v6781 = vand.u32 %v6780, 4294901760
        %6782 = vmatmul.mubr.f32.gmra.mrb[0].mxu0 %v6781
        %v6783 = vpop.f32.mrb[0].mxu0
        %v6784 = vadd.f32 %v6646, %v6783
        %v6785 = vpop.f32.mrb[0].mxu0
        %6786 = vmatprep.mubr.f32.mxu0 0.0
        %v6787 = vand.u32 %v4284, 4294901760
        %v6788 = vsub.f32 %v4284, %v6787
        %v6789 = vand.u32 %v6788, 4294901760
        %6790 = vmatmul.mubr.f32.gmra.mrb[0].mxu0 %v6789
        %v6791 = vpop.f32.mrb[0].mxu0
        %v6792 = vadd.f32 %v6653, %v6791
        %v6793 = vpop.f32.mrb[0].mxu0
        %6794 = vmatprep.mubr.f32.mxu0 0.0
        %v6795 = vand.u32 %v4285, 4294901760
        %v6796 = vsub.f32 %v4285, %v6795
        %v6797 = vand.u32 %v6796, 4294901760
        %6798 = vmatmul.mubr.f32.gmra.mrb[0].mxu0 %v6797
        %v6799 = vpop.f32.mrb[0].mxu0
        %v6800 = vadd.f32 %v6660, %v6799
        %v6801 = vpop.f32.mrb[0].mxu0
        %6802 = vmatprep.mubr.f32.mxu0 0.0
        %v6803 = vand.u32 %v4286, 4294901760
        %v6804 = vsub.f32 %v4286, %v6803
        %v6805 = vand.u32 %v6804, 4294901760
        %6806 = vmatmul.mubr.f32.gmra.mrb[0].mxu0 %v6805
        %v6807 = vpop.f32.mrb[0].mxu0
        %v6808 = vadd.f32 %v6667, %v6807
        %v6809 = vpop.f32.mrb[0].mxu0
        %6810 = vmatprep.mubr.f32.mxu0 0.0
        %v6811 = vand.u32 %v4287, 4294901760
        %v6812 = vsub.f32 %v4287, %v6811
        %v6813 = vand.u32 %v6812, 4294901760
        %6814 = vmatmul.mubr.f32.gmra.mrb[0].mxu0 %v6813
        %v6815 = vpop.f32.mrb[0].mxu0
        %v6816 = vadd.f32 %v6674, %v6815
        %v6817 = vpop.f32.mrb[0].mxu0
        %6818 = vmatprep.mubr.f32.mxu0 0.0
        %v6819 = vand.u32 %v4288, 4294901760
        %v6820 = vsub.f32 %v4288, %v6819
        %v6821 = vand.u32 %v6820, 4294901760
        %6822 = vmatmul.mubr.f32.gmra.mrb[0].mxu0 %v6821
        %v6823 = vpop.f32.mrb[0].mxu0
        %v6824 = vadd.f32 %v6681, %v6823
        %v6825 = vpop.f32.mrb[0].mxu0
        %6826 = vmatprep.mubr.f32.mxu0 0.0
        %v6827 = vand.u32 %v4289, 4294901760
        %v6828 = vsub.f32 %v4289, %v6827
        %v6829 = vand.u32 %v6828, 4294901760
        %6830 = vmatmul.mubr.f32.gmra.mrb[0].mxu0 %v6829
        %v6831 = vpop.f32.mrb[0].mxu0
        %v6832 = vadd.f32 %v6688, %v6831
        %v6833 = vpop.f32.mrb[0].mxu0
        %6834 = vmatprep.mubr.f32.mxu0 0.0
        %v6835 = vand.u32 %v4290, 4294901760
        %v6836 = vsub.f32 %v4290, %v6835
        %v6837 = vand.u32 %v6836, 4294901760
        %6838 = vmatmul.mubr.f32.gmra.mrb[0].mxu0 %v6837
        %v6839 = vpop.f32.mrb[0].mxu0
        %v6840 = vadd.f32 %v6695, %v6839
        %v6841 = vpop.f32.mrb[0].mxu0
        %6842 = vdwg.mxu0
        %6843 = vmatprep.subr.mxu0 0.0
        %v6844 = vand.u32 %v4291, 4294901760
        %v6845 = vsub.f32 %v4291, %v6844
        %v6846 = vand.u32 %v6845, 4294901760
        %6847 = vmatpush1.msra.mxu0 %v6846
        %6848 = vmatprep.subr.mxu0 0.0
        %v6849 = vand.u32 %v4292, 4294901760
        %v6850 = vsub.f32 %v4292, %v6849
        %v6851 = vand.u32 %v6850, 4294901760
        %6852 = vmatpush1.msra.mxu0 %v6851
        %6853 = vmatprep.subr.mxu0 0.0
        %v6854 = vand.u32 %v4293, 4294901760
        %v6855 = vsub.f32 %v4293, %v6854
        %v6856 = vand.u32 %v6855, 4294901760
        %6857 = vmatpush1.msra.mxu0 %v6856
        %6858 = vmatprep.subr.mxu0 0.0
        %v6859 = vand.u32 %v4294, 4294901760
        %v6860 = vsub.f32 %v4294, %v6859
        %v6861 = vand.u32 %v6860, 4294901760
        %6862 = vmatpush1.msra.mxu0 %v6861
        %6863 = vmatprep.subr.mxu0 0.0
        %v6864 = vand.u32 %v4295, 4294901760
        %v6865 = vsub.f32 %v4295, %v6864
        %v6866 = vand.u32 %v6865, 4294901760
        %6867 = vmatpush1.msra.mxu0 %v6866
        %6868 = vmatprep.subr.mxu0 0.0
        %v6869 = vand.u32 %v4296, 4294901760
        %v6870 = vsub.f32 %v4296, %v6869
        %v6871 = vand.u32 %v6870, 4294901760
        %6872 = vmatpush1.msra.mxu0 %v6871
        %6873 = vmatprep.subr.mxu0 0.0
        %v6874 = vand.u32 %v4297, 4294901760
        %v6875 = vsub.f32 %v4297, %v6874
        %v6876 = vand.u32 %v6875, 4294901760
        %6877 = vmatpush1.msra.mxu0 %v6876
        %6878 = vmatprep.subr.mxu0 0.0
        %v6879 = vand.u32 %v4298, 4294901760
        %v6880 = vsub.f32 %v4298, %v6879
        %v6881 = vand.u32 %v6880, 4294901760
        %6882 = vmatpush1.msra.mxu0 %v6881
        %6883 = vmatprep.subr.mxu0 0.0
        %v6884 = vand.u32 %v4299, 4294901760
        %v6885 = vsub.f32 %v4299, %v6884
        %v6886 = vand.u32 %v6885, 4294901760
        %6887 = vmatpush1.msra.mxu0 %v6886
        %6888 = vmatprep.subr.mxu0 0.0
        %v6889 = vand.u32 %v4300, 4294901760
        %v6890 = vsub.f32 %v4300, %v6889
        %v6891 = vand.u32 %v6890, 4294901760
        %6892 = vmatpush1.msra.mxu0 %v6891
        %6893 = vmatprep.subr.mxu0 0.0
        %v6894 = vand.u32 %v4301, 4294901760
        %v6895 = vsub.f32 %v4301, %v6894
        %v6896 = vand.u32 %v6895, 4294901760
        %6897 = vmatpush1.msra.mxu0 %v6896
        %6898 = vmatprep.subr.mxu0 0.0
        %v6899 = vand.u32 %v4302, 4294901760
        %v6900 = vsub.f32 %v4302, %v6899
        %v6901 = vand.u32 %v6900, 4294901760
        %6902 = vmatpush1.msra.mxu0 %v6901
        %6903 = vmatprep.subr.mxu0 0.0
        %v6904 = vand.u32 %v4303, 4294901760
        %v6905 = vsub.f32 %v4303, %v6904
        %v6906 = vand.u32 %v6905, 4294901760
        %6907 = vmatpush1.msra.mxu0 %v6906
        %6908 = vmatprep.subr.mxu0 0.0
        %v6909 = vand.u32 %v4304, 4294901760
        %v6910 = vsub.f32 %v4304, %v6909
        %v6911 = vand.u32 %v6910, 4294901760
        %6912 = vmatpush1.msra.mxu0 %v6911
        %6913 = vmatprep.subr.mxu0 0.0
        %v6914 = vand.u32 %v4305, 4294901760
        %v6915 = vsub.f32 %v4305, %v6914
        %v6916 = vand.u32 %v6915, 4294901760
        %6917 = vmatpush1.msra.mxu0 %v6916
        %6918 = vmatprep.subr.mxu0 0.0
        %v6919 = vand.u32 %v4306, 4294901760
        %v6920 = vsub.f32 %v4306, %v6919
        %v6921 = vand.u32 %v6920, 4294901760
        %6922 = vmatpush1.msra.mxu0 %v6921
        %6923 = vmatprep.subr.mxu0 0.0
        %6924 = vmatpush1.msra.mxu0 0.0
        %6925 = vmatprep.subr.mxu0 0.0
        %6926 = vmatpush1.msra.mxu0 0.0
        %6927 = vmatprep.subr.mxu0 0.0
        %6928 = vmatpush1.msra.mxu0 0.0
        %6929 = vmatprep.subr.mxu0 0.0
        %6930 = vmatpush1.msra.mxu0 0.0
        %6931 = vmatprep.subr.mxu0 0.0
        %6932 = vmatpush1.msra.mxu0 0.0
        %6933 = vmatprep.subr.mxu0 0.0
        %6934 = vmatpush1.msra.mxu0 0.0
        %6935 = vmatprep.subr.mxu0 0.0
        %6936 = vmatpush1.msra.mxu0 0.0
        %6937 = vmatprep.subr.mxu0 0.0
        %6938 = vmatpush1.msra.mxu0 0.0
        %6939 = vmatprep.subr.mxu0 0.0
        %6940 = vmatpush1.msra.mxu0 0.0
        %6941 = vmatprep.subr.mxu0 0.0
        %6942 = vmatpush1.msra.mxu0 0.0
        %6943 = vmatprep.subr.mxu0 0.0
        %6944 = vmatpush1.msra.mxu0 0.0
        %6945 = vmatprep.subr.mxu0 0.0
        %6946 = vmatpush1.msra.mxu0 0.0
        %6947 = vmatprep.subr.mxu0 0.0
        %6948 = vmatpush1.msra.mxu0 0.0
        %6949 = vmatprep.subr.mxu0 0.0
        %6950 = vmatpush1.msra.mxu0 0.0
        %6951 = vmatprep.subr.mxu0 0.0
        %6952 = vmatpush1.msra.mxu0 0.0
        %6953 = vmatprep.subr.mxu0 0.0
        %6954 = vmatpush1.msra.mxu0 0.0
        %6955 = vmatprep.mubr.f32.mxu0 0.0
        %v6956 = vand.u32 %v4283, 4294901760
        %6957 = vmatmul.mubr.f32.gmra.mrb[0].mxu0 %v6956
        %v6958 = vpop.f32.mrb[0].mxu0
        %v6959 = vadd.f32 %v6784, %v6958
        %v6960 = vpop.f32.mrb[0].mxu0
        %6961 = vmatprep.mubr.f32.mxu0 0.0
        %v6962 = vand.u32 %v4284, 4294901760
        %6963 = vmatmul.mubr.f32.gmra.mrb[0].mxu0 %v6962
        %v6964 = vpop.f32.mrb[0].mxu0
        %v6965 = vadd.f32 %v6792, %v6964
        %v6966 = vpop.f32.mrb[0].mxu0
        %6967 = vmatprep.mubr.f32.mxu0 0.0
        %v6968 = vand.u32 %v4285, 4294901760
        %6969 = vmatmul.mubr.f32.gmra.mrb[0].mxu0 %v6968
        %v6970 = vpop.f32.mrb[0].mxu0
        %v6971 = vadd.f32 %v6800, %v6970
        %v6972 = vpop.f32.mrb[0].mxu0
        %6973 = vmatprep.mubr.f32.mxu0 0.0
        %v6974 = vand.u32 %v4286, 4294901760
        %6975 = vmatmul.mubr.f32.gmra.mrb[0].mxu0 %v6974
        %v6976 = vpop.f32.mrb[0].mxu0
        %v6977 = vadd.f32 %v6808, %v6976
        %v6978 = vpop.f32.mrb[0].mxu0
        %6979 = vmatprep.mubr.f32.mxu0 0.0
        %v6980 = vand.u32 %v4287, 4294901760
        %6981 = vmatmul.mubr.f32.gmra.mrb[0].mxu0 %v6980
        %v6982 = vpop.f32.mrb[0].mxu0
        %v6983 = vadd.f32 %v6816, %v6982
        %v6984 = vpop.f32.mrb[0].mxu0
        %6985 = vmatprep.mubr.f32.mxu0 0.0
        %v6986 = vand.u32 %v4288, 4294901760
        %6987 = vmatmul.mubr.f32.gmra.mrb[0].mxu0 %v6986
        %v6988 = vpop.f32.mrb[0].mxu0
        %v6989 = vadd.f32 %v6824, %v6988
        %v6990 = vpop.f32.mrb[0].mxu0
        %6991 = vmatprep.mubr.f32.mxu0 0.0
        %v6992 = vand.u32 %v4289, 4294901760
        %6993 = vmatmul.mubr.f32.gmra.mrb[0].mxu0 %v6992
        %v6994 = vpop.f32.mrb[0].mxu0
        %v6995 = vadd.f32 %v6832, %v6994
        %v6996 = vpop.f32.mrb[0].mxu0
        %6997 = vmatprep.mubr.f32.mxu0 0.0
        %v6998 = vand.u32 %v4290, 4294901760
        %6999 = vmatmul.mubr.f32.gmra.mrb[0].mxu0 %v6998
        %v7000 = vpop.f32.mrb[0].mxu0
        %v7001 = vadd.f32 %v6840, %v7000
        %v7002 = vpop.f32.mrb[0].mxu0
        %7003 = vdwg.mxu0
        %7004 = vmatprep.subr.mxu0 0.0
        %v7005 = vand.u32 %v4291, 4294901760
        %7006 = vmatpush1.msra.mxu0 %v7005
        %7007 = vmatprep.subr.mxu0 0.0
        %v7008 = vand.u32 %v4292, 4294901760
        %7009 = vmatpush1.msra.mxu0 %v7008
        %7010 = vmatprep.subr.mxu0 0.0
        %v7011 = vand.u32 %v4293, 4294901760
        %7012 = vmatpush1.msra.mxu0 %v7011
        %7013 = vmatprep.subr.mxu0 0.0
        %v7014 = vand.u32 %v4294, 4294901760
        %7015 = vmatpush1.msra.mxu0 %v7014
        %7016 = vmatprep.subr.mxu0 0.0
        %v7017 = vand.u32 %v4295, 4294901760
        %7018 = vmatpush1.msra.mxu0 %v7017
        %7019 = vmatprep.subr.mxu0 0.0
        %v7020 = vand.u32 %v4296, 4294901760
        %7021 = vmatpush1.msra.mxu0 %v7020
        %7022 = vmatprep.subr.mxu0 0.0
        %v7023 = vand.u32 %v4297, 4294901760
        %7024 = vmatpush1.msra.mxu0 %v7023
        %7025 = vmatprep.subr.mxu0 0.0
        %v7026 = vand.u32 %v4298, 4294901760
        %7027 = vmatpush1.msra.mxu0 %v7026
        %7028 = vmatprep.subr.mxu0 0.0
        %v7029 = vand.u32 %v4299, 4294901760
        %7030 = vmatpush1.msra.mxu0 %v7029
        %7031 = vmatprep.subr.mxu0 0.0
        %v7032 = vand.u32 %v4300, 4294901760
        %7033 = vmatpush1.msra.mxu0 %v7032
        %7034 = vmatprep.subr.mxu0 0.0
        %v7035 = vand.u32 %v4301, 4294901760
        %7036 = vmatpush1.msra.mxu0 %v7035
        %7037 = vmatprep.subr.mxu0 0.0
        %v7038 = vand.u32 %v4302, 4294901760
        %7039 = vmatpush1.msra.mxu0 %v7038
        %7040 = vmatprep.subr.mxu0 0.0
        %v7041 = vand.u32 %v4303, 4294901760
        %7042 = vmatpush1.msra.mxu0 %v7041
        %7043 = vmatprep.subr.mxu0 0.0
        %v7044 = vand.u32 %v4304, 4294901760
        %7045 = vmatpush1.msra.mxu0 %v7044
        %7046 = vmatprep.subr.mxu0 0.0
        %v7047 = vand.u32 %v4305, 4294901760
        %7048 = vmatpush1.msra.mxu0 %v7047
        %7049 = vmatprep.subr.mxu0 0.0
        %v7050 = vand.u32 %v4306, 4294901760
        %7051 = vmatpush1.msra.mxu0 %v7050
        %7052 = vmatprep.subr.mxu0 0.0
        %7053 = vmatpush1.msra.mxu0 0.0
        %7054 = vmatprep.subr.mxu0 0.0
        %7055 = vmatpush1.msra.mxu0 0.0
        %7056 = vmatprep.subr.mxu0 0.0
        %7057 = vmatpush1.msra.mxu0 0.0
        %7058 = vmatprep.subr.mxu0 0.0
        %7059 = vmatpush1.msra.mxu0 0.0
        %7060 = vmatprep.subr.mxu0 0.0
        %7061 = vmatpush1.msra.mxu0 0.0
        %7062 = vmatprep.subr.mxu0 0.0
        %7063 = vmatpush1.msra.mxu0 0.0
        %7064 = vmatprep.subr.mxu0 0.0
        %7065 = vmatpush1.msra.mxu0 0.0
        %7066 = vmatprep.subr.mxu0 0.0
        %7067 = vmatpush1.msra.mxu0 0.0
        %7068 = vmatprep.subr.mxu0 0.0
        %7069 = vmatpush1.msra.mxu0 0.0
        %7070 = vmatprep.subr.mxu0 0.0
        %7071 = vmatpush1.msra.mxu0 0.0
        %7072 = vmatprep.subr.mxu0 0.0
        %7073 = vmatpush1.msra.mxu0 0.0
        %7074 = vmatprep.subr.mxu0 0.0
        %7075 = vmatpush1.msra.mxu0 0.0
        %7076 = vmatprep.subr.mxu0 0.0
        %7077 = vmatpush1.msra.mxu0 0.0
        %7078 = vmatprep.subr.mxu0 0.0
        %7079 = vmatpush1.msra.mxu0 0.0
        %7080 = vmatprep.subr.mxu0 0.0
        %7081 = vmatpush1.msra.mxu0 0.0
        %7082 = vmatprep.subr.mxu0 0.0
        %7083 = vmatpush1.msra.mxu0 0.0
        %7084 = vmatprep.mubr.f32.mxu0 0.0
        %v7085 = vand.u32 %v4283, 4294901760
        %7086 = vmatmul.mubr.f32.gmra.mrb[0].mxu0 %v7085
        %v7087 = vpop.f32.mrb[0].mxu0
        %v7088 = vadd.f32 %v6959, %v7087
        %v7089 = vpop.f32.mrb[0].mxu0
        %7090 = vmatprep.mubr.f32.mxu0 0.0
        %v7091 = vand.u32 %v4284, 4294901760
        %7092 = vmatmul.mubr.f32.gmra.mrb[0].mxu0 %v7091
        %v7093 = vpop.f32.mrb[0].mxu0
        %v7094 = vadd.f32 %v6965, %v7093
        %v7095 = vpop.f32.mrb[0].mxu0
        %7096 = vmatprep.mubr.f32.mxu0 0.0
        %v7097 = vand.u32 %v4285, 4294901760
        %7098 = vmatmul.mubr.f32.gmra.mrb[0].mxu0 %v7097
        %v7099 = vpop.f32.mrb[0].mxu0
        %v7100 = vadd.f32 %v6971, %v7099
        %v7101 = vpop.f32.mrb[0].mxu0
        %7102 = vmatprep.mubr.f32.mxu0 0.0
        %v7103 = vand.u32 %v4286, 4294901760
        %7104 = vmatmul.mubr.f32.gmra.mrb[0].mxu0 %v7103
        %v7105 = vpop.f32.mrb[0].mxu0
        %v7106 = vadd.f32 %v6977, %v7105
        %v7107 = vpop.f32.mrb[0].mxu0
        %7108 = vmatprep.mubr.f32.mxu0 0.0
        %v7109 = vand.u32 %v4287, 4294901760
        %7110 = vmatmul.mubr.f32.gmra.mrb[0].mxu0 %v7109
        %v7111 = vpop.f32.mrb[0].mxu0
        %v7112 = vadd.f32 %v6983, %v7111
        %v7113 = vpop.f32.mrb[0].mxu0
        %7114 = vmatprep.mubr.f32.mxu0 0.0
        %v7115 = vand.u32 %v4288, 4294901760
        %7116 = vmatmul.mubr.f32.gmra.mrb[0].mxu0 %v7115
        %v7117 = vpop.f32.mrb[0].mxu0
        %v7118 = vadd.f32 %v6989, %v7117
        %v7119 = vpop.f32.mrb[0].mxu0
        %7120 = vmatprep.mubr.f32.mxu0 0.0
        %v7121 = vand.u32 %v4289, 4294901760
        %7122 = vmatmul.mubr.f32.gmra.mrb[0].mxu0 %v7121
        %v7123 = vpop.f32.mrb[0].mxu0
        %v7124 = vadd.f32 %v6995, %v7123
        %v7125 = vpop.f32.mrb[0].mxu0
        %7126 = vmatprep.mubr.f32.mxu0 0.0
        %v7127 = vand.u32 %v4290, 4294901760
        %7128 = vmatmul.mubr.f32.gmra.mrb[0].mxu0 %v7127
        %v7129 = vpop.f32.mrb[0].mxu0
        %v7130 = vadd.f32 %v7001, %v7129
        %v7131 = vpop.f32.mrb[0].mxu0
        %7132 = vdwg.mxu0
        %v7133 = vrcp.pop %v5204
        %v7134 = vmul.f32 1.0, %v7133
        %v7135 = vrcp.pop %v5210
        %v7136 = vmul.f32 1.0, %v7135
        %v7137 = vrcp.pop %v5216
        %v7138 = vmul.f32 1.0, %v7137
        %v7139 = vrcp.pop %v5222
        %v7140 = vmul.f32 1.0, %v7139
        %v7141 = vrcp.pop %v5228
        %v7142 = vmul.f32 1.0, %v7141
        %v7143 = vrcp.pop %v5234
        %v7144 = vmul.f32 1.0, %v7143
        %v7145 = vrcp.pop %v5240
        %v7146 = vmul.f32 1.0, %v7145
        %v7147 = vrcp.pop %v5246
        %v7148 = vmul.f32 1.0, %v7147
        %v7149 = vmul.f32 %v7088, %v7134
        %v7150 = vmul.f32 %v7094, %v7136
        %v7151 = vmul.f32 %v7100, %v7138
        %v7152 = vmul.f32 %v7106, %v7140
        %v7153 = vmul.f32 %v7112, %v7142
        %v7154 = vmul.f32 %v7118, %v7144
        %v7155 = vmul.f32 %v7124, %v7146
        %v7156 = vmul.f32 %v7130, %v7148
        %v7157 = vmul.f32 %v6146, %v7134
        %v7158 = vmul.f32 %v6152, %v7136
        %v7159 = vmul.f32 %v6158, %v7138
        %v7160 = vmul.f32 %v6164, %v7140
        %v7161 = vmul.f32 %v6170, %v7142
        %v7162 = vmul.f32 %v6176, %v7144
        %v7163 = vmul.f32 %v6182, %v7146
        %v7164 = vmul.f32 %v6188, %v7148
        %v7165 = vlog2.pop %v7157
        %v7166 = vmul.f32 %v7165, 0.6931472
        %v7167 = vlog2.pop %v7158
        %v7168 = vmul.f32 %v7167, 0.6931472
        %v7169 = vlog2.pop %v7159
        %v7170 = vmul.f32 %v7169, 0.6931472
        %v7171 = vlog2.pop %v7160
        %v7172 = vmul.f32 %v7171, 0.6931472
        %v7173 = vlog2.pop %v7161
        %v7174 = vmul.f32 %v7173, 0.6931472
        %v7175 = vlog2.pop %v7162
        %v7176 = vmul.f32 %v7175, 0.6931472
        %v7177 = vlog2.pop %v7163
        %v7178 = vmul.f32 %v7177, 0.6931472
        %v7179 = vlog2.pop %v7164
        %v7180 = vmul.f32 %v7179, 0.6931472
        %v7181 = vadd.f32 %v7149, %v7166
        %v7182 = vadd.f32 %v7150, %v7168
        %v7183 = vadd.f32 %v7151, %v7170
        %v7184 = vadd.f32 %v7152, %v7172
        %v7185 = vadd.f32 %v7153, %v7174
        %v7186 = vadd.f32 %v7154, %v7176
        %v7187 = vadd.f32 %v7155, %v7178
        %v7188 = vadd.f32 %v7156, %v7180
        %v7189 = vsub.f32 %v1744, %v928
        %v7190 = vsub.f32 %v1747, %v931
        %v7191 = vsub.f32 %v1750, %v934
        %v7192 = vsub.f32 %v1753, %v937
        %v7193 = vsub.f32 %v1756, %v940
        %v7194 = vsub.f32 %v1759, %v943
        %v7195 = vsub.f32 %v1762, %v946
        %v7196 = vsub.f32 %v1765, %v949
        %v7197 = vsub.f32 %v1768, %v952
        %v7198 = vsub.f32 %v1771, %v955
        %v7199 = vsub.f32 %v1774, %v958
        %v7200 = vsub.f32 %v1777, %v961
        %v7201 = vsub.f32 %v1780, %v964
        %v7202 = vsub.f32 %v1783, %v967
        %v7203 = vsub.f32 %v1786, %v970
        %v7204 = vsub.f32 %v1789, %v973
        %v7205 = vsub.f32 %v1792, %v976
        %v7206 = vsub.f32 %v1795, %v979
        %v7207 = vsub.f32 %v1798, %v982
        %v7208 = vsub.f32 %v1801, %v985
        %v7209 = vsub.f32 %v1804, %v988
        %v7210 = vsub.f32 %v1807, %v991
        %v7211 = vsub.f32 %v1810, %v994
        %v7212 = vsub.f32 %v1813, %v997
        %v7213 = vsub.f32 %v1816, %v1000
        %v7214 = vsub.f32 %v1819, %v1003
        %v7215 = vsub.f32 %v1822, %v1006
        %v7216 = vsub.f32 %v1825, %v1009
        %v7217 = vsub.f32 %v1828, %v1012
        %v7218 = vsub.f32 %v1831, %v1015
        %v7219 = vsub.f32 %v1834, %v1018
        %v7220 = vsub.f32 %v1837, %v1021
        %v7221 = vsub.f32 %v1840, %v1024
        %v7222 = vsub.f32 %v1843, %v1027
        %v7223 = vsub.f32 %v1846, %v1030
        %v7224 = vsub.f32 %v1849, %v1033
        %v7225 = vsub.f32 %v1852, %v1036
        %v7226 = vsub.f32 %v1855, %v1039
        %v7227 = vsub.f32 %v1858, %v1042
        %v7228 = vsub.f32 %v1861, %v1045
        %v7229 = vsub.f32 %v1864, %v1048
        %v7230 = vsub.f32 %v1867, %v1051
        %v7231 = vsub.f32 %v1870, %v1054
        %v7232 = vsub.f32 %v1873, %v1057
        %v7233 = vsub.f32 %v1876, %v1060
        %v7234 = vsub.f32 %v1879, %v1063
        %v7235 = vsub.f32 %v1882, %v1066
        %v7236 = vsub.f32 %v1885, %v1069
        %v7237 = vsub.f32 %v1888, %v1072
        %v7238 = vsub.f32 %v1891, %v1075
        %v7239 = vsub.f32 %v1894, %v1078
        %v7240 = vsub.f32 %v1897, %v1081
        %v7241 = vsub.f32 %v1900, %v1084
        %v7242 = vsub.f32 %v1903, %v1087
        %v7243 = vsub.f32 %v1906, %v1090
        %v7244 = vsub.f32 %v1909, %v1093
        %v7245 = vsub.f32 %v1912, %v1096
        %v7246 = vsub.f32 %v1915, %v1099
        %v7247 = vsub.f32 %v1918, %v1102
        %v7248 = vsub.f32 %v1921, %v1105
        %v7249 = vsub.f32 %v1924, %v1108
        %v7250 = vsub.f32 %v1927, %v1111
        %v7251 = vsub.f32 %v1930, %v1114
        %v7252 = vsub.f32 %v1933, %v1117
        %v7317 = vlaneseq
        %v7318 = vshrl.u32 %v7317, 7
        %v7319 = vsub.s32 %v2000, %v7318
        %v7320 = vrot.slane %v7189, %v7319
        %v7321 = vlaneseq
        %v7322 = vshrl.u32 %v7321, 7
        %v7323 = vsub.s32 %v2000, %v7322
        %v7324 = vrot.slane %v7190, %v7323
        %v7325 = vlaneseq
        %v7326 = vshrl.u32 %v7325, 7
        %v7327 = vsub.s32 %v2000, %v7326
        %v7328 = vrot.slane %v7191, %v7327
        %v7329 = vlaneseq
        %v7330 = vshrl.u32 %v7329, 7
        %v7331 = vsub.s32 %v2000, %v7330
        %v7332 = vrot.slane %v7192, %v7331
        %v7333 = vlaneseq
        %v7334 = vshrl.u32 %v7333, 7
        %v7335 = vsub.s32 %v2000, %v7334
        %v7336 = vrot.slane %v7193, %v7335
        %v7337 = vlaneseq
        %v7338 = vshrl.u32 %v7337, 7
        %v7339 = vsub.s32 %v2000, %v7338
        %v7340 = vrot.slane %v7194, %v7339
        %v7341 = vlaneseq
        %v7342 = vshrl.u32 %v7341, 7
        %v7343 = vsub.s32 %v2000, %v7342
        %v7344 = vrot.slane %v7195, %v7343
        %v7345 = vlaneseq
        %v7346 = vshrl.u32 %v7345, 7
        %v7347 = vsub.s32 %v2000, %v7346
        %v7348 = vrot.slane %v7196, %v7347
        %v7349 = vlaneseq
        %v7350 = vshrl.u32 %v7349, 7
        %v7351 = vsub.s32 %v2000, %v7350
        %v7352 = vrot.slane %v7197, %v7351
        %v7353 = vlaneseq
        %v7354 = vshrl.u32 %v7353, 7
        %v7355 = vsub.s32 %v2000, %v7354
        %v7356 = vrot.slane %v7198, %v7355
        %v7357 = vlaneseq
        %v7358 = vshrl.u32 %v7357, 7
        %v7359 = vsub.s32 %v2000, %v7358
        %v7360 = vrot.slane %v7199, %v7359
        %v7361 = vlaneseq
        %v7362 = vshrl.u32 %v7361, 7
        %v7363 = vsub.s32 %v2000, %v7362
        %v7364 = vrot.slane %v7200, %v7363
        %v7365 = vlaneseq
        %v7366 = vshrl.u32 %v7365, 7
        %v7367 = vsub.s32 %v2000, %v7366
        %v7368 = vrot.slane %v7201, %v7367
        %v7369 = vlaneseq
        %v7370 = vshrl.u32 %v7369, 7
        %v7371 = vsub.s32 %v2000, %v7370
        %v7372 = vrot.slane %v7202, %v7371
        %v7373 = vlaneseq
        %v7374 = vshrl.u32 %v7373, 7
        %v7375 = vsub.s32 %v2000, %v7374
        %v7376 = vrot.slane %v7203, %v7375
        %v7377 = vlaneseq
        %v7378 = vshrl.u32 %v7377, 7
        %v7379 = vsub.s32 %v2000, %v7378
        %v7380 = vrot.slane %v7204, %v7379
        %v7381 = vlaneseq
        %v7382 = vshrl.u32 %v7381, 7
        %v7383 = vsub.s32 %v2000, %v7382
        %v7384 = vrot.slane %v7205, %v7383
        %v7385 = vlaneseq
        %v7386 = vshrl.u32 %v7385, 7
        %v7387 = vsub.s32 %v2000, %v7386
        %v7388 = vrot.slane %v7206, %v7387
        %v7389 = vlaneseq
        %v7390 = vshrl.u32 %v7389, 7
        %v7391 = vsub.s32 %v2000, %v7390
        %v7392 = vrot.slane %v7207, %v7391
        %v7393 = vlaneseq
        %v7394 = vshrl.u32 %v7393, 7
        %v7395 = vsub.s32 %v2000, %v7394
        %v7396 = vrot.slane %v7208, %v7395
        %v7397 = vlaneseq
        %v7398 = vshrl.u32 %v7397, 7
        %v7399 = vsub.s32 %v2000, %v7398
        %v7400 = vrot.slane %v7209, %v7399
        %v7401 = vlaneseq
        %v7402 = vshrl.u32 %v7401, 7
        %v7403 = vsub.s32 %v2000, %v7402
        %v7404 = vrot.slane %v7210, %v7403
        %v7405 = vlaneseq
        %v7406 = vshrl.u32 %v7405, 7
        %v7407 = vsub.s32 %v2000, %v7406
        %v7408 = vrot.slane %v7211, %v7407
        %v7409 = vlaneseq
        %v7410 = vshrl.u32 %v7409, 7
        %v7411 = vsub.s32 %v2000, %v7410
        %v7412 = vrot.slane %v7212, %v7411
        %v7413 = vlaneseq
        %v7414 = vshrl.u32 %v7413, 7
        %v7415 = vsub.s32 %v2000, %v7414
        %v7416 = vrot.slane %v7213, %v7415
        %v7417 = vlaneseq
        %v7418 = vshrl.u32 %v7417, 7
        %v7419 = vsub.s32 %v2000, %v7418
        %v7420 = vrot.slane %v7214, %v7419
        %v7421 = vlaneseq
        %v7422 = vshrl.u32 %v7421, 7
        %v7423 = vsub.s32 %v2000, %v7422
        %v7424 = vrot.slane %v7215, %v7423
        %v7425 = vlaneseq
        %v7426 = vshrl.u32 %v7425, 7
        %v7427 = vsub.s32 %v2000, %v7426
        %v7428 = vrot.slane %v7216, %v7427
        %v7429 = vlaneseq
        %v7430 = vshrl.u32 %v7429, 7
        %v7431 = vsub.s32 %v2000, %v7430
        %v7432 = vrot.slane %v7217, %v7431
        %v7433 = vlaneseq
        %v7434 = vshrl.u32 %v7433, 7
        %v7435 = vsub.s32 %v2000, %v7434
        %v7436 = vrot.slane %v7218, %v7435
        %v7437 = vlaneseq
        %v7438 = vshrl.u32 %v7437, 7
        %v7439 = vsub.s32 %v2000, %v7438
        %v7440 = vrot.slane %v7219, %v7439
        %v7441 = vlaneseq
        %v7442 = vshrl.u32 %v7441, 7
        %v7443 = vsub.s32 %v2000, %v7442
        %v7444 = vrot.slane %v7220, %v7443
        %v7445 = vlaneseq
        %v7446 = vshrl.u32 %v7445, 7
        %v7447 = vsub.s32 %v2000, %v7446
        %v7448 = vrot.slane %v7221, %v7447
        %v7449 = vlaneseq
        %v7450 = vshrl.u32 %v7449, 7
        %v7451 = vsub.s32 %v2000, %v7450
        %v7452 = vrot.slane %v7222, %v7451
        %v7453 = vlaneseq
        %v7454 = vshrl.u32 %v7453, 7
        %v7455 = vsub.s32 %v2000, %v7454
        %v7456 = vrot.slane %v7223, %v7455
        %v7457 = vlaneseq
        %v7458 = vshrl.u32 %v7457, 7
        %v7459 = vsub.s32 %v2000, %v7458
        %v7460 = vrot.slane %v7224, %v7459
        %v7461 = vlaneseq
        %v7462 = vshrl.u32 %v7461, 7
        %v7463 = vsub.s32 %v2000, %v7462
        %v7464 = vrot.slane %v7225, %v7463
        %v7465 = vlaneseq
        %v7466 = vshrl.u32 %v7465, 7
        %v7467 = vsub.s32 %v2000, %v7466
        %v7468 = vrot.slane %v7226, %v7467
        %v7469 = vlaneseq
        %v7470 = vshrl.u32 %v7469, 7
        %v7471 = vsub.s32 %v2000, %v7470
        %v7472 = vrot.slane %v7227, %v7471
        %v7473 = vlaneseq
        %v7474 = vshrl.u32 %v7473, 7
        %v7475 = vsub.s32 %v2000, %v7474
        %v7476 = vrot.slane %v7228, %v7475
        %v7477 = vlaneseq
        %v7478 = vshrl.u32 %v7477, 7
        %v7479 = vsub.s32 %v2000, %v7478
        %v7480 = vrot.slane %v7229, %v7479
        %v7481 = vlaneseq
        %v7482 = vshrl.u32 %v7481, 7
        %v7483 = vsub.s32 %v2000, %v7482
        %v7484 = vrot.slane %v7230, %v7483
        %v7485 = vlaneseq
        %v7486 = vshrl.u32 %v7485, 7
        %v7487 = vsub.s32 %v2000, %v7486
        %v7488 = vrot.slane %v7231, %v7487
        %v7489 = vlaneseq
        %v7490 = vshrl.u32 %v7489, 7
        %v7491 = vsub.s32 %v2000, %v7490
        %v7492 = vrot.slane %v7232, %v7491
        %v7493 = vlaneseq
        %v7494 = vshrl.u32 %v7493, 7
        %v7495 = vsub.s32 %v2000, %v7494
        %v7496 = vrot.slane %v7233, %v7495
        %v7497 = vlaneseq
        %v7498 = vshrl.u32 %v7497, 7
        %v7499 = vsub.s32 %v2000, %v7498
        %v7500 = vrot.slane %v7234, %v7499
        %v7501 = vlaneseq
        %v7502 = vshrl.u32 %v7501, 7
        %v7503 = vsub.s32 %v2000, %v7502
        %v7504 = vrot.slane %v7235, %v7503
        %v7505 = vlaneseq
        %v7506 = vshrl.u32 %v7505, 7
        %v7507 = vsub.s32 %v2000, %v7506
        %v7508 = vrot.slane %v7236, %v7507
        %v7509 = vlaneseq
        %v7510 = vshrl.u32 %v7509, 7
        %v7511 = vsub.s32 %v2000, %v7510
        %v7512 = vrot.slane %v7237, %v7511
        %v7513 = vlaneseq
        %v7514 = vshrl.u32 %v7513, 7
        %v7515 = vsub.s32 %v2000, %v7514
        %v7516 = vrot.slane %v7238, %v7515
        %v7517 = vlaneseq
        %v7518 = vshrl.u32 %v7517, 7
        %v7519 = vsub.s32 %v2000, %v7518
        %v7520 = vrot.slane %v7239, %v7519
        %v7521 = vlaneseq
        %v7522 = vshrl.u32 %v7521, 7
        %v7523 = vsub.s32 %v2000, %v7522
        %v7524 = vrot.slane %v7240, %v7523
        %v7525 = vlaneseq
        %v7526 = vshrl.u32 %v7525, 7
        %v7527 = vsub.s32 %v2000, %v7526
        %v7528 = vrot.slane %v7241, %v7527
        %v7529 = vlaneseq
        %v7530 = vshrl.u32 %v7529, 7
        %v7531 = vsub.s32 %v2000, %v7530
        %v7532 = vrot.slane %v7242, %v7531
        %v7533 = vlaneseq
        %v7534 = vshrl.u32 %v7533, 7
        %v7535 = vsub.s32 %v2000, %v7534
        %v7536 = vrot.slane %v7243, %v7535
        %v7537 = vlaneseq
        %v7538 = vshrl.u32 %v7537, 7
        %v7539 = vsub.s32 %v2000, %v7538
        %v7540 = vrot.slane %v7244, %v7539
        %v7541 = vlaneseq
        %v7542 = vshrl.u32 %v7541, 7
        %v7543 = vsub.s32 %v2000, %v7542
        %v7544 = vrot.slane %v7245, %v7543
        %v7545 = vlaneseq
        %v7546 = vshrl.u32 %v7545, 7
        %v7547 = vsub.s32 %v2000, %v7546
        %v7548 = vrot.slane %v7246, %v7547
        %v7549 = vlaneseq
        %v7550 = vshrl.u32 %v7549, 7
        %v7551 = vsub.s32 %v2000, %v7550
        %v7552 = vrot.slane %v7247, %v7551
        %v7553 = vlaneseq
        %v7554 = vshrl.u32 %v7553, 7
        %v7555 = vsub.s32 %v2000, %v7554
        %v7556 = vrot.slane %v7248, %v7555
        %v7557 = vlaneseq
        %v7558 = vshrl.u32 %v7557, 7
        %v7559 = vsub.s32 %v2000, %v7558
        %v7560 = vrot.slane %v7249, %v7559
        %v7561 = vlaneseq
        %v7562 = vshrl.u32 %v7561, 7
        %v7563 = vsub.s32 %v2000, %v7562
        %v7564 = vrot.slane %v7250, %v7563
        %v7565 = vlaneseq
        %v7566 = vshrl.u32 %v7565, 7
        %v7567 = vsub.s32 %v2000, %v7566
        %v7568 = vrot.slane %v7251, %v7567
        %v7569 = vlaneseq
        %v7570 = vshrl.u32 %v7569, 7
        %v7571 = vsub.s32 %v2000, %v7570
        %v7572 = vrot.slane %v7252, %v7571
        %v7573 = vsel %vm2257, %v7324, %v7320
        %v7574 = vsel %vm2259, %v7328, %v7573
        %v7575 = vsel %vm2261, %v7332, %v7574
        %v7576 = vsel %vm2263, %v7336, %v7575
        %v7577 = vsel %vm2265, %v7340, %v7576
        %v7578 = vsel %vm2267, %v7344, %v7577
        %v7579 = vsel %vm2269, %v7348, %v7578
        %v7580 = vsel %vm2257, %v7356, %v7352
        %v7581 = vsel %vm2259, %v7360, %v7580
        %v7582 = vsel %vm2261, %v7364, %v7581
        %v7583 = vsel %vm2263, %v7368, %v7582
        %v7584 = vsel %vm2265, %v7372, %v7583
        %v7585 = vsel %vm2267, %v7376, %v7584
        %v7586 = vsel %vm2269, %v7380, %v7585
        %v7587 = vsel %vm2257, %v7388, %v7384
        %v7588 = vsel %vm2259, %v7392, %v7587
        %v7589 = vsel %vm2261, %v7396, %v7588
        %v7590 = vsel %vm2263, %v7400, %v7589
        %v7591 = vsel %vm2265, %v7404, %v7590
        %v7592 = vsel %vm2267, %v7408, %v7591
        %v7593 = vsel %vm2269, %v7412, %v7592
        %v7594 = vsel %vm2257, %v7420, %v7416
        %v7595 = vsel %vm2259, %v7424, %v7594
        %v7596 = vsel %vm2261, %v7428, %v7595
        %v7597 = vsel %vm2263, %v7432, %v7596
        %v7598 = vsel %vm2265, %v7436, %v7597
        %v7599 = vsel %vm2267, %v7440, %v7598
        %v7600 = vsel %vm2269, %v7444, %v7599
        %v7601 = vsel %vm2257, %v7452, %v7448
        %v7602 = vsel %vm2259, %v7456, %v7601
        %v7603 = vsel %vm2261, %v7460, %v7602
        %v7604 = vsel %vm2263, %v7464, %v7603
        %v7605 = vsel %vm2265, %v7468, %v7604
        %v7606 = vsel %vm2267, %v7472, %v7605
        %v7607 = vsel %vm2269, %v7476, %v7606
        %v7608 = vsel %vm2257, %v7484, %v7480
        %v7609 = vsel %vm2259, %v7488, %v7608
        %v7610 = vsel %vm2261, %v7492, %v7609
        %v7611 = vsel %vm2263, %v7496, %v7610
        %v7612 = vsel %vm2265, %v7500, %v7611
        %v7613 = vsel %vm2267, %v7504, %v7612
        %v7614 = vsel %vm2269, %v7508, %v7613
        %v7615 = vsel %vm2257, %v7516, %v7512
        %v7616 = vsel %vm2259, %v7520, %v7615
        %v7617 = vsel %vm2261, %v7524, %v7616
        %v7618 = vsel %vm2263, %v7528, %v7617
        %v7619 = vsel %vm2265, %v7532, %v7618
        %v7620 = vsel %vm2267, %v7536, %v7619
        %v7621 = vsel %vm2269, %v7540, %v7620
        %v7622 = vsel %vm2257, %v7548, %v7544
        %v7623 = vsel %vm2259, %v7552, %v7622
        %v7624 = vsel %vm2261, %v7556, %v7623
        %v7625 = vsel %vm2263, %v7560, %v7624
        %v7626 = vsel %vm2265, %v7564, %v7625
        %v7627 = vsel %vm2267, %v7568, %v7626
        %v7628 = vsel %vm2269, %v7572, %v7627
        %v7637 = vadd.f32 %v7181, %v7579
        %v7638 = vadd.f32 %v7182, %v7586
        %v7639 = vadd.f32 %v7183, %v7593
        %v7640 = vadd.f32 %v7184, %v7600
        %v7641 = vadd.f32 %v7185, %v7607
        %v7642 = vadd.f32 %v7186, %v7614
        %v7643 = vadd.f32 %v7187, %v7621
        %v7644 = vadd.f32 %v7188, %v7628
        %v7645 = vsel %vm2320, %v7637, 0.0
        %v7646 = vsel %vm2320, %v7638, 0.0
        %v7647 = vadd.f32 %v7645, %v7646
        %v7648 = vsel %vm2320, %v7639, 0.0
        %v7649 = vadd.f32 %v7647, %v7648
        %v7650 = vsel %vm2320, %v7640, 0.0
        %v7651 = vadd.f32 %v7649, %v7650
        %v7652 = vsel %vm2320, %v7641, 0.0
        %v7653 = vadd.f32 %v7651, %v7652
        %v7654 = vsel %vm2320, %v7642, 0.0
        %v7655 = vadd.f32 %v7653, %v7654
        %v7656 = vsel %vm2320, %v7643, 0.0
        %v7657 = vadd.f32 %v7655, %v7656
        %v7658 = vsel %vm2320, %v7644, 0.0
        %v7659 = vadd.f32 %v7657, %v7658
        %7660 = vadd.xlane.f32.xlu0 %v7659
        %v7661 = vpop.xlane.xlu0 %7660
        %v7662 = vrot.slane %v7661, 4
        %v7663 = vadd.f32 %v7661, %v7662
        %v7664 = vrot.slane %v7663, 2
        %v7665 = vadd.f32 %v7663, %v7664
        %v7666 = vrot.slane %v7665, 1
        %v7667 = vadd.f32 %v7665, %v7666
        %s7668 = vtos %v7667
        %v7669 = vstv %s7668
        %7670 = vst [vmem:[%s282] sm:$0xff] %v7669
        %s7671 = sand.u32 %s127, 1
        %s7672 = scalar_lea.sflag [#allocation4], %s7671
        %s7673 = sand.u32 %s127, 1
        %s7674 = smul.addr %s7673, 8
        %s7675 = scalar_lea.vmem [#allocation10], %s7674
        // Predicated region
        $region53: #{tpu_custom_call.1} parent=35 // pred_check
          %p7676 = pneg %p137
        $region54: #{tpu_custom_call.1} parent=35 // pred_check_branch
          %7678 = sbr.rel (%p7676) target = $region56
        $region55: #{tpu_custom_call.1} parent=35 // pred_region
          %s7680 = ssub.s32 128, 128
          %7681 = vsyncadd %s7672, %s7680
          %s7682 = smul.addr %s25, 128
          %s7683 = scalar_lea.hbm %s4, %s7682
          %s7685 = sshll.u32 %s7675, 4
          %s7686 = int_to_ptr.vmem [resolvable:$true] %s7685
          %7688 = dma.vmem_to_hbm [thread:$0]  %s7686, 128, %s7683, %s7672
        $region56: #{tpu_custom_call.1} parent=35 // pred_fallthru
          _
      $region36: #{tpu_custom_call.1} parent=5 // pred_fallthru
        _
      %p7689 = scmp.le.s32.totalorder 2, %s20
      // Predicated region
      $region57: #{tpu_custom_call.1} parent=5 // pred_check
        %p7690 = pneg %p7689
      $region58: #{tpu_custom_call.1} parent=5 // pred_check_branch
        %7692 = sbr.rel (%p7690) target = $region60
      $region59: #{tpu_custom_call.1} parent=5 // pred_region
        %s7693 = ssub.s32 %s20, 2
        // Predicated region
        $region61: #{tpu_custom_call.1} parent=59 // pred_check
          %p7694 = pneg %p143
        $region62: #{tpu_custom_call.1} parent=59 // pred_check_branch
          %7696 = sbr.rel (%p7694) target = $region64
        $region63: #{tpu_custom_call.1} parent=59 // pred_region
          %s7697 = sand.u32 %s128, 1
          %s7698 = scalar_lea.sflag [#allocation4], %s7697
          %s7699 = sand.u32 %s128, 1
          %s7700 = smul.addr %s7699, 8
          %s7701 = scalar_lea.vmem [#allocation10], %s7700
          %7702 = dma.done %s7698, 128
        $region64: #{tpu_custom_call.1} parent=59 // pred_fallthru
          _
      $region60: #{tpu_custom_call.1} parent=5 // pred_fallthru
        _
    $region6: #{tpu_custom_call.1} parent=1 // loop_footer
      %s24 = sadd.s32 1, %s20
    $region7: #{tpu_custom_call.1} parent=1 // loop_footer_branch
      %19 = sbr.rel target = $region3
    $region8: #{tpu_custom_call.1} parent=1 // loop_exit
      _
    %7703 = vsyncpa [#allocation3], 1
    %s7704 = scalar_lea.sflag [#allocation3], 1
    %7705 = vsyncpa %s7704, 1
    %7706 = vsyncpa [#allocation6], 1
    %s7707 = scalar_lea.sflag [#allocation6], 1
    %7708 = vsyncpa %s7707, 1
    %7709 = vsyncpa [#allocation9], 1
    %7710 = vsyncpa [#allocation4], 1
    %s7711 = scalar_lea.sflag [#allocation4], 1
    %7712 = vsyncpa %s7711, 1

</llo_original>
